<compile_context>
chip_gen: v5e
topology: v5e:2x2
jax: 0.10.0
libtpu: 0.0.40
codegen_flags: <defaults>
</compile_context>

<pallas_src>
import functools

import numpy as np
import jax
import jax.numpy as jnp
from jax import lax
from jax.experimental import pallas as pl
from jax.experimental.pallas import tpu as pltpu

EPS = 1e-5
LANE = 128


def _ceil_to(x, m):
    return ((x + m - 1) // m) * m


def _bn_relu(y, gamma, beta):
    """Training-mode BatchNorm (biased var) + ReLU on a (M, C) f32 block.

    Two-pass centered variance (numerically robust), then the affine is folded
    into one multiply+add per element before the ReLU.
    """
    inv_n = 1.0 / y.shape[0]
    mean = jnp.sum(y, axis=0, keepdims=True) * inv_n            # (1, C)
    d = y - mean
    var = jnp.sum(d * d, axis=0, keepdims=True) * inv_n         # (1, C), >= 0
    scale = gamma * lax.rsqrt(var + EPS)
    return jnp.maximum(d * scale + beta, 0.0)


def _conv3x3_accum(pad_ref, w_ref, N, H, W, dot_dtype):
    """3x3 'SAME' conv as 9 accumulated MXU matmuls (no materialized im2col).

    pad_ref: (N, H+2, W+2, Cp_in) VMEM ref (already zero-padded).
    w_ref:   (9, Cp_in, Cp_out) VMEM ref, tap-major (ky*3 + kx).
    Returns (N*H*W, Cp_out) f32.
    """
    M = N * H * W
    Cp_in = pad_ref.shape[-1]
    Cp_out = w_ref.shape[-1]
    acc = jnp.zeros((M, Cp_out), jnp.float32)
    t = 0
    for ky in range(3):
        for kx in range(3):
            tap = pad_ref[:, ky:ky + H, kx:kx + W, :].reshape(M, Cp_in)
            acc = acc + jnp.dot(tap.astype(dot_dtype),
                                w_ref[t].astype(dot_dtype),
                                preferred_element_type=jnp.float32)
            t += 1
    return acc


def double_conv_kernel(x_ref, w1_ref, g1_ref, bt1_ref,
                       w2_ref, g2_ref, bt2_ref,
                       o_ref, pad1_ref, pad2_ref, *, dot_dtype):
    N, H, W, _ = x_ref.shape
    Cp1 = pad2_ref.shape[-1]

    # ---- spatial zero-pad of the input in VMEM ----
    # Full-buffer zero fill (one pass of unmasked, lane-dense stores), then a
    # lane-dense interior write (channels already padded to 128 in wrapper).
    pad1_ref[...] = jnp.zeros_like(pad1_ref)
    pad1_ref[:, 1:H + 1, 1:W + 1, :] = x_ref[...]

    # ---- conv1 (bias folded away by training-mode BN) + BN1 + ReLU ----
    y = _conv3x3_accum(pad1_ref, w1_ref, N, H, W, dot_dtype)    # (NHW, Cp1)
    y = _bn_relu(y, g1_ref[...], bt1_ref[...])

    # ---- stage-1 activation written straight into interior of pad2 ----
    pad2_ref[...] = jnp.zeros_like(pad2_ref)
    pad2_ref[:, 1:H + 1, 1:W + 1, :] = y.reshape(N, H, W, Cp1)

    # ---- conv2 + BN2 + ReLU, lane-dense output store ----
    z = _conv3x3_accum(pad2_ref, w2_ref, N, H, W, dot_dtype)    # (NHW, Cp2)
    o_ref[...] = _bn_relu(z, g2_ref[...], bt2_ref[...])


def double_conv(x_nchw, params, dot_dtype=jnp.float32):
    """x_nchw: (N, Cin, H, W) float32.  Returns (N, Cout, H, W) float32."""
    w1, b1, g1, bt1, w2, b2, g2, bt2 = params
    del b1, b2  # conv bias cancels exactly under training-mode BatchNorm
    N, Cin, H, W = x_nchw.shape
    C1 = w1.shape[-1]
    C2 = w2.shape[-1]

    # Pad every channel axis up to a multiple of 128 so all kernel-internal
    # loads/stores/VPU ops and the MXU K/N dims are lane-dense.
    Cpi = _ceil_to(Cin, LANE)
    Cp1 = _ceil_to(C1, LANE)
    Cp2 = _ceil_to(C2, LANE)

    x = jnp.transpose(x_nchw, (0, 2, 3, 1))                     # NHWC
    x = jnp.pad(x, ((0, 0), (0, 0), (0, 0), (0, Cpi - Cin)))

    # Per-tap weight slabs (9, Cp_in, Cp_out), HWIO flatten order tap-major.
    w1p = jnp.pad(w1, ((0, 0), (0, 0), (0, Cpi - Cin), (0, Cp1 - C1)))
    w1p = w1p.reshape(9, Cpi, Cp1)
    w2p = jnp.pad(w2, ((0, 0), (0, 0), (0, Cp1 - C1), (0, Cp2 - C2)))
    w2p = w2p.reshape(9, Cp1, Cp2)

    g1p = jnp.pad(g1, ((0, 0), (0, Cp1 - C1)))
    bt1p = jnp.pad(bt1, ((0, 0), (0, Cp1 - C1)))
    g2p = jnp.pad(g2, ((0, 0), (0, Cp2 - C2)))
    bt2p = jnp.pad(bt2, ((0, 0), (0, Cp2 - C2)))

    vmem = pl.BlockSpec(memory_space=pltpu.MemorySpace.VMEM)
    kernel = functools.partial(double_conv_kernel, dot_dtype=dot_dtype)

    out_flat = pl.pallas_call(
        kernel,
        out_shape=jax.ShapeDtypeStruct((N * H * W, Cp2), jnp.float32),
        in_specs=[vmem] * 7,
        out_specs=vmem,
        scratch_shapes=[
            pltpu.VMEM((N, H + 2, W + 2, Cpi), jnp.float32),    # padded input
            pltpu.VMEM((N, H + 2, W + 2, Cp1), jnp.float32),    # padded stage-1 act
        ],
        # No vmem_limit_bytes: real requirement here is < 4 MiB, well inside
        # the default scoped VMEM limit on v5e/v6e/v7x.
    )(x, w1p, g1p, bt1p, w2p, g2p, bt2p)

    out_nhwc = out_flat[:, :C2].reshape(N, H, W, C2)
    return jnp.transpose(out_nhwc, (0, 3, 1, 2))                # back to NCHW


def make_params(key, in_channels, out_channels):
    """Deterministic params.  Conv weights kept HWIO = (3,3,Cin,Cout)."""
    k1, k2, k3, k4 = jax.random.split(key, 4)
    fan1 = in_channels * 9
    fan2 = out_channels * 9
    w1 = jax.random.uniform(k1, (3, 3, in_channels, out_channels),
                            jnp.float32, -1.0, 1.0) / np.sqrt(fan1)
    b1 = jax.random.uniform(k2, (1, out_channels),
                            jnp.float32, -1.0, 1.0) / np.sqrt(fan1)
    w2 = jax.random.uniform(k3, (3, 3, out_channels, out_channels),
                            jnp.float32, -1.0, 1.0) / np.sqrt(fan2)
    b2 = jax.random.uniform(k4, (1, out_channels),
                            jnp.float32, -1.0, 1.0) / np.sqrt(fan2)
    g1 = jnp.ones((1, out_channels), jnp.float32)    # BN gamma (default 1)
    bt1 = jnp.zeros((1, out_channels), jnp.float32)  # BN beta  (default 0)
    g2 = jnp.ones((1, out_channels), jnp.float32)
    bt2 = jnp.zeros((1, out_channels), jnp.float32)
    return (w1, b1, g1, bt1, w2, b2, g2, bt2)


def reference_double_conv(x_nchw, params):
    """Pure-JAX reference (NHWC conv WITH bias + training-mode BN + ReLU)."""
    w1, b1, g1, bt1, w2, b2, g2, bt2 = params
    x = jnp.transpose(x_nchw, (0, 2, 3, 1))
    dn = ('NHWC', 'HWIO', 'NHWC')

    def block(x, w, b, g, bt):
        y = lax.conv_general_dilated(x, w, (1, 1), 'SAME',
                                     dimension_numbers=dn) + b.reshape(1, 1, 1, -1)
        mean = jnp.mean(y, axis=(0, 1, 2), keepdims=True)
        var = jnp.mean((y - mean) ** 2, axis=(0, 1, 2), keepdims=True)
        y = (y - mean) * lax.rsqrt(var + EPS)
        y = y * g.reshape(1, 1, 1, -1) + bt.reshape(1, 1, 1, -1)
        return jnp.maximum(y, 0.0)

    y = block(x, w1, b1, g1, bt1)
    z = block(y, w2, b2, g2, bt2)
    return jnp.transpose(z, (0, 3, 1, 2))


if __name__ == "__main__":
    key = jax.random.PRNGKey(0)
    kx, kp = jax.random.split(key)

    N, Cin, Cout, H, W = 2, 4, 8, 16, 16
    x = jax.random.normal(kx, (N, Cin, H, W), jnp.float32)
    params = make_params(kp, Cin, Cout)

    out = jax.block_until_ready(double_conv(x, params))
    ref = jax.block_until_ready(reference_double_conv(x, params))

    np.testing.assert_allclose(np.asarray(out), np.asarray(ref),
                               rtol=1e-4, atol=1e-4)
    assert out.shape == (N, Cout, H, W)
    print("KERNEL_OK")
</pallas_src>

<mosaic_0001>
module attributes {stable_mosaic.version = 11 : i64} {
  func.func @double_conv_kernel(%arg0: memref<2x16x16x128xf32, #tpu.memory_space<vmem>>, %arg1: memref<9x128x128xf32, #tpu.memory_space<vmem>>, %arg2: memref<1x128xf32, #tpu.memory_space<vmem>>, %arg3: memref<1x128xf32, #tpu.memory_space<vmem>>, %arg4: memref<9x128x128xf32, #tpu.memory_space<vmem>>, %arg5: memref<1x128xf32, #tpu.memory_space<vmem>>, %arg6: memref<1x128xf32, #tpu.memory_space<vmem>>, %arg7: memref<512x128xf32, #tpu.memory_space<vmem>>, %arg8: memref<2x18x18x128xf32, #tpu.memory_space<vmem>>, %arg9: memref<2x18x18x128xf32, #tpu.memory_space<vmem>>) attributes {dimension_semantics = [], scalar_prefetch = 0 : i64, scratch_operands = 2 : i64, tpu.core_type = #tpu.core_type<tc>} {
    %cst = arith.constant 0.000000e+00 : f32
    %0 = vector.broadcast %cst : f32 to vector<2x18x18x128xf32>
    %c0 = arith.constant 0 : index
    %c0_0 = arith.constant 0 : index
    %c0_1 = arith.constant 0 : index
    %c0_2 = arith.constant 0 : index
    %1 = vector.load %arg8[%c0, %c0_0, %c0_1, %c0_2] : memref<2x18x18x128xf32, #tpu.memory_space<vmem>>, vector<2x18x18x128xf32>
    tpu.vector_store %arg8[%c0, %c0_0, %c0_1, %c0_2], %0 {strides = array<i32>} : memref<2x18x18x128xf32, #tpu.memory_space<vmem>>, vector<2x18x18x128xf32>,
    %c0_3 = arith.constant 0 : index
    %c0_4 = arith.constant 0 : index
    %c0_5 = arith.constant 0 : index
    %c0_6 = arith.constant 0 : index
    %2 = vector.load %arg0[%c0_3, %c0_4, %c0_5, %c0_6] : memref<2x16x16x128xf32, #tpu.memory_space<vmem>>, vector<2x16x16x128xf32>
    %c0_7 = arith.constant 0 : index
    %c1 = arith.constant 1 : index
    %c1_8 = arith.constant 1 : index
    %c0_9 = arith.constant 0 : index
    %3 = vector.load %arg8[%c0_7, %c1, %c1_8, %c0_9] : memref<2x18x18x128xf32, #tpu.memory_space<vmem>>, vector<2x16x16x128xf32>
    tpu.vector_store %arg8[%c0_7, %c1, %c1_8, %c0_9], %2 {strides = array<i32>} : memref<2x18x18x128xf32, #tpu.memory_space<vmem>>, vector<2x16x16x128xf32>,
    %cst_10 = arith.constant 0.000000e+00 : f32
    %4 = vector.broadcast %cst_10 : f32 to vector<512x128xf32>
    %c0_11 = arith.constant 0 : index
    %c0_12 = arith.constant 0 : index
    %c0_13 = arith.constant 0 : index
    %c0_14 = arith.constant 0 : index
    %5 = vector.load %arg8[%c0_11, %c0_12, %c0_13, %c0_14] : memref<2x18x18x128xf32, #tpu.memory_space<vmem>>, vector<2x16x16x128xf32>
    %6 = vector.shape_cast %5 : vector<2x16x16x128xf32> to vector<512x128xf32>
    %c0_15 = arith.constant 0 : index
    %c0_16 = arith.constant 0 : index
    %c0_17 = arith.constant 0 : index
    %7 = vector.load %arg1[%c0_15, %c0_16, %c0_17] : memref<9x128x128xf32, #tpu.memory_space<vmem>>, vector<1x128x128xf32>
    %8 = vector.shape_cast %7 : vector<1x128x128xf32> to vector<128x128xf32>
    %cst_18 = arith.constant dense<0.000000e+00> : vector<512x128xf32>
    %9 = tpu.matmul %6, %8, %cst_18 {dimension_numbers = #tpu.dot_dimension_numbers<[1], [0], [0], [1], [0, 0, 1, 1], [], []>} : vector<512x128xf32>, vector<128x128xf32>, vector<512x128xf32> -> vector<512x128xf32>
    %10 = arith.addf %4, %9 : vector<512x128xf32>
    %c0_19 = arith.constant 0 : index
    %c0_20 = arith.constant 0 : index
    %c1_21 = arith.constant 1 : index
    %c0_22 = arith.constant 0 : index
    %11 = vector.load %arg8[%c0_19, %c0_20, %c1_21, %c0_22] : memref<2x18x18x128xf32, #tpu.memory_space<vmem>>, vector<2x16x16x128xf32>
    %12 = vector.shape_cast %11 : vector<2x16x16x128xf32> to vector<512x128xf32>
    %c1_23 = arith.constant 1 : index
    %c0_24 = arith.constant 0 : index
    %c0_25 = arith.constant 0 : index
    %13 = vector.load %arg1[%c1_23, %c0_24, %c0_25] : memref<9x128x128xf32, #tpu.memory_space<vmem>>, vector<1x128x128xf32>
    %14 = vector.shape_cast %13 : vector<1x128x128xf32> to vector<128x128xf32>
    %cst_26 = arith.constant dense<0.000000e+00> : vector<512x128xf32>
    %15 = tpu.matmul %12, %14, %cst_26 {dimension_numbers = #tpu.dot_dimension_numbers<[1], [0], [0], [1], [0, 0, 1, 1], [], []>} : vector<512x128xf32>, vector<128x128xf32>, vector<512x128xf32> -> vector<512x128xf32>
    %16 = arith.addf %10, %15 : vector<512x128xf32>
    %c0_27 = arith.constant 0 : index
    %c0_28 = arith.constant 0 : index
    %c2 = arith.constant 2 : index
    %c0_29 = arith.constant 0 : index
    %17 = vector.load %arg8[%c0_27, %c0_28, %c2, %c0_29] : memref<2x18x18x128xf32, #tpu.memory_space<vmem>>, vector<2x16x16x128xf32>
    %18 = vector.shape_cast %17 : vector<2x16x16x128xf32> to vector<512x128xf32>
    %c2_30 = arith.constant 2 : index
    %c0_31 = arith.constant 0 : index
    %c0_32 = arith.constant 0 : index
    %19 = vector.load %arg1[%c2_30, %c0_31, %c0_32] : memref<9x128x128xf32, #tpu.memory_space<vmem>>, vector<1x128x128xf32>
    %20 = vector.shape_cast %19 : vector<1x128x128xf32> to vector<128x128xf32>
    %cst_33 = arith.constant dense<0.000000e+00> : vector<512x128xf32>
    %21 = tpu.matmul %18, %20, %cst_33 {dimension_numbers = #tpu.dot_dimension_numbers<[1], [0], [0], [1], [0, 0, 1, 1], [], []>} : vector<512x128xf32>, vector<128x128xf32>, vector<512x128xf32> -> vector<512x128xf32>
    %22 = arith.addf %16, %21 : vector<512x128xf32>
    %c0_34 = arith.constant 0 : index
    %c1_35 = arith.constant 1 : index
    %c0_36 = arith.constant 0 : index
    %c0_37 = arith.constant 0 : index
    %23 = vector.load %arg8[%c0_34, %c1_35, %c0_36, %c0_37] : memref<2x18x18x128xf32, #tpu.memory_space<vmem>>, vector<2x16x16x128xf32>
    %24 = vector.shape_cast %23 : vector<2x16x16x128xf32> to vector<512x128xf32>
    %c3 = arith.constant 3 : index
    %c0_38 = arith.constant 0 : index
    %c0_39 = arith.constant 0 : index
    %25 = vector.load %arg1[%c3, %c0_38, %c0_39] : memref<9x128x128xf32, #tpu.memory_space<vmem>>, vector<1x128x128xf32>
    %26 = vector.shape_cast %25 : vector<1x128x128xf32> to vector<128x128xf32>
    %cst_40 = arith.constant dense<0.000000e+00> : vector<512x128xf32>
    %27 = tpu.matmul %24, %26, %cst_40 {dimension_numbers = #tpu.dot_dimension_numbers<[1], [0], [0], [1], [0, 0, 1, 1], [], []>} : vector<512x128xf32>, vector<128x128xf32>, vector<512x128xf32> -> vector<512x128xf32>
    %28 = arith.addf %22, %27 : vector<512x128xf32>
    %c0_41 = arith.constant 0 : index
    %c1_42 = arith.constant 1 : index
    %c1_43 = arith.constant 1 : index
    %c0_44 = arith.constant 0 : index
    %29 = vector.load %arg8[%c0_41, %c1_42, %c1_43, %c0_44] : memref<2x18x18x128xf32, #tpu.memory_space<vmem>>, vector<2x16x16x128xf32>
    %30 = vector.shape_cast %29 : vector<2x16x16x128xf32> to vector<512x128xf32>
    %c4 = arith.constant 4 : index
    %c0_45 = arith.constant 0 : index
    %c0_46 = arith.constant 0 : index
    %31 = vector.load %arg1[%c4, %c0_45, %c0_46] : memref<9x128x128xf32, #tpu.memory_space<vmem>>, vector<1x128x128xf32>
    %32 = vector.shape_cast %31 : vector<1x128x128xf32> to vector<128x128xf32>
    %cst_47 = arith.constant dense<0.000000e+00> : vector<512x128xf32>
    %33 = tpu.matmul %30, %32, %cst_47 {dimension_numbers = #tpu.dot_dimension_numbers<[1], [0], [0], [1], [0, 0, 1, 1], [], []>} : vector<512x128xf32>, vector<128x128xf32>, vector<512x128xf32> -> vector<512x128xf32>
    %34 = arith.addf %28, %33 : vector<512x128xf32>
    %c0_48 = arith.constant 0 : index
    %c1_49 = arith.constant 1 : index
    %c2_50 = arith.constant 2 : index
    %c0_51 = arith.constant 0 : index
    %35 = vector.load %arg8[%c0_48, %c1_49, %c2_50, %c0_51] : memref<2x18x18x128xf32, #tpu.memory_space<vmem>>, vector<2x16x16x128xf32>
    %36 = vector.shape_cast %35 : vector<2x16x16x128xf32> to vector<512x128xf32>
    %c5 = arith.constant 5 : index
    %c0_52 = arith.constant 0 : index
    %c0_53 = arith.constant 0 : index
    %37 = vector.load %arg1[%c5, %c0_52, %c0_53] : memref<9x128x128xf32, #tpu.memory_space<vmem>>, vector<1x128x128xf32>
    %38 = vector.shape_cast %37 : vector<1x128x128xf32> to vector<128x128xf32>
    %cst_54 = arith.constant dense<0.000000e+00> : vector<512x128xf32>
    %39 = tpu.matmul %36, %38, %cst_54 {dimension_numbers = #tpu.dot_dimension_numbers<[1], [0], [0], [1], [0, 0, 1, 1], [], []>} : vector<512x128xf32>, vector<128x128xf32>, vector<512x128xf32> -> vector<512x128xf32>
    %40 = arith.addf %34, %39 : vector<512x128xf32>
    %c0_55 = arith.constant 0 : index
    %c2_56 = arith.constant 2 : index
    %c0_57 = arith.constant 0 : index
    %c0_58 = arith.constant 0 : index
    %41 = vector.load %arg8[%c0_55, %c2_56, %c0_57, %c0_58] : memref<2x18x18x128xf32, #tpu.memory_space<vmem>>, vector<2x16x16x128xf32>
    %42 = vector.shape_cast %41 : vector<2x16x16x128xf32> to vector<512x128xf32>
    %c6 = arith.constant 6 : index
    %c0_59 = arith.constant 0 : index
    %c0_60 = arith.constant 0 : index
    %43 = vector.load %arg1[%c6, %c0_59, %c0_60] : memref<9x128x128xf32, #tpu.memory_space<vmem>>, vector<1x128x128xf32>
    %44 = vector.shape_cast %43 : vector<1x128x128xf32> to vector<128x128xf32>
    %cst_61 = arith.constant dense<0.000000e+00> : vector<512x128xf32>
    %45 = tpu.matmul %42, %44, %cst_61 {dimension_numbers = #tpu.dot_dimension_numbers<[1], [0], [0], [1], [0, 0, 1, 1], [], []>} : vector<512x128xf32>, vector<128x128xf32>, vector<512x128xf32> -> vector<512x128xf32>
    %46 = arith.addf %40, %45 : vector<512x128xf32>
    %c0_62 = arith.constant 0 : index
    %c2_63 = arith.constant 2 : index
    %c1_64 = arith.constant 1 : index
    %c0_65 = arith.constant 0 : index
    %47 = vector.load %arg8[%c0_62, %c2_63, %c1_64, %c0_65] : memref<2x18x18x128xf32, #tpu.memory_space<vmem>>, vector<2x16x16x128xf32>
    %48 = vector.shape_cast %47 : vector<2x16x16x128xf32> to vector<512x128xf32>
    %c7 = arith.constant 7 : index
    %c0_66 = arith.constant 0 : index
    %c0_67 = arith.constant 0 : index
    %49 = vector.load %arg1[%c7, %c0_66, %c0_67] : memref<9x128x128xf32, #tpu.memory_space<vmem>>, vector<1x128x128xf32>
    %50 = vector.shape_cast %49 : vector<1x128x128xf32> to vector<128x128xf32>
    %cst_68 = arith.constant dense<0.000000e+00> : vector<512x128xf32>
    %51 = tpu.matmul %48, %50, %cst_68 {dimension_numbers = #tpu.dot_dimension_numbers<[1], [0], [0], [1], [0, 0, 1, 1], [], []>} : vector<512x128xf32>, vector<128x128xf32>, vector<512x128xf32> -> vector<512x128xf32>
    %52 = arith.addf %46, %51 : vector<512x128xf32>
    %c0_69 = arith.constant 0 : index
    %c2_70 = arith.constant 2 : index
    %c2_71 = arith.constant 2 : index
    %c0_72 = arith.constant 0 : index
    %53 = vector.load %arg8[%c0_69, %c2_70, %c2_71, %c0_72] : memref<2x18x18x128xf32, #tpu.memory_space<vmem>>, vector<2x16x16x128xf32>
    %54 = vector.shape_cast %53 : vector<2x16x16x128xf32> to vector<512x128xf32>
    %c8 = arith.constant 8 : index
    %c0_73 = arith.constant 0 : index
    %c0_74 = arith.constant 0 : index
    %55 = vector.load %arg1[%c8, %c0_73, %c0_74] : memref<9x128x128xf32, #tpu.memory_space<vmem>>, vector<1x128x128xf32>
    %56 = vector.shape_cast %55 : vector<1x128x128xf32> to vector<128x128xf32>
    %cst_75 = arith.constant dense<0.000000e+00> : vector<512x128xf32>
    %57 = tpu.matmul %54, %56, %cst_75 {dimension_numbers = #tpu.dot_dimension_numbers<[1], [0], [0], [1], [0, 0, 1, 1], [], []>} : vector<512x128xf32>, vector<128x128xf32>, vector<512x128xf32> -> vector<512x128xf32>
    %58 = arith.addf %52, %57 : vector<512x128xf32>
    %c0_76 = arith.constant 0 : index
    %c0_77 = arith.constant 0 : index
    %59 = vector.load %arg2[%c0_76, %c0_77] : memref<1x128xf32, #tpu.memory_space<vmem>>, vector<1x128xf32>
    %c0_78 = arith.constant 0 : index
    %c0_79 = arith.constant 0 : index
    %60 = vector.load %arg3[%c0_78, %c0_79] : memref<1x128xf32, #tpu.memory_space<vmem>>, vector<1x128xf32>
    %cst_80 = arith.constant dense<0.000000e+00> : vector<128xf32>
    %61 = vector.multi_reduction <add>, %58, %cst_80 [0] : vector<512x128xf32> to vector<128xf32>
    %62 = vector.shape_cast %61 : vector<128xf32> to vector<1x128xf32>
    %cst_81 = arith.constant 0.001953125 : f32
    %63 = vector.broadcast %cst_81 : f32 to vector<1x128xf32>
    %64 = arith.mulf %62, %63 : vector<1x128xf32>
    %65 = vector.broadcast %64 : vector<1x128xf32> to vector<512x128xf32>
    %66 = arith.subf %58, %65 : vector<512x128xf32>
    %67 = arith.mulf %66, %66 : vector<512x128xf32>
    %cst_82 = arith.constant dense<0.000000e+00> : vector<128xf32>
    %68 = vector.multi_reduction <add>, %67, %cst_82 [0] : vector<512x128xf32> to vector<128xf32>
    %69 = vector.shape_cast %68 : vector<128xf32> to vector<1x128xf32>
    %cst_83 = arith.constant 0.001953125 : f32
    %70 = vector.broadcast %cst_83 : f32 to vector<1x128xf32>
    %71 = arith.mulf %69, %70 : vector<1x128xf32>
    %cst_84 = arith.constant 9.99999974E-6 : f32
    %72 = vector.broadcast %cst_84 : f32 to vector<1x128xf32>
    %73 = arith.addf %71, %72 : vector<1x128xf32>
    %74 = math.rsqrt %73 : vector<1x128xf32>
    %75 = arith.mulf %59, %74 : vector<1x128xf32>
    %76 = vector.broadcast %75 : vector<1x128xf32> to vector<512x128xf32>
    %77 = arith.mulf %66, %76 : vector<512x128xf32>
    %78 = vector.broadcast %60 : vector<1x128xf32> to vector<512x128xf32>
    %79 = arith.addf %77, %78 : vector<512x128xf32>
    %cst_85 = arith.constant 0.000000e+00 : f32
    %80 = vector.broadcast %cst_85 : f32 to vector<512x128xf32>
    %81 = arith.maximumf %79, %80 : vector<512x128xf32>
    %cst_86 = arith.constant 0.000000e+00 : f32
    %82 = vector.broadcast %cst_86 : f32 to vector<2x18x18x128xf32>
    %c0_87 = arith.constant 0 : index
    %c0_88 = arith.constant 0 : index
    %c0_89 = arith.constant 0 : index
    %c0_90 = arith.constant 0 : index
    %83 = vector.load %arg9[%c0_87, %c0_88, %c0_89, %c0_90] : memref<2x18x18x128xf32, #tpu.memory_space<vmem>>, vector<2x18x18x128xf32>
    tpu.vector_store %arg9[%c0_87, %c0_88, %c0_89, %c0_90], %82 {strides = array<i32>} : memref<2x18x18x128xf32, #tpu.memory_space<vmem>>, vector<2x18x18x128xf32>,
    %84 = vector.shape_cast %81 : vector<512x128xf32> to vector<2x16x16x128xf32>
    %c0_91 = arith.constant 0 : index
    %c1_92 = arith.constant 1 : index
    %c1_93 = arith.constant 1 : index
    %c0_94 = arith.constant 0 : index
    %85 = vector.load %arg9[%c0_91, %c1_92, %c1_93, %c0_94] : memref<2x18x18x128xf32, #tpu.memory_space<vmem>>, vector<2x16x16x128xf32>
    tpu.vector_store %arg9[%c0_91, %c1_92, %c1_93, %c0_94], %84 {strides = array<i32>} : memref<2x18x18x128xf32, #tpu.memory_space<vmem>>, vector<2x16x16x128xf32>,
    %cst_95 = arith.constant 0.000000e+00 : f32
    %86 = vector.broadcast %cst_95 : f32 to vector<512x128xf32>
    %c0_96 = arith.constant 0 : index
    %c0_97 = arith.constant 0 : index
    %c0_98 = arith.constant 0 : index
    %c0_99 = arith.constant 0 : index
    %87 = vector.load %arg9[%c0_96, %c0_97, %c0_98, %c0_99] : memref<2x18x18x128xf32, #tpu.memory_space<vmem>>, vector<2x16x16x128xf32>
    %88 = vector.shape_cast %87 : vector<2x16x16x128xf32> to vector<512x128xf32>
    %c0_100 = arith.constant 0 : index
    %c0_101 = arith.constant 0 : index
    %c0_102 = arith.constant 0 : index
    %89 = vector.load %arg4[%c0_100, %c0_101, %c0_102] : memref<9x128x128xf32, #tpu.memory_space<vmem>>, vector<1x128x128xf32>
    %90 = vector.shape_cast %89 : vector<1x128x128xf32> to vector<128x128xf32>
    %cst_103 = arith.constant dense<0.000000e+00> : vector<512x128xf32>
    %91 = tpu.matmul %88, %90, %cst_103 {dimension_numbers = #tpu.dot_dimension_numbers<[1], [0], [0], [1], [0, 0, 1, 1], [], []>} : vector<512x128xf32>, vector<128x128xf32>, vector<512x128xf32> -> vector<512x128xf32>
    %92 = arith.addf %86, %91 : vector<512x128xf32>
    %c0_104 = arith.constant 0 : index
    %c0_105 = arith.constant 0 : index
    %c1_106 = arith.constant 1 : index
    %c0_107 = arith.constant 0 : index
    %93 = vector.load %arg9[%c0_104, %c0_105, %c1_106, %c0_107] : memref<2x18x18x128xf32, #tpu.memory_space<vmem>>, vector<2x16x16x128xf32>
    %94 = vector.shape_cast %93 : vector<2x16x16x128xf32> to vector<512x128xf32>
    %c1_108 = arith.constant 1 : index
    %c0_109 = arith.constant 0 : index
    %c0_110 = arith.constant 0 : index
    %95 = vector.load %arg4[%c1_108, %c0_109, %c0_110] : memref<9x128x128xf32, #tpu.memory_space<vmem>>, vector<1x128x128xf32>
    %96 = vector.shape_cast %95 : vector<1x128x128xf32> to vector<128x128xf32>
    %cst_111 = arith.constant dense<0.000000e+00> : vector<512x128xf32>
    %97 = tpu.matmul %94, %96, %cst_111 {dimension_numbers = #tpu.dot_dimension_numbers<[1], [0], [0], [1], [0, 0, 1, 1], [], []>} : vector<512x128xf32>, vector<128x128xf32>, vector<512x128xf32> -> vector<512x128xf32>
    %98 = arith.addf %92, %97 : vector<512x128xf32>
    %c0_112 = arith.constant 0 : index
    %c0_113 = arith.constant 0 : index
    %c2_114 = arith.constant 2 : index
    %c0_115 = arith.constant 0 : index
    %99 = vector.load %arg9[%c0_112, %c0_113, %c2_114, %c0_115] : memref<2x18x18x128xf32, #tpu.memory_space<vmem>>, vector<2x16x16x128xf32>
    %100 = vector.shape_cast %99 : vector<2x16x16x128xf32> to vector<512x128xf32>
    %c2_116 = arith.constant 2 : index
    %c0_117 = arith.constant 0 : index
    %c0_118 = arith.constant 0 : index
    %101 = vector.load %arg4[%c2_116, %c0_117, %c0_118] : memref<9x128x128xf32, #tpu.memory_space<vmem>>, vector<1x128x128xf32>
    %102 = vector.shape_cast %101 : vector<1x128x128xf32> to vector<128x128xf32>
    %cst_119 = arith.constant dense<0.000000e+00> : vector<512x128xf32>
    %103 = tpu.matmul %100, %102, %cst_119 {dimension_numbers = #tpu.dot_dimension_numbers<[1], [0], [0], [1], [0, 0, 1, 1], [], []>} : vector<512x128xf32>, vector<128x128xf32>, vector<512x128xf32> -> vector<512x128xf32>
    %104 = arith.addf %98, %103 : vector<512x128xf32>
    %c0_120 = arith.constant 0 : index
    %c1_121 = arith.constant 1 : index
    %c0_122 = arith.constant 0 : index
    %c0_123 = arith.constant 0 : index
    %105 = vector.load %arg9[%c0_120, %c1_121, %c0_122, %c0_123] : memref<2x18x18x128xf32, #tpu.memory_space<vmem>>, vector<2x16x16x128xf32>
    %106 = vector.shape_cast %105 : vector<2x16x16x128xf32> to vector<512x128xf32>
    %c3_124 = arith.constant 3 : index
    %c0_125 = arith.constant 0 : index
    %c0_126 = arith.constant 0 : index
    %107 = vector.load %arg4[%c3_124, %c0_125, %c0_126] : memref<9x128x128xf32, #tpu.memory_space<vmem>>, vector<1x128x128xf32>
    %108 = vector.shape_cast %107 : vector<1x128x128xf32> to vector<128x128xf32>
    %cst_127 = arith.constant dense<0.000000e+00> : vector<512x128xf32>
    %109 = tpu.matmul %106, %108, %cst_127 {dimension_numbers = #tpu.dot_dimension_numbers<[1], [0], [0], [1], [0, 0, 1, 1], [], []>} : vector<512x128xf32>, vector<128x128xf32>, vector<512x128xf32> -> vector<512x128xf32>
    %110 = arith.addf %104, %109 : vector<512x128xf32>
    %c0_128 = arith.constant 0 : index
    %c1_129 = arith.constant 1 : index
    %c1_130 = arith.constant 1 : index
    %c0_131 = arith.constant 0 : index
    %111 = vector.load %arg9[%c0_128, %c1_129, %c1_130, %c0_131] : memref<2x18x18x128xf32, #tpu.memory_space<vmem>>, vector<2x16x16x128xf32>
    %112 = vector.shape_cast %111 : vector<2x16x16x128xf32> to vector<512x128xf32>
    %c4_132 = arith.constant 4 : index
    %c0_133 = arith.constant 0 : index
    %c0_134 = arith.constant 0 : index
    %113 = vector.load %arg4[%c4_132, %c0_133, %c0_134] : memref<9x128x128xf32, #tpu.memory_space<vmem>>, vector<1x128x128xf32>
    %114 = vector.shape_cast %113 : vector<1x128x128xf32> to vector<128x128xf32>
    %cst_135 = arith.constant dense<0.000000e+00> : vector<512x128xf32>
    %115 = tpu.matmul %112, %114, %cst_135 {dimension_numbers = #tpu.dot_dimension_numbers<[1], [0], [0], [1], [0, 0, 1, 1], [], []>} : vector<512x128xf32>, vector<128x128xf32>, vector<512x128xf32> -> vector<512x128xf32>
    %116 = arith.addf %110, %115 : vector<512x128xf32>
    %c0_136 = arith.constant 0 : index
    %c1_137 = arith.constant 1 : index
    %c2_138 = arith.constant 2 : index
    %c0_139 = arith.constant 0 : index
    %117 = vector.load %arg9[%c0_136, %c1_137, %c2_138, %c0_139] : memref<2x18x18x128xf32, #tpu.memory_space<vmem>>, vector<2x16x16x128xf32>
    %118 = vector.shape_cast %117 : vector<2x16x16x128xf32> to vector<512x128xf32>
    %c5_140 = arith.constant 5 : index
    %c0_141 = arith.constant 0 : index
    %c0_142 = arith.constant 0 : index
    %119 = vector.load %arg4[%c5_140, %c0_141, %c0_142] : memref<9x128x128xf32, #tpu.memory_space<vmem>>, vector<1x128x128xf32>
    %120 = vector.shape_cast %119 : vector<1x128x128xf32> to vector<128x128xf32>
    %cst_143 = arith.constant dense<0.000000e+00> : vector<512x128xf32>
    %121 = tpu.matmul %118, %120, %cst_143 {dimension_numbers = #tpu.dot_dimension_numbers<[1], [0], [0], [1], [0, 0, 1, 1], [], []>} : vector<512x128xf32>, vector<128x128xf32>, vector<512x128xf32> -> vector<512x128xf32>
    %122 = arith.addf %116, %121 : vector<512x128xf32>
    %c0_144 = arith.constant 0 : index
    %c2_145 = arith.constant 2 : index
    %c0_146 = arith.constant 0 : index
    %c0_147 = arith.constant 0 : index
    %123 = vector.load %arg9[%c0_144, %c2_145, %c0_146, %c0_147] : memref<2x18x18x128xf32, #tpu.memory_space<vmem>>, vector<2x16x16x128xf32>
    %124 = vector.shape_cast %123 : vector<2x16x16x128xf32> to vector<512x128xf32>
    %c6_148 = arith.constant 6 : index
    %c0_149 = arith.constant 0 : index
    %c0_150 = arith.constant 0 : index
    %125 = vector.load %arg4[%c6_148, %c0_149, %c0_150] : memref<9x128x128xf32, #tpu.memory_space<vmem>>, vector<1x128x128xf32>
    %126 = vector.shape_cast %125 : vector<1x128x128xf32> to vector<128x128xf32>
    %cst_151 = arith.constant dense<0.000000e+00> : vector<512x128xf32>
    %127 = tpu.matmul %124, %126, %cst_151 {dimension_numbers = #tpu.dot_dimension_numbers<[1], [0], [0], [1], [0, 0, 1, 1], [], []>} : vector<512x128xf32>, vector<128x128xf32>, vector<512x128xf32> -> vector<512x128xf32>
    %128 = arith.addf %122, %127 : vector<512x128xf32>
    %c0_152 = arith.constant 0 : index
    %c2_153 = arith.constant 2 : index
    %c1_154 = arith.constant 1 : index
    %c0_155 = arith.constant 0 : index
    %129 = vector.load %arg9[%c0_152, %c2_153, %c1_154, %c0_155] : memref<2x18x18x128xf32, #tpu.memory_space<vmem>>, vector<2x16x16x128xf32>
    %130 = vector.shape_cast %129 : vector<2x16x16x128xf32> to vector<512x128xf32>
    %c7_156 = arith.constant 7 : index
    %c0_157 = arith.constant 0 : index
    %c0_158 = arith.constant 0 : index
    %131 = vector.load %arg4[%c7_156, %c0_157, %c0_158] : memref<9x128x128xf32, #tpu.memory_space<vmem>>, vector<1x128x128xf32>
    %132 = vector.shape_cast %131 : vector<1x128x128xf32> to vector<128x128xf32>
    %cst_159 = arith.constant dense<0.000000e+00> : vector<512x128xf32>
    %133 = tpu.matmul %130, %132, %cst_159 {dimension_numbers = #tpu.dot_dimension_numbers<[1], [0], [0], [1], [0, 0, 1, 1], [], []>} : vector<512x128xf32>, vector<128x128xf32>, vector<512x128xf32> -> vector<512x128xf32>
    %134 = arith.addf %128, %133 : vector<512x128xf32>
    %c0_160 = arith.constant 0 : index
    %c2_161 = arith.constant 2 : index
    %c2_162 = arith.constant 2 : index
    %c0_163 = arith.constant 0 : index
    %135 = vector.load %arg9[%c0_160, %c2_161, %c2_162, %c0_163] : memref<2x18x18x128xf32, #tpu.memory_space<vmem>>, vector<2x16x16x128xf32>
    %136 = vector.shape_cast %135 : vector<2x16x16x128xf32> to vector<512x128xf32>
    %c8_164 = arith.constant 8 : index
    %c0_165 = arith.constant 0 : index
    %c0_166 = arith.constant 0 : index
    %137 = vector.load %arg4[%c8_164, %c0_165, %c0_166] : memref<9x128x128xf32, #tpu.memory_space<vmem>>, vector<1x128x128xf32>
    %138 = vector.shape_cast %137 : vector<1x128x128xf32> to vector<128x128xf32>
    %cst_167 = arith.constant dense<0.000000e+00> : vector<512x128xf32>
    %139 = tpu.matmul %136, %138, %cst_167 {dimension_numbers = #tpu.dot_dimension_numbers<[1], [0], [0], [1], [0, 0, 1, 1], [], []>} : vector<512x128xf32>, vector<128x128xf32>, vector<512x128xf32> -> vector<512x128xf32>
    %140 = arith.addf %134, %139 : vector<512x128xf32>
    %c0_168 = arith.constant 0 : index
    %c0_169 = arith.constant 0 : index
    %141 = vector.load %arg5[%c0_168, %c0_169] : memref<1x128xf32, #tpu.memory_space<vmem>>, vector<1x128xf32>
    %c0_170 = arith.constant 0 : index
    %c0_171 = arith.constant 0 : index
    %142 = vector.load %arg6[%c0_170, %c0_171] : memref<1x128xf32, #tpu.memory_space<vmem>>, vector<1x128xf32>
    %cst_172 = arith.constant dense<0.000000e+00> : vector<128xf32>
    %143 = vector.multi_reduction <add>, %140, %cst_172 [0] : vector<512x128xf32> to vector<128xf32>
    %144 = vector.shape_cast %143 : vector<128xf32> to vector<1x128xf32>
    %cst_173 = arith.constant 0.001953125 : f32
    %145 = vector.broadcast %cst_173 : f32 to vector<1x128xf32>
    %146 = arith.mulf %144, %145 : vector<1x128xf32>
    %147 = vector.broadcast %146 : vector<1x128xf32> to vector<512x128xf32>
    %148 = arith.subf %140, %147 : vector<512x128xf32>
    %149 = arith.mulf %148, %148 : vector<512x128xf32>
    %cst_174 = arith.constant dense<0.000000e+00> : vector<128xf32>
    %150 = vector.multi_reduction <add>, %149, %cst_174 [0] : vector<512x128xf32> to vector<128xf32>
    %151 = vector.shape_cast %150 : vector<128xf32> to vector<1x128xf32>
    %cst_175 = arith.constant 0.001953125 : f32
    %152 = vector.broadcast %cst_175 : f32 to vector<1x128xf32>
    %153 = arith.mulf %151, %152 : vector<1x128xf32>
    %cst_176 = arith.constant 9.99999974E-6 : f32
    %154 = vector.broadcast %cst_176 : f32 to vector<1x128xf32>
    %155 = arith.addf %153, %154 : vector<1x128xf32>
    %156 = math.rsqrt %155 : vector<1x128xf32>
    %157 = arith.mulf %141, %156 : vector<1x128xf32>
    %158 = vector.broadcast %157 : vector<1x128xf32> to vector<512x128xf32>
    %159 = arith.mulf %148, %158 : vector<512x128xf32>
    %160 = vector.broadcast %142 : vector<1x128xf32> to vector<512x128xf32>
    %161 = arith.addf %159, %160 : vector<512x128xf32>
    %cst_177 = arith.constant 0.000000e+00 : f32
    %162 = vector.broadcast %cst_177 : f32 to vector<512x128xf32>
    %163 = arith.maximumf %161, %162 : vector<512x128xf32>
    %c0_178 = arith.constant 0 : index
    %c0_179 = arith.constant 0 : index
    %164 = vector.load %arg7[%c0_178, %c0_179] : memref<512x128xf32, #tpu.memory_space<vmem>>, vector<512x128xf32>
    tpu.vector_store %arg7[%c0_178, %c0_179], %163 {strides = array<i32>} : memref<512x128xf32, #tpu.memory_space<vmem>>, vector<512x128xf32>,
    return
  }
}

</mosaic_0001>

<llo_original>
// kernel: tpu_custom_call.1
$region0: #{tpu_custom_call.1}
  #allocation0 [shape = 'u32[]', space=smem, size = 0x4, offset = 0x4, fixed_abs, tag = 'smem constant byte address 0x4 - core index']
  #allocation1 [shape = 'u32[72,128]{1,0:T(1,128)}', space=vmem, size = 0x9000, scoped, tag = 'internal scratch']
  #allocation2 [shape = 'f32[2,18,18,128]{3,2,1,0:T(8,128)}', space=vmem, size = 0x6c000, scoped, tag = 'scratch operand']
  #allocation3 [shape = 'f32[2,18,18,128]{3,2,1,0:T(8,128)}', space=vmem, size = 0x6c000, scoped, tag = 'scratch operand']
  %s0 = inlined_call_operand.hbm [shape: f32[2,16,16,128], index: 0, kind: input, shape index: {}]
  %s1 = inlined_call_operand.hbm [shape: f32[9,128,128], index: 1, kind: input, shape index: {}]
  %s2 = inlined_call_operand.vmem [shape: f32[1,128], index: 2, kind: input, shape index: {}]
  %s3 = inlined_call_operand.vmem [shape: f32[1,128], index: 3, kind: input, shape index: {}]
  %s4 = inlined_call_operand.hbm [shape: f32[9,128,128], index: 4, kind: input, shape index: {}]
  %s5 = inlined_call_operand.vmem [shape: f32[1,128], index: 5, kind: input, shape index: {}]
  %s6 = inlined_call_operand.vmem [shape: f32[1,128], index: 6, kind: input, shape index: {}]
  %s7 = inlined_call_operand.hbm [shape: f32[512,128], index: 7, kind: output, shape index: {}]
  %s8 = sld [smem:[#allocation0]]
  $region50: #{tpu_custom_call.1} parent=0
    _
  %s10 = ssub.s32 1, %s8
  %s11 = scalar_select 0, %s10, %s8
  $region1: #{tpu_custom_call.1} parent=0
    #allocation4 [shape = 'u8[262144]{0}', space=vmem, size = 0x40000, scoped, tag = 'input window, operand 0, single buffered']
    #allocation5 [shape = 's32[1]{0}', space=sflag, size = 0x4, scoped, tag = 'scoped memory for tpu_custom_call.1']
    #allocation6 [shape = 's32[1]{0}', space=sflag, size = 0x4, scoped, tag = 'scoped memory for tpu_custom_call.1']
    #allocation7 [shape = 'u8[589824]{0}', space=vmem, size = 0x90000, scoped, tag = 'input window, operand 1, single buffered']
    #allocation8 [shape = 's32[1]{0}', space=sflag, size = 0x4, scoped, tag = 'scoped memory for tpu_custom_call.1']
    #allocation9 [shape = 'u8[589824]{0}', space=vmem, size = 0x90000, scoped, tag = 'input window, operand 4, single buffered']
    #allocation10 [shape = 'u8[262144]{0}', space=vmem, size = 0x40000, scoped, tag = 'output window, operand 0, single buffered']
    %12 = vsyncpa [#allocation5], 0
    %13 = vsyncpa [#allocation8], 0
    %14 = vsyncpa [#allocation6], 0
    // Predicated region
    $region2: #{tpu_custom_call.1} parent=1 // pred_check
      _
    $region3: #{tpu_custom_call.1} parent=1 // pred_check_branch
      %16 = sbr.rel (0) target = $region5
    $region4: #{tpu_custom_call.1} parent=1 // pred_region
      %18 = vsyncadd [#allocation5], 0
      %s19 = sshll.u32 %s0, 4
      %s20 = int_to_ptr.hbm [resolvable:$true] %s19
      %s21 = sshll.u32 [#allocation4], 4
      %s22 = int_to_ptr.vmem [resolvable:$true] %s21
      %27 = dma.hbm_to_vmem [thread:$0]  %s20, 8192, %s22, [#allocation5], 128, 128, 8
    $region5: #{tpu_custom_call.1} parent=1 // pred_fallthru
      _
    // Predicated region
    $region6: #{tpu_custom_call.1} parent=1 // pred_check
      _
    $region7: #{tpu_custom_call.1} parent=1 // pred_check_branch
      %29 = sbr.rel (0) target = $region9
    $region8: #{tpu_custom_call.1} parent=1 // pred_region
      %31 = vsyncadd [#allocation8], 0
      %s32 = sshll.u32 %s1, 4
      %s33 = int_to_ptr.hbm [resolvable:$true] %s32
      %s34 = sshll.u32 [#allocation7], 4
      %s35 = int_to_ptr.vmem [resolvable:$true] %s34
      %40 = dma.hbm_to_vmem [thread:$0]  %s33, 18432, %s35, [#allocation8], 128, 128, 8
    $region9: #{tpu_custom_call.1} parent=1 // pred_fallthru
      _
    // Predicated region
    $region10: #{tpu_custom_call.1} parent=1 // pred_check
      _
    $region11: #{tpu_custom_call.1} parent=1 // pred_check_branch
      %42 = sbr.rel (0) target = $region13
    $region12: #{tpu_custom_call.1} parent=1 // pred_region
      _
    $region13: #{tpu_custom_call.1} parent=1 // pred_fallthru
      _
    // Predicated region
    $region14: #{tpu_custom_call.1} parent=1 // pred_check
      _
    $region15: #{tpu_custom_call.1} parent=1 // pred_check_branch
      %44 = sbr.rel (0) target = $region17
    $region16: #{tpu_custom_call.1} parent=1 // pred_region
      _
    $region17: #{tpu_custom_call.1} parent=1 // pred_fallthru
      _
    // Predicated region
    $region18: #{tpu_custom_call.1} parent=1 // pred_check
      _
    $region19: #{tpu_custom_call.1} parent=1 // pred_check_branch
      %46 = sbr.rel (0) target = $region21
    $region20: #{tpu_custom_call.1} parent=1 // pred_region
      %48 = vsyncadd [#allocation8], 0
      %s49 = sshll.u32 %s4, 4
      %s50 = int_to_ptr.hbm [resolvable:$true] %s49
      %s51 = sshll.u32 [#allocation9], 4
      %s52 = int_to_ptr.vmem [resolvable:$true] %s51
      %57 = dma.hbm_to_vmem [thread:$0]  %s50, 18432, %s52, [#allocation8], 128, 128, 8
    $region21: #{tpu_custom_call.1} parent=1 // pred_fallthru
      _
    // Predicated region
    $region22: #{tpu_custom_call.1} parent=1 // pred_check
      _
    $region23: #{tpu_custom_call.1} parent=1 // pred_check_branch
      %59 = sbr.rel (0) target = $region25
    $region24: #{tpu_custom_call.1} parent=1 // pred_region
      _
    $region25: #{tpu_custom_call.1} parent=1 // pred_fallthru
      _
    // Predicated region
    $region26: #{tpu_custom_call.1} parent=1 // pred_check
      _
    $region27: #{tpu_custom_call.1} parent=1 // pred_check_branch
      %61 = sbr.rel (0) target = $region29
    $region28: #{tpu_custom_call.1} parent=1 // pred_region
      _
    $region29: #{tpu_custom_call.1} parent=1 // pred_fallthru
      _
    // Predicated region
    $region30: #{tpu_custom_call.1} parent=1 // pred_check
      _
    $region31: #{tpu_custom_call.1} parent=1 // pred_check_branch
      %63 = sbr.rel (0) target = $region33
    $region32: #{tpu_custom_call.1} parent=1 // pred_region
      %65 = dma.done [#allocation5], 8192
    $region33: #{tpu_custom_call.1} parent=1 // pred_fallthru
      _
    // Predicated region
    $region34: #{tpu_custom_call.1} parent=1 // pred_check
      _
    $region35: #{tpu_custom_call.1} parent=1 // pred_check_branch
      %67 = sbr.rel (0) target = $region37
    $region36: #{tpu_custom_call.1} parent=1 // pred_region
      %69 = dma.done [#allocation8], 18432
    $region37: #{tpu_custom_call.1} parent=1 // pred_fallthru
      _
    // Predicated region
    $region38: #{tpu_custom_call.1} parent=1 // pred_check
      _
    $region39: #{tpu_custom_call.1} parent=1 // pred_check_branch
      %71 = sbr.rel (0) target = $region41
    $region40: #{tpu_custom_call.1} parent=1 // pred_region
      %73 = dma.done [#allocation8], 18432
    $region41: #{tpu_custom_call.1} parent=1 // pred_fallthru
      _
    %74 = vst [vmem:[#allocation2] sm:$0xff] 0.0
    %75 = vst [vmem:[#allocation2 + $0x8] sm:$0xff] 0.0
    %76 = vst [vmem:[#allocation2 + $0x10] sm:$0x3] 0.0
    %77 = vst [vmem:[#allocation2 + $0x18] sm:$0xff] 0.0
    %78 = vst [vmem:[#allocation2 + $0x20] sm:$0xff] 0.0
    %79 = vst [vmem:[#allocation2 + $0x28] sm:$0x3] 0.0
    %80 = vst [vmem:[#allocation2 + $0x30] sm:$0xff] 0.0
    %81 = vst [vmem:[#allocation2 + $0x38] sm:$0xff] 0.0
    %82 = vst [vmem:[#allocation2 + $0x40] sm:$0x3] 0.0
    %83 = vst [vmem:[#allocation2 + $0x48] sm:$0xff] 0.0
    %84 = vst [vmem:[#allocation2 + $0x50] sm:$0xff] 0.0
    %85 = vst [vmem:[#allocation2 + $0x58] sm:$0x3] 0.0
    %86 = vst [vmem:[#allocation2 + $0x60] sm:$0xff] 0.0
    %87 = vst [vmem:[#allocation2 + $0x68] sm:$0xff] 0.0
    %88 = vst [vmem:[#allocation2 + $0x70] sm:$0x3] 0.0
    %89 = vst [vmem:[#allocation2 + $0x78] sm:$0xff] 0.0
    %90 = vst [vmem:[#allocation2 + $0x80] sm:$0xff] 0.0
    %91 = vst [vmem:[#allocation2 + $0x88] sm:$0x3] 0.0
    %92 = vst [vmem:[#allocation2 + $0x90] sm:$0xff] 0.0
    %93 = vst [vmem:[#allocation2 + $0x98] sm:$0xff] 0.0
    %94 = vst [vmem:[#allocation2 + $0xa0] sm:$0x3] 0.0
    %95 = vst [vmem:[#allocation2 + $0xa8] sm:$0xff] 0.0
    %96 = vst [vmem:[#allocation2 + $0xb0] sm:$0xff] 0.0
    %97 = vst [vmem:[#allocation2 + $0xb8] sm:$0x3] 0.0
    %98 = vst [vmem:[#allocation2 + $0xc0] sm:$0xff] 0.0
    %99 = vst [vmem:[#allocation2 + $0xc8] sm:$0xff] 0.0
    %100 = vst [vmem:[#allocation2 + $0xd0] sm:$0x3] 0.0
    %101 = vst [vmem:[#allocation2 + $0xd8] sm:$0xff] 0.0
    %102 = vst [vmem:[#allocation2 + $0xe0] sm:$0xff] 0.0
    %103 = vst [vmem:[#allocation2 + $0xe8] sm:$0x3] 0.0
    %104 = vst [vmem:[#allocation2 + $0xf0] sm:$0xff] 0.0
    %105 = vst [vmem:[#allocation2 + $0xf8] sm:$0xff] 0.0
    %106 = vst [vmem:[#allocation2 + $0x100] sm:$0x3] 0.0
    %107 = vst [vmem:[#allocation2 + $0x108] sm:$0xff] 0.0
    %108 = vst [vmem:[#allocation2 + $0x110] sm:$0xff] 0.0
    %109 = vst [vmem:[#allocation2 + $0x118] sm:$0x3] 0.0
    %110 = vst [vmem:[#allocation2 + $0x120] sm:$0xff] 0.0
    %111 = vst [vmem:[#allocation2 + $0x128] sm:$0xff] 0.0
    %112 = vst [vmem:[#allocation2 + $0x130] sm:$0x3] 0.0
    %113 = vst [vmem:[#allocation2 + $0x138] sm:$0xff] 0.0
    %114 = vst [vmem:[#allocation2 + $0x140] sm:$0xff] 0.0
    %115 = vst [vmem:[#allocation2 + $0x148] sm:$0x3] 0.0
    %116 = vst [vmem:[#allocation2 + $0x150] sm:$0xff] 0.0
    %117 = vst [vmem:[#allocation2 + $0x158] sm:$0xff] 0.0
    %118 = vst [vmem:[#allocation2 + $0x160] sm:$0x3] 0.0
    %119 = vst [vmem:[#allocation2 + $0x168] sm:$0xff] 0.0
    %120 = vst [vmem:[#allocation2 + $0x170] sm:$0xff] 0.0
    %121 = vst [vmem:[#allocation2 + $0x178] sm:$0x3] 0.0
    %122 = vst [vmem:[#allocation2 + $0x180] sm:$0xff] 0.0
    %123 = vst [vmem:[#allocation2 + $0x188] sm:$0xff] 0.0
    %124 = vst [vmem:[#allocation2 + $0x190] sm:$0x3] 0.0
    %125 = vst [vmem:[#allocation2 + $0x198] sm:$0xff] 0.0
    %126 = vst [vmem:[#allocation2 + $0x1a0] sm:$0xff] 0.0
    %127 = vst [vmem:[#allocation2 + $0x1a8] sm:$0x3] 0.0
    %128 = vst [vmem:[#allocation2 + $0x1b0] sm:$0xff] 0.0
    %129 = vst [vmem:[#allocation2 + $0x1b8] sm:$0xff] 0.0
    %130 = vst [vmem:[#allocation2 + $0x1c0] sm:$0x3] 0.0
    %131 = vst [vmem:[#allocation2 + $0x1c8] sm:$0xff] 0.0
    %132 = vst [vmem:[#allocation2 + $0x1d0] sm:$0xff] 0.0
    %133 = vst [vmem:[#allocation2 + $0x1d8] sm:$0x3] 0.0
    %134 = vst [vmem:[#allocation2 + $0x1e0] sm:$0xff] 0.0
    %135 = vst [vmem:[#allocation2 + $0x1e8] sm:$0xff] 0.0
    %136 = vst [vmem:[#allocation2 + $0x1f0] sm:$0x3] 0.0
    %137 = vst [vmem:[#allocation2 + $0x1f8] sm:$0xff] 0.0
    %138 = vst [vmem:[#allocation2 + $0x200] sm:$0xff] 0.0
    %139 = vst [vmem:[#allocation2 + $0x208] sm:$0x3] 0.0
    %140 = vst [vmem:[#allocation2 + $0x210] sm:$0xff] 0.0
    %141 = vst [vmem:[#allocation2 + $0x218] sm:$0xff] 0.0
    %142 = vst [vmem:[#allocation2 + $0x220] sm:$0x3] 0.0
    %143 = vst [vmem:[#allocation2 + $0x228] sm:$0xff] 0.0
    %144 = vst [vmem:[#allocation2 + $0x230] sm:$0xff] 0.0
    %145 = vst [vmem:[#allocation2 + $0x238] sm:$0x3] 0.0
    %146 = vst [vmem:[#allocation2 + $0x240] sm:$0xff] 0.0
    %147 = vst [vmem:[#allocation2 + $0x248] sm:$0xff] 0.0
    %148 = vst [vmem:[#allocation2 + $0x250] sm:$0x3] 0.0
    %149 = vst [vmem:[#allocation2 + $0x258] sm:$0xff] 0.0
    %150 = vst [vmem:[#allocation2 + $0x260] sm:$0xff] 0.0
    %151 = vst [vmem:[#allocation2 + $0x268] sm:$0x3] 0.0
    %152 = vst [vmem:[#allocation2 + $0x270] sm:$0xff] 0.0
    %153 = vst [vmem:[#allocation2 + $0x278] sm:$0xff] 0.0
    %154 = vst [vmem:[#allocation2 + $0x280] sm:$0x3] 0.0
    %155 = vst [vmem:[#allocation2 + $0x288] sm:$0xff] 0.0
    %156 = vst [vmem:[#allocation2 + $0x290] sm:$0xff] 0.0
    %157 = vst [vmem:[#allocation2 + $0x298] sm:$0x3] 0.0
    %158 = vst [vmem:[#allocation2 + $0x2a0] sm:$0xff] 0.0
    %159 = vst [vmem:[#allocation2 + $0x2a8] sm:$0xff] 0.0
    %160 = vst [vmem:[#allocation2 + $0x2b0] sm:$0x3] 0.0
    %161 = vst [vmem:[#allocation2 + $0x2b8] sm:$0xff] 0.0
    %162 = vst [vmem:[#allocation2 + $0x2c0] sm:$0xff] 0.0
    %163 = vst [vmem:[#allocation2 + $0x2c8] sm:$0x3] 0.0
    %164 = vst [vmem:[#allocation2 + $0x2d0] sm:$0xff] 0.0
    %165 = vst [vmem:[#allocation2 + $0x2d8] sm:$0xff] 0.0
    %166 = vst [vmem:[#allocation2 + $0x2e0] sm:$0x3] 0.0
    %167 = vst [vmem:[#allocation2 + $0x2e8] sm:$0xff] 0.0
    %168 = vst [vmem:[#allocation2 + $0x2f0] sm:$0xff] 0.0
    %169 = vst [vmem:[#allocation2 + $0x2f8] sm:$0x3] 0.0
    %170 = vst [vmem:[#allocation2 + $0x300] sm:$0xff] 0.0
    %171 = vst [vmem:[#allocation2 + $0x308] sm:$0xff] 0.0
    %172 = vst [vmem:[#allocation2 + $0x310] sm:$0x3] 0.0
    %173 = vst [vmem:[#allocation2 + $0x318] sm:$0xff] 0.0
    %174 = vst [vmem:[#allocation2 + $0x320] sm:$0xff] 0.0
    %175 = vst [vmem:[#allocation2 + $0x328] sm:$0x3] 0.0
    %176 = vst [vmem:[#allocation2 + $0x330] sm:$0xff] 0.0
    %177 = vst [vmem:[#allocation2 + $0x338] sm:$0xff] 0.0
    %178 = vst [vmem:[#allocation2 + $0x340] sm:$0x3] 0.0
    %179 = vst [vmem:[#allocation2 + $0x348] sm:$0xff] 0.0
    %180 = vst [vmem:[#allocation2 + $0x350] sm:$0xff] 0.0
    %181 = vst [vmem:[#allocation2 + $0x358] sm:$0x3] 0.0
    %v182 = vld [vmem:[#allocation4] sm:$0xff]
    %v183 = vld [vmem:[#allocation4 + $0x8] sm:$0xff]
    %v184 = vld [vmem:[#allocation4 + $0x10] sm:$0xff]
    %v185 = vld [vmem:[#allocation4 + $0x18] sm:$0xff]
    %v186 = vld [vmem:[#allocation4 + $0x20] sm:$0xff]
    %v187 = vld [vmem:[#allocation4 + $0x28] sm:$0xff]
    %v188 = vld [vmem:[#allocation4 + $0x30] sm:$0xff]
    %v189 = vld [vmem:[#allocation4 + $0x38] sm:$0xff]
    %v190 = vld [vmem:[#allocation4 + $0x40] sm:$0xff]
    %v191 = vld [vmem:[#allocation4 + $0x48] sm:$0xff]
    %v192 = vld [vmem:[#allocation4 + $0x50] sm:$0xff]
    %v193 = vld [vmem:[#allocation4 + $0x58] sm:$0xff]
    %v194 = vld [vmem:[#allocation4 + $0x60] sm:$0xff]
    %v195 = vld [vmem:[#allocation4 + $0x68] sm:$0xff]
    %v196 = vld [vmem:[#allocation4 + $0x70] sm:$0xff]
    %v197 = vld [vmem:[#allocation4 + $0x78] sm:$0xff]
    %v198 = vld [vmem:[#allocation4 + $0x80] sm:$0xff]
    %v199 = vld [vmem:[#allocation4 + $0x88] sm:$0xff]
    %v200 = vld [vmem:[#allocation4 + $0x90] sm:$0xff]
    %v201 = vld [vmem:[#allocation4 + $0x98] sm:$0xff]
    %v202 = vld [vmem:[#allocation4 + $0xa0] sm:$0xff]
    %v203 = vld [vmem:[#allocation4 + $0xa8] sm:$0xff]
    %v204 = vld [vmem:[#allocation4 + $0xb0] sm:$0xff]
    %v205 = vld [vmem:[#allocation4 + $0xb8] sm:$0xff]
    %v206 = vld [vmem:[#allocation4 + $0xc0] sm:$0xff]
    %v207 = vld [vmem:[#allocation4 + $0xc8] sm:$0xff]
    %v208 = vld [vmem:[#allocation4 + $0xd0] sm:$0xff]
    %v209 = vld [vmem:[#allocation4 + $0xd8] sm:$0xff]
    %v210 = vld [vmem:[#allocation4 + $0xe0] sm:$0xff]
    %v211 = vld [vmem:[#allocation4 + $0xe8] sm:$0xff]
    %v212 = vld [vmem:[#allocation4 + $0xf0] sm:$0xff]
    %v213 = vld [vmem:[#allocation4 + $0xf8] sm:$0xff]
    %v214 = vld [vmem:[#allocation4 + $0x100] sm:$0xff]
    %v215 = vld [vmem:[#allocation4 + $0x108] sm:$0xff]
    %v216 = vld [vmem:[#allocation4 + $0x110] sm:$0xff]
    %v217 = vld [vmem:[#allocation4 + $0x118] sm:$0xff]
    %v218 = vld [vmem:[#allocation4 + $0x120] sm:$0xff]
    %v219 = vld [vmem:[#allocation4 + $0x128] sm:$0xff]
    %v220 = vld [vmem:[#allocation4 + $0x130] sm:$0xff]
    %v221 = vld [vmem:[#allocation4 + $0x138] sm:$0xff]
    %v222 = vld [vmem:[#allocation4 + $0x140] sm:$0xff]
    %v223 = vld [vmem:[#allocation4 + $0x148] sm:$0xff]
    %v224 = vld [vmem:[#allocation4 + $0x150] sm:$0xff]
    %v225 = vld [vmem:[#allocation4 + $0x158] sm:$0xff]
    %v226 = vld [vmem:[#allocation4 + $0x160] sm:$0xff]
    %v227 = vld [vmem:[#allocation4 + $0x168] sm:$0xff]
    %v228 = vld [vmem:[#allocation4 + $0x170] sm:$0xff]
    %v229 = vld [vmem:[#allocation4 + $0x178] sm:$0xff]
    %v230 = vld [vmem:[#allocation4 + $0x180] sm:$0xff]
    %v231 = vld [vmem:[#allocation4 + $0x188] sm:$0xff]
    %v232 = vld [vmem:[#allocation4 + $0x190] sm:$0xff]
    %v233 = vld [vmem:[#allocation4 + $0x198] sm:$0xff]
    %v234 = vld [vmem:[#allocation4 + $0x1a0] sm:$0xff]
    %v235 = vld [vmem:[#allocation4 + $0x1a8] sm:$0xff]
    %v236 = vld [vmem:[#allocation4 + $0x1b0] sm:$0xff]
    %v237 = vld [vmem:[#allocation4 + $0x1b8] sm:$0xff]
    %v238 = vld [vmem:[#allocation4 + $0x1c0] sm:$0xff]
    %v239 = vld [vmem:[#allocation4 + $0x1c8] sm:$0xff]
    %v240 = vld [vmem:[#allocation4 + $0x1d0] sm:$0xff]
    %v241 = vld [vmem:[#allocation4 + $0x1d8] sm:$0xff]
    %v242 = vld [vmem:[#allocation4 + $0x1e0] sm:$0xff]
    %v243 = vld [vmem:[#allocation4 + $0x1e8] sm:$0xff]
    %v244 = vld [vmem:[#allocation4 + $0x1f0] sm:$0xff]
    %v245 = vld [vmem:[#allocation4 + $0x1f8] sm:$0xff]
    %s246 = scalar_lea.vmem [#allocation2], 24
    %247 = vst [vmem:[%s246 + $0x1] sm:$0xff] %v182
    %248 = vst [vmem:[%s246 + $0x9] sm:$0xff] %v183
    %249 = vst [vmem:[%s246 + $0x19] sm:$0xff] %v184
    %250 = vst [vmem:[%s246 + $0x21] sm:$0xff] %v185
    %251 = vst [vmem:[%s246 + $0x31] sm:$0xff] %v186
    %252 = vst [vmem:[%s246 + $0x39] sm:$0xff] %v187
    %253 = vst [vmem:[%s246 + $0x49] sm:$0xff] %v188
    %254 = vst [vmem:[%s246 + $0x51] sm:$0xff] %v189
    %255 = vst [vmem:[%s246 + $0x61] sm:$0xff] %v190
    %256 = vst [vmem:[%s246 + $0x69] sm:$0xff] %v191
    %257 = vst [vmem:[%s246 + $0x79] sm:$0xff] %v192
    %258 = vst [vmem:[%s246 + $0x81] sm:$0xff] %v193
    %259 = vst [vmem:[%s246 + $0x91] sm:$0xff] %v194
    %260 = vst [vmem:[%s246 + $0x99] sm:$0xff] %v195
    %261 = vst [vmem:[%s246 + $0xa9] sm:$0xff] %v196
    %262 = vst [vmem:[%s246 + $0xb1] sm:$0xff] %v197
    %263 = vst [vmem:[%s246 + $0xc1] sm:$0xff] %v198
    %264 = vst [vmem:[%s246 + $0xc9] sm:$0xff] %v199
    %265 = vst [vmem:[%s246 + $0xd9] sm:$0xff] %v200
    %266 = vst [vmem:[%s246 + $0xe1] sm:$0xff] %v201
    %267 = vst [vmem:[%s246 + $0xf1] sm:$0xff] %v202
    %268 = vst [vmem:[%s246 + $0xf9] sm:$0xff] %v203
    %269 = vst [vmem:[%s246 + $0x109] sm:$0xff] %v204
    %270 = vst [vmem:[%s246 + $0x111] sm:$0xff] %v205
    %271 = vst [vmem:[%s246 + $0x121] sm:$0xff] %v206
    %272 = vst [vmem:[%s246 + $0x129] sm:$0xff] %v207
    %273 = vst [vmem:[%s246 + $0x139] sm:$0xff] %v208
    %274 = vst [vmem:[%s246 + $0x141] sm:$0xff] %v209
    %275 = vst [vmem:[%s246 + $0x151] sm:$0xff] %v210
    %276 = vst [vmem:[%s246 + $0x159] sm:$0xff] %v211
    %277 = vst [vmem:[%s246 + $0x169] sm:$0xff] %v212
    %278 = vst [vmem:[%s246 + $0x171] sm:$0xff] %v213
    %279 = vst [vmem:[%s246 + $0x1b1] sm:$0xff] %v214
    %280 = vst [vmem:[%s246 + $0x1b9] sm:$0xff] %v215
    %281 = vst [vmem:[%s246 + $0x1c9] sm:$0xff] %v216
    %282 = vst [vmem:[%s246 + $0x1d1] sm:$0xff] %v217
    %283 = vst [vmem:[%s246 + $0x1e1] sm:$0xff] %v218
    %284 = vst [vmem:[%s246 + $0x1e9] sm:$0xff] %v219
    %285 = vst [vmem:[%s246 + $0x1f9] sm:$0xff] %v220
    %286 = vst [vmem:[%s246 + $0x201] sm:$0xff] %v221
    %287 = vst [vmem:[%s246 + $0x211] sm:$0xff] %v222
    %288 = vst [vmem:[%s246 + $0x219] sm:$0xff] %v223
    %289 = vst [vmem:[%s246 + $0x229] sm:$0xff] %v224
    %290 = vst [vmem:[%s246 + $0x231] sm:$0xff] %v225
    %291 = vst [vmem:[%s246 + $0x241] sm:$0xff] %v226
    %292 = vst [vmem:[%s246 + $0x249] sm:$0xff] %v227
    %293 = vst [vmem:[%s246 + $0x259] sm:$0xff] %v228
    %294 = vst [vmem:[%s246 + $0x261] sm:$0xff] %v229
    %295 = vst [vmem:[%s246 + $0x271] sm:$0xff] %v230
    %296 = vst [vmem:[%s246 + $0x279] sm:$0xff] %v231
    %297 = vst [vmem:[%s246 + $0x289] sm:$0xff] %v232
    %298 = vst [vmem:[%s246 + $0x291] sm:$0xff] %v233
    %299 = vst [vmem:[%s246 + $0x2a1] sm:$0xff] %v234
    %300 = vst [vmem:[%s246 + $0x2a9] sm:$0xff] %v235
    %301 = vst [vmem:[%s246 + $0x2b9] sm:$0xff] %v236
    %302 = vst [vmem:[%s246 + $0x2c1] sm:$0xff] %v237
    %303 = vst [vmem:[%s246 + $0x2d1] sm:$0xff] %v238
    %304 = vst [vmem:[%s246 + $0x2d9] sm:$0xff] %v239
    %305 = vst [vmem:[%s246 + $0x2e9] sm:$0xff] %v240
    %306 = vst [vmem:[%s246 + $0x2f1] sm:$0xff] %v241
    %307 = vst [vmem:[%s246 + $0x301] sm:$0xff] %v242
    %308 = vst [vmem:[%s246 + $0x309] sm:$0xff] %v243
    %309 = vst [vmem:[%s246 + $0x319] sm:$0xff] %v244
    %310 = vst [vmem:[%s246 + $0x321] sm:$0xff] %v245
    %v311 = vld [vmem:[#allocation2] sm:$0xff]
    %v312 = vld [vmem:[#allocation2 + $0x8] sm:$0xff]
    %v313 = vld [vmem:[#allocation2 + $0x18] sm:$0xff]
    %v314 = vld [vmem:[#allocation2 + $0x20] sm:$0xff]
    %v315 = vld [vmem:[#allocation2 + $0x30] sm:$0xff]
    %v316 = vld [vmem:[#allocation2 + $0x38] sm:$0xff]
    %v317 = vld [vmem:[#allocation2 + $0x48] sm:$0xff]
    %v318 = vld [vmem:[#allocation2 + $0x50] sm:$0xff]
    %v319 = vld [vmem:[#allocation2 + $0x60] sm:$0xff]
    %v320 = vld [vmem:[#allocation2 + $0x68] sm:$0xff]
    %v321 = vld [vmem:[#allocation2 + $0x78] sm:$0xff]
    %v322 = vld [vmem:[#allocation2 + $0x80] sm:$0xff]
    %v323 = vld [vmem:[#allocation2 + $0x90] sm:$0xff]
    %v324 = vld [vmem:[#allocation2 + $0x98] sm:$0xff]
    %v325 = vld [vmem:[#allocation2 + $0xa8] sm:$0xff]
    %v326 = vld [vmem:[#allocation2 + $0xb0] sm:$0xff]
    %v327 = vld [vmem:[#allocation2 + $0xc0] sm:$0xff]
    %v328 = vld [vmem:[#allocation2 + $0xc8] sm:$0xff]
    %v329 = vld [vmem:[#allocation2 + $0xd8] sm:$0xff]
    %v330 = vld [vmem:[#allocation2 + $0xe0] sm:$0xff]
    %v331 = vld [vmem:[#allocation2 + $0xf0] sm:$0xff]
    %v332 = vld [vmem:[#allocation2 + $0xf8] sm:$0xff]
    %v333 = vld [vmem:[#allocation2 + $0x108] sm:$0xff]
    %v334 = vld [vmem:[#allocation2 + $0x110] sm:$0xff]
    %v335 = vld [vmem:[#allocation2 + $0x120] sm:$0xff]
    %v336 = vld [vmem:[#allocation2 + $0x128] sm:$0xff]
    %v337 = vld [vmem:[#allocation2 + $0x138] sm:$0xff]
    %v338 = vld [vmem:[#allocation2 + $0x140] sm:$0xff]
    %v339 = vld [vmem:[#allocation2 + $0x150] sm:$0xff]
    %v340 = vld [vmem:[#allocation2 + $0x158] sm:$0xff]
    %v341 = vld [vmem:[#allocation2 + $0x168] sm:$0xff]
    %v342 = vld [vmem:[#allocation2 + $0x170] sm:$0xff]
    %v343 = vld [vmem:[#allocation2 + $0x1b0] sm:$0xff]
    %v344 = vld [vmem:[#allocation2 + $0x1b8] sm:$0xff]
    %v345 = vld [vmem:[#allocation2 + $0x1c8] sm:$0xff]
    %v346 = vld [vmem:[#allocation2 + $0x1d0] sm:$0xff]
    %v347 = vld [vmem:[#allocation2 + $0x1e0] sm:$0xff]
    %v348 = vld [vmem:[#allocation2 + $0x1e8] sm:$0xff]
    %v349 = vld [vmem:[#allocation2 + $0x1f8] sm:$0xff]
    %v350 = vld [vmem:[#allocation2 + $0x200] sm:$0xff]
    %v351 = vld [vmem:[#allocation2 + $0x210] sm:$0xff]
    %v352 = vld [vmem:[#allocation2 + $0x218] sm:$0xff]
    %v353 = vld [vmem:[#allocation2 + $0x228] sm:$0xff]
    %v354 = vld [vmem:[#allocation2 + $0x230] sm:$0xff]
    %v355 = vld [vmem:[#allocation2 + $0x240] sm:$0xff]
    %v356 = vld [vmem:[#allocation2 + $0x248] sm:$0xff]
    %v357 = vld [vmem:[#allocation2 + $0x258] sm:$0xff]
    %v358 = vld [vmem:[#allocation2 + $0x260] sm:$0xff]
    %v359 = vld [vmem:[#allocation2 + $0x270] sm:$0xff]
    %v360 = vld [vmem:[#allocation2 + $0x278] sm:$0xff]
    %v361 = vld [vmem:[#allocation2 + $0x288] sm:$0xff]
    %v362 = vld [vmem:[#allocation2 + $0x290] sm:$0xff]
    %v363 = vld [vmem:[#allocation2 + $0x2a0] sm:$0xff]
    %v364 = vld [vmem:[#allocation2 + $0x2a8] sm:$0xff]
    %v365 = vld [vmem:[#allocation2 + $0x2b8] sm:$0xff]
    %v366 = vld [vmem:[#allocation2 + $0x2c0] sm:$0xff]
    %v367 = vld [vmem:[#allocation2 + $0x2d0] sm:$0xff]
    %v368 = vld [vmem:[#allocation2 + $0x2d8] sm:$0xff]
    %v369 = vld [vmem:[#allocation2 + $0x2e8] sm:$0xff]
    %v370 = vld [vmem:[#allocation2 + $0x2f0] sm:$0xff]
    %v371 = vld [vmem:[#allocation2 + $0x300] sm:$0xff]
    %v372 = vld [vmem:[#allocation2 + $0x308] sm:$0xff]
    %v373 = vld [vmem:[#allocation2 + $0x318] sm:$0xff]
    %v374 = vld [vmem:[#allocation2 + $0x320] sm:$0xff]
    %v375 = vld [vmem:[#allocation7] sm:$0xff]
    %v376 = vld [vmem:[#allocation7 + $0x8] sm:$0xff]
    %v377 = vld [vmem:[#allocation7 + $0x10] sm:$0xff]
    %v378 = vld [vmem:[#allocation7 + $0x18] sm:$0xff]
    %v379 = vld [vmem:[#allocation7 + $0x20] sm:$0xff]
    %v380 = vld [vmem:[#allocation7 + $0x28] sm:$0xff]
    %v381 = vld [vmem:[#allocation7 + $0x30] sm:$0xff]
    %v382 = vld [vmem:[#allocation7 + $0x38] sm:$0xff]
    %v383 = vld [vmem:[#allocation7 + $0x40] sm:$0xff]
    %v384 = vld [vmem:[#allocation7 + $0x48] sm:$0xff]
    %v385 = vld [vmem:[#allocation7 + $0x50] sm:$0xff]
    %v386 = vld [vmem:[#allocation7 + $0x58] sm:$0xff]
    %v387 = vld [vmem:[#allocation7 + $0x60] sm:$0xff]
    %v388 = vld [vmem:[#allocation7 + $0x68] sm:$0xff]
    %v389 = vld [vmem:[#allocation7 + $0x70] sm:$0xff]
    %v390 = vld [vmem:[#allocation7 + $0x78] sm:$0xff]
    %v391 = vld [vmem:[#allocation2 + $0x1] sm:$0xff]
    %v392 = vld [vmem:[#allocation2 + $0x9] sm:$0xff]
    %v393 = vld [vmem:[#allocation2 + $0x19] sm:$0xff]
    %v394 = vld [vmem:[#allocation2 + $0x21] sm:$0xff]
    %v395 = vld [vmem:[#allocation2 + $0x31] sm:$0xff]
    %v396 = vld [vmem:[#allocation2 + $0x39] sm:$0xff]
    %v397 = vld [vmem:[#allocation2 + $0x49] sm:$0xff]
    %v398 = vld [vmem:[#allocation2 + $0x51] sm:$0xff]
    %v399 = vld [vmem:[#allocation2 + $0x61] sm:$0xff]
    %v400 = vld [vmem:[#allocation2 + $0x69] sm:$0xff]
    %v401 = vld [vmem:[#allocation2 + $0x79] sm:$0xff]
    %v402 = vld [vmem:[#allocation2 + $0x81] sm:$0xff]
    %v403 = vld [vmem:[#allocation2 + $0x91] sm:$0xff]
    %v404 = vld [vmem:[#allocation2 + $0x99] sm:$0xff]
    %v405 = vld [vmem:[#allocation2 + $0xa9] sm:$0xff]
    %v406 = vld [vmem:[#allocation2 + $0xb1] sm:$0xff]
    %v407 = vld [vmem:[#allocation2 + $0xc1] sm:$0xff]
    %v408 = vld [vmem:[#allocation2 + $0xc9] sm:$0xff]
    %v409 = vld [vmem:[#allocation2 + $0xd9] sm:$0xff]
    %v410 = vld [vmem:[#allocation2 + $0xe1] sm:$0xff]
    %v411 = vld [vmem:[#allocation2 + $0xf1] sm:$0xff]
    %v412 = vld [vmem:[#allocation2 + $0xf9] sm:$0xff]
    %v413 = vld [vmem:[#allocation2 + $0x109] sm:$0xff]
    %v414 = vld [vmem:[#allocation2 + $0x111] sm:$0xff]
    %v415 = vld [vmem:[#allocation2 + $0x121] sm:$0xff]
    %v416 = vld [vmem:[#allocation2 + $0x129] sm:$0xff]
    %v417 = vld [vmem:[#allocation2 + $0x139] sm:$0xff]
    %v418 = vld [vmem:[#allocation2 + $0x141] sm:$0xff]
    %v419 = vld [vmem:[#allocation2 + $0x151] sm:$0xff]
    %v420 = vld [vmem:[#allocation2 + $0x159] sm:$0xff]
    %v421 = vld [vmem:[#allocation2 + $0x169] sm:$0xff]
    %v422 = vld [vmem:[#allocation2 + $0x171] sm:$0xff]
    %v423 = vld [vmem:[#allocation2 + $0x1b1] sm:$0xff]
    %v424 = vld [vmem:[#allocation2 + $0x1b9] sm:$0xff]
    %v425 = vld [vmem:[#allocation2 + $0x1c9] sm:$0xff]
    %v426 = vld [vmem:[#allocation2 + $0x1d1] sm:$0xff]
    %v427 = vld [vmem:[#allocation2 + $0x1e1] sm:$0xff]
    %v428 = vld [vmem:[#allocation2 + $0x1e9] sm:$0xff]
    %v429 = vld [vmem:[#allocation2 + $0x1f9] sm:$0xff]
    %v430 = vld [vmem:[#allocation2 + $0x201] sm:$0xff]
    %v431 = vld [vmem:[#allocation2 + $0x211] sm:$0xff]
    %v432 = vld [vmem:[#allocation2 + $0x219] sm:$0xff]
    %v433 = vld [vmem:[#allocation2 + $0x229] sm:$0xff]
    %v434 = vld [vmem:[#allocation2 + $0x231] sm:$0xff]
    %v435 = vld [vmem:[#allocation2 + $0x241] sm:$0xff]
    %v436 = vld [vmem:[#allocation2 + $0x249] sm:$0xff]
    %v437 = vld [vmem:[#allocation2 + $0x259] sm:$0xff]
    %v438 = vld [vmem:[#allocation2 + $0x261] sm:$0xff]
    %v439 = vld [vmem:[#allocation2 + $0x271] sm:$0xff]
    %v440 = vld [vmem:[#allocation2 + $0x279] sm:$0xff]
    %v441 = vld [vmem:[#allocation2 + $0x289] sm:$0xff]
    %v442 = vld [vmem:[#allocation2 + $0x291] sm:$0xff]
    %v443 = vld [vmem:[#allocation2 + $0x2a1] sm:$0xff]
    %v444 = vld [vmem:[#allocation2 + $0x2a9] sm:$0xff]
    %v445 = vld [vmem:[#allocation2 + $0x2b9] sm:$0xff]
    %v446 = vld [vmem:[#allocation2 + $0x2c1] sm:$0xff]
    %v447 = vld [vmem:[#allocation2 + $0x2d1] sm:$0xff]
    %v448 = vld [vmem:[#allocation2 + $0x2d9] sm:$0xff]
    %v449 = vld [vmem:[#allocation2 + $0x2e9] sm:$0xff]
    %v450 = vld [vmem:[#allocation2 + $0x2f1] sm:$0xff]
    %v451 = vld [vmem:[#allocation2 + $0x301] sm:$0xff]
    %v452 = vld [vmem:[#allocation2 + $0x309] sm:$0xff]
    %v453 = vld [vmem:[#allocation2 + $0x319] sm:$0xff]
    %v454 = vld [vmem:[#allocation2 + $0x321] sm:$0xff]
    %s455 = scalar_lea.vmem [#allocation7], 128
    %v456 = vld [vmem:[%s455] sm:$0xff]
    %v457 = vld [vmem:[%s455 + $0x8] sm:$0xff]
    %v458 = vld [vmem:[%s455 + $0x10] sm:$0xff]
    %v459 = vld [vmem:[%s455 + $0x18] sm:$0xff]
    %v460 = vld [vmem:[%s455 + $0x20] sm:$0xff]
    %v461 = vld [vmem:[%s455 + $0x28] sm:$0xff]
    %v462 = vld [vmem:[%s455 + $0x30] sm:$0xff]
    %v463 = vld [vmem:[%s455 + $0x38] sm:$0xff]
    %v464 = vld [vmem:[%s455 + $0x40] sm:$0xff]
    %v465 = vld [vmem:[%s455 + $0x48] sm:$0xff]
    %v466 = vld [vmem:[%s455 + $0x50] sm:$0xff]
    %v467 = vld [vmem:[%s455 + $0x58] sm:$0xff]
    %v468 = vld [vmem:[%s455 + $0x60] sm:$0xff]
    %v469 = vld [vmem:[%s455 + $0x68] sm:$0xff]
    %v470 = vld [vmem:[%s455 + $0x70] sm:$0xff]
    %v471 = vld [vmem:[%s455 + $0x78] sm:$0xff]
    %472 = vmatpush.msra.mxu0 %v471
    %473 = vmatpush.msra.mxu0 %v470
    %474 = vmatpush.msra.mxu0 %v469
    %475 = vmatpush.msra.mxu0 %v468
    %476 = vmatpush.msra.mxu0 %v467
    %477 = vmatpush.msra.mxu0 %v466
    %478 = vmatpush.msra.mxu0 %v465
    %479 = vmatpush.msra.mxu0 %v464
    %480 = vmatpush.msra.mxu0 %v463
    %481 = vmatpush.msra.mxu0 %v462
    %482 = vmatpush.msra.mxu0 %v461
    %483 = vmatpush.msra.mxu0 %v460
    %484 = vmatpush.msra.mxu0 %v459
    %485 = vmatpush.msra.mxu0 %v458
    %486 = vmatpush.msra.mxu0 %v457
    %487 = vmatpush.msra.mxu0 %v456
    %488 = vmatmul.f32.gmra.mxu0 %v391
    %v489 = vpop.f32.mrf.mxu0
    %v490 = vadd.f32 0.0, %v489
    %491 = vmatmul.f32.gmra.mxu0 %v392
    %v492 = vpop.f32.mrf.mxu0
    %v493 = vadd.f32 0.0, %v492
    %494 = vmatmul.f32.gmra.mxu0 %v393
    %v495 = vpop.f32.mrf.mxu0
    %v496 = vadd.f32 0.0, %v495
    %497 = vmatmul.f32.gmra.mxu0 %v394
    %v498 = vpop.f32.mrf.mxu0
    %v499 = vadd.f32 0.0, %v498
    %500 = vmatmul.f32.gmra.mxu0 %v395
    %v501 = vpop.f32.mrf.mxu0
    %v502 = vadd.f32 0.0, %v501
    %503 = vmatmul.f32.gmra.mxu0 %v396
    %v504 = vpop.f32.mrf.mxu0
    %v505 = vadd.f32 0.0, %v504
    %506 = vmatmul.f32.gmra.mxu0 %v397
    %v507 = vpop.f32.mrf.mxu0
    %v508 = vadd.f32 0.0, %v507
    %509 = vmatmul.f32.gmra.mxu0 %v398
    %v510 = vpop.f32.mrf.mxu0
    %v511 = vadd.f32 0.0, %v510
    %512 = vmatmul.f32.gmra.mxu0 %v399
    %v513 = vpop.f32.mrf.mxu0
    %v514 = vadd.f32 0.0, %v513
    %515 = vmatmul.f32.gmra.mxu0 %v400
    %v516 = vpop.f32.mrf.mxu0
    %v517 = vadd.f32 0.0, %v516
    %518 = vmatmul.f32.gmra.mxu0 %v401
    %v519 = vpop.f32.mrf.mxu0
    %v520 = vadd.f32 0.0, %v519
    %521 = vmatmul.f32.gmra.mxu0 %v402
    %v522 = vpop.f32.mrf.mxu0
    %v523 = vadd.f32 0.0, %v522
    %524 = vmatmul.f32.gmra.mxu0 %v403
    %v525 = vpop.f32.mrf.mxu0
    %v526 = vadd.f32 0.0, %v525
    %527 = vmatmul.f32.gmra.mxu0 %v404
    %v528 = vpop.f32.mrf.mxu0
    %v529 = vadd.f32 0.0, %v528
    %530 = vmatmul.f32.gmra.mxu0 %v405
    %v531 = vpop.f32.mrf.mxu0
    %v532 = vadd.f32 0.0, %v531
    %533 = vmatmul.f32.gmra.mxu0 %v406
    %v534 = vpop.f32.mrf.mxu0
    %v535 = vadd.f32 0.0, %v534
    %536 = vmatmul.f32.gmra.mxu0 %v407
    %v537 = vpop.f32.mrf.mxu0
    %v538 = vadd.f32 0.0, %v537
    %539 = vmatmul.f32.gmra.mxu0 %v408
    %v540 = vpop.f32.mrf.mxu0
    %v541 = vadd.f32 0.0, %v540
    %542 = vmatmul.f32.gmra.mxu0 %v409
    %v543 = vpop.f32.mrf.mxu0
    %v544 = vadd.f32 0.0, %v543
    %545 = vmatmul.f32.gmra.mxu0 %v410
    %v546 = vpop.f32.mrf.mxu0
    %v547 = vadd.f32 0.0, %v546
    %548 = vmatmul.f32.gmra.mxu0 %v411
    %v549 = vpop.f32.mrf.mxu0
    %v550 = vadd.f32 0.0, %v549
    %551 = vmatmul.f32.gmra.mxu0 %v412
    %v552 = vpop.f32.mrf.mxu0
    %v553 = vadd.f32 0.0, %v552
    %554 = vmatmul.f32.gmra.mxu0 %v413
    %v555 = vpop.f32.mrf.mxu0
    %v556 = vadd.f32 0.0, %v555
    %557 = vmatmul.f32.gmra.mxu0 %v414
    %v558 = vpop.f32.mrf.mxu0
    %v559 = vadd.f32 0.0, %v558
    %560 = vmatmul.f32.gmra.mxu0 %v415
    %v561 = vpop.f32.mrf.mxu0
    %v562 = vadd.f32 0.0, %v561
    %563 = vmatmul.f32.gmra.mxu0 %v416
    %v564 = vpop.f32.mrf.mxu0
    %v565 = vadd.f32 0.0, %v564
    %566 = vmatmul.f32.gmra.mxu0 %v417
    %v567 = vpop.f32.mrf.mxu0
    %v568 = vadd.f32 0.0, %v567
    %569 = vmatmul.f32.gmra.mxu0 %v418
    %v570 = vpop.f32.mrf.mxu0
    %v571 = vadd.f32 0.0, %v570
    %572 = vmatmul.f32.gmra.mxu0 %v419
    %v573 = vpop.f32.mrf.mxu0
    %v574 = vadd.f32 0.0, %v573
    %575 = vmatmul.f32.gmra.mxu0 %v420
    %v576 = vpop.f32.mrf.mxu0
    %v577 = vadd.f32 0.0, %v576
    %578 = vmatmul.f32.gmra.mxu0 %v421
    %v579 = vpop.f32.mrf.mxu0
    %v580 = vadd.f32 0.0, %v579
    %581 = vmatmul.f32.gmra.mxu0 %v422
    %v582 = vpop.f32.mrf.mxu0
    %v583 = vadd.f32 0.0, %v582
    %584 = vmatmul.f32.gmra.mxu0 %v423
    %v585 = vpop.f32.mrf.mxu0
    %v586 = vadd.f32 0.0, %v585
    %587 = vmatmul.f32.gmra.mxu0 %v424
    %v588 = vpop.f32.mrf.mxu0
    %v589 = vadd.f32 0.0, %v588
    %590 = vmatmul.f32.gmra.mxu0 %v425
    %v591 = vpop.f32.mrf.mxu0
    %v592 = vadd.f32 0.0, %v591
    %593 = vmatmul.f32.gmra.mxu0 %v426
    %v594 = vpop.f32.mrf.mxu0
    %v595 = vadd.f32 0.0, %v594
    %596 = vmatmul.f32.gmra.mxu0 %v427
    %v597 = vpop.f32.mrf.mxu0
    %v598 = vadd.f32 0.0, %v597
    %599 = vmatmul.f32.gmra.mxu0 %v428
    %v600 = vpop.f32.mrf.mxu0
    %v601 = vadd.f32 0.0, %v600
    %602 = vmatmul.f32.gmra.mxu0 %v429
    %v603 = vpop.f32.mrf.mxu0
    %v604 = vadd.f32 0.0, %v603
    %605 = vmatmul.f32.gmra.mxu0 %v430
    %v606 = vpop.f32.mrf.mxu0
    %v607 = vadd.f32 0.0, %v606
    %608 = vmatmul.f32.gmra.mxu0 %v431
    %v609 = vpop.f32.mrf.mxu0
    %v610 = vadd.f32 0.0, %v609
    %611 = vmatmul.f32.gmra.mxu0 %v432
    %v612 = vpop.f32.mrf.mxu0
    %v613 = vadd.f32 0.0, %v612
    %614 = vmatmul.f32.gmra.mxu0 %v433
    %v615 = vpop.f32.mrf.mxu0
    %v616 = vadd.f32 0.0, %v615
    %617 = vmatmul.f32.gmra.mxu0 %v434
    %v618 = vpop.f32.mrf.mxu0
    %v619 = vadd.f32 0.0, %v618
    %620 = vmatmul.f32.gmra.mxu0 %v435
    %v621 = vpop.f32.mrf.mxu0
    %v622 = vadd.f32 0.0, %v621
    %623 = vmatmul.f32.gmra.mxu0 %v436
    %v624 = vpop.f32.mrf.mxu0
    %v625 = vadd.f32 0.0, %v624
    %626 = vmatmul.f32.gmra.mxu0 %v437
    %v627 = vpop.f32.mrf.mxu0
    %v628 = vadd.f32 0.0, %v627
    %629 = vmatmul.f32.gmra.mxu0 %v438
    %v630 = vpop.f32.mrf.mxu0
    %v631 = vadd.f32 0.0, %v630
    %632 = vmatmul.f32.gmra.mxu0 %v439
    %v633 = vpop.f32.mrf.mxu0
    %v634 = vadd.f32 0.0, %v633
    %635 = vmatmul.f32.gmra.mxu0 %v440
    %v636 = vpop.f32.mrf.mxu0
    %v637 = vadd.f32 0.0, %v636
    %638 = vmatmul.f32.gmra.mxu0 %v441
    %v639 = vpop.f32.mrf.mxu0
    %v640 = vadd.f32 0.0, %v639
    %641 = vmatmul.f32.gmra.mxu0 %v442
    %v642 = vpop.f32.mrf.mxu0
    %v643 = vadd.f32 0.0, %v642
    %644 = vmatmul.f32.gmra.mxu0 %v443
    %v645 = vpop.f32.mrf.mxu0
    %v646 = vadd.f32 0.0, %v645
    %647 = vmatmul.f32.gmra.mxu0 %v444
    %v648 = vpop.f32.mrf.mxu0
    %v649 = vadd.f32 0.0, %v648
    %650 = vmatmul.f32.gmra.mxu0 %v445
    %v651 = vpop.f32.mrf.mxu0
    %v652 = vadd.f32 0.0, %v651
    %653 = vmatmul.f32.gmra.mxu0 %v446
    %v654 = vpop.f32.mrf.mxu0
    %v655 = vadd.f32 0.0, %v654
    %656 = vmatmul.f32.gmra.mxu0 %v447
    %v657 = vpop.f32.mrf.mxu0
    %v658 = vadd.f32 0.0, %v657
    %659 = vmatmul.f32.gmra.mxu0 %v448
    %v660 = vpop.f32.mrf.mxu0
    %v661 = vadd.f32 0.0, %v660
    %662 = vmatmul.f32.gmra.mxu0 %v449
    %v663 = vpop.f32.mrf.mxu0
    %v664 = vadd.f32 0.0, %v663
    %665 = vmatmul.f32.gmra.mxu0 %v450
    %v666 = vpop.f32.mrf.mxu0
    %v667 = vadd.f32 0.0, %v666
    %668 = vmatmul.f32.gmra.mxu0 %v451
    %v669 = vpop.f32.mrf.mxu0
    %v670 = vadd.f32 0.0, %v669
    %671 = vmatmul.f32.gmra.mxu0 %v452
    %v672 = vpop.f32.mrf.mxu0
    %v673 = vadd.f32 0.0, %v672
    %674 = vmatmul.f32.gmra.mxu0 %v453
    %v675 = vpop.f32.mrf.mxu0
    %v676 = vadd.f32 0.0, %v675
    %677 = vmatmul.f32.gmra.mxu0 %v454
    %v678 = vpop.f32.mrf.mxu0
    %v679 = vadd.f32 0.0, %v678
    %680 = vdwg.mxu0
    %681 = vmatpush.msra.mxu0 %v390
    %682 = vmatpush.msra.mxu0 %v389
    %683 = vmatpush.msra.mxu0 %v388
    %684 = vmatpush.msra.mxu0 %v387
    %685 = vmatpush.msra.mxu0 %v386
    %686 = vmatpush.msra.mxu0 %v385
    %687 = vmatpush.msra.mxu0 %v384
    %688 = vmatpush.msra.mxu0 %v383
    %689 = vmatpush.msra.mxu0 %v382
    %690 = vmatpush.msra.mxu0 %v381
    %691 = vmatpush.msra.mxu0 %v380
    %692 = vmatpush.msra.mxu0 %v379
    %693 = vmatpush.msra.mxu0 %v378
    %694 = vmatpush.msra.mxu0 %v377
    %695 = vmatpush.msra.mxu0 %v376
    %696 = vmatpush.msra.mxu0 %v375
    %697 = vmatmul.f32.gmra.mxu0 %v311
    %v698 = vpop.f32.mrf.mxu0
    %v699 = vadd.f32 %v490, %v698
    %700 = vmatmul.f32.gmra.mxu0 %v312
    %v701 = vpop.f32.mrf.mxu0
    %v702 = vadd.f32 %v493, %v701
    %703 = vmatmul.f32.gmra.mxu0 %v313
    %v704 = vpop.f32.mrf.mxu0
    %v705 = vadd.f32 %v496, %v704
    %706 = vmatmul.f32.gmra.mxu0 %v314
    %v707 = vpop.f32.mrf.mxu0
    %v708 = vadd.f32 %v499, %v707
    %709 = vmatmul.f32.gmra.mxu0 %v315
    %v710 = vpop.f32.mrf.mxu0
    %v711 = vadd.f32 %v502, %v710
    %712 = vmatmul.f32.gmra.mxu0 %v316
    %v713 = vpop.f32.mrf.mxu0
    %v714 = vadd.f32 %v505, %v713
    %715 = vmatmul.f32.gmra.mxu0 %v317
    %v716 = vpop.f32.mrf.mxu0
    %v717 = vadd.f32 %v508, %v716
    %718 = vmatmul.f32.gmra.mxu0 %v318
    %v719 = vpop.f32.mrf.mxu0
    %v720 = vadd.f32 %v511, %v719
    %721 = vmatmul.f32.gmra.mxu0 %v319
    %v722 = vpop.f32.mrf.mxu0
    %v723 = vadd.f32 %v514, %v722
    %724 = vmatmul.f32.gmra.mxu0 %v320
    %v725 = vpop.f32.mrf.mxu0
    %v726 = vadd.f32 %v517, %v725
    %727 = vmatmul.f32.gmra.mxu0 %v321
    %v728 = vpop.f32.mrf.mxu0
    %v729 = vadd.f32 %v520, %v728
    %730 = vmatmul.f32.gmra.mxu0 %v322
    %v731 = vpop.f32.mrf.mxu0
    %v732 = vadd.f32 %v523, %v731
    %733 = vmatmul.f32.gmra.mxu0 %v323
    %v734 = vpop.f32.mrf.mxu0
    %v735 = vadd.f32 %v526, %v734
    %736 = vmatmul.f32.gmra.mxu0 %v324
    %v737 = vpop.f32.mrf.mxu0
    %v738 = vadd.f32 %v529, %v737
    %739 = vmatmul.f32.gmra.mxu0 %v325
    %v740 = vpop.f32.mrf.mxu0
    %v741 = vadd.f32 %v532, %v740
    %742 = vmatmul.f32.gmra.mxu0 %v326
    %v743 = vpop.f32.mrf.mxu0
    %v744 = vadd.f32 %v535, %v743
    %745 = vmatmul.f32.gmra.mxu0 %v327
    %v746 = vpop.f32.mrf.mxu0
    %v747 = vadd.f32 %v538, %v746
    %748 = vmatmul.f32.gmra.mxu0 %v328
    %v749 = vpop.f32.mrf.mxu0
    %v750 = vadd.f32 %v541, %v749
    %751 = vmatmul.f32.gmra.mxu0 %v329
    %v752 = vpop.f32.mrf.mxu0
    %v753 = vadd.f32 %v544, %v752
    %754 = vmatmul.f32.gmra.mxu0 %v330
    %v755 = vpop.f32.mrf.mxu0
    %v756 = vadd.f32 %v547, %v755
    %757 = vmatmul.f32.gmra.mxu0 %v331
    %v758 = vpop.f32.mrf.mxu0
    %v759 = vadd.f32 %v550, %v758
    %760 = vmatmul.f32.gmra.mxu0 %v332
    %v761 = vpop.f32.mrf.mxu0
    %v762 = vadd.f32 %v553, %v761
    %763 = vmatmul.f32.gmra.mxu0 %v333
    %v764 = vpop.f32.mrf.mxu0
    %v765 = vadd.f32 %v556, %v764
    %766 = vmatmul.f32.gmra.mxu0 %v334
    %v767 = vpop.f32.mrf.mxu0
    %v768 = vadd.f32 %v559, %v767
    %769 = vmatmul.f32.gmra.mxu0 %v335
    %v770 = vpop.f32.mrf.mxu0
    %v771 = vadd.f32 %v562, %v770
    %772 = vmatmul.f32.gmra.mxu0 %v336
    %v773 = vpop.f32.mrf.mxu0
    %v774 = vadd.f32 %v565, %v773
    %775 = vmatmul.f32.gmra.mxu0 %v337
    %v776 = vpop.f32.mrf.mxu0
    %v777 = vadd.f32 %v568, %v776
    %778 = vmatmul.f32.gmra.mxu0 %v338
    %v779 = vpop.f32.mrf.mxu0
    %v780 = vadd.f32 %v571, %v779
    %781 = vmatmul.f32.gmra.mxu0 %v339
    %v782 = vpop.f32.mrf.mxu0
    %v783 = vadd.f32 %v574, %v782
    %784 = vmatmul.f32.gmra.mxu0 %v340
    %v785 = vpop.f32.mrf.mxu0
    %v786 = vadd.f32 %v577, %v785
    %787 = vmatmul.f32.gmra.mxu0 %v341
    %v788 = vpop.f32.mrf.mxu0
    %v789 = vadd.f32 %v580, %v788
    %790 = vmatmul.f32.gmra.mxu0 %v342
    %v791 = vpop.f32.mrf.mxu0
    %v792 = vadd.f32 %v583, %v791
    %793 = vmatmul.f32.gmra.mxu0 %v343
    %v794 = vpop.f32.mrf.mxu0
    %v795 = vadd.f32 %v586, %v794
    %796 = vmatmul.f32.gmra.mxu0 %v344
    %v797 = vpop.f32.mrf.mxu0
    %v798 = vadd.f32 %v589, %v797
    %799 = vmatmul.f32.gmra.mxu0 %v345
    %v800 = vpop.f32.mrf.mxu0
    %v801 = vadd.f32 %v592, %v800
    %802 = vmatmul.f32.gmra.mxu0 %v346
    %v803 = vpop.f32.mrf.mxu0
    %v804 = vadd.f32 %v595, %v803
    %805 = vmatmul.f32.gmra.mxu0 %v347
    %v806 = vpop.f32.mrf.mxu0
    %v807 = vadd.f32 %v598, %v806
    %808 = vmatmul.f32.gmra.mxu0 %v348
    %v809 = vpop.f32.mrf.mxu0
    %v810 = vadd.f32 %v601, %v809
    %811 = vmatmul.f32.gmra.mxu0 %v349
    %v812 = vpop.f32.mrf.mxu0
    %v813 = vadd.f32 %v604, %v812
    %814 = vmatmul.f32.gmra.mxu0 %v350
    %v815 = vpop.f32.mrf.mxu0
    %v816 = vadd.f32 %v607, %v815
    %817 = vmatmul.f32.gmra.mxu0 %v351
    %v818 = vpop.f32.mrf.mxu0
    %v819 = vadd.f32 %v610, %v818
    %820 = vmatmul.f32.gmra.mxu0 %v352
    %v821 = vpop.f32.mrf.mxu0
    %v822 = vadd.f32 %v613, %v821
    %823 = vmatmul.f32.gmra.mxu0 %v353
    %v824 = vpop.f32.mrf.mxu0
    %v825 = vadd.f32 %v616, %v824
    %826 = vmatmul.f32.gmra.mxu0 %v354
    %v827 = vpop.f32.mrf.mxu0
    %v828 = vadd.f32 %v619, %v827
    %829 = vmatmul.f32.gmra.mxu0 %v355
    %v830 = vpop.f32.mrf.mxu0
    %v831 = vadd.f32 %v622, %v830
    %832 = vmatmul.f32.gmra.mxu0 %v356
    %v833 = vpop.f32.mrf.mxu0
    %v834 = vadd.f32 %v625, %v833
    %835 = vmatmul.f32.gmra.mxu0 %v357
    %v836 = vpop.f32.mrf.mxu0
    %v837 = vadd.f32 %v628, %v836
    %838 = vmatmul.f32.gmra.mxu0 %v358
    %v839 = vpop.f32.mrf.mxu0
    %v840 = vadd.f32 %v631, %v839
    %841 = vmatmul.f32.gmra.mxu0 %v359
    %v842 = vpop.f32.mrf.mxu0
    %v843 = vadd.f32 %v634, %v842
    %844 = vmatmul.f32.gmra.mxu0 %v360
    %v845 = vpop.f32.mrf.mxu0
    %v846 = vadd.f32 %v637, %v845
    %847 = vmatmul.f32.gmra.mxu0 %v361
    %v848 = vpop.f32.mrf.mxu0
    %v849 = vadd.f32 %v640, %v848
    %850 = vmatmul.f32.gmra.mxu0 %v362
    %v851 = vpop.f32.mrf.mxu0
    %v852 = vadd.f32 %v643, %v851
    %853 = vmatmul.f32.gmra.mxu0 %v363
    %v854 = vpop.f32.mrf.mxu0
    %v855 = vadd.f32 %v646, %v854
    %856 = vmatmul.f32.gmra.mxu0 %v364
    %v857 = vpop.f32.mrf.mxu0
    %v858 = vadd.f32 %v649, %v857
    %859 = vmatmul.f32.gmra.mxu0 %v365
    %v860 = vpop.f32.mrf.mxu0
    %v861 = vadd.f32 %v652, %v860
    %862 = vmatmul.f32.gmra.mxu0 %v366
    %v863 = vpop.f32.mrf.mxu0
    %v864 = vadd.f32 %v655, %v863
    %865 = vmatmul.f32.gmra.mxu0 %v367
    %v866 = vpop.f32.mrf.mxu0
    %v867 = vadd.f32 %v658, %v866
    %868 = vmatmul.f32.gmra.mxu0 %v368
    %v869 = vpop.f32.mrf.mxu0
    %v870 = vadd.f32 %v661, %v869
    %871 = vmatmul.f32.gmra.mxu0 %v369
    %v872 = vpop.f32.mrf.mxu0
    %v873 = vadd.f32 %v664, %v872
    %874 = vmatmul.f32.gmra.mxu0 %v370
    %v875 = vpop.f32.mrf.mxu0
    %v876 = vadd.f32 %v667, %v875
    %877 = vmatmul.f32.gmra.mxu0 %v371
    %v878 = vpop.f32.mrf.mxu0
    %v879 = vadd.f32 %v670, %v878
    %880 = vmatmul.f32.gmra.mxu0 %v372
    %v881 = vpop.f32.mrf.mxu0
    %v882 = vadd.f32 %v673, %v881
    %883 = vmatmul.f32.gmra.mxu0 %v373
    %v884 = vpop.f32.mrf.mxu0
    %v885 = vadd.f32 %v676, %v884
    %886 = vmatmul.f32.gmra.mxu0 %v374
    %v887 = vpop.f32.mrf.mxu0
    %v888 = vadd.f32 %v679, %v887
    %889 = vdwg.mxu0
    %v890 = vld [vmem:[#allocation2 + $0x2] sm:$0xff]
    %v891 = vld [vmem:[#allocation2 + $0xa] sm:$0xff]
    %v892 = vld [vmem:[#allocation2 + $0x1a] sm:$0xff]
    %v893 = vld [vmem:[#allocation2 + $0x22] sm:$0xff]
    %v894 = vld [vmem:[#allocation2 + $0x32] sm:$0xff]
    %v895 = vld [vmem:[#allocation2 + $0x3a] sm:$0xff]
    %v896 = vld [vmem:[#allocation2 + $0x4a] sm:$0xff]
    %v897 = vld [vmem:[#allocation2 + $0x52] sm:$0xff]
    %v898 = vld [vmem:[#allocation2 + $0x62] sm:$0xff]
    %v899 = vld [vmem:[#allocation2 + $0x6a] sm:$0xff]
    %v900 = vld [vmem:[#allocation2 + $0x7a] sm:$0xff]
    %v901 = vld [vmem:[#allocation2 + $0x82] sm:$0xff]
    %v902 = vld [vmem:[#allocation2 + $0x92] sm:$0xff]
    %v903 = vld [vmem:[#allocation2 + $0x9a] sm:$0xff]
    %v904 = vld [vmem:[#allocation2 + $0xaa] sm:$0xff]
    %v905 = vld [vmem:[#allocation2 + $0xb2] sm:$0xff]
    %v906 = vld [vmem:[#allocation2 + $0xc2] sm:$0xff]
    %v907 = vld [vmem:[#allocation2 + $0xca] sm:$0xff]
    %v908 = vld [vmem:[#allocation2 + $0xda] sm:$0xff]
    %v909 = vld [vmem:[#allocation2 + $0xe2] sm:$0xff]
    %v910 = vld [vmem:[#allocation2 + $0xf2] sm:$0xff]
    %v911 = vld [vmem:[#allocation2 + $0xfa] sm:$0xff]
    %v912 = vld [vmem:[#allocation2 + $0x10a] sm:$0xff]
    %v913 = vld [vmem:[#allocation2 + $0x112] sm:$0xff]
    %v914 = vld [vmem:[#allocation2 + $0x122] sm:$0xff]
    %v915 = vld [vmem:[#allocation2 + $0x12a] sm:$0xff]
    %v916 = vld [vmem:[#allocation2 + $0x13a] sm:$0xff]
    %v917 = vld [vmem:[#allocation2 + $0x142] sm:$0xff]
    %v918 = vld [vmem:[#allocation2 + $0x152] sm:$0xff]
    %v919 = vld [vmem:[#allocation2 + $0x15a] sm:$0xff]
    %v920 = vld [vmem:[#allocation2 + $0x16a] sm:$0xff]
    %v921 = vld [vmem:[#allocation2 + $0x172] sm:$0xff]
    %v922 = vld [vmem:[#allocation2 + $0x1b2] sm:$0xff]
    %v923 = vld [vmem:[#allocation2 + $0x1ba] sm:$0xff]
    %v924 = vld [vmem:[#allocation2 + $0x1ca] sm:$0xff]
    %v925 = vld [vmem:[#allocation2 + $0x1d2] sm:$0xff]
    %v926 = vld [vmem:[#allocation2 + $0x1e2] sm:$0xff]
    %v927 = vld [vmem:[#allocation2 + $0x1ea] sm:$0xff]
    %v928 = vld [vmem:[#allocation2 + $0x1fa] sm:$0xff]
    %v929 = vld [vmem:[#allocation2 + $0x202] sm:$0xff]
    %v930 = vld [vmem:[#allocation2 + $0x212] sm:$0xff]
    %v931 = vld [vmem:[#allocation2 + $0x21a] sm:$0xff]
    %v932 = vld [vmem:[#allocation2 + $0x22a] sm:$0xff]
    %v933 = vld [vmem:[#allocation2 + $0x232] sm:$0xff]
    %v934 = vld [vmem:[#allocation2 + $0x242] sm:$0xff]
    %v935 = vld [vmem:[#allocation2 + $0x24a] sm:$0xff]
    %v936 = vld [vmem:[#allocation2 + $0x25a] sm:$0xff]
    %v937 = vld [vmem:[#allocation2 + $0x262] sm:$0xff]
    %v938 = vld [vmem:[#allocation2 + $0x272] sm:$0xff]
    %v939 = vld [vmem:[#allocation2 + $0x27a] sm:$0xff]
    %v940 = vld [vmem:[#allocation2 + $0x28a] sm:$0xff]
    %v941 = vld [vmem:[#allocation2 + $0x292] sm:$0xff]
    %v942 = vld [vmem:[#allocation2 + $0x2a2] sm:$0xff]
    %v943 = vld [vmem:[#allocation2 + $0x2aa] sm:$0xff]
    %v944 = vld [vmem:[#allocation2 + $0x2ba] sm:$0xff]
    %v945 = vld [vmem:[#allocation2 + $0x2c2] sm:$0xff]
    %v946 = vld [vmem:[#allocation2 + $0x2d2] sm:$0xff]
    %v947 = vld [vmem:[#allocation2 + $0x2da] sm:$0xff]
    %v948 = vld [vmem:[#allocation2 + $0x2ea] sm:$0xff]
    %v949 = vld [vmem:[#allocation2 + $0x2f2] sm:$0xff]
    %v950 = vld [vmem:[#allocation2 + $0x302] sm:$0xff]
    %v951 = vld [vmem:[#allocation2 + $0x30a] sm:$0xff]
    %v952 = vld [vmem:[#allocation2 + $0x31a] sm:$0xff]
    %v953 = vld [vmem:[#allocation2 + $0x322] sm:$0xff]
    %s954 = scalar_lea.vmem [#allocation7], 256
    %v955 = vld [vmem:[%s954] sm:$0xff]
    %v956 = vld [vmem:[%s954 + $0x8] sm:$0xff]
    %v957 = vld [vmem:[%s954 + $0x10] sm:$0xff]
    %v958 = vld [vmem:[%s954 + $0x18] sm:$0xff]
    %v959 = vld [vmem:[%s954 + $0x20] sm:$0xff]
    %v960 = vld [vmem:[%s954 + $0x28] sm:$0xff]
    %v961 = vld [vmem:[%s954 + $0x30] sm:$0xff]
    %v962 = vld [vmem:[%s954 + $0x38] sm:$0xff]
    %v963 = vld [vmem:[%s954 + $0x40] sm:$0xff]
    %v964 = vld [vmem:[%s954 + $0x48] sm:$0xff]
    %v965 = vld [vmem:[%s954 + $0x50] sm:$0xff]
    %v966 = vld [vmem:[%s954 + $0x58] sm:$0xff]
    %v967 = vld [vmem:[%s954 + $0x60] sm:$0xff]
    %v968 = vld [vmem:[%s954 + $0x68] sm:$0xff]
    %v969 = vld [vmem:[%s954 + $0x70] sm:$0xff]
    %v970 = vld [vmem:[%s954 + $0x78] sm:$0xff]
    %971 = vmatpush.msra.mxu0 %v970
    %972 = vmatpush.msra.mxu0 %v969
    %973 = vmatpush.msra.mxu0 %v968
    %974 = vmatpush.msra.mxu0 %v967
    %975 = vmatpush.msra.mxu0 %v966
    %976 = vmatpush.msra.mxu0 %v965
    %977 = vmatpush.msra.mxu0 %v964
    %978 = vmatpush.msra.mxu0 %v963
    %979 = vmatpush.msra.mxu0 %v962
    %980 = vmatpush.msra.mxu0 %v961
    %981 = vmatpush.msra.mxu0 %v960
    %982 = vmatpush.msra.mxu0 %v959
    %983 = vmatpush.msra.mxu0 %v958
    %984 = vmatpush.msra.mxu0 %v957
    %985 = vmatpush.msra.mxu0 %v956
    %986 = vmatpush.msra.mxu0 %v955
    %987 = vmatmul.f32.gmra.mxu0 %v890
    %v988 = vpop.f32.mrf.mxu0
    %v989 = vadd.f32 0.0, %v988
    %990 = vmatmul.f32.gmra.mxu0 %v891
    %v991 = vpop.f32.mrf.mxu0
    %v992 = vadd.f32 0.0, %v991
    %993 = vmatmul.f32.gmra.mxu0 %v892
    %v994 = vpop.f32.mrf.mxu0
    %v995 = vadd.f32 0.0, %v994
    %996 = vmatmul.f32.gmra.mxu0 %v893
    %v997 = vpop.f32.mrf.mxu0
    %v998 = vadd.f32 0.0, %v997
    %999 = vmatmul.f32.gmra.mxu0 %v894
    %v1000 = vpop.f32.mrf.mxu0
    %v1001 = vadd.f32 0.0, %v1000
    %1002 = vmatmul.f32.gmra.mxu0 %v895
    %v1003 = vpop.f32.mrf.mxu0
    %v1004 = vadd.f32 0.0, %v1003
    %1005 = vmatmul.f32.gmra.mxu0 %v896
    %v1006 = vpop.f32.mrf.mxu0
    %v1007 = vadd.f32 0.0, %v1006
    %1008 = vmatmul.f32.gmra.mxu0 %v897
    %v1009 = vpop.f32.mrf.mxu0
    %v1010 = vadd.f32 0.0, %v1009
    %1011 = vmatmul.f32.gmra.mxu0 %v898
    %v1012 = vpop.f32.mrf.mxu0
    %v1013 = vadd.f32 0.0, %v1012
    %1014 = vmatmul.f32.gmra.mxu0 %v899
    %v1015 = vpop.f32.mrf.mxu0
    %v1016 = vadd.f32 0.0, %v1015
    %1017 = vmatmul.f32.gmra.mxu0 %v900
    %v1018 = vpop.f32.mrf.mxu0
    %v1019 = vadd.f32 0.0, %v1018
    %1020 = vmatmul.f32.gmra.mxu0 %v901
    %v1021 = vpop.f32.mrf.mxu0
    %v1022 = vadd.f32 0.0, %v1021
    %1023 = vmatmul.f32.gmra.mxu0 %v902
    %v1024 = vpop.f32.mrf.mxu0
    %v1025 = vadd.f32 0.0, %v1024
    %1026 = vmatmul.f32.gmra.mxu0 %v903
    %v1027 = vpop.f32.mrf.mxu0
    %v1028 = vadd.f32 0.0, %v1027
    %1029 = vmatmul.f32.gmra.mxu0 %v904
    %v1030 = vpop.f32.mrf.mxu0
    %v1031 = vadd.f32 0.0, %v1030
    %1032 = vmatmul.f32.gmra.mxu0 %v905
    %v1033 = vpop.f32.mrf.mxu0
    %v1034 = vadd.f32 0.0, %v1033
    %1035 = vmatmul.f32.gmra.mxu0 %v906
    %v1036 = vpop.f32.mrf.mxu0
    %v1037 = vadd.f32 0.0, %v1036
    %1038 = vmatmul.f32.gmra.mxu0 %v907
    %v1039 = vpop.f32.mrf.mxu0
    %v1040 = vadd.f32 0.0, %v1039
    %1041 = vmatmul.f32.gmra.mxu0 %v908
    %v1042 = vpop.f32.mrf.mxu0
    %v1043 = vadd.f32 0.0, %v1042
    %1044 = vmatmul.f32.gmra.mxu0 %v909
    %v1045 = vpop.f32.mrf.mxu0
    %v1046 = vadd.f32 0.0, %v1045
    %1047 = vmatmul.f32.gmra.mxu0 %v910
    %v1048 = vpop.f32.mrf.mxu0
    %v1049 = vadd.f32 0.0, %v1048
    %1050 = vmatmul.f32.gmra.mxu0 %v911
    %v1051 = vpop.f32.mrf.mxu0
    %v1052 = vadd.f32 0.0, %v1051
    %1053 = vmatmul.f32.gmra.mxu0 %v912
    %v1054 = vpop.f32.mrf.mxu0
    %v1055 = vadd.f32 0.0, %v1054
    %1056 = vmatmul.f32.gmra.mxu0 %v913
    %v1057 = vpop.f32.mrf.mxu0
    %v1058 = vadd.f32 0.0, %v1057
    %1059 = vmatmul.f32.gmra.mxu0 %v914
    %v1060 = vpop.f32.mrf.mxu0
    %v1061 = vadd.f32 0.0, %v1060
    %1062 = vmatmul.f32.gmra.mxu0 %v915
    %v1063 = vpop.f32.mrf.mxu0
    %v1064 = vadd.f32 0.0, %v1063
    %1065 = vmatmul.f32.gmra.mxu0 %v916
    %v1066 = vpop.f32.mrf.mxu0
    %v1067 = vadd.f32 0.0, %v1066
    %1068 = vmatmul.f32.gmra.mxu0 %v917
    %v1069 = vpop.f32.mrf.mxu0
    %v1070 = vadd.f32 0.0, %v1069
    %1071 = vmatmul.f32.gmra.mxu0 %v918
    %v1072 = vpop.f32.mrf.mxu0
    %v1073 = vadd.f32 0.0, %v1072
    %1074 = vmatmul.f32.gmra.mxu0 %v919
    %v1075 = vpop.f32.mrf.mxu0
    %v1076 = vadd.f32 0.0, %v1075
    %1077 = vmatmul.f32.gmra.mxu0 %v920
    %v1078 = vpop.f32.mrf.mxu0
    %v1079 = vadd.f32 0.0, %v1078
    %1080 = vmatmul.f32.gmra.mxu0 %v921
    %v1081 = vpop.f32.mrf.mxu0
    %v1082 = vadd.f32 0.0, %v1081
    %1083 = vmatmul.f32.gmra.mxu0 %v922
    %v1084 = vpop.f32.mrf.mxu0
    %v1085 = vadd.f32 0.0, %v1084
    %1086 = vmatmul.f32.gmra.mxu0 %v923
    %v1087 = vpop.f32.mrf.mxu0
    %v1088 = vadd.f32 0.0, %v1087
    %1089 = vmatmul.f32.gmra.mxu0 %v924
    %v1090 = vpop.f32.mrf.mxu0
    %v1091 = vadd.f32 0.0, %v1090
    %1092 = vmatmul.f32.gmra.mxu0 %v925
    %v1093 = vpop.f32.mrf.mxu0
    %v1094 = vadd.f32 0.0, %v1093
    %1095 = vmatmul.f32.gmra.mxu0 %v926
    %v1096 = vpop.f32.mrf.mxu0
    %v1097 = vadd.f32 0.0, %v1096
    %1098 = vmatmul.f32.gmra.mxu0 %v927
    %v1099 = vpop.f32.mrf.mxu0
    %v1100 = vadd.f32 0.0, %v1099
    %1101 = vmatmul.f32.gmra.mxu0 %v928
    %v1102 = vpop.f32.mrf.mxu0
    %v1103 = vadd.f32 0.0, %v1102
    %1104 = vmatmul.f32.gmra.mxu0 %v929
    %v1105 = vpop.f32.mrf.mxu0
    %v1106 = vadd.f32 0.0, %v1105
    %1107 = vmatmul.f32.gmra.mxu0 %v930
    %v1108 = vpop.f32.mrf.mxu0
    %v1109 = vadd.f32 0.0, %v1108
    %1110 = vmatmul.f32.gmra.mxu0 %v931
    %v1111 = vpop.f32.mrf.mxu0
    %v1112 = vadd.f32 0.0, %v1111
    %1113 = vmatmul.f32.gmra.mxu0 %v932
    %v1114 = vpop.f32.mrf.mxu0
    %v1115 = vadd.f32 0.0, %v1114
    %1116 = vmatmul.f32.gmra.mxu0 %v933
    %v1117 = vpop.f32.mrf.mxu0
    %v1118 = vadd.f32 0.0, %v1117
    %1119 = vmatmul.f32.gmra.mxu0 %v934
    %v1120 = vpop.f32.mrf.mxu0
    %v1121 = vadd.f32 0.0, %v1120
    %1122 = vmatmul.f32.gmra.mxu0 %v935
    %v1123 = vpop.f32.mrf.mxu0
    %v1124 = vadd.f32 0.0, %v1123
    %1125 = vmatmul.f32.gmra.mxu0 %v936
    %v1126 = vpop.f32.mrf.mxu0
    %v1127 = vadd.f32 0.0, %v1126
    %1128 = vmatmul.f32.gmra.mxu0 %v937
    %v1129 = vpop.f32.mrf.mxu0
    %v1130 = vadd.f32 0.0, %v1129
    %1131 = vmatmul.f32.gmra.mxu0 %v938
    %v1132 = vpop.f32.mrf.mxu0
    %v1133 = vadd.f32 0.0, %v1132
    %1134 = vmatmul.f32.gmra.mxu0 %v939
    %v1135 = vpop.f32.mrf.mxu0
    %v1136 = vadd.f32 0.0, %v1135
    %1137 = vmatmul.f32.gmra.mxu0 %v940
    %v1138 = vpop.f32.mrf.mxu0
    %v1139 = vadd.f32 0.0, %v1138
    %1140 = vmatmul.f32.gmra.mxu0 %v941
    %v1141 = vpop.f32.mrf.mxu0
    %v1142 = vadd.f32 0.0, %v1141
    %1143 = vmatmul.f32.gmra.mxu0 %v942
    %v1144 = vpop.f32.mrf.mxu0
    %v1145 = vadd.f32 0.0, %v1144
    %1146 = vmatmul.f32.gmra.mxu0 %v943
    %v1147 = vpop.f32.mrf.mxu0
    %v1148 = vadd.f32 0.0, %v1147
    %1149 = vmatmul.f32.gmra.mxu0 %v944
    %v1150 = vpop.f32.mrf.mxu0
    %v1151 = vadd.f32 0.0, %v1150
    %1152 = vmatmul.f32.gmra.mxu0 %v945
    %v1153 = vpop.f32.mrf.mxu0
    %v1154 = vadd.f32 0.0, %v1153
    %1155 = vmatmul.f32.gmra.mxu0 %v946
    %v1156 = vpop.f32.mrf.mxu0
    %v1157 = vadd.f32 0.0, %v1156
    %1158 = vmatmul.f32.gmra.mxu0 %v947
    %v1159 = vpop.f32.mrf.mxu0
    %v1160 = vadd.f32 0.0, %v1159
    %1161 = vmatmul.f32.gmra.mxu0 %v948
    %v1162 = vpop.f32.mrf.mxu0
    %v1163 = vadd.f32 0.0, %v1162
    %1164 = vmatmul.f32.gmra.mxu0 %v949
    %v1165 = vpop.f32.mrf.mxu0
    %v1166 = vadd.f32 0.0, %v1165
    %1167 = vmatmul.f32.gmra.mxu0 %v950
    %v1168 = vpop.f32.mrf.mxu0
    %v1169 = vadd.f32 0.0, %v1168
    %1170 = vmatmul.f32.gmra.mxu0 %v951
    %v1171 = vpop.f32.mrf.mxu0
    %v1172 = vadd.f32 0.0, %v1171
    %1173 = vmatmul.f32.gmra.mxu0 %v952
    %v1174 = vpop.f32.mrf.mxu0
    %v1175 = vadd.f32 0.0, %v1174
    %1176 = vmatmul.f32.gmra.mxu0 %v953
    %v1177 = vpop.f32.mrf.mxu0
    %v1178 = vadd.f32 0.0, %v1177
    %1179 = vdwg.mxu0
    %v1180 = vadd.f32 %v699, %v989
    %v1181 = vadd.f32 %v702, %v992
    %v1182 = vadd.f32 %v705, %v995
    %v1183 = vadd.f32 %v708, %v998
    %v1184 = vadd.f32 %v711, %v1001
    %v1185 = vadd.f32 %v714, %v1004
    %v1186 = vadd.f32 %v717, %v1007
    %v1187 = vadd.f32 %v720, %v1010
    %v1188 = vadd.f32 %v723, %v1013
    %v1189 = vadd.f32 %v726, %v1016
    %v1190 = vadd.f32 %v729, %v1019
    %v1191 = vadd.f32 %v732, %v1022
    %v1192 = vadd.f32 %v735, %v1025
    %v1193 = vadd.f32 %v738, %v1028
    %v1194 = vadd.f32 %v741, %v1031
    %v1195 = vadd.f32 %v744, %v1034
    %v1196 = vadd.f32 %v747, %v1037
    %v1197 = vadd.f32 %v750, %v1040
    %v1198 = vadd.f32 %v753, %v1043
    %v1199 = vadd.f32 %v756, %v1046
    %v1200 = vadd.f32 %v759, %v1049
    %v1201 = vadd.f32 %v762, %v1052
    %v1202 = vadd.f32 %v765, %v1055
    %v1203 = vadd.f32 %v768, %v1058
    %v1204 = vadd.f32 %v771, %v1061
    %v1205 = vadd.f32 %v774, %v1064
    %v1206 = vadd.f32 %v777, %v1067
    %v1207 = vadd.f32 %v780, %v1070
    %v1208 = vadd.f32 %v783, %v1073
    %v1209 = vadd.f32 %v786, %v1076
    %v1210 = vadd.f32 %v789, %v1079
    %v1211 = vadd.f32 %v792, %v1082
    %v1212 = vadd.f32 %v795, %v1085
    %v1213 = vadd.f32 %v798, %v1088
    %v1214 = vadd.f32 %v801, %v1091
    %v1215 = vadd.f32 %v804, %v1094
    %v1216 = vadd.f32 %v807, %v1097
    %v1217 = vadd.f32 %v810, %v1100
    %v1218 = vadd.f32 %v813, %v1103
    %v1219 = vadd.f32 %v816, %v1106
    %v1220 = vadd.f32 %v819, %v1109
    %v1221 = vadd.f32 %v822, %v1112
    %v1222 = vadd.f32 %v825, %v1115
    %v1223 = vadd.f32 %v828, %v1118
    %v1224 = vadd.f32 %v831, %v1121
    %v1225 = vadd.f32 %v834, %v1124
    %v1226 = vadd.f32 %v837, %v1127
    %v1227 = vadd.f32 %v840, %v1130
    %v1228 = vadd.f32 %v843, %v1133
    %v1229 = vadd.f32 %v846, %v1136
    %v1230 = vadd.f32 %v849, %v1139
    %v1231 = vadd.f32 %v852, %v1142
    %v1232 = vadd.f32 %v855, %v1145
    %v1233 = vadd.f32 %v858, %v1148
    %v1234 = vadd.f32 %v861, %v1151
    %v1235 = vadd.f32 %v864, %v1154
    %v1236 = vadd.f32 %v867, %v1157
    %v1237 = vadd.f32 %v870, %v1160
    %v1238 = vadd.f32 %v873, %v1163
    %v1239 = vadd.f32 %v876, %v1166
    %v1240 = vadd.f32 %v879, %v1169
    %v1241 = vadd.f32 %v882, %v1172
    %v1242 = vadd.f32 %v885, %v1175
    %v1243 = vadd.f32 %v888, %v1178
    %v1244 = vld [vmem:[%s246] sm:$0xff]
    %v1245 = vld [vmem:[%s246 + $0x8] sm:$0xff]
    %v1246 = vld [vmem:[%s246 + $0x18] sm:$0xff]
    %v1247 = vld [vmem:[%s246 + $0x20] sm:$0xff]
    %v1248 = vld [vmem:[%s246 + $0x30] sm:$0xff]
    %v1249 = vld [vmem:[%s246 + $0x38] sm:$0xff]
    %v1250 = vld [vmem:[%s246 + $0x48] sm:$0xff]
    %v1251 = vld [vmem:[%s246 + $0x50] sm:$0xff]
    %v1252 = vld [vmem:[%s246 + $0x60] sm:$0xff]
    %v1253 = vld [vmem:[%s246 + $0x68] sm:$0xff]
    %v1254 = vld [vmem:[%s246 + $0x78] sm:$0xff]
    %v1255 = vld [vmem:[%s246 + $0x80] sm:$0xff]
    %v1256 = vld [vmem:[%s246 + $0x90] sm:$0xff]
    %v1257 = vld [vmem:[%s246 + $0x98] sm:$0xff]
    %v1258 = vld [vmem:[%s246 + $0xa8] sm:$0xff]
    %v1259 = vld [vmem:[%s246 + $0xb0] sm:$0xff]
    %v1260 = vld [vmem:[%s246 + $0xc0] sm:$0xff]
    %v1261 = vld [vmem:[%s246 + $0xc8] sm:$0xff]
    %v1262 = vld [vmem:[%s246 + $0xd8] sm:$0xff]
    %v1263 = vld [vmem:[%s246 + $0xe0] sm:$0xff]
    %v1264 = vld [vmem:[%s246 + $0xf0] sm:$0xff]
    %v1265 = vld [vmem:[%s246 + $0xf8] sm:$0xff]
    %v1266 = vld [vmem:[%s246 + $0x108] sm:$0xff]
    %v1267 = vld [vmem:[%s246 + $0x110] sm:$0xff]
    %v1268 = vld [vmem:[%s246 + $0x120] sm:$0xff]
    %v1269 = vld [vmem:[%s246 + $0x128] sm:$0xff]
    %v1270 = vld [vmem:[%s246 + $0x138] sm:$0xff]
    %v1271 = vld [vmem:[%s246 + $0x140] sm:$0xff]
    %v1272 = vld [vmem:[%s246 + $0x150] sm:$0xff]
    %v1273 = vld [vmem:[%s246 + $0x158] sm:$0xff]
    %v1274 = vld [vmem:[%s246 + $0x168] sm:$0xff]
    %v1275 = vld [vmem:[%s246 + $0x170] sm:$0xff]
    %v1276 = vld [vmem:[%s246 + $0x1b0] sm:$0xff]
    %v1277 = vld [vmem:[%s246 + $0x1b8] sm:$0xff]
    %v1278 = vld [vmem:[%s246 + $0x1c8] sm:$0xff]
    %v1279 = vld [vmem:[%s246 + $0x1d0] sm:$0xff]
    %v1280 = vld [vmem:[%s246 + $0x1e0] sm:$0xff]
    %v1281 = vld [vmem:[%s246 + $0x1e8] sm:$0xff]
    %v1282 = vld [vmem:[%s246 + $0x1f8] sm:$0xff]
    %v1283 = vld [vmem:[%s246 + $0x200] sm:$0xff]
    %v1284 = vld [vmem:[%s246 + $0x210] sm:$0xff]
    %v1285 = vld [vmem:[%s246 + $0x218] sm:$0xff]
    %v1286 = vld [vmem:[%s246 + $0x228] sm:$0xff]
    %v1287 = vld [vmem:[%s246 + $0x230] sm:$0xff]
    %v1288 = vld [vmem:[%s246 + $0x240] sm:$0xff]
    %v1289 = vld [vmem:[%s246 + $0x248] sm:$0xff]
    %v1290 = vld [vmem:[%s246 + $0x258] sm:$0xff]
    %v1291 = vld [vmem:[%s246 + $0x260] sm:$0xff]
    %v1292 = vld [vmem:[%s246 + $0x270] sm:$0xff]
    %v1293 = vld [vmem:[%s246 + $0x278] sm:$0xff]
    %v1294 = vld [vmem:[%s246 + $0x288] sm:$0xff]
    %v1295 = vld [vmem:[%s246 + $0x290] sm:$0xff]
    %v1296 = vld [vmem:[%s246 + $0x2a0] sm:$0xff]
    %v1297 = vld [vmem:[%s246 + $0x2a8] sm:$0xff]
    %v1298 = vld [vmem:[%s246 + $0x2b8] sm:$0xff]
    %v1299 = vld [vmem:[%s246 + $0x2c0] sm:$0xff]
    %v1300 = vld [vmem:[%s246 + $0x2d0] sm:$0xff]
    %v1301 = vld [vmem:[%s246 + $0x2d8] sm:$0xff]
    %v1302 = vld [vmem:[%s246 + $0x2e8] sm:$0xff]
    %v1303 = vld [vmem:[%s246 + $0x2f0] sm:$0xff]
    %v1304 = vld [vmem:[%s246 + $0x300] sm:$0xff]
    %v1305 = vld [vmem:[%s246 + $0x308] sm:$0xff]
    %v1306 = vld [vmem:[%s246 + $0x318] sm:$0xff]
    %v1307 = vld [vmem:[%s246 + $0x320] sm:$0xff]
    %s1308 = scalar_lea.vmem [#allocation7], 384
    %v1309 = vld [vmem:[%s1308] sm:$0xff]
    %v1310 = vld [vmem:[%s1308 + $0x8] sm:$0xff]
    %v1311 = vld [vmem:[%s1308 + $0x10] sm:$0xff]
    %v1312 = vld [vmem:[%s1308 + $0x18] sm:$0xff]
    %v1313 = vld [vmem:[%s1308 + $0x20] sm:$0xff]
    %v1314 = vld [vmem:[%s1308 + $0x28] sm:$0xff]
    %v1315 = vld [vmem:[%s1308 + $0x30] sm:$0xff]
    %v1316 = vld [vmem:[%s1308 + $0x38] sm:$0xff]
    %v1317 = vld [vmem:[%s1308 + $0x40] sm:$0xff]
    %v1318 = vld [vmem:[%s1308 + $0x48] sm:$0xff]
    %v1319 = vld [vmem:[%s1308 + $0x50] sm:$0xff]
    %v1320 = vld [vmem:[%s1308 + $0x58] sm:$0xff]
    %v1321 = vld [vmem:[%s1308 + $0x60] sm:$0xff]
    %v1322 = vld [vmem:[%s1308 + $0x68] sm:$0xff]
    %v1323 = vld [vmem:[%s1308 + $0x70] sm:$0xff]
    %v1324 = vld [vmem:[%s1308 + $0x78] sm:$0xff]
    %1325 = vmatpush.msra.mxu0 %v1324
    %1326 = vmatpush.msra.mxu0 %v1323
    %1327 = vmatpush.msra.mxu0 %v1322
    %1328 = vmatpush.msra.mxu0 %v1321
    %1329 = vmatpush.msra.mxu0 %v1320
    %1330 = vmatpush.msra.mxu0 %v1319
    %1331 = vmatpush.msra.mxu0 %v1318
    %1332 = vmatpush.msra.mxu0 %v1317
    %1333 = vmatpush.msra.mxu0 %v1316
    %1334 = vmatpush.msra.mxu0 %v1315
    %1335 = vmatpush.msra.mxu0 %v1314
    %1336 = vmatpush.msra.mxu0 %v1313
    %1337 = vmatpush.msra.mxu0 %v1312
    %1338 = vmatpush.msra.mxu0 %v1311
    %1339 = vmatpush.msra.mxu0 %v1310
    %1340 = vmatpush.msra.mxu0 %v1309
    %1341 = vmatmul.f32.gmra.mxu0 %v1244
    %v1342 = vpop.f32.mrf.mxu0
    %v1343 = vadd.f32 0.0, %v1342
    %1344 = vmatmul.f32.gmra.mxu0 %v1245
    %v1345 = vpop.f32.mrf.mxu0
    %v1346 = vadd.f32 0.0, %v1345
    %1347 = vmatmul.f32.gmra.mxu0 %v1246
    %v1348 = vpop.f32.mrf.mxu0
    %v1349 = vadd.f32 0.0, %v1348
    %1350 = vmatmul.f32.gmra.mxu0 %v1247
    %v1351 = vpop.f32.mrf.mxu0
    %v1352 = vadd.f32 0.0, %v1351
    %1353 = vmatmul.f32.gmra.mxu0 %v1248
    %v1354 = vpop.f32.mrf.mxu0
    %v1355 = vadd.f32 0.0, %v1354
    %1356 = vmatmul.f32.gmra.mxu0 %v1249
    %v1357 = vpop.f32.mrf.mxu0
    %v1358 = vadd.f32 0.0, %v1357
    %1359 = vmatmul.f32.gmra.mxu0 %v1250
    %v1360 = vpop.f32.mrf.mxu0
    %v1361 = vadd.f32 0.0, %v1360
    %1362 = vmatmul.f32.gmra.mxu0 %v1251
    %v1363 = vpop.f32.mrf.mxu0
    %v1364 = vadd.f32 0.0, %v1363
    %1365 = vmatmul.f32.gmra.mxu0 %v1252
    %v1366 = vpop.f32.mrf.mxu0
    %v1367 = vadd.f32 0.0, %v1366
    %1368 = vmatmul.f32.gmra.mxu0 %v1253
    %v1369 = vpop.f32.mrf.mxu0
    %v1370 = vadd.f32 0.0, %v1369
    %1371 = vmatmul.f32.gmra.mxu0 %v1254
    %v1372 = vpop.f32.mrf.mxu0
    %v1373 = vadd.f32 0.0, %v1372
    %1374 = vmatmul.f32.gmra.mxu0 %v1255
    %v1375 = vpop.f32.mrf.mxu0
    %v1376 = vadd.f32 0.0, %v1375
    %1377 = vmatmul.f32.gmra.mxu0 %v1256
    %v1378 = vpop.f32.mrf.mxu0
    %v1379 = vadd.f32 0.0, %v1378
    %1380 = vmatmul.f32.gmra.mxu0 %v1257
    %v1381 = vpop.f32.mrf.mxu0
    %v1382 = vadd.f32 0.0, %v1381
    %1383 = vmatmul.f32.gmra.mxu0 %v1258
    %v1384 = vpop.f32.mrf.mxu0
    %v1385 = vadd.f32 0.0, %v1384
    %1386 = vmatmul.f32.gmra.mxu0 %v1259
    %v1387 = vpop.f32.mrf.mxu0
    %v1388 = vadd.f32 0.0, %v1387
    %1389 = vmatmul.f32.gmra.mxu0 %v1260
    %v1390 = vpop.f32.mrf.mxu0
    %v1391 = vadd.f32 0.0, %v1390
    %1392 = vmatmul.f32.gmra.mxu0 %v1261
    %v1393 = vpop.f32.mrf.mxu0
    %v1394 = vadd.f32 0.0, %v1393
    %1395 = vmatmul.f32.gmra.mxu0 %v1262
    %v1396 = vpop.f32.mrf.mxu0
    %v1397 = vadd.f32 0.0, %v1396
    %1398 = vmatmul.f32.gmra.mxu0 %v1263
    %v1399 = vpop.f32.mrf.mxu0
    %v1400 = vadd.f32 0.0, %v1399
    %1401 = vmatmul.f32.gmra.mxu0 %v1264
    %v1402 = vpop.f32.mrf.mxu0
    %v1403 = vadd.f32 0.0, %v1402
    %1404 = vmatmul.f32.gmra.mxu0 %v1265
    %v1405 = vpop.f32.mrf.mxu0
    %v1406 = vadd.f32 0.0, %v1405
    %1407 = vmatmul.f32.gmra.mxu0 %v1266
    %v1408 = vpop.f32.mrf.mxu0
    %v1409 = vadd.f32 0.0, %v1408
    %1410 = vmatmul.f32.gmra.mxu0 %v1267
    %v1411 = vpop.f32.mrf.mxu0
    %v1412 = vadd.f32 0.0, %v1411
    %1413 = vmatmul.f32.gmra.mxu0 %v1268
    %v1414 = vpop.f32.mrf.mxu0
    %v1415 = vadd.f32 0.0, %v1414
    %1416 = vmatmul.f32.gmra.mxu0 %v1269
    %v1417 = vpop.f32.mrf.mxu0
    %v1418 = vadd.f32 0.0, %v1417
    %1419 = vmatmul.f32.gmra.mxu0 %v1270
    %v1420 = vpop.f32.mrf.mxu0
    %v1421 = vadd.f32 0.0, %v1420
    %1422 = vmatmul.f32.gmra.mxu0 %v1271
    %v1423 = vpop.f32.mrf.mxu0
    %v1424 = vadd.f32 0.0, %v1423
    %1425 = vmatmul.f32.gmra.mxu0 %v1272
    %v1426 = vpop.f32.mrf.mxu0
    %v1427 = vadd.f32 0.0, %v1426
    %1428 = vmatmul.f32.gmra.mxu0 %v1273
    %v1429 = vpop.f32.mrf.mxu0
    %v1430 = vadd.f32 0.0, %v1429
    %1431 = vmatmul.f32.gmra.mxu0 %v1274
    %v1432 = vpop.f32.mrf.mxu0
    %v1433 = vadd.f32 0.0, %v1432
    %1434 = vmatmul.f32.gmra.mxu0 %v1275
    %v1435 = vpop.f32.mrf.mxu0
    %v1436 = vadd.f32 0.0, %v1435
    %1437 = vmatmul.f32.gmra.mxu0 %v1276
    %v1438 = vpop.f32.mrf.mxu0
    %v1439 = vadd.f32 0.0, %v1438
    %1440 = vmatmul.f32.gmra.mxu0 %v1277
    %v1441 = vpop.f32.mrf.mxu0
    %v1442 = vadd.f32 0.0, %v1441
    %1443 = vmatmul.f32.gmra.mxu0 %v1278
    %v1444 = vpop.f32.mrf.mxu0
    %v1445 = vadd.f32 0.0, %v1444
    %1446 = vmatmul.f32.gmra.mxu0 %v1279
    %v1447 = vpop.f32.mrf.mxu0
    %v1448 = vadd.f32 0.0, %v1447
    %1449 = vmatmul.f32.gmra.mxu0 %v1280
    %v1450 = vpop.f32.mrf.mxu0
    %v1451 = vadd.f32 0.0, %v1450
    %1452 = vmatmul.f32.gmra.mxu0 %v1281
    %v1453 = vpop.f32.mrf.mxu0
    %v1454 = vadd.f32 0.0, %v1453
    %1455 = vmatmul.f32.gmra.mxu0 %v1282
    %v1456 = vpop.f32.mrf.mxu0
    %v1457 = vadd.f32 0.0, %v1456
    %1458 = vmatmul.f32.gmra.mxu0 %v1283
    %v1459 = vpop.f32.mrf.mxu0
    %v1460 = vadd.f32 0.0, %v1459
    %1461 = vmatmul.f32.gmra.mxu0 %v1284
    %v1462 = vpop.f32.mrf.mxu0
    %v1463 = vadd.f32 0.0, %v1462
    %1464 = vmatmul.f32.gmra.mxu0 %v1285
    %v1465 = vpop.f32.mrf.mxu0
    %v1466 = vadd.f32 0.0, %v1465
    %1467 = vmatmul.f32.gmra.mxu0 %v1286
    %v1468 = vpop.f32.mrf.mxu0
    %v1469 = vadd.f32 0.0, %v1468
    %1470 = vmatmul.f32.gmra.mxu0 %v1287
    %v1471 = vpop.f32.mrf.mxu0
    %v1472 = vadd.f32 0.0, %v1471
    %1473 = vmatmul.f32.gmra.mxu0 %v1288
    %v1474 = vpop.f32.mrf.mxu0
    %v1475 = vadd.f32 0.0, %v1474
    %1476 = vmatmul.f32.gmra.mxu0 %v1289
    %v1477 = vpop.f32.mrf.mxu0
    %v1478 = vadd.f32 0.0, %v1477
    %1479 = vmatmul.f32.gmra.mxu0 %v1290
    %v1480 = vpop.f32.mrf.mxu0
    %v1481 = vadd.f32 0.0, %v1480
    %1482 = vmatmul.f32.gmra.mxu0 %v1291
    %v1483 = vpop.f32.mrf.mxu0
    %v1484 = vadd.f32 0.0, %v1483
    %1485 = vmatmul.f32.gmra.mxu0 %v1292
    %v1486 = vpop.f32.mrf.mxu0
    %v1487 = vadd.f32 0.0, %v1486
    %1488 = vmatmul.f32.gmra.mxu0 %v1293
    %v1489 = vpop.f32.mrf.mxu0
    %v1490 = vadd.f32 0.0, %v1489
    %1491 = vmatmul.f32.gmra.mxu0 %v1294
    %v1492 = vpop.f32.mrf.mxu0
    %v1493 = vadd.f32 0.0, %v1492
    %1494 = vmatmul.f32.gmra.mxu0 %v1295
    %v1495 = vpop.f32.mrf.mxu0
    %v1496 = vadd.f32 0.0, %v1495
    %1497 = vmatmul.f32.gmra.mxu0 %v1296
    %v1498 = vpop.f32.mrf.mxu0
    %v1499 = vadd.f32 0.0, %v1498
    %1500 = vmatmul.f32.gmra.mxu0 %v1297
    %v1501 = vpop.f32.mrf.mxu0
    %v1502 = vadd.f32 0.0, %v1501
    %1503 = vmatmul.f32.gmra.mxu0 %v1298
    %v1504 = vpop.f32.mrf.mxu0
    %v1505 = vadd.f32 0.0, %v1504
    %1506 = vmatmul.f32.gmra.mxu0 %v1299
    %v1507 = vpop.f32.mrf.mxu0
    %v1508 = vadd.f32 0.0, %v1507
    %1509 = vmatmul.f32.gmra.mxu0 %v1300
    %v1510 = vpop.f32.mrf.mxu0
    %v1511 = vadd.f32 0.0, %v1510
    %1512 = vmatmul.f32.gmra.mxu0 %v1301
    %v1513 = vpop.f32.mrf.mxu0
    %v1514 = vadd.f32 0.0, %v1513
    %1515 = vmatmul.f32.gmra.mxu0 %v1302
    %v1516 = vpop.f32.mrf.mxu0
    %v1517 = vadd.f32 0.0, %v1516
    %1518 = vmatmul.f32.gmra.mxu0 %v1303
    %v1519 = vpop.f32.mrf.mxu0
    %v1520 = vadd.f32 0.0, %v1519
    %1521 = vmatmul.f32.gmra.mxu0 %v1304
    %v1522 = vpop.f32.mrf.mxu0
    %v1523 = vadd.f32 0.0, %v1522
    %1524 = vmatmul.f32.gmra.mxu0 %v1305
    %v1525 = vpop.f32.mrf.mxu0
    %v1526 = vadd.f32 0.0, %v1525
    %1527 = vmatmul.f32.gmra.mxu0 %v1306
    %v1528 = vpop.f32.mrf.mxu0
    %v1529 = vadd.f32 0.0, %v1528
    %1530 = vmatmul.f32.gmra.mxu0 %v1307
    %v1531 = vpop.f32.mrf.mxu0
    %v1532 = vadd.f32 0.0, %v1531
    %1533 = vdwg.mxu0
    %v1534 = vadd.f32 %v1180, %v1343
    %v1535 = vadd.f32 %v1181, %v1346
    %v1536 = vadd.f32 %v1182, %v1349
    %v1537 = vadd.f32 %v1183, %v1352
    %v1538 = vadd.f32 %v1184, %v1355
    %v1539 = vadd.f32 %v1185, %v1358
    %v1540 = vadd.f32 %v1186, %v1361
    %v1541 = vadd.f32 %v1187, %v1364
    %v1542 = vadd.f32 %v1188, %v1367
    %v1543 = vadd.f32 %v1189, %v1370
    %v1544 = vadd.f32 %v1190, %v1373
    %v1545 = vadd.f32 %v1191, %v1376
    %v1546 = vadd.f32 %v1192, %v1379
    %v1547 = vadd.f32 %v1193, %v1382
    %v1548 = vadd.f32 %v1194, %v1385
    %v1549 = vadd.f32 %v1195, %v1388
    %v1550 = vadd.f32 %v1196, %v1391
    %v1551 = vadd.f32 %v1197, %v1394
    %v1552 = vadd.f32 %v1198, %v1397
    %v1553 = vadd.f32 %v1199, %v1400
    %v1554 = vadd.f32 %v1200, %v1403
    %v1555 = vadd.f32 %v1201, %v1406
    %v1556 = vadd.f32 %v1202, %v1409
    %v1557 = vadd.f32 %v1203, %v1412
    %v1558 = vadd.f32 %v1204, %v1415
    %v1559 = vadd.f32 %v1205, %v1418
    %v1560 = vadd.f32 %v1206, %v1421
    %v1561 = vadd.f32 %v1207, %v1424
    %v1562 = vadd.f32 %v1208, %v1427
    %v1563 = vadd.f32 %v1209, %v1430
    %v1564 = vadd.f32 %v1210, %v1433
    %v1565 = vadd.f32 %v1211, %v1436
    %v1566 = vadd.f32 %v1212, %v1439
    %v1567 = vadd.f32 %v1213, %v1442
    %v1568 = vadd.f32 %v1214, %v1445
    %v1569 = vadd.f32 %v1215, %v1448
    %v1570 = vadd.f32 %v1216, %v1451
    %v1571 = vadd.f32 %v1217, %v1454
    %v1572 = vadd.f32 %v1218, %v1457
    %v1573 = vadd.f32 %v1219, %v1460
    %v1574 = vadd.f32 %v1220, %v1463
    %v1575 = vadd.f32 %v1221, %v1466
    %v1576 = vadd.f32 %v1222, %v1469
    %v1577 = vadd.f32 %v1223, %v1472
    %v1578 = vadd.f32 %v1224, %v1475
    %v1579 = vadd.f32 %v1225, %v1478
    %v1580 = vadd.f32 %v1226, %v1481
    %v1581 = vadd.f32 %v1227, %v1484
    %v1582 = vadd.f32 %v1228, %v1487
    %v1583 = vadd.f32 %v1229, %v1490
    %v1584 = vadd.f32 %v1230, %v1493
    %v1585 = vadd.f32 %v1231, %v1496
    %v1586 = vadd.f32 %v1232, %v1499
    %v1587 = vadd.f32 %v1233, %v1502
    %v1588 = vadd.f32 %v1234, %v1505
    %v1589 = vadd.f32 %v1235, %v1508
    %v1590 = vadd.f32 %v1236, %v1511
    %v1591 = vadd.f32 %v1237, %v1514
    %v1592 = vadd.f32 %v1238, %v1517
    %v1593 = vadd.f32 %v1239, %v1520
    %v1594 = vadd.f32 %v1240, %v1523
    %v1595 = vadd.f32 %v1241, %v1526
    %v1596 = vadd.f32 %v1242, %v1529
    %v1597 = vadd.f32 %v1243, %v1532
    %v1598 = vld [vmem:[%s246 + $0x1] sm:$0xff]
    %v1599 = vld [vmem:[%s246 + $0x9] sm:$0xff]
    %v1600 = vld [vmem:[%s246 + $0x19] sm:$0xff]
    %v1601 = vld [vmem:[%s246 + $0x21] sm:$0xff]
    %v1602 = vld [vmem:[%s246 + $0x31] sm:$0xff]
    %v1603 = vld [vmem:[%s246 + $0x39] sm:$0xff]
    %v1604 = vld [vmem:[%s246 + $0x49] sm:$0xff]
    %v1605 = vld [vmem:[%s246 + $0x51] sm:$0xff]
    %v1606 = vld [vmem:[%s246 + $0x61] sm:$0xff]
    %v1607 = vld [vmem:[%s246 + $0x69] sm:$0xff]
    %v1608 = vld [vmem:[%s246 + $0x79] sm:$0xff]
    %v1609 = vld [vmem:[%s246 + $0x81] sm:$0xff]
    %v1610 = vld [vmem:[%s246 + $0x91] sm:$0xff]
    %v1611 = vld [vmem:[%s246 + $0x99] sm:$0xff]
    %v1612 = vld [vmem:[%s246 + $0xa9] sm:$0xff]
    %v1613 = vld [vmem:[%s246 + $0xb1] sm:$0xff]
    %v1614 = vld [vmem:[%s246 + $0xc1] sm:$0xff]
    %v1615 = vld [vmem:[%s246 + $0xc9] sm:$0xff]
    %v1616 = vld [vmem:[%s246 + $0xd9] sm:$0xff]
    %v1617 = vld [vmem:[%s246 + $0xe1] sm:$0xff]
    %v1618 = vld [vmem:[%s246 + $0xf1] sm:$0xff]
    %v1619 = vld [vmem:[%s246 + $0xf9] sm:$0xff]
    %v1620 = vld [vmem:[%s246 + $0x109] sm:$0xff]
    %v1621 = vld [vmem:[%s246 + $0x111] sm:$0xff]
    %v1622 = vld [vmem:[%s246 + $0x121] sm:$0xff]
    %v1623 = vld [vmem:[%s246 + $0x129] sm:$0xff]
    %v1624 = vld [vmem:[%s246 + $0x139] sm:$0xff]
    %v1625 = vld [vmem:[%s246 + $0x141] sm:$0xff]
    %v1626 = vld [vmem:[%s246 + $0x151] sm:$0xff]
    %v1627 = vld [vmem:[%s246 + $0x159] sm:$0xff]
    %v1628 = vld [vmem:[%s246 + $0x169] sm:$0xff]
    %v1629 = vld [vmem:[%s246 + $0x171] sm:$0xff]
    %v1630 = vld [vmem:[%s246 + $0x1b1] sm:$0xff]
    %v1631 = vld [vmem:[%s246 + $0x1b9] sm:$0xff]
    %v1632 = vld [vmem:[%s246 + $0x1c9] sm:$0xff]
    %v1633 = vld [vmem:[%s246 + $0x1d1] sm:$0xff]
    %v1634 = vld [vmem:[%s246 + $0x1e1] sm:$0xff]
    %v1635 = vld [vmem:[%s246 + $0x1e9] sm:$0xff]
    %v1636 = vld [vmem:[%s246 + $0x1f9] sm:$0xff]
    %v1637 = vld [vmem:[%s246 + $0x201] sm:$0xff]
    %v1638 = vld [vmem:[%s246 + $0x211] sm:$0xff]
    %v1639 = vld [vmem:[%s246 + $0x219] sm:$0xff]
    %v1640 = vld [vmem:[%s246 + $0x229] sm:$0xff]
    %v1641 = vld [vmem:[%s246 + $0x231] sm:$0xff]
    %v1642 = vld [vmem:[%s246 + $0x241] sm:$0xff]
    %v1643 = vld [vmem:[%s246 + $0x249] sm:$0xff]
    %v1644 = vld [vmem:[%s246 + $0x259] sm:$0xff]
    %v1645 = vld [vmem:[%s246 + $0x261] sm:$0xff]
    %v1646 = vld [vmem:[%s246 + $0x271] sm:$0xff]
    %v1647 = vld [vmem:[%s246 + $0x279] sm:$0xff]
    %v1648 = vld [vmem:[%s246 + $0x289] sm:$0xff]
    %v1649 = vld [vmem:[%s246 + $0x291] sm:$0xff]
    %v1650 = vld [vmem:[%s246 + $0x2a1] sm:$0xff]
    %v1651 = vld [vmem:[%s246 + $0x2a9] sm:$0xff]
    %v1652 = vld [vmem:[%s246 + $0x2b9] sm:$0xff]
    %v1653 = vld [vmem:[%s246 + $0x2c1] sm:$0xff]
    %v1654 = vld [vmem:[%s246 + $0x2d1] sm:$0xff]
    %v1655 = vld [vmem:[%s246 + $0x2d9] sm:$0xff]
    %v1656 = vld [vmem:[%s246 + $0x2e9] sm:$0xff]
    %v1657 = vld [vmem:[%s246 + $0x2f1] sm:$0xff]
    %v1658 = vld [vmem:[%s246 + $0x301] sm:$0xff]
    %v1659 = vld [vmem:[%s246 + $0x309] sm:$0xff]
    %v1660 = vld [vmem:[%s246 + $0x319] sm:$0xff]
    %v1661 = vld [vmem:[%s246 + $0x321] sm:$0xff]
    %s1662 = scalar_lea.vmem [#allocation7], 512
    %v1663 = vld [vmem:[%s1662] sm:$0xff]
    %v1664 = vld [vmem:[%s1662 + $0x8] sm:$0xff]
    %v1665 = vld [vmem:[%s1662 + $0x10] sm:$0xff]
    %v1666 = vld [vmem:[%s1662 + $0x18] sm:$0xff]
    %v1667 = vld [vmem:[%s1662 + $0x20] sm:$0xff]
    %v1668 = vld [vmem:[%s1662 + $0x28] sm:$0xff]
    %v1669 = vld [vmem:[%s1662 + $0x30] sm:$0xff]
    %v1670 = vld [vmem:[%s1662 + $0x38] sm:$0xff]
    %v1671 = vld [vmem:[%s1662 + $0x40] sm:$0xff]
    %v1672 = vld [vmem:[%s1662 + $0x48] sm:$0xff]
    %v1673 = vld [vmem:[%s1662 + $0x50] sm:$0xff]
    %v1674 = vld [vmem:[%s1662 + $0x58] sm:$0xff]
    %v1675 = vld [vmem:[%s1662 + $0x60] sm:$0xff]
    %v1676 = vld [vmem:[%s1662 + $0x68] sm:$0xff]
    %v1677 = vld [vmem:[%s1662 + $0x70] sm:$0xff]
    %v1678 = vld [vmem:[%s1662 + $0x78] sm:$0xff]
    %1679 = vmatpush.msra.mxu0 %v1678
    %1680 = vmatpush.msra.mxu0 %v1677
    %1681 = vmatpush.msra.mxu0 %v1676
    %1682 = vmatpush.msra.mxu0 %v1675
    %1683 = vmatpush.msra.mxu0 %v1674
    %1684 = vmatpush.msra.mxu0 %v1673
    %1685 = vmatpush.msra.mxu0 %v1672
    %1686 = vmatpush.msra.mxu0 %v1671
    %1687 = vmatpush.msra.mxu0 %v1670
    %1688 = vmatpush.msra.mxu0 %v1669
    %1689 = vmatpush.msra.mxu0 %v1668
    %1690 = vmatpush.msra.mxu0 %v1667
    %1691 = vmatpush.msra.mxu0 %v1666
    %1692 = vmatpush.msra.mxu0 %v1665
    %1693 = vmatpush.msra.mxu0 %v1664
    %1694 = vmatpush.msra.mxu0 %v1663
    %1695 = vmatmul.f32.gmra.mxu0 %v1598
    %v1696 = vpop.f32.mrf.mxu0
    %v1697 = vadd.f32 0.0, %v1696
    %1698 = vmatmul.f32.gmra.mxu0 %v1599
    %v1699 = vpop.f32.mrf.mxu0
    %v1700 = vadd.f32 0.0, %v1699
    %1701 = vmatmul.f32.gmra.mxu0 %v1600
    %v1702 = vpop.f32.mrf.mxu0
    %v1703 = vadd.f32 0.0, %v1702
    %1704 = vmatmul.f32.gmra.mxu0 %v1601
    %v1705 = vpop.f32.mrf.mxu0
    %v1706 = vadd.f32 0.0, %v1705
    %1707 = vmatmul.f32.gmra.mxu0 %v1602
    %v1708 = vpop.f32.mrf.mxu0
    %v1709 = vadd.f32 0.0, %v1708
    %1710 = vmatmul.f32.gmra.mxu0 %v1603
    %v1711 = vpop.f32.mrf.mxu0
    %v1712 = vadd.f32 0.0, %v1711
    %1713 = vmatmul.f32.gmra.mxu0 %v1604
    %v1714 = vpop.f32.mrf.mxu0
    %v1715 = vadd.f32 0.0, %v1714
    %1716 = vmatmul.f32.gmra.mxu0 %v1605
    %v1717 = vpop.f32.mrf.mxu0
    %v1718 = vadd.f32 0.0, %v1717
    %1719 = vmatmul.f32.gmra.mxu0 %v1606
    %v1720 = vpop.f32.mrf.mxu0
    %v1721 = vadd.f32 0.0, %v1720
    %1722 = vmatmul.f32.gmra.mxu0 %v1607
    %v1723 = vpop.f32.mrf.mxu0
    %v1724 = vadd.f32 0.0, %v1723
    %1725 = vmatmul.f32.gmra.mxu0 %v1608
    %v1726 = vpop.f32.mrf.mxu0
    %v1727 = vadd.f32 0.0, %v1726
    %1728 = vmatmul.f32.gmra.mxu0 %v1609
    %v1729 = vpop.f32.mrf.mxu0
    %v1730 = vadd.f32 0.0, %v1729
    %1731 = vmatmul.f32.gmra.mxu0 %v1610
    %v1732 = vpop.f32.mrf.mxu0
    %v1733 = vadd.f32 0.0, %v1732
    %1734 = vmatmul.f32.gmra.mxu0 %v1611
    %v1735 = vpop.f32.mrf.mxu0
    %v1736 = vadd.f32 0.0, %v1735
    %1737 = vmatmul.f32.gmra.mxu0 %v1612
    %v1738 = vpop.f32.mrf.mxu0
    %v1739 = vadd.f32 0.0, %v1738
    %1740 = vmatmul.f32.gmra.mxu0 %v1613
    %v1741 = vpop.f32.mrf.mxu0
    %v1742 = vadd.f32 0.0, %v1741
    %1743 = vmatmul.f32.gmra.mxu0 %v1614
    %v1744 = vpop.f32.mrf.mxu0
    %v1745 = vadd.f32 0.0, %v1744
    %1746 = vmatmul.f32.gmra.mxu0 %v1615
    %v1747 = vpop.f32.mrf.mxu0
    %v1748 = vadd.f32 0.0, %v1747
    %1749 = vmatmul.f32.gmra.mxu0 %v1616
    %v1750 = vpop.f32.mrf.mxu0
    %v1751 = vadd.f32 0.0, %v1750
    %1752 = vmatmul.f32.gmra.mxu0 %v1617
    %v1753 = vpop.f32.mrf.mxu0
    %v1754 = vadd.f32 0.0, %v1753
    %1755 = vmatmul.f32.gmra.mxu0 %v1618
    %v1756 = vpop.f32.mrf.mxu0
    %v1757 = vadd.f32 0.0, %v1756
    %1758 = vmatmul.f32.gmra.mxu0 %v1619
    %v1759 = vpop.f32.mrf.mxu0
    %v1760 = vadd.f32 0.0, %v1759
    %1761 = vmatmul.f32.gmra.mxu0 %v1620
    %v1762 = vpop.f32.mrf.mxu0
    %v1763 = vadd.f32 0.0, %v1762
    %1764 = vmatmul.f32.gmra.mxu0 %v1621
    %v1765 = vpop.f32.mrf.mxu0
    %v1766 = vadd.f32 0.0, %v1765
    %1767 = vmatmul.f32.gmra.mxu0 %v1622
    %v1768 = vpop.f32.mrf.mxu0
    %v1769 = vadd.f32 0.0, %v1768
    %1770 = vmatmul.f32.gmra.mxu0 %v1623
    %v1771 = vpop.f32.mrf.mxu0
    %v1772 = vadd.f32 0.0, %v1771
    %1773 = vmatmul.f32.gmra.mxu0 %v1624
    %v1774 = vpop.f32.mrf.mxu0
    %v1775 = vadd.f32 0.0, %v1774
    %1776 = vmatmul.f32.gmra.mxu0 %v1625
    %v1777 = vpop.f32.mrf.mxu0
    %v1778 = vadd.f32 0.0, %v1777
    %1779 = vmatmul.f32.gmra.mxu0 %v1626
    %v1780 = vpop.f32.mrf.mxu0
    %v1781 = vadd.f32 0.0, %v1780
    %1782 = vmatmul.f32.gmra.mxu0 %v1627
    %v1783 = vpop.f32.mrf.mxu0
    %v1784 = vadd.f32 0.0, %v1783
    %1785 = vmatmul.f32.gmra.mxu0 %v1628
    %v1786 = vpop.f32.mrf.mxu0
    %v1787 = vadd.f32 0.0, %v1786
    %1788 = vmatmul.f32.gmra.mxu0 %v1629
    %v1789 = vpop.f32.mrf.mxu0
    %v1790 = vadd.f32 0.0, %v1789
    %1791 = vmatmul.f32.gmra.mxu0 %v1630
    %v1792 = vpop.f32.mrf.mxu0
    %v1793 = vadd.f32 0.0, %v1792
    %1794 = vmatmul.f32.gmra.mxu0 %v1631
    %v1795 = vpop.f32.mrf.mxu0
    %v1796 = vadd.f32 0.0, %v1795
    %1797 = vmatmul.f32.gmra.mxu0 %v1632
    %v1798 = vpop.f32.mrf.mxu0
    %v1799 = vadd.f32 0.0, %v1798
    %1800 = vmatmul.f32.gmra.mxu0 %v1633
    %v1801 = vpop.f32.mrf.mxu0
    %v1802 = vadd.f32 0.0, %v1801
    %1803 = vmatmul.f32.gmra.mxu0 %v1634
    %v1804 = vpop.f32.mrf.mxu0
    %v1805 = vadd.f32 0.0, %v1804
    %1806 = vmatmul.f32.gmra.mxu0 %v1635
    %v1807 = vpop.f32.mrf.mxu0
    %v1808 = vadd.f32 0.0, %v1807
    %1809 = vmatmul.f32.gmra.mxu0 %v1636
    %v1810 = vpop.f32.mrf.mxu0
    %v1811 = vadd.f32 0.0, %v1810
    %1812 = vmatmul.f32.gmra.mxu0 %v1637
    %v1813 = vpop.f32.mrf.mxu0
    %v1814 = vadd.f32 0.0, %v1813
    %1815 = vmatmul.f32.gmra.mxu0 %v1638
    %v1816 = vpop.f32.mrf.mxu0
    %v1817 = vadd.f32 0.0, %v1816
    %1818 = vmatmul.f32.gmra.mxu0 %v1639
    %v1819 = vpop.f32.mrf.mxu0
    %v1820 = vadd.f32 0.0, %v1819
    %1821 = vmatmul.f32.gmra.mxu0 %v1640
    %v1822 = vpop.f32.mrf.mxu0
    %v1823 = vadd.f32 0.0, %v1822
    %1824 = vmatmul.f32.gmra.mxu0 %v1641
    %v1825 = vpop.f32.mrf.mxu0
    %v1826 = vadd.f32 0.0, %v1825
    %1827 = vmatmul.f32.gmra.mxu0 %v1642
    %v1828 = vpop.f32.mrf.mxu0
    %v1829 = vadd.f32 0.0, %v1828
    %1830 = vmatmul.f32.gmra.mxu0 %v1643
    %v1831 = vpop.f32.mrf.mxu0
    %v1832 = vadd.f32 0.0, %v1831
    %1833 = vmatmul.f32.gmra.mxu0 %v1644
    %v1834 = vpop.f32.mrf.mxu0
    %v1835 = vadd.f32 0.0, %v1834
    %1836 = vmatmul.f32.gmra.mxu0 %v1645
    %v1837 = vpop.f32.mrf.mxu0
    %v1838 = vadd.f32 0.0, %v1837
    %1839 = vmatmul.f32.gmra.mxu0 %v1646
    %v1840 = vpop.f32.mrf.mxu0
    %v1841 = vadd.f32 0.0, %v1840
    %1842 = vmatmul.f32.gmra.mxu0 %v1647
    %v1843 = vpop.f32.mrf.mxu0
    %v1844 = vadd.f32 0.0, %v1843
    %1845 = vmatmul.f32.gmra.mxu0 %v1648
    %v1846 = vpop.f32.mrf.mxu0
    %v1847 = vadd.f32 0.0, %v1846
    %1848 = vmatmul.f32.gmra.mxu0 %v1649
    %v1849 = vpop.f32.mrf.mxu0
    %v1850 = vadd.f32 0.0, %v1849
    %1851 = vmatmul.f32.gmra.mxu0 %v1650
    %v1852 = vpop.f32.mrf.mxu0
    %v1853 = vadd.f32 0.0, %v1852
    %1854 = vmatmul.f32.gmra.mxu0 %v1651
    %v1855 = vpop.f32.mrf.mxu0
    %v1856 = vadd.f32 0.0, %v1855
    %1857 = vmatmul.f32.gmra.mxu0 %v1652
    %v1858 = vpop.f32.mrf.mxu0
    %v1859 = vadd.f32 0.0, %v1858
    %1860 = vmatmul.f32.gmra.mxu0 %v1653
    %v1861 = vpop.f32.mrf.mxu0
    %v1862 = vadd.f32 0.0, %v1861
    %1863 = vmatmul.f32.gmra.mxu0 %v1654
    %v1864 = vpop.f32.mrf.mxu0
    %v1865 = vadd.f32 0.0, %v1864
    %1866 = vmatmul.f32.gmra.mxu0 %v1655
    %v1867 = vpop.f32.mrf.mxu0
    %v1868 = vadd.f32 0.0, %v1867
    %1869 = vmatmul.f32.gmra.mxu0 %v1656
    %v1870 = vpop.f32.mrf.mxu0
    %v1871 = vadd.f32 0.0, %v1870
    %1872 = vmatmul.f32.gmra.mxu0 %v1657
    %v1873 = vpop.f32.mrf.mxu0
    %v1874 = vadd.f32 0.0, %v1873
    %1875 = vmatmul.f32.gmra.mxu0 %v1658
    %v1876 = vpop.f32.mrf.mxu0
    %v1877 = vadd.f32 0.0, %v1876
    %1878 = vmatmul.f32.gmra.mxu0 %v1659
    %v1879 = vpop.f32.mrf.mxu0
    %v1880 = vadd.f32 0.0, %v1879
    %1881 = vmatmul.f32.gmra.mxu0 %v1660
    %v1882 = vpop.f32.mrf.mxu0
    %v1883 = vadd.f32 0.0, %v1882
    %1884 = vmatmul.f32.gmra.mxu0 %v1661
    %v1885 = vpop.f32.mrf.mxu0
    %v1886 = vadd.f32 0.0, %v1885
    %1887 = vdwg.mxu0
    %v1888 = vadd.f32 %v1534, %v1697
    %v1889 = vadd.f32 %v1535, %v1700
    %v1890 = vadd.f32 %v1536, %v1703
    %v1891 = vadd.f32 %v1537, %v1706
    %v1892 = vadd.f32 %v1538, %v1709
    %v1893 = vadd.f32 %v1539, %v1712
    %v1894 = vadd.f32 %v1540, %v1715
    %v1895 = vadd.f32 %v1541, %v1718
    %v1896 = vadd.f32 %v1542, %v1721
    %v1897 = vadd.f32 %v1543, %v1724
    %v1898 = vadd.f32 %v1544, %v1727
    %v1899 = vadd.f32 %v1545, %v1730
    %v1900 = vadd.f32 %v1546, %v1733
    %v1901 = vadd.f32 %v1547, %v1736
    %v1902 = vadd.f32 %v1548, %v1739
    %v1903 = vadd.f32 %v1549, %v1742
    %v1904 = vadd.f32 %v1550, %v1745
    %v1905 = vadd.f32 %v1551, %v1748
    %v1906 = vadd.f32 %v1552, %v1751
    %v1907 = vadd.f32 %v1553, %v1754
    %v1908 = vadd.f32 %v1554, %v1757
    %v1909 = vadd.f32 %v1555, %v1760
    %v1910 = vadd.f32 %v1556, %v1763
    %v1911 = vadd.f32 %v1557, %v1766
    %v1912 = vadd.f32 %v1558, %v1769
    %v1913 = vadd.f32 %v1559, %v1772
    %v1914 = vadd.f32 %v1560, %v1775
    %v1915 = vadd.f32 %v1561, %v1778
    %v1916 = vadd.f32 %v1562, %v1781
    %v1917 = vadd.f32 %v1563, %v1784
    %v1918 = vadd.f32 %v1564, %v1787
    %v1919 = vadd.f32 %v1565, %v1790
    %v1920 = vadd.f32 %v1566, %v1793
    %v1921 = vadd.f32 %v1567, %v1796
    %v1922 = vadd.f32 %v1568, %v1799
    %v1923 = vadd.f32 %v1569, %v1802
    %v1924 = vadd.f32 %v1570, %v1805
    %v1925 = vadd.f32 %v1571, %v1808
    %v1926 = vadd.f32 %v1572, %v1811
    %v1927 = vadd.f32 %v1573, %v1814
    %v1928 = vadd.f32 %v1574, %v1817
    %v1929 = vadd.f32 %v1575, %v1820
    %v1930 = vadd.f32 %v1576, %v1823
    %v1931 = vadd.f32 %v1577, %v1826
    %v1932 = vadd.f32 %v1578, %v1829
    %v1933 = vadd.f32 %v1579, %v1832
    %v1934 = vadd.f32 %v1580, %v1835
    %v1935 = vadd.f32 %v1581, %v1838
    %v1936 = vadd.f32 %v1582, %v1841
    %v1937 = vadd.f32 %v1583, %v1844
    %v1938 = vadd.f32 %v1584, %v1847
    %v1939 = vadd.f32 %v1585, %v1850
    %v1940 = vadd.f32 %v1586, %v1853
    %v1941 = vadd.f32 %v1587, %v1856
    %v1942 = vadd.f32 %v1588, %v1859
    %v1943 = vadd.f32 %v1589, %v1862
    %v1944 = vadd.f32 %v1590, %v1865
    %v1945 = vadd.f32 %v1591, %v1868
    %v1946 = vadd.f32 %v1592, %v1871
    %v1947 = vadd.f32 %v1593, %v1874
    %v1948 = vadd.f32 %v1594, %v1877
    %v1949 = vadd.f32 %v1595, %v1880
    %v1950 = vadd.f32 %v1596, %v1883
    %v1951 = vadd.f32 %v1597, %v1886
    %v1952 = vld [vmem:[%s246 + $0x2] sm:$0xff]
    %v1953 = vld [vmem:[%s246 + $0xa] sm:$0xff]
    %v1954 = vld [vmem:[%s246 + $0x1a] sm:$0xff]
    %v1955 = vld [vmem:[%s246 + $0x22] sm:$0xff]
    %v1956 = vld [vmem:[%s246 + $0x32] sm:$0xff]
    %v1957 = vld [vmem:[%s246 + $0x3a] sm:$0xff]
    %v1958 = vld [vmem:[%s246 + $0x4a] sm:$0xff]
    %v1959 = vld [vmem:[%s246 + $0x52] sm:$0xff]
    %v1960 = vld [vmem:[%s246 + $0x62] sm:$0xff]
    %v1961 = vld [vmem:[%s246 + $0x6a] sm:$0xff]
    %v1962 = vld [vmem:[%s246 + $0x7a] sm:$0xff]
    %v1963 = vld [vmem:[%s246 + $0x82] sm:$0xff]
    %v1964 = vld [vmem:[%s246 + $0x92] sm:$0xff]
    %v1965 = vld [vmem:[%s246 + $0x9a] sm:$0xff]
    %v1966 = vld [vmem:[%s246 + $0xaa] sm:$0xff]
    %v1967 = vld [vmem:[%s246 + $0xb2] sm:$0xff]
    %v1968 = vld [vmem:[%s246 + $0xc2] sm:$0xff]
    %v1969 = vld [vmem:[%s246 + $0xca] sm:$0xff]
    %v1970 = vld [vmem:[%s246 + $0xda] sm:$0xff]
    %v1971 = vld [vmem:[%s246 + $0xe2] sm:$0xff]
    %v1972 = vld [vmem:[%s246 + $0xf2] sm:$0xff]
    %v1973 = vld [vmem:[%s246 + $0xfa] sm:$0xff]
    %v1974 = vld [vmem:[%s246 + $0x10a] sm:$0xff]
    %v1975 = vld [vmem:[%s246 + $0x112] sm:$0xff]
    %v1976 = vld [vmem:[%s246 + $0x122] sm:$0xff]
    %v1977 = vld [vmem:[%s246 + $0x12a] sm:$0xff]
    %v1978 = vld [vmem:[%s246 + $0x13a] sm:$0xff]
    %v1979 = vld [vmem:[%s246 + $0x142] sm:$0xff]
    %v1980 = vld [vmem:[%s246 + $0x152] sm:$0xff]
    %v1981 = vld [vmem:[%s246 + $0x15a] sm:$0xff]
    %v1982 = vld [vmem:[%s246 + $0x16a] sm:$0xff]
    %v1983 = vld [vmem:[%s246 + $0x172] sm:$0xff]
    %v1984 = vld [vmem:[%s246 + $0x1b2] sm:$0xff]
    %v1985 = vld [vmem:[%s246 + $0x1ba] sm:$0xff]
    %v1986 = vld [vmem:[%s246 + $0x1ca] sm:$0xff]
    %v1987 = vld [vmem:[%s246 + $0x1d2] sm:$0xff]
    %v1988 = vld [vmem:[%s246 + $0x1e2] sm:$0xff]
    %v1989 = vld [vmem:[%s246 + $0x1ea] sm:$0xff]
    %v1990 = vld [vmem:[%s246 + $0x1fa] sm:$0xff]
    %v1991 = vld [vmem:[%s246 + $0x202] sm:$0xff]
    %v1992 = vld [vmem:[%s246 + $0x212] sm:$0xff]
    %v1993 = vld [vmem:[%s246 + $0x21a] sm:$0xff]
    %v1994 = vld [vmem:[%s246 + $0x22a] sm:$0xff]
    %v1995 = vld [vmem:[%s246 + $0x232] sm:$0xff]
    %v1996 = vld [vmem:[%s246 + $0x242] sm:$0xff]
    %v1997 = vld [vmem:[%s246 + $0x24a] sm:$0xff]
    %v1998 = vld [vmem:[%s246 + $0x25a] sm:$0xff]
    %v1999 = vld [vmem:[%s246 + $0x262] sm:$0xff]
    %v2000 = vld [vmem:[%s246 + $0x272] sm:$0xff]
    %v2001 = vld [vmem:[%s246 + $0x27a] sm:$0xff]
    %v2002 = vld [vmem:[%s246 + $0x28a] sm:$0xff]
    %v2003 = vld [vmem:[%s246 + $0x292] sm:$0xff]
    %v2004 = vld [vmem:[%s246 + $0x2a2] sm:$0xff]
    %v2005 = vld [vmem:[%s246 + $0x2aa] sm:$0xff]
    %v2006 = vld [vmem:[%s246 + $0x2ba] sm:$0xff]
    %v2007 = vld [vmem:[%s246 + $0x2c2] sm:$0xff]
    %v2008 = vld [vmem:[%s246 + $0x2d2] sm:$0xff]
    %v2009 = vld [vmem:[%s246 + $0x2da] sm:$0xff]
    %v2010 = vld [vmem:[%s246 + $0x2ea] sm:$0xff]
    %v2011 = vld [vmem:[%s246 + $0x2f2] sm:$0xff]
    %v2012 = vld [vmem:[%s246 + $0x302] sm:$0xff]
    %v2013 = vld [vmem:[%s246 + $0x30a] sm:$0xff]
    %v2014 = vld [vmem:[%s246 + $0x31a] sm:$0xff]
    %v2015 = vld [vmem:[%s246 + $0x322] sm:$0xff]
    %s2016 = scalar_lea.vmem [#allocation7], 640
    %v2017 = vld [vmem:[%s2016] sm:$0xff]
    %v2018 = vld [vmem:[%s2016 + $0x8] sm:$0xff]
    %v2019 = vld [vmem:[%s2016 + $0x10] sm:$0xff]
    %v2020 = vld [vmem:[%s2016 + $0x18] sm:$0xff]
    %v2021 = vld [vmem:[%s2016 + $0x20] sm:$0xff]
    %v2022 = vld [vmem:[%s2016 + $0x28] sm:$0xff]
    %v2023 = vld [vmem:[%s2016 + $0x30] sm:$0xff]
    %v2024 = vld [vmem:[%s2016 + $0x38] sm:$0xff]
    %v2025 = vld [vmem:[%s2016 + $0x40] sm:$0xff]
    %v2026 = vld [vmem:[%s2016 + $0x48] sm:$0xff]
    %v2027 = vld [vmem:[%s2016 + $0x50] sm:$0xff]
    %v2028 = vld [vmem:[%s2016 + $0x58] sm:$0xff]
    %v2029 = vld [vmem:[%s2016 + $0x60] sm:$0xff]
    %v2030 = vld [vmem:[%s2016 + $0x68] sm:$0xff]
    %v2031 = vld [vmem:[%s2016 + $0x70] sm:$0xff]
    %v2032 = vld [vmem:[%s2016 + $0x78] sm:$0xff]
    %2033 = vmatpush.msra.mxu0 %v2032
    %2034 = vmatpush.msra.mxu0 %v2031
    %2035 = vmatpush.msra.mxu0 %v2030
    %2036 = vmatpush.msra.mxu0 %v2029
    %2037 = vmatpush.msra.mxu0 %v2028
    %2038 = vmatpush.msra.mxu0 %v2027
    %2039 = vmatpush.msra.mxu0 %v2026
    %2040 = vmatpush.msra.mxu0 %v2025
    %2041 = vmatpush.msra.mxu0 %v2024
    %2042 = vmatpush.msra.mxu0 %v2023
    %2043 = vmatpush.msra.mxu0 %v2022
    %2044 = vmatpush.msra.mxu0 %v2021
    %2045 = vmatpush.msra.mxu0 %v2020
    %2046 = vmatpush.msra.mxu0 %v2019
    %2047 = vmatpush.msra.mxu0 %v2018
    %2048 = vmatpush.msra.mxu0 %v2017
    %2049 = vmatmul.f32.gmra.mxu0 %v1952
    %v2050 = vpop.f32.mrf.mxu0
    %v2051 = vadd.f32 0.0, %v2050
    %2052 = vmatmul.f32.gmra.mxu0 %v1953
    %v2053 = vpop.f32.mrf.mxu0
    %v2054 = vadd.f32 0.0, %v2053
    %2055 = vmatmul.f32.gmra.mxu0 %v1954
    %v2056 = vpop.f32.mrf.mxu0
    %v2057 = vadd.f32 0.0, %v2056
    %2058 = vmatmul.f32.gmra.mxu0 %v1955
    %v2059 = vpop.f32.mrf.mxu0
    %v2060 = vadd.f32 0.0, %v2059
    %2061 = vmatmul.f32.gmra.mxu0 %v1956
    %v2062 = vpop.f32.mrf.mxu0
    %v2063 = vadd.f32 0.0, %v2062
    %2064 = vmatmul.f32.gmra.mxu0 %v1957
    %v2065 = vpop.f32.mrf.mxu0
    %v2066 = vadd.f32 0.0, %v2065
    %2067 = vmatmul.f32.gmra.mxu0 %v1958
    %v2068 = vpop.f32.mrf.mxu0
    %v2069 = vadd.f32 0.0, %v2068
    %2070 = vmatmul.f32.gmra.mxu0 %v1959
    %v2071 = vpop.f32.mrf.mxu0
    %v2072 = vadd.f32 0.0, %v2071
    %2073 = vmatmul.f32.gmra.mxu0 %v1960
    %v2074 = vpop.f32.mrf.mxu0
    %v2075 = vadd.f32 0.0, %v2074
    %2076 = vmatmul.f32.gmra.mxu0 %v1961
    %v2077 = vpop.f32.mrf.mxu0
    %v2078 = vadd.f32 0.0, %v2077
    %2079 = vmatmul.f32.gmra.mxu0 %v1962
    %v2080 = vpop.f32.mrf.mxu0
    %v2081 = vadd.f32 0.0, %v2080
    %2082 = vmatmul.f32.gmra.mxu0 %v1963
    %v2083 = vpop.f32.mrf.mxu0
    %v2084 = vadd.f32 0.0, %v2083
    %2085 = vmatmul.f32.gmra.mxu0 %v1964
    %v2086 = vpop.f32.mrf.mxu0
    %v2087 = vadd.f32 0.0, %v2086
    %2088 = vmatmul.f32.gmra.mxu0 %v1965
    %v2089 = vpop.f32.mrf.mxu0
    %v2090 = vadd.f32 0.0, %v2089
    %2091 = vmatmul.f32.gmra.mxu0 %v1966
    %v2092 = vpop.f32.mrf.mxu0
    %v2093 = vadd.f32 0.0, %v2092
    %2094 = vmatmul.f32.gmra.mxu0 %v1967
    %v2095 = vpop.f32.mrf.mxu0
    %v2096 = vadd.f32 0.0, %v2095
    %2097 = vmatmul.f32.gmra.mxu0 %v1968
    %v2098 = vpop.f32.mrf.mxu0
    %v2099 = vadd.f32 0.0, %v2098
    %2100 = vmatmul.f32.gmra.mxu0 %v1969
    %v2101 = vpop.f32.mrf.mxu0
    %v2102 = vadd.f32 0.0, %v2101
    %2103 = vmatmul.f32.gmra.mxu0 %v1970
    %v2104 = vpop.f32.mrf.mxu0
    %v2105 = vadd.f32 0.0, %v2104
    %2106 = vmatmul.f32.gmra.mxu0 %v1971
    %v2107 = vpop.f32.mrf.mxu0
    %v2108 = vadd.f32 0.0, %v2107
    %2109 = vmatmul.f32.gmra.mxu0 %v1972
    %v2110 = vpop.f32.mrf.mxu0
    %v2111 = vadd.f32 0.0, %v2110
    %2112 = vmatmul.f32.gmra.mxu0 %v1973
    %v2113 = vpop.f32.mrf.mxu0
    %v2114 = vadd.f32 0.0, %v2113
    %2115 = vmatmul.f32.gmra.mxu0 %v1974
    %v2116 = vpop.f32.mrf.mxu0
    %v2117 = vadd.f32 0.0, %v2116
    %2118 = vmatmul.f32.gmra.mxu0 %v1975
    %v2119 = vpop.f32.mrf.mxu0
    %v2120 = vadd.f32 0.0, %v2119
    %2121 = vmatmul.f32.gmra.mxu0 %v1976
    %v2122 = vpop.f32.mrf.mxu0
    %v2123 = vadd.f32 0.0, %v2122
    %2124 = vmatmul.f32.gmra.mxu0 %v1977
    %v2125 = vpop.f32.mrf.mxu0
    %v2126 = vadd.f32 0.0, %v2125
    %2127 = vmatmul.f32.gmra.mxu0 %v1978
    %v2128 = vpop.f32.mrf.mxu0
    %v2129 = vadd.f32 0.0, %v2128
    %2130 = vmatmul.f32.gmra.mxu0 %v1979
    %v2131 = vpop.f32.mrf.mxu0
    %v2132 = vadd.f32 0.0, %v2131
    %2133 = vmatmul.f32.gmra.mxu0 %v1980
    %v2134 = vpop.f32.mrf.mxu0
    %v2135 = vadd.f32 0.0, %v2134
    %2136 = vmatmul.f32.gmra.mxu0 %v1981
    %v2137 = vpop.f32.mrf.mxu0
    %v2138 = vadd.f32 0.0, %v2137
    %2139 = vmatmul.f32.gmra.mxu0 %v1982
    %v2140 = vpop.f32.mrf.mxu0
    %v2141 = vadd.f32 0.0, %v2140
    %2142 = vmatmul.f32.gmra.mxu0 %v1983
    %v2143 = vpop.f32.mrf.mxu0
    %v2144 = vadd.f32 0.0, %v2143
    %2145 = vmatmul.f32.gmra.mxu0 %v1984
    %v2146 = vpop.f32.mrf.mxu0
    %v2147 = vadd.f32 0.0, %v2146
    %2148 = vmatmul.f32.gmra.mxu0 %v1985
    %v2149 = vpop.f32.mrf.mxu0
    %v2150 = vadd.f32 0.0, %v2149
    %2151 = vmatmul.f32.gmra.mxu0 %v1986
    %v2152 = vpop.f32.mrf.mxu0
    %v2153 = vadd.f32 0.0, %v2152
    %2154 = vmatmul.f32.gmra.mxu0 %v1987
    %v2155 = vpop.f32.mrf.mxu0
    %v2156 = vadd.f32 0.0, %v2155
    %2157 = vmatmul.f32.gmra.mxu0 %v1988
    %v2158 = vpop.f32.mrf.mxu0
    %v2159 = vadd.f32 0.0, %v2158
    %2160 = vmatmul.f32.gmra.mxu0 %v1989
    %v2161 = vpop.f32.mrf.mxu0
    %v2162 = vadd.f32 0.0, %v2161
    %2163 = vmatmul.f32.gmra.mxu0 %v1990
    %v2164 = vpop.f32.mrf.mxu0
    %v2165 = vadd.f32 0.0, %v2164
    %2166 = vmatmul.f32.gmra.mxu0 %v1991
    %v2167 = vpop.f32.mrf.mxu0
    %v2168 = vadd.f32 0.0, %v2167
    %2169 = vmatmul.f32.gmra.mxu0 %v1992
    %v2170 = vpop.f32.mrf.mxu0
    %v2171 = vadd.f32 0.0, %v2170
    %2172 = vmatmul.f32.gmra.mxu0 %v1993
    %v2173 = vpop.f32.mrf.mxu0
    %v2174 = vadd.f32 0.0, %v2173
    %2175 = vmatmul.f32.gmra.mxu0 %v1994
    %v2176 = vpop.f32.mrf.mxu0
    %v2177 = vadd.f32 0.0, %v2176
    %2178 = vmatmul.f32.gmra.mxu0 %v1995
    %v2179 = vpop.f32.mrf.mxu0
    %v2180 = vadd.f32 0.0, %v2179
    %2181 = vmatmul.f32.gmra.mxu0 %v1996
    %v2182 = vpop.f32.mrf.mxu0
    %v2183 = vadd.f32 0.0, %v2182
    %2184 = vmatmul.f32.gmra.mxu0 %v1997
    %v2185 = vpop.f32.mrf.mxu0
    %v2186 = vadd.f32 0.0, %v2185
    %2187 = vmatmul.f32.gmra.mxu0 %v1998
    %v2188 = vpop.f32.mrf.mxu0
    %v2189 = vadd.f32 0.0, %v2188
    %2190 = vmatmul.f32.gmra.mxu0 %v1999
    %v2191 = vpop.f32.mrf.mxu0
    %v2192 = vadd.f32 0.0, %v2191
    %2193 = vmatmul.f32.gmra.mxu0 %v2000
    %v2194 = vpop.f32.mrf.mxu0
    %v2195 = vadd.f32 0.0, %v2194
    %2196 = vmatmul.f32.gmra.mxu0 %v2001
    %v2197 = vpop.f32.mrf.mxu0
    %v2198 = vadd.f32 0.0, %v2197
    %2199 = vmatmul.f32.gmra.mxu0 %v2002
    %v2200 = vpop.f32.mrf.mxu0
    %v2201 = vadd.f32 0.0, %v2200
    %2202 = vmatmul.f32.gmra.mxu0 %v2003
    %v2203 = vpop.f32.mrf.mxu0
    %v2204 = vadd.f32 0.0, %v2203
    %2205 = vmatmul.f32.gmra.mxu0 %v2004
    %v2206 = vpop.f32.mrf.mxu0
    %v2207 = vadd.f32 0.0, %v2206
    %2208 = vmatmul.f32.gmra.mxu0 %v2005
    %v2209 = vpop.f32.mrf.mxu0
    %v2210 = vadd.f32 0.0, %v2209
    %2211 = vmatmul.f32.gmra.mxu0 %v2006
    %v2212 = vpop.f32.mrf.mxu0
    %v2213 = vadd.f32 0.0, %v2212
    %2214 = vmatmul.f32.gmra.mxu0 %v2007
    %v2215 = vpop.f32.mrf.mxu0
    %v2216 = vadd.f32 0.0, %v2215
    %2217 = vmatmul.f32.gmra.mxu0 %v2008
    %v2218 = vpop.f32.mrf.mxu0
    %v2219 = vadd.f32 0.0, %v2218
    %2220 = vmatmul.f32.gmra.mxu0 %v2009
    %v2221 = vpop.f32.mrf.mxu0
    %v2222 = vadd.f32 0.0, %v2221
    %2223 = vmatmul.f32.gmra.mxu0 %v2010
    %v2224 = vpop.f32.mrf.mxu0
    %v2225 = vadd.f32 0.0, %v2224
    %2226 = vmatmul.f32.gmra.mxu0 %v2011
    %v2227 = vpop.f32.mrf.mxu0
    %v2228 = vadd.f32 0.0, %v2227
    %2229 = vmatmul.f32.gmra.mxu0 %v2012
    %v2230 = vpop.f32.mrf.mxu0
    %v2231 = vadd.f32 0.0, %v2230
    %2232 = vmatmul.f32.gmra.mxu0 %v2013
    %v2233 = vpop.f32.mrf.mxu0
    %v2234 = vadd.f32 0.0, %v2233
    %2235 = vmatmul.f32.gmra.mxu0 %v2014
    %v2236 = vpop.f32.mrf.mxu0
    %v2237 = vadd.f32 0.0, %v2236
    %2238 = vmatmul.f32.gmra.mxu0 %v2015
    %v2239 = vpop.f32.mrf.mxu0
    %v2240 = vadd.f32 0.0, %v2239
    %2241 = vdwg.mxu0
    %v2242 = vadd.f32 %v1888, %v2051
    %v2243 = vadd.f32 %v1889, %v2054
    %v2244 = vadd.f32 %v1890, %v2057
    %v2245 = vadd.f32 %v1891, %v2060
    %v2246 = vadd.f32 %v1892, %v2063
    %v2247 = vadd.f32 %v1893, %v2066
    %v2248 = vadd.f32 %v1894, %v2069
    %v2249 = vadd.f32 %v1895, %v2072
    %v2250 = vadd.f32 %v1896, %v2075
    %v2251 = vadd.f32 %v1897, %v2078
    %v2252 = vadd.f32 %v1898, %v2081
    %v2253 = vadd.f32 %v1899, %v2084
    %v2254 = vadd.f32 %v1900, %v2087
    %v2255 = vadd.f32 %v1901, %v2090
    %v2256 = vadd.f32 %v1902, %v2093
    %v2257 = vadd.f32 %v1903, %v2096
    %v2258 = vadd.f32 %v1904, %v2099
    %v2259 = vadd.f32 %v1905, %v2102
    %v2260 = vadd.f32 %v1906, %v2105
    %v2261 = vadd.f32 %v1907, %v2108
    %v2262 = vadd.f32 %v1908, %v2111
    %v2263 = vadd.f32 %v1909, %v2114
    %v2264 = vadd.f32 %v1910, %v2117
    %v2265 = vadd.f32 %v1911, %v2120
    %v2266 = vadd.f32 %v1912, %v2123
    %v2267 = vadd.f32 %v1913, %v2126
    %v2268 = vadd.f32 %v1914, %v2129
    %v2269 = vadd.f32 %v1915, %v2132
    %v2270 = vadd.f32 %v1916, %v2135
    %v2271 = vadd.f32 %v1917, %v2138
    %v2272 = vadd.f32 %v1918, %v2141
    %v2273 = vadd.f32 %v1919, %v2144
    %v2274 = vadd.f32 %v1920, %v2147
    %v2275 = vadd.f32 %v1921, %v2150
    %v2276 = vadd.f32 %v1922, %v2153
    %v2277 = vadd.f32 %v1923, %v2156
    %v2278 = vadd.f32 %v1924, %v2159
    %v2279 = vadd.f32 %v1925, %v2162
    %v2280 = vadd.f32 %v1926, %v2165
    %v2281 = vadd.f32 %v1927, %v2168
    %v2282 = vadd.f32 %v1928, %v2171
    %v2283 = vadd.f32 %v1929, %v2174
    %v2284 = vadd.f32 %v1930, %v2177
    %v2285 = vadd.f32 %v1931, %v2180
    %v2286 = vadd.f32 %v1932, %v2183
    %v2287 = vadd.f32 %v1933, %v2186
    %v2288 = vadd.f32 %v1934, %v2189
    %v2289 = vadd.f32 %v1935, %v2192
    %v2290 = vadd.f32 %v1936, %v2195
    %v2291 = vadd.f32 %v1937, %v2198
    %v2292 = vadd.f32 %v1938, %v2201
    %v2293 = vadd.f32 %v1939, %v2204
    %v2294 = vadd.f32 %v1940, %v2207
    %v2295 = vadd.f32 %v1941, %v2210
    %v2296 = vadd.f32 %v1942, %v2213
    %v2297 = vadd.f32 %v1943, %v2216
    %v2298 = vadd.f32 %v1944, %v2219
    %v2299 = vadd.f32 %v1945, %v2222
    %v2300 = vadd.f32 %v1946, %v2225
    %v2301 = vadd.f32 %v1947, %v2228
    %v2302 = vadd.f32 %v1948, %v2231
    %v2303 = vadd.f32 %v1949, %v2234
    %v2304 = vadd.f32 %v1950, %v2237
    %v2305 = vadd.f32 %v1951, %v2240
    %s2306 = scalar_lea.vmem [#allocation2], 48
    %v2307 = vld [vmem:[%s2306] sm:$0xff]
    %v2308 = vld [vmem:[%s2306 + $0x8] sm:$0xff]
    %v2309 = vld [vmem:[%s2306 + $0x18] sm:$0xff]
    %v2310 = vld [vmem:[%s2306 + $0x20] sm:$0xff]
    %v2311 = vld [vmem:[%s2306 + $0x30] sm:$0xff]
    %v2312 = vld [vmem:[%s2306 + $0x38] sm:$0xff]
    %v2313 = vld [vmem:[%s2306 + $0x48] sm:$0xff]
    %v2314 = vld [vmem:[%s2306 + $0x50] sm:$0xff]
    %v2315 = vld [vmem:[%s2306 + $0x60] sm:$0xff]
    %v2316 = vld [vmem:[%s2306 + $0x68] sm:$0xff]
    %v2317 = vld [vmem:[%s2306 + $0x78] sm:$0xff]
    %v2318 = vld [vmem:[%s2306 + $0x80] sm:$0xff]
    %v2319 = vld [vmem:[%s2306 + $0x90] sm:$0xff]
    %v2320 = vld [vmem:[%s2306 + $0x98] sm:$0xff]
    %v2321 = vld [vmem:[%s2306 + $0xa8] sm:$0xff]
    %v2322 = vld [vmem:[%s2306 + $0xb0] sm:$0xff]
    %v2323 = vld [vmem:[%s2306 + $0xc0] sm:$0xff]
    %v2324 = vld [vmem:[%s2306 + $0xc8] sm:$0xff]
    %v2325 = vld [vmem:[%s2306 + $0xd8] sm:$0xff]
    %v2326 = vld [vmem:[%s2306 + $0xe0] sm:$0xff]
    %v2327 = vld [vmem:[%s2306 + $0xf0] sm:$0xff]
    %v2328 = vld [vmem:[%s2306 + $0xf8] sm:$0xff]
    %v2329 = vld [vmem:[%s2306 + $0x108] sm:$0xff]
    %v2330 = vld [vmem:[%s2306 + $0x110] sm:$0xff]
    %v2331 = vld [vmem:[%s2306 + $0x120] sm:$0xff]
    %v2332 = vld [vmem:[%s2306 + $0x128] sm:$0xff]
    %v2333 = vld [vmem:[%s2306 + $0x138] sm:$0xff]
    %v2334 = vld [vmem:[%s2306 + $0x140] sm:$0xff]
    %v2335 = vld [vmem:[%s2306 + $0x150] sm:$0xff]
    %v2336 = vld [vmem:[%s2306 + $0x158] sm:$0xff]
    %v2337 = vld [vmem:[%s2306 + $0x168] sm:$0xff]
    %v2338 = vld [vmem:[%s2306 + $0x170] sm:$0xff]
    %v2339 = vld [vmem:[%s2306 + $0x1b0] sm:$0xff]
    %v2340 = vld [vmem:[%s2306 + $0x1b8] sm:$0xff]
    %v2341 = vld [vmem:[%s2306 + $0x1c8] sm:$0xff]
    %v2342 = vld [vmem:[%s2306 + $0x1d0] sm:$0xff]
    %v2343 = vld [vmem:[%s2306 + $0x1e0] sm:$0xff]
    %v2344 = vld [vmem:[%s2306 + $0x1e8] sm:$0xff]
    %v2345 = vld [vmem:[%s2306 + $0x1f8] sm:$0xff]
    %v2346 = vld [vmem:[%s2306 + $0x200] sm:$0xff]
    %v2347 = vld [vmem:[%s2306 + $0x210] sm:$0xff]
    %v2348 = vld [vmem:[%s2306 + $0x218] sm:$0xff]
    %v2349 = vld [vmem:[%s2306 + $0x228] sm:$0xff]
    %v2350 = vld [vmem:[%s2306 + $0x230] sm:$0xff]
    %v2351 = vld [vmem:[%s2306 + $0x240] sm:$0xff]
    %v2352 = vld [vmem:[%s2306 + $0x248] sm:$0xff]
    %v2353 = vld [vmem:[%s2306 + $0x258] sm:$0xff]
    %v2354 = vld [vmem:[%s2306 + $0x260] sm:$0xff]
    %v2355 = vld [vmem:[%s2306 + $0x270] sm:$0xff]
    %v2356 = vld [vmem:[%s2306 + $0x278] sm:$0xff]
    %v2357 = vld [vmem:[%s2306 + $0x288] sm:$0xff]
    %v2358 = vld [vmem:[%s2306 + $0x290] sm:$0xff]
    %v2359 = vld [vmem:[%s2306 + $0x2a0] sm:$0xff]
    %v2360 = vld [vmem:[%s2306 + $0x2a8] sm:$0xff]
    %v2361 = vld [vmem:[%s2306 + $0x2b8] sm:$0xff]
    %v2362 = vld [vmem:[%s2306 + $0x2c0] sm:$0xff]
    %v2363 = vld [vmem:[%s2306 + $0x2d0] sm:$0xff]
    %v2364 = vld [vmem:[%s2306 + $0x2d8] sm:$0xff]
    %v2365 = vld [vmem:[%s2306 + $0x2e8] sm:$0xff]
    %v2366 = vld [vmem:[%s2306 + $0x2f0] sm:$0xff]
    %v2367 = vld [vmem:[%s2306 + $0x300] sm:$0xff]
    %v2368 = vld [vmem:[%s2306 + $0x308] sm:$0xff]
    %v2369 = vld [vmem:[%s2306 + $0x318] sm:$0xff]
    %v2370 = vld [vmem:[%s2306 + $0x320] sm:$0xff]
    %s2371 = scalar_lea.vmem [#allocation7], 768
    %v2372 = vld [vmem:[%s2371] sm:$0xff]
    %v2373 = vld [vmem:[%s2371 + $0x8] sm:$0xff]
    %v2374 = vld [vmem:[%s2371 + $0x10] sm:$0xff]
    %v2375 = vld [vmem:[%s2371 + $0x18] sm:$0xff]
    %v2376 = vld [vmem:[%s2371 + $0x20] sm:$0xff]
    %v2377 = vld [vmem:[%s2371 + $0x28] sm:$0xff]
    %v2378 = vld [vmem:[%s2371 + $0x30] sm:$0xff]
    %v2379 = vld [vmem:[%s2371 + $0x38] sm:$0xff]
    %v2380 = vld [vmem:[%s2371 + $0x40] sm:$0xff]
    %v2381 = vld [vmem:[%s2371 + $0x48] sm:$0xff]
    %v2382 = vld [vmem:[%s2371 + $0x50] sm:$0xff]
    %v2383 = vld [vmem:[%s2371 + $0x58] sm:$0xff]
    %v2384 = vld [vmem:[%s2371 + $0x60] sm:$0xff]
    %v2385 = vld [vmem:[%s2371 + $0x68] sm:$0xff]
    %v2386 = vld [vmem:[%s2371 + $0x70] sm:$0xff]
    %v2387 = vld [vmem:[%s2371 + $0x78] sm:$0xff]
    %2388 = vmatpush.msra.mxu0 %v2387
    %2389 = vmatpush.msra.mxu0 %v2386
    %2390 = vmatpush.msra.mxu0 %v2385
    %2391 = vmatpush.msra.mxu0 %v2384
    %2392 = vmatpush.msra.mxu0 %v2383
    %2393 = vmatpush.msra.mxu0 %v2382
    %2394 = vmatpush.msra.mxu0 %v2381
    %2395 = vmatpush.msra.mxu0 %v2380
    %2396 = vmatpush.msra.mxu0 %v2379
    %2397 = vmatpush.msra.mxu0 %v2378
    %2398 = vmatpush.msra.mxu0 %v2377
    %2399 = vmatpush.msra.mxu0 %v2376
    %2400 = vmatpush.msra.mxu0 %v2375
    %2401 = vmatpush.msra.mxu0 %v2374
    %2402 = vmatpush.msra.mxu0 %v2373
    %2403 = vmatpush.msra.mxu0 %v2372
    %2404 = vmatmul.f32.gmra.mxu0 %v2307
    %v2405 = vpop.f32.mrf.mxu0
    %v2406 = vadd.f32 0.0, %v2405
    %2407 = vmatmul.f32.gmra.mxu0 %v2308
    %v2408 = vpop.f32.mrf.mxu0
    %v2409 = vadd.f32 0.0, %v2408
    %2410 = vmatmul.f32.gmra.mxu0 %v2309
    %v2411 = vpop.f32.mrf.mxu0
    %v2412 = vadd.f32 0.0, %v2411
    %2413 = vmatmul.f32.gmra.mxu0 %v2310
    %v2414 = vpop.f32.mrf.mxu0
    %v2415 = vadd.f32 0.0, %v2414
    %2416 = vmatmul.f32.gmra.mxu0 %v2311
    %v2417 = vpop.f32.mrf.mxu0
    %v2418 = vadd.f32 0.0, %v2417
    %2419 = vmatmul.f32.gmra.mxu0 %v2312
    %v2420 = vpop.f32.mrf.mxu0
    %v2421 = vadd.f32 0.0, %v2420
    %2422 = vmatmul.f32.gmra.mxu0 %v2313
    %v2423 = vpop.f32.mrf.mxu0
    %v2424 = vadd.f32 0.0, %v2423
    %2425 = vmatmul.f32.gmra.mxu0 %v2314
    %v2426 = vpop.f32.mrf.mxu0
    %v2427 = vadd.f32 0.0, %v2426
    %2428 = vmatmul.f32.gmra.mxu0 %v2315
    %v2429 = vpop.f32.mrf.mxu0
    %v2430 = vadd.f32 0.0, %v2429
    %2431 = vmatmul.f32.gmra.mxu0 %v2316
    %v2432 = vpop.f32.mrf.mxu0
    %v2433 = vadd.f32 0.0, %v2432
    %2434 = vmatmul.f32.gmra.mxu0 %v2317
    %v2435 = vpop.f32.mrf.mxu0
    %v2436 = vadd.f32 0.0, %v2435
    %2437 = vmatmul.f32.gmra.mxu0 %v2318
    %v2438 = vpop.f32.mrf.mxu0
    %v2439 = vadd.f32 0.0, %v2438
    %2440 = vmatmul.f32.gmra.mxu0 %v2319
    %v2441 = vpop.f32.mrf.mxu0
    %v2442 = vadd.f32 0.0, %v2441
    %2443 = vmatmul.f32.gmra.mxu0 %v2320
    %v2444 = vpop.f32.mrf.mxu0
    %v2445 = vadd.f32 0.0, %v2444
    %2446 = vmatmul.f32.gmra.mxu0 %v2321
    %v2447 = vpop.f32.mrf.mxu0
    %v2448 = vadd.f32 0.0, %v2447
    %2449 = vmatmul.f32.gmra.mxu0 %v2322
    %v2450 = vpop.f32.mrf.mxu0
    %v2451 = vadd.f32 0.0, %v2450
    %2452 = vmatmul.f32.gmra.mxu0 %v2323
    %v2453 = vpop.f32.mrf.mxu0
    %v2454 = vadd.f32 0.0, %v2453
    %2455 = vmatmul.f32.gmra.mxu0 %v2324
    %v2456 = vpop.f32.mrf.mxu0
    %v2457 = vadd.f32 0.0, %v2456
    %2458 = vmatmul.f32.gmra.mxu0 %v2325
    %v2459 = vpop.f32.mrf.mxu0
    %v2460 = vadd.f32 0.0, %v2459
    %2461 = vmatmul.f32.gmra.mxu0 %v2326
    %v2462 = vpop.f32.mrf.mxu0
    %v2463 = vadd.f32 0.0, %v2462
    %2464 = vmatmul.f32.gmra.mxu0 %v2327
    %v2465 = vpop.f32.mrf.mxu0
    %v2466 = vadd.f32 0.0, %v2465
    %2467 = vmatmul.f32.gmra.mxu0 %v2328
    %v2468 = vpop.f32.mrf.mxu0
    %v2469 = vadd.f32 0.0, %v2468
    %2470 = vmatmul.f32.gmra.mxu0 %v2329
    %v2471 = vpop.f32.mrf.mxu0
    %v2472 = vadd.f32 0.0, %v2471
    %2473 = vmatmul.f32.gmra.mxu0 %v2330
    %v2474 = vpop.f32.mrf.mxu0
    %v2475 = vadd.f32 0.0, %v2474
    %2476 = vmatmul.f32.gmra.mxu0 %v2331
    %v2477 = vpop.f32.mrf.mxu0
    %v2478 = vadd.f32 0.0, %v2477
    %2479 = vmatmul.f32.gmra.mxu0 %v2332
    %v2480 = vpop.f32.mrf.mxu0
    %v2481 = vadd.f32 0.0, %v2480
    %2482 = vmatmul.f32.gmra.mxu0 %v2333
    %v2483 = vpop.f32.mrf.mxu0
    %v2484 = vadd.f32 0.0, %v2483
    %2485 = vmatmul.f32.gmra.mxu0 %v2334
    %v2486 = vpop.f32.mrf.mxu0
    %v2487 = vadd.f32 0.0, %v2486
    %2488 = vmatmul.f32.gmra.mxu0 %v2335
    %v2489 = vpop.f32.mrf.mxu0
    %v2490 = vadd.f32 0.0, %v2489
    %2491 = vmatmul.f32.gmra.mxu0 %v2336
    %v2492 = vpop.f32.mrf.mxu0
    %v2493 = vadd.f32 0.0, %v2492
    %2494 = vmatmul.f32.gmra.mxu0 %v2337
    %v2495 = vpop.f32.mrf.mxu0
    %v2496 = vadd.f32 0.0, %v2495
    %2497 = vmatmul.f32.gmra.mxu0 %v2338
    %v2498 = vpop.f32.mrf.mxu0
    %v2499 = vadd.f32 0.0, %v2498
    %2500 = vmatmul.f32.gmra.mxu0 %v2339
    %v2501 = vpop.f32.mrf.mxu0
    %v2502 = vadd.f32 0.0, %v2501
    %2503 = vmatmul.f32.gmra.mxu0 %v2340
    %v2504 = vpop.f32.mrf.mxu0
    %v2505 = vadd.f32 0.0, %v2504
    %2506 = vmatmul.f32.gmra.mxu0 %v2341
    %v2507 = vpop.f32.mrf.mxu0
    %v2508 = vadd.f32 0.0, %v2507
    %2509 = vmatmul.f32.gmra.mxu0 %v2342
    %v2510 = vpop.f32.mrf.mxu0
    %v2511 = vadd.f32 0.0, %v2510
    %2512 = vmatmul.f32.gmra.mxu0 %v2343
    %v2513 = vpop.f32.mrf.mxu0
    %v2514 = vadd.f32 0.0, %v2513
    %2515 = vmatmul.f32.gmra.mxu0 %v2344
    %v2516 = vpop.f32.mrf.mxu0
    %v2517 = vadd.f32 0.0, %v2516
    %2518 = vmatmul.f32.gmra.mxu0 %v2345
    %v2519 = vpop.f32.mrf.mxu0
    %v2520 = vadd.f32 0.0, %v2519
    %2521 = vmatmul.f32.gmra.mxu0 %v2346
    %v2522 = vpop.f32.mrf.mxu0
    %v2523 = vadd.f32 0.0, %v2522
    %2524 = vmatmul.f32.gmra.mxu0 %v2347
    %v2525 = vpop.f32.mrf.mxu0
    %v2526 = vadd.f32 0.0, %v2525
    %2527 = vmatmul.f32.gmra.mxu0 %v2348
    %v2528 = vpop.f32.mrf.mxu0
    %v2529 = vadd.f32 0.0, %v2528
    %2530 = vmatmul.f32.gmra.mxu0 %v2349
    %v2531 = vpop.f32.mrf.mxu0
    %v2532 = vadd.f32 0.0, %v2531
    %2533 = vmatmul.f32.gmra.mxu0 %v2350
    %v2534 = vpop.f32.mrf.mxu0
    %v2535 = vadd.f32 0.0, %v2534
    %2536 = vmatmul.f32.gmra.mxu0 %v2351
    %v2537 = vpop.f32.mrf.mxu0
    %v2538 = vadd.f32 0.0, %v2537
    %2539 = vmatmul.f32.gmra.mxu0 %v2352
    %v2540 = vpop.f32.mrf.mxu0
    %v2541 = vadd.f32 0.0, %v2540
    %2542 = vmatmul.f32.gmra.mxu0 %v2353
    %v2543 = vpop.f32.mrf.mxu0
    %v2544 = vadd.f32 0.0, %v2543
    %2545 = vmatmul.f32.gmra.mxu0 %v2354
    %v2546 = vpop.f32.mrf.mxu0
    %v2547 = vadd.f32 0.0, %v2546
    %2548 = vmatmul.f32.gmra.mxu0 %v2355
    %v2549 = vpop.f32.mrf.mxu0
    %v2550 = vadd.f32 0.0, %v2549
    %2551 = vmatmul.f32.gmra.mxu0 %v2356
    %v2552 = vpop.f32.mrf.mxu0
    %v2553 = vadd.f32 0.0, %v2552
    %2554 = vmatmul.f32.gmra.mxu0 %v2357
    %v2555 = vpop.f32.mrf.mxu0
    %v2556 = vadd.f32 0.0, %v2555
    %2557 = vmatmul.f32.gmra.mxu0 %v2358
    %v2558 = vpop.f32.mrf.mxu0
    %v2559 = vadd.f32 0.0, %v2558
    %2560 = vmatmul.f32.gmra.mxu0 %v2359
    %v2561 = vpop.f32.mrf.mxu0
    %v2562 = vadd.f32 0.0, %v2561
    %2563 = vmatmul.f32.gmra.mxu0 %v2360
    %v2564 = vpop.f32.mrf.mxu0
    %v2565 = vadd.f32 0.0, %v2564
    %2566 = vmatmul.f32.gmra.mxu0 %v2361
    %v2567 = vpop.f32.mrf.mxu0
    %v2568 = vadd.f32 0.0, %v2567
    %2569 = vmatmul.f32.gmra.mxu0 %v2362
    %v2570 = vpop.f32.mrf.mxu0
    %v2571 = vadd.f32 0.0, %v2570
    %2572 = vmatmul.f32.gmra.mxu0 %v2363
    %v2573 = vpop.f32.mrf.mxu0
    %v2574 = vadd.f32 0.0, %v2573
    %2575 = vmatmul.f32.gmra.mxu0 %v2364
    %v2576 = vpop.f32.mrf.mxu0
    %v2577 = vadd.f32 0.0, %v2576
    %2578 = vmatmul.f32.gmra.mxu0 %v2365
    %v2579 = vpop.f32.mrf.mxu0
    %v2580 = vadd.f32 0.0, %v2579
    %2581 = vmatmul.f32.gmra.mxu0 %v2366
    %v2582 = vpop.f32.mrf.mxu0
    %v2583 = vadd.f32 0.0, %v2582
    %2584 = vmatmul.f32.gmra.mxu0 %v2367
    %v2585 = vpop.f32.mrf.mxu0
    %v2586 = vadd.f32 0.0, %v2585
    %2587 = vmatmul.f32.gmra.mxu0 %v2368
    %v2588 = vpop.f32.mrf.mxu0
    %v2589 = vadd.f32 0.0, %v2588
    %2590 = vmatmul.f32.gmra.mxu0 %v2369
    %v2591 = vpop.f32.mrf.mxu0
    %v2592 = vadd.f32 0.0, %v2591
    %2593 = vmatmul.f32.gmra.mxu0 %v2370
    %v2594 = vpop.f32.mrf.mxu0
    %v2595 = vadd.f32 0.0, %v2594
    %2596 = vdwg.mxu0
    %v2597 = vadd.f32 %v2242, %v2406
    %v2598 = vadd.f32 %v2243, %v2409
    %v2599 = vadd.f32 %v2244, %v2412
    %v2600 = vadd.f32 %v2245, %v2415
    %v2601 = vadd.f32 %v2246, %v2418
    %v2602 = vadd.f32 %v2247, %v2421
    %v2603 = vadd.f32 %v2248, %v2424
    %v2604 = vadd.f32 %v2249, %v2427
    %v2605 = vadd.f32 %v2250, %v2430
    %v2606 = vadd.f32 %v2251, %v2433
    %v2607 = vadd.f32 %v2252, %v2436
    %v2608 = vadd.f32 %v2253, %v2439
    %v2609 = vadd.f32 %v2254, %v2442
    %v2610 = vadd.f32 %v2255, %v2445
    %v2611 = vadd.f32 %v2256, %v2448
    %v2612 = vadd.f32 %v2257, %v2451
    %v2613 = vadd.f32 %v2258, %v2454
    %v2614 = vadd.f32 %v2259, %v2457
    %v2615 = vadd.f32 %v2260, %v2460
    %v2616 = vadd.f32 %v2261, %v2463
    %v2617 = vadd.f32 %v2262, %v2466
    %v2618 = vadd.f32 %v2263, %v2469
    %v2619 = vadd.f32 %v2264, %v2472
    %v2620 = vadd.f32 %v2265, %v2475
    %v2621 = vadd.f32 %v2266, %v2478
    %v2622 = vadd.f32 %v2267, %v2481
    %v2623 = vadd.f32 %v2268, %v2484
    %v2624 = vadd.f32 %v2269, %v2487
    %v2625 = vadd.f32 %v2270, %v2490
    %v2626 = vadd.f32 %v2271, %v2493
    %v2627 = vadd.f32 %v2272, %v2496
    %v2628 = vadd.f32 %v2273, %v2499
    %v2629 = vadd.f32 %v2274, %v2502
    %v2630 = vadd.f32 %v2275, %v2505
    %v2631 = vadd.f32 %v2276, %v2508
    %v2632 = vadd.f32 %v2277, %v2511
    %v2633 = vadd.f32 %v2278, %v2514
    %v2634 = vadd.f32 %v2279, %v2517
    %v2635 = vadd.f32 %v2280, %v2520
    %v2636 = vadd.f32 %v2281, %v2523
    %v2637 = vadd.f32 %v2282, %v2526
    %v2638 = vadd.f32 %v2283, %v2529
    %v2639 = vadd.f32 %v2284, %v2532
    %v2640 = vadd.f32 %v2285, %v2535
    %v2641 = vadd.f32 %v2286, %v2538
    %v2642 = vadd.f32 %v2287, %v2541
    %v2643 = vadd.f32 %v2288, %v2544
    %v2644 = vadd.f32 %v2289, %v2547
    %v2645 = vadd.f32 %v2290, %v2550
    %v2646 = vadd.f32 %v2291, %v2553
    %v2647 = vadd.f32 %v2292, %v2556
    %v2648 = vadd.f32 %v2293, %v2559
    %v2649 = vadd.f32 %v2294, %v2562
    %v2650 = vadd.f32 %v2295, %v2565
    %v2651 = vadd.f32 %v2296, %v2568
    %v2652 = vadd.f32 %v2297, %v2571
    %v2653 = vadd.f32 %v2298, %v2574
    %v2654 = vadd.f32 %v2299, %v2577
    %v2655 = vadd.f32 %v2300, %v2580
    %v2656 = vadd.f32 %v2301, %v2583
    %v2657 = vadd.f32 %v2302, %v2586
    %v2658 = vadd.f32 %v2303, %v2589
    %v2659 = vadd.f32 %v2304, %v2592
    %v2660 = vadd.f32 %v2305, %v2595
    %v2661 = vld [vmem:[%s2306 + $0x1] sm:$0xff]
    %v2662 = vld [vmem:[%s2306 + $0x9] sm:$0xff]
    %v2663 = vld [vmem:[%s2306 + $0x19] sm:$0xff]
    %v2664 = vld [vmem:[%s2306 + $0x21] sm:$0xff]
    %v2665 = vld [vmem:[%s2306 + $0x31] sm:$0xff]
    %v2666 = vld [vmem:[%s2306 + $0x39] sm:$0xff]
    %v2667 = vld [vmem:[%s2306 + $0x49] sm:$0xff]
    %v2668 = vld [vmem:[%s2306 + $0x51] sm:$0xff]
    %v2669 = vld [vmem:[%s2306 + $0x61] sm:$0xff]
    %v2670 = vld [vmem:[%s2306 + $0x69] sm:$0xff]
    %v2671 = vld [vmem:[%s2306 + $0x79] sm:$0xff]
    %v2672 = vld [vmem:[%s2306 + $0x81] sm:$0xff]
    %v2673 = vld [vmem:[%s2306 + $0x91] sm:$0xff]
    %v2674 = vld [vmem:[%s2306 + $0x99] sm:$0xff]
    %v2675 = vld [vmem:[%s2306 + $0xa9] sm:$0xff]
    %v2676 = vld [vmem:[%s2306 + $0xb1] sm:$0xff]
    %v2677 = vld [vmem:[%s2306 + $0xc1] sm:$0xff]
    %v2678 = vld [vmem:[%s2306 + $0xc9] sm:$0xff]
    %v2679 = vld [vmem:[%s2306 + $0xd9] sm:$0xff]
    %v2680 = vld [vmem:[%s2306 + $0xe1] sm:$0xff]
    %v2681 = vld [vmem:[%s2306 + $0xf1] sm:$0xff]
    %v2682 = vld [vmem:[%s2306 + $0xf9] sm:$0xff]
    %v2683 = vld [vmem:[%s2306 + $0x109] sm:$0xff]
    %v2684 = vld [vmem:[%s2306 + $0x111] sm:$0xff]
    %v2685 = vld [vmem:[%s2306 + $0x121] sm:$0xff]
    %v2686 = vld [vmem:[%s2306 + $0x129] sm:$0xff]
    %v2687 = vld [vmem:[%s2306 + $0x139] sm:$0xff]
    %v2688 = vld [vmem:[%s2306 + $0x141] sm:$0xff]
    %v2689 = vld [vmem:[%s2306 + $0x151] sm:$0xff]
    %v2690 = vld [vmem:[%s2306 + $0x159] sm:$0xff]
    %v2691 = vld [vmem:[%s2306 + $0x169] sm:$0xff]
    %v2692 = vld [vmem:[%s2306 + $0x171] sm:$0xff]
    %v2693 = vld [vmem:[%s2306 + $0x1b1] sm:$0xff]
    %v2694 = vld [vmem:[%s2306 + $0x1b9] sm:$0xff]
    %v2695 = vld [vmem:[%s2306 + $0x1c9] sm:$0xff]
    %v2696 = vld [vmem:[%s2306 + $0x1d1] sm:$0xff]
    %v2697 = vld [vmem:[%s2306 + $0x1e1] sm:$0xff]
    %v2698 = vld [vmem:[%s2306 + $0x1e9] sm:$0xff]
    %v2699 = vld [vmem:[%s2306 + $0x1f9] sm:$0xff]
    %v2700 = vld [vmem:[%s2306 + $0x201] sm:$0xff]
    %v2701 = vld [vmem:[%s2306 + $0x211] sm:$0xff]
    %v2702 = vld [vmem:[%s2306 + $0x219] sm:$0xff]
    %v2703 = vld [vmem:[%s2306 + $0x229] sm:$0xff]
    %v2704 = vld [vmem:[%s2306 + $0x231] sm:$0xff]
    %v2705 = vld [vmem:[%s2306 + $0x241] sm:$0xff]
    %v2706 = vld [vmem:[%s2306 + $0x249] sm:$0xff]
    %v2707 = vld [vmem:[%s2306 + $0x259] sm:$0xff]
    %v2708 = vld [vmem:[%s2306 + $0x261] sm:$0xff]
    %v2709 = vld [vmem:[%s2306 + $0x271] sm:$0xff]
    %v2710 = vld [vmem:[%s2306 + $0x279] sm:$0xff]
    %v2711 = vld [vmem:[%s2306 + $0x289] sm:$0xff]
    %v2712 = vld [vmem:[%s2306 + $0x291] sm:$0xff]
    %v2713 = vld [vmem:[%s2306 + $0x2a1] sm:$0xff]
    %v2714 = vld [vmem:[%s2306 + $0x2a9] sm:$0xff]
    %v2715 = vld [vmem:[%s2306 + $0x2b9] sm:$0xff]
    %v2716 = vld [vmem:[%s2306 + $0x2c1] sm:$0xff]
    %v2717 = vld [vmem:[%s2306 + $0x2d1] sm:$0xff]
    %v2718 = vld [vmem:[%s2306 + $0x2d9] sm:$0xff]
    %v2719 = vld [vmem:[%s2306 + $0x2e9] sm:$0xff]
    %v2720 = vld [vmem:[%s2306 + $0x2f1] sm:$0xff]
    %v2721 = vld [vmem:[%s2306 + $0x301] sm:$0xff]
    %v2722 = vld [vmem:[%s2306 + $0x309] sm:$0xff]
    %v2723 = vld [vmem:[%s2306 + $0x319] sm:$0xff]
    %v2724 = vld [vmem:[%s2306 + $0x321] sm:$0xff]
    %s2725 = scalar_lea.vmem [#allocation7], 896
    %v2726 = vld [vmem:[%s2725] sm:$0xff]
    %v2727 = vld [vmem:[%s2725 + $0x8] sm:$0xff]
    %v2728 = vld [vmem:[%s2725 + $0x10] sm:$0xff]
    %v2729 = vld [vmem:[%s2725 + $0x18] sm:$0xff]
    %v2730 = vld [vmem:[%s2725 + $0x20] sm:$0xff]
    %v2731 = vld [vmem:[%s2725 + $0x28] sm:$0xff]
    %v2732 = vld [vmem:[%s2725 + $0x30] sm:$0xff]
    %v2733 = vld [vmem:[%s2725 + $0x38] sm:$0xff]
    %v2734 = vld [vmem:[%s2725 + $0x40] sm:$0xff]
    %v2735 = vld [vmem:[%s2725 + $0x48] sm:$0xff]
    %v2736 = vld [vmem:[%s2725 + $0x50] sm:$0xff]
    %v2737 = vld [vmem:[%s2725 + $0x58] sm:$0xff]
    %v2738 = vld [vmem:[%s2725 + $0x60] sm:$0xff]
    %v2739 = vld [vmem:[%s2725 + $0x68] sm:$0xff]
    %v2740 = vld [vmem:[%s2725 + $0x70] sm:$0xff]
    %v2741 = vld [vmem:[%s2725 + $0x78] sm:$0xff]
    %2742 = vmatpush.msra.mxu0 %v2741
    %2743 = vmatpush.msra.mxu0 %v2740
    %2744 = vmatpush.msra.mxu0 %v2739
    %2745 = vmatpush.msra.mxu0 %v2738
    %2746 = vmatpush.msra.mxu0 %v2737
    %2747 = vmatpush.msra.mxu0 %v2736
    %2748 = vmatpush.msra.mxu0 %v2735
    %2749 = vmatpush.msra.mxu0 %v2734
    %2750 = vmatpush.msra.mxu0 %v2733
    %2751 = vmatpush.msra.mxu0 %v2732
    %2752 = vmatpush.msra.mxu0 %v2731
    %2753 = vmatpush.msra.mxu0 %v2730
    %2754 = vmatpush.msra.mxu0 %v2729
    %2755 = vmatpush.msra.mxu0 %v2728
    %2756 = vmatpush.msra.mxu0 %v2727
    %2757 = vmatpush.msra.mxu0 %v2726
    %2758 = vmatmul.f32.gmra.mxu0 %v2661
    %v2759 = vpop.f32.mrf.mxu0
    %v2760 = vadd.f32 0.0, %v2759
    %2761 = vmatmul.f32.gmra.mxu0 %v2662
    %v2762 = vpop.f32.mrf.mxu0
    %v2763 = vadd.f32 0.0, %v2762
    %2764 = vmatmul.f32.gmra.mxu0 %v2663
    %v2765 = vpop.f32.mrf.mxu0
    %v2766 = vadd.f32 0.0, %v2765
    %2767 = vmatmul.f32.gmra.mxu0 %v2664
    %v2768 = vpop.f32.mrf.mxu0
    %v2769 = vadd.f32 0.0, %v2768
    %2770 = vmatmul.f32.gmra.mxu0 %v2665
    %v2771 = vpop.f32.mrf.mxu0
    %v2772 = vadd.f32 0.0, %v2771
    %2773 = vmatmul.f32.gmra.mxu0 %v2666
    %v2774 = vpop.f32.mrf.mxu0
    %v2775 = vadd.f32 0.0, %v2774
    %2776 = vmatmul.f32.gmra.mxu0 %v2667
    %v2777 = vpop.f32.mrf.mxu0
    %v2778 = vadd.f32 0.0, %v2777
    %2779 = vmatmul.f32.gmra.mxu0 %v2668
    %v2780 = vpop.f32.mrf.mxu0
    %v2781 = vadd.f32 0.0, %v2780
    %2782 = vmatmul.f32.gmra.mxu0 %v2669
    %v2783 = vpop.f32.mrf.mxu0
    %v2784 = vadd.f32 0.0, %v2783
    %2785 = vmatmul.f32.gmra.mxu0 %v2670
    %v2786 = vpop.f32.mrf.mxu0
    %v2787 = vadd.f32 0.0, %v2786
    %2788 = vmatmul.f32.gmra.mxu0 %v2671
    %v2789 = vpop.f32.mrf.mxu0
    %v2790 = vadd.f32 0.0, %v2789
    %2791 = vmatmul.f32.gmra.mxu0 %v2672
    %v2792 = vpop.f32.mrf.mxu0
    %v2793 = vadd.f32 0.0, %v2792
    %2794 = vmatmul.f32.gmra.mxu0 %v2673
    %v2795 = vpop.f32.mrf.mxu0
    %v2796 = vadd.f32 0.0, %v2795
    %2797 = vmatmul.f32.gmra.mxu0 %v2674
    %v2798 = vpop.f32.mrf.mxu0
    %v2799 = vadd.f32 0.0, %v2798
    %2800 = vmatmul.f32.gmra.mxu0 %v2675
    %v2801 = vpop.f32.mrf.mxu0
    %v2802 = vadd.f32 0.0, %v2801
    %2803 = vmatmul.f32.gmra.mxu0 %v2676
    %v2804 = vpop.f32.mrf.mxu0
    %v2805 = vadd.f32 0.0, %v2804
    %2806 = vmatmul.f32.gmra.mxu0 %v2677
    %v2807 = vpop.f32.mrf.mxu0
    %v2808 = vadd.f32 0.0, %v2807
    %2809 = vmatmul.f32.gmra.mxu0 %v2678
    %v2810 = vpop.f32.mrf.mxu0
    %v2811 = vadd.f32 0.0, %v2810
    %2812 = vmatmul.f32.gmra.mxu0 %v2679
    %v2813 = vpop.f32.mrf.mxu0
    %v2814 = vadd.f32 0.0, %v2813
    %2815 = vmatmul.f32.gmra.mxu0 %v2680
    %v2816 = vpop.f32.mrf.mxu0
    %v2817 = vadd.f32 0.0, %v2816
    %2818 = vmatmul.f32.gmra.mxu0 %v2681
    %v2819 = vpop.f32.mrf.mxu0
    %v2820 = vadd.f32 0.0, %v2819
    %2821 = vmatmul.f32.gmra.mxu0 %v2682
    %v2822 = vpop.f32.mrf.mxu0
    %v2823 = vadd.f32 0.0, %v2822
    %2824 = vmatmul.f32.gmra.mxu0 %v2683
    %v2825 = vpop.f32.mrf.mxu0
    %v2826 = vadd.f32 0.0, %v2825
    %2827 = vmatmul.f32.gmra.mxu0 %v2684
    %v2828 = vpop.f32.mrf.mxu0
    %v2829 = vadd.f32 0.0, %v2828
    %2830 = vmatmul.f32.gmra.mxu0 %v2685
    %v2831 = vpop.f32.mrf.mxu0
    %v2832 = vadd.f32 0.0, %v2831
    %2833 = vmatmul.f32.gmra.mxu0 %v2686
    %v2834 = vpop.f32.mrf.mxu0
    %v2835 = vadd.f32 0.0, %v2834
    %2836 = vmatmul.f32.gmra.mxu0 %v2687
    %v2837 = vpop.f32.mrf.mxu0
    %v2838 = vadd.f32 0.0, %v2837
    %2839 = vmatmul.f32.gmra.mxu0 %v2688
    %v2840 = vpop.f32.mrf.mxu0
    %v2841 = vadd.f32 0.0, %v2840
    %2842 = vmatmul.f32.gmra.mxu0 %v2689
    %v2843 = vpop.f32.mrf.mxu0
    %v2844 = vadd.f32 0.0, %v2843
    %2845 = vmatmul.f32.gmra.mxu0 %v2690
    %v2846 = vpop.f32.mrf.mxu0
    %v2847 = vadd.f32 0.0, %v2846
    %2848 = vmatmul.f32.gmra.mxu0 %v2691
    %v2849 = vpop.f32.mrf.mxu0
    %v2850 = vadd.f32 0.0, %v2849
    %2851 = vmatmul.f32.gmra.mxu0 %v2692
    %v2852 = vpop.f32.mrf.mxu0
    %v2853 = vadd.f32 0.0, %v2852
    %2854 = vmatmul.f32.gmra.mxu0 %v2693
    %v2855 = vpop.f32.mrf.mxu0
    %v2856 = vadd.f32 0.0, %v2855
    %2857 = vmatmul.f32.gmra.mxu0 %v2694
    %v2858 = vpop.f32.mrf.mxu0
    %v2859 = vadd.f32 0.0, %v2858
    %2860 = vmatmul.f32.gmra.mxu0 %v2695
    %v2861 = vpop.f32.mrf.mxu0
    %v2862 = vadd.f32 0.0, %v2861
    %2863 = vmatmul.f32.gmra.mxu0 %v2696
    %v2864 = vpop.f32.mrf.mxu0
    %v2865 = vadd.f32 0.0, %v2864
    %2866 = vmatmul.f32.gmra.mxu0 %v2697
    %v2867 = vpop.f32.mrf.mxu0
    %v2868 = vadd.f32 0.0, %v2867
    %2869 = vmatmul.f32.gmra.mxu0 %v2698
    %v2870 = vpop.f32.mrf.mxu0
    %v2871 = vadd.f32 0.0, %v2870
    %2872 = vmatmul.f32.gmra.mxu0 %v2699
    %v2873 = vpop.f32.mrf.mxu0
    %v2874 = vadd.f32 0.0, %v2873
    %2875 = vmatmul.f32.gmra.mxu0 %v2700
    %v2876 = vpop.f32.mrf.mxu0
    %v2877 = vadd.f32 0.0, %v2876
    %2878 = vmatmul.f32.gmra.mxu0 %v2701
    %v2879 = vpop.f32.mrf.mxu0
    %v2880 = vadd.f32 0.0, %v2879
    %2881 = vmatmul.f32.gmra.mxu0 %v2702
    %v2882 = vpop.f32.mrf.mxu0
    %v2883 = vadd.f32 0.0, %v2882
    %2884 = vmatmul.f32.gmra.mxu0 %v2703
    %v2885 = vpop.f32.mrf.mxu0
    %v2886 = vadd.f32 0.0, %v2885
    %2887 = vmatmul.f32.gmra.mxu0 %v2704
    %v2888 = vpop.f32.mrf.mxu0
    %v2889 = vadd.f32 0.0, %v2888
    %2890 = vmatmul.f32.gmra.mxu0 %v2705
    %v2891 = vpop.f32.mrf.mxu0
    %v2892 = vadd.f32 0.0, %v2891
    %2893 = vmatmul.f32.gmra.mxu0 %v2706
    %v2894 = vpop.f32.mrf.mxu0
    %v2895 = vadd.f32 0.0, %v2894
    %2896 = vmatmul.f32.gmra.mxu0 %v2707
    %v2897 = vpop.f32.mrf.mxu0
    %v2898 = vadd.f32 0.0, %v2897
    %2899 = vmatmul.f32.gmra.mxu0 %v2708
    %v2900 = vpop.f32.mrf.mxu0
    %v2901 = vadd.f32 0.0, %v2900
    %2902 = vmatmul.f32.gmra.mxu0 %v2709
    %v2903 = vpop.f32.mrf.mxu0
    %v2904 = vadd.f32 0.0, %v2903
    %2905 = vmatmul.f32.gmra.mxu0 %v2710
    %v2906 = vpop.f32.mrf.mxu0
    %v2907 = vadd.f32 0.0, %v2906
    %2908 = vmatmul.f32.gmra.mxu0 %v2711
    %v2909 = vpop.f32.mrf.mxu0
    %v2910 = vadd.f32 0.0, %v2909
    %2911 = vmatmul.f32.gmra.mxu0 %v2712
    %v2912 = vpop.f32.mrf.mxu0
    %v2913 = vadd.f32 0.0, %v2912
    %2914 = vmatmul.f32.gmra.mxu0 %v2713
    %v2915 = vpop.f32.mrf.mxu0
    %v2916 = vadd.f32 0.0, %v2915
    %2917 = vmatmul.f32.gmra.mxu0 %v2714
    %v2918 = vpop.f32.mrf.mxu0
    %v2919 = vadd.f32 0.0, %v2918
    %2920 = vmatmul.f32.gmra.mxu0 %v2715
    %v2921 = vpop.f32.mrf.mxu0
    %v2922 = vadd.f32 0.0, %v2921
    %2923 = vmatmul.f32.gmra.mxu0 %v2716
    %v2924 = vpop.f32.mrf.mxu0
    %v2925 = vadd.f32 0.0, %v2924
    %2926 = vmatmul.f32.gmra.mxu0 %v2717
    %v2927 = vpop.f32.mrf.mxu0
    %v2928 = vadd.f32 0.0, %v2927
    %2929 = vmatmul.f32.gmra.mxu0 %v2718
    %v2930 = vpop.f32.mrf.mxu0
    %v2931 = vadd.f32 0.0, %v2930
    %2932 = vmatmul.f32.gmra.mxu0 %v2719
    %v2933 = vpop.f32.mrf.mxu0
    %v2934 = vadd.f32 0.0, %v2933
    %2935 = vmatmul.f32.gmra.mxu0 %v2720
    %v2936 = vpop.f32.mrf.mxu0
    %v2937 = vadd.f32 0.0, %v2936
    %2938 = vmatmul.f32.gmra.mxu0 %v2721
    %v2939 = vpop.f32.mrf.mxu0
    %v2940 = vadd.f32 0.0, %v2939
    %2941 = vmatmul.f32.gmra.mxu0 %v2722
    %v2942 = vpop.f32.mrf.mxu0
    %v2943 = vadd.f32 0.0, %v2942
    %2944 = vmatmul.f32.gmra.mxu0 %v2723
    %v2945 = vpop.f32.mrf.mxu0
    %v2946 = vadd.f32 0.0, %v2945
    %2947 = vmatmul.f32.gmra.mxu0 %v2724
    %v2948 = vpop.f32.mrf.mxu0
    %v2949 = vadd.f32 0.0, %v2948
    %2950 = vdwg.mxu0
    %v2951 = vadd.f32 %v2597, %v2760
    %v2952 = vadd.f32 %v2598, %v2763
    %v2953 = vadd.f32 %v2599, %v2766
    %v2954 = vadd.f32 %v2600, %v2769
    %v2955 = vadd.f32 %v2601, %v2772
    %v2956 = vadd.f32 %v2602, %v2775
    %v2957 = vadd.f32 %v2603, %v2778
    %v2958 = vadd.f32 %v2604, %v2781
    %v2959 = vadd.f32 %v2605, %v2784
    %v2960 = vadd.f32 %v2606, %v2787
    %v2961 = vadd.f32 %v2607, %v2790
    %v2962 = vadd.f32 %v2608, %v2793
    %v2963 = vadd.f32 %v2609, %v2796
    %v2964 = vadd.f32 %v2610, %v2799
    %v2965 = vadd.f32 %v2611, %v2802
    %v2966 = vadd.f32 %v2612, %v2805
    %v2967 = vadd.f32 %v2613, %v2808
    %v2968 = vadd.f32 %v2614, %v2811
    %v2969 = vadd.f32 %v2615, %v2814
    %v2970 = vadd.f32 %v2616, %v2817
    %v2971 = vadd.f32 %v2617, %v2820
    %v2972 = vadd.f32 %v2618, %v2823
    %v2973 = vadd.f32 %v2619, %v2826
    %v2974 = vadd.f32 %v2620, %v2829
    %v2975 = vadd.f32 %v2621, %v2832
    %v2976 = vadd.f32 %v2622, %v2835
    %v2977 = vadd.f32 %v2623, %v2838
    %v2978 = vadd.f32 %v2624, %v2841
    %v2979 = vadd.f32 %v2625, %v2844
    %v2980 = vadd.f32 %v2626, %v2847
    %v2981 = vadd.f32 %v2627, %v2850
    %v2982 = vadd.f32 %v2628, %v2853
    %v2983 = vadd.f32 %v2629, %v2856
    %v2984 = vadd.f32 %v2630, %v2859
    %v2985 = vadd.f32 %v2631, %v2862
    %v2986 = vadd.f32 %v2632, %v2865
    %v2987 = vadd.f32 %v2633, %v2868
    %v2988 = vadd.f32 %v2634, %v2871
    %v2989 = vadd.f32 %v2635, %v2874
    %v2990 = vadd.f32 %v2636, %v2877
    %v2991 = vadd.f32 %v2637, %v2880
    %v2992 = vadd.f32 %v2638, %v2883
    %v2993 = vadd.f32 %v2639, %v2886
    %v2994 = vadd.f32 %v2640, %v2889
    %v2995 = vadd.f32 %v2641, %v2892
    %v2996 = vadd.f32 %v2642, %v2895
    %v2997 = vadd.f32 %v2643, %v2898
    %v2998 = vadd.f32 %v2644, %v2901
    %v2999 = vadd.f32 %v2645, %v2904
    %v3000 = vadd.f32 %v2646, %v2907
    %v3001 = vadd.f32 %v2647, %v2910
    %v3002 = vadd.f32 %v2648, %v2913
    %v3003 = vadd.f32 %v2649, %v2916
    %v3004 = vadd.f32 %v2650, %v2919
    %v3005 = vadd.f32 %v2651, %v2922
    %v3006 = vadd.f32 %v2652, %v2925
    %v3007 = vadd.f32 %v2653, %v2928
    %v3008 = vadd.f32 %v2654, %v2931
    %v3009 = vadd.f32 %v2655, %v2934
    %v3010 = vadd.f32 %v2656, %v2937
    %v3011 = vadd.f32 %v2657, %v2940
    %v3012 = vadd.f32 %v2658, %v2943
    %v3013 = vadd.f32 %v2659, %v2946
    %v3014 = vadd.f32 %v2660, %v2949
    %v3015 = vld [vmem:[%s2306 + $0x2] sm:$0xff]
    %v3016 = vld [vmem:[%s2306 + $0xa] sm:$0xff]
    %v3017 = vld [vmem:[%s2306 + $0x1a] sm:$0xff]
    %v3018 = vld [vmem:[%s2306 + $0x22] sm:$0xff]
    %v3019 = vld [vmem:[%s2306 + $0x32] sm:$0xff]
    %v3020 = vld [vmem:[%s2306 + $0x3a] sm:$0xff]
    %v3021 = vld [vmem:[%s2306 + $0x4a] sm:$0xff]
    %v3022 = vld [vmem:[%s2306 + $0x52] sm:$0xff]
    %v3023 = vld [vmem:[%s2306 + $0x62] sm:$0xff]
    %v3024 = vld [vmem:[%s2306 + $0x6a] sm:$0xff]
    %v3025 = vld [vmem:[%s2306 + $0x7a] sm:$0xff]
    %v3026 = vld [vmem:[%s2306 + $0x82] sm:$0xff]
    %v3027 = vld [vmem:[%s2306 + $0x92] sm:$0xff]
    %v3028 = vld [vmem:[%s2306 + $0x9a] sm:$0xff]
    %v3029 = vld [vmem:[%s2306 + $0xaa] sm:$0xff]
    %v3030 = vld [vmem:[%s2306 + $0xb2] sm:$0xff]
    %v3031 = vld [vmem:[%s2306 + $0xc2] sm:$0xff]
    %v3032 = vld [vmem:[%s2306 + $0xca] sm:$0xff]
    %v3033 = vld [vmem:[%s2306 + $0xda] sm:$0xff]
    %v3034 = vld [vmem:[%s2306 + $0xe2] sm:$0xff]
    %v3035 = vld [vmem:[%s2306 + $0xf2] sm:$0xff]
    %v3036 = vld [vmem:[%s2306 + $0xfa] sm:$0xff]
    %v3037 = vld [vmem:[%s2306 + $0x10a] sm:$0xff]
    %v3038 = vld [vmem:[%s2306 + $0x112] sm:$0xff]
    %v3039 = vld [vmem:[%s2306 + $0x122] sm:$0xff]
    %v3040 = vld [vmem:[%s2306 + $0x12a] sm:$0xff]
    %v3041 = vld [vmem:[%s2306 + $0x13a] sm:$0xff]
    %v3042 = vld [vmem:[%s2306 + $0x142] sm:$0xff]
    %v3043 = vld [vmem:[%s2306 + $0x152] sm:$0xff]
    %v3044 = vld [vmem:[%s2306 + $0x15a] sm:$0xff]
    %v3045 = vld [vmem:[%s2306 + $0x16a] sm:$0xff]
    %v3046 = vld [vmem:[%s2306 + $0x172] sm:$0xff]
    %v3047 = vld [vmem:[%s2306 + $0x1b2] sm:$0xff]
    %v3048 = vld [vmem:[%s2306 + $0x1ba] sm:$0xff]
    %v3049 = vld [vmem:[%s2306 + $0x1ca] sm:$0xff]
    %v3050 = vld [vmem:[%s2306 + $0x1d2] sm:$0xff]
    %v3051 = vld [vmem:[%s2306 + $0x1e2] sm:$0xff]
    %v3052 = vld [vmem:[%s2306 + $0x1ea] sm:$0xff]
    %v3053 = vld [vmem:[%s2306 + $0x1fa] sm:$0xff]
    %v3054 = vld [vmem:[%s2306 + $0x202] sm:$0xff]
    %v3055 = vld [vmem:[%s2306 + $0x212] sm:$0xff]
    %v3056 = vld [vmem:[%s2306 + $0x21a] sm:$0xff]
    %v3057 = vld [vmem:[%s2306 + $0x22a] sm:$0xff]
    %v3058 = vld [vmem:[%s2306 + $0x232] sm:$0xff]
    %v3059 = vld [vmem:[%s2306 + $0x242] sm:$0xff]
    %v3060 = vld [vmem:[%s2306 + $0x24a] sm:$0xff]
    %v3061 = vld [vmem:[%s2306 + $0x25a] sm:$0xff]
    %v3062 = vld [vmem:[%s2306 + $0x262] sm:$0xff]
    %v3063 = vld [vmem:[%s2306 + $0x272] sm:$0xff]
    %v3064 = vld [vmem:[%s2306 + $0x27a] sm:$0xff]
    %v3065 = vld [vmem:[%s2306 + $0x28a] sm:$0xff]
    %v3066 = vld [vmem:[%s2306 + $0x292] sm:$0xff]
    %v3067 = vld [vmem:[%s2306 + $0x2a2] sm:$0xff]
    %v3068 = vld [vmem:[%s2306 + $0x2aa] sm:$0xff]
    %v3069 = vld [vmem:[%s2306 + $0x2ba] sm:$0xff]
    %v3070 = vld [vmem:[%s2306 + $0x2c2] sm:$0xff]
    %v3071 = vld [vmem:[%s2306 + $0x2d2] sm:$0xff]
    %v3072 = vld [vmem:[%s2306 + $0x2da] sm:$0xff]
    %v3073 = vld [vmem:[%s2306 + $0x2ea] sm:$0xff]
    %v3074 = vld [vmem:[%s2306 + $0x2f2] sm:$0xff]
    %v3075 = vld [vmem:[%s2306 + $0x302] sm:$0xff]
    %v3076 = vld [vmem:[%s2306 + $0x30a] sm:$0xff]
    %v3077 = vld [vmem:[%s2306 + $0x31a] sm:$0xff]
    %v3078 = vld [vmem:[%s2306 + $0x322] sm:$0xff]
    %s3079 = scalar_lea.vmem [#allocation7], 1024
    %v3080 = vld [vmem:[%s3079] sm:$0xff]
    %v3081 = vld [vmem:[%s3079 + $0x8] sm:$0xff]
    %v3082 = vld [vmem:[%s3079 + $0x10] sm:$0xff]
    %v3083 = vld [vmem:[%s3079 + $0x18] sm:$0xff]
    %v3084 = vld [vmem:[%s3079 + $0x20] sm:$0xff]
    %v3085 = vld [vmem:[%s3079 + $0x28] sm:$0xff]
    %v3086 = vld [vmem:[%s3079 + $0x30] sm:$0xff]
    %v3087 = vld [vmem:[%s3079 + $0x38] sm:$0xff]
    %v3088 = vld [vmem:[%s3079 + $0x40] sm:$0xff]
    %v3089 = vld [vmem:[%s3079 + $0x48] sm:$0xff]
    %v3090 = vld [vmem:[%s3079 + $0x50] sm:$0xff]
    %v3091 = vld [vmem:[%s3079 + $0x58] sm:$0xff]
    %v3092 = vld [vmem:[%s3079 + $0x60] sm:$0xff]
    %v3093 = vld [vmem:[%s3079 + $0x68] sm:$0xff]
    %v3094 = vld [vmem:[%s3079 + $0x70] sm:$0xff]
    %v3095 = vld [vmem:[%s3079 + $0x78] sm:$0xff]
    %3096 = vmatpush.msra.mxu0 %v3095
    %3097 = vmatpush.msra.mxu0 %v3094
    %3098 = vmatpush.msra.mxu0 %v3093
    %3099 = vmatpush.msra.mxu0 %v3092
    %3100 = vmatpush.msra.mxu0 %v3091
    %3101 = vmatpush.msra.mxu0 %v3090
    %3102 = vmatpush.msra.mxu0 %v3089
    %3103 = vmatpush.msra.mxu0 %v3088
    %3104 = vmatpush.msra.mxu0 %v3087
    %3105 = vmatpush.msra.mxu0 %v3086
    %3106 = vmatpush.msra.mxu0 %v3085
    %3107 = vmatpush.msra.mxu0 %v3084
    %3108 = vmatpush.msra.mxu0 %v3083
    %3109 = vmatpush.msra.mxu0 %v3082
    %3110 = vmatpush.msra.mxu0 %v3081
    %3111 = vmatpush.msra.mxu0 %v3080
    %3112 = vmatmul.f32.gmra.mxu0 %v3015
    %v3113 = vpop.f32.mrf.mxu0
    %v3114 = vadd.f32 0.0, %v3113
    %3115 = vmatmul.f32.gmra.mxu0 %v3016
    %v3116 = vpop.f32.mrf.mxu0
    %v3117 = vadd.f32 0.0, %v3116
    %3118 = vmatmul.f32.gmra.mxu0 %v3017
    %v3119 = vpop.f32.mrf.mxu0
    %v3120 = vadd.f32 0.0, %v3119
    %3121 = vmatmul.f32.gmra.mxu0 %v3018
    %v3122 = vpop.f32.mrf.mxu0
    %v3123 = vadd.f32 0.0, %v3122
    %3124 = vmatmul.f32.gmra.mxu0 %v3019
    %v3125 = vpop.f32.mrf.mxu0
    %v3126 = vadd.f32 0.0, %v3125
    %3127 = vmatmul.f32.gmra.mxu0 %v3020
    %v3128 = vpop.f32.mrf.mxu0
    %v3129 = vadd.f32 0.0, %v3128
    %3130 = vmatmul.f32.gmra.mxu0 %v3021
    %v3131 = vpop.f32.mrf.mxu0
    %v3132 = vadd.f32 0.0, %v3131
    %3133 = vmatmul.f32.gmra.mxu0 %v3022
    %v3134 = vpop.f32.mrf.mxu0
    %v3135 = vadd.f32 0.0, %v3134
    %3136 = vmatmul.f32.gmra.mxu0 %v3023
    %v3137 = vpop.f32.mrf.mxu0
    %v3138 = vadd.f32 0.0, %v3137
    %3139 = vmatmul.f32.gmra.mxu0 %v3024
    %v3140 = vpop.f32.mrf.mxu0
    %v3141 = vadd.f32 0.0, %v3140
    %3142 = vmatmul.f32.gmra.mxu0 %v3025
    %v3143 = vpop.f32.mrf.mxu0
    %v3144 = vadd.f32 0.0, %v3143
    %3145 = vmatmul.f32.gmra.mxu0 %v3026
    %v3146 = vpop.f32.mrf.mxu0
    %v3147 = vadd.f32 0.0, %v3146
    %3148 = vmatmul.f32.gmra.mxu0 %v3027
    %v3149 = vpop.f32.mrf.mxu0
    %v3150 = vadd.f32 0.0, %v3149
    %3151 = vmatmul.f32.gmra.mxu0 %v3028
    %v3152 = vpop.f32.mrf.mxu0
    %v3153 = vadd.f32 0.0, %v3152
    %3154 = vmatmul.f32.gmra.mxu0 %v3029
    %v3155 = vpop.f32.mrf.mxu0
    %v3156 = vadd.f32 0.0, %v3155
    %3157 = vmatmul.f32.gmra.mxu0 %v3030
    %v3158 = vpop.f32.mrf.mxu0
    %v3159 = vadd.f32 0.0, %v3158
    %3160 = vmatmul.f32.gmra.mxu0 %v3031
    %v3161 = vpop.f32.mrf.mxu0
    %v3162 = vadd.f32 0.0, %v3161
    %3163 = vmatmul.f32.gmra.mxu0 %v3032
    %v3164 = vpop.f32.mrf.mxu0
    %v3165 = vadd.f32 0.0, %v3164
    %3166 = vmatmul.f32.gmra.mxu0 %v3033
    %v3167 = vpop.f32.mrf.mxu0
    %v3168 = vadd.f32 0.0, %v3167
    %3169 = vmatmul.f32.gmra.mxu0 %v3034
    %v3170 = vpop.f32.mrf.mxu0
    %v3171 = vadd.f32 0.0, %v3170
    %3172 = vmatmul.f32.gmra.mxu0 %v3035
    %v3173 = vpop.f32.mrf.mxu0
    %v3174 = vadd.f32 0.0, %v3173
    %3175 = vmatmul.f32.gmra.mxu0 %v3036
    %v3176 = vpop.f32.mrf.mxu0
    %v3177 = vadd.f32 0.0, %v3176
    %3178 = vmatmul.f32.gmra.mxu0 %v3037
    %v3179 = vpop.f32.mrf.mxu0
    %v3180 = vadd.f32 0.0, %v3179
    %3181 = vmatmul.f32.gmra.mxu0 %v3038
    %v3182 = vpop.f32.mrf.mxu0
    %v3183 = vadd.f32 0.0, %v3182
    %3184 = vmatmul.f32.gmra.mxu0 %v3039
    %v3185 = vpop.f32.mrf.mxu0
    %v3186 = vadd.f32 0.0, %v3185
    %3187 = vmatmul.f32.gmra.mxu0 %v3040
    %v3188 = vpop.f32.mrf.mxu0
    %v3189 = vadd.f32 0.0, %v3188
    %3190 = vmatmul.f32.gmra.mxu0 %v3041
    %v3191 = vpop.f32.mrf.mxu0
    %v3192 = vadd.f32 0.0, %v3191
    %3193 = vmatmul.f32.gmra.mxu0 %v3042
    %v3194 = vpop.f32.mrf.mxu0
    %v3195 = vadd.f32 0.0, %v3194
    %3196 = vmatmul.f32.gmra.mxu0 %v3043
    %v3197 = vpop.f32.mrf.mxu0
    %v3198 = vadd.f32 0.0, %v3197
    %3199 = vmatmul.f32.gmra.mxu0 %v3044
    %v3200 = vpop.f32.mrf.mxu0
    %v3201 = vadd.f32 0.0, %v3200
    %3202 = vmatmul.f32.gmra.mxu0 %v3045
    %v3203 = vpop.f32.mrf.mxu0
    %v3204 = vadd.f32 0.0, %v3203
    %3205 = vmatmul.f32.gmra.mxu0 %v3046
    %v3206 = vpop.f32.mrf.mxu0
    %v3207 = vadd.f32 0.0, %v3206
    %3208 = vmatmul.f32.gmra.mxu0 %v3047
    %v3209 = vpop.f32.mrf.mxu0
    %v3210 = vadd.f32 0.0, %v3209
    %3211 = vmatmul.f32.gmra.mxu0 %v3048
    %v3212 = vpop.f32.mrf.mxu0
    %v3213 = vadd.f32 0.0, %v3212
    %3214 = vmatmul.f32.gmra.mxu0 %v3049
    %v3215 = vpop.f32.mrf.mxu0
    %v3216 = vadd.f32 0.0, %v3215
    %3217 = vmatmul.f32.gmra.mxu0 %v3050
    %v3218 = vpop.f32.mrf.mxu0
    %v3219 = vadd.f32 0.0, %v3218
    %3220 = vmatmul.f32.gmra.mxu0 %v3051
    %v3221 = vpop.f32.mrf.mxu0
    %v3222 = vadd.f32 0.0, %v3221
    %3223 = vmatmul.f32.gmra.mxu0 %v3052
    %v3224 = vpop.f32.mrf.mxu0
    %v3225 = vadd.f32 0.0, %v3224
    %3226 = vmatmul.f32.gmra.mxu0 %v3053
    %v3227 = vpop.f32.mrf.mxu0
    %v3228 = vadd.f32 0.0, %v3227
    %3229 = vmatmul.f32.gmra.mxu0 %v3054
    %v3230 = vpop.f32.mrf.mxu0
    %v3231 = vadd.f32 0.0, %v3230
    %3232 = vmatmul.f32.gmra.mxu0 %v3055
    %v3233 = vpop.f32.mrf.mxu0
    %v3234 = vadd.f32 0.0, %v3233
    %3235 = vmatmul.f32.gmra.mxu0 %v3056
    %v3236 = vpop.f32.mrf.mxu0
    %v3237 = vadd.f32 0.0, %v3236
    %3238 = vmatmul.f32.gmra.mxu0 %v3057
    %v3239 = vpop.f32.mrf.mxu0
    %v3240 = vadd.f32 0.0, %v3239
    %3241 = vmatmul.f32.gmra.mxu0 %v3058
    %v3242 = vpop.f32.mrf.mxu0
    %v3243 = vadd.f32 0.0, %v3242
    %3244 = vmatmul.f32.gmra.mxu0 %v3059
    %v3245 = vpop.f32.mrf.mxu0
    %v3246 = vadd.f32 0.0, %v3245
    %3247 = vmatmul.f32.gmra.mxu0 %v3060
    %v3248 = vpop.f32.mrf.mxu0
    %v3249 = vadd.f32 0.0, %v3248
    %3250 = vmatmul.f32.gmra.mxu0 %v3061
    %v3251 = vpop.f32.mrf.mxu0
    %v3252 = vadd.f32 0.0, %v3251
    %3253 = vmatmul.f32.gmra.mxu0 %v3062
    %v3254 = vpop.f32.mrf.mxu0
    %v3255 = vadd.f32 0.0, %v3254
    %3256 = vmatmul.f32.gmra.mxu0 %v3063
    %v3257 = vpop.f32.mrf.mxu0
    %v3258 = vadd.f32 0.0, %v3257
    %3259 = vmatmul.f32.gmra.mxu0 %v3064
    %v3260 = vpop.f32.mrf.mxu0
    %v3261 = vadd.f32 0.0, %v3260
    %3262 = vmatmul.f32.gmra.mxu0 %v3065
    %v3263 = vpop.f32.mrf.mxu0
    %v3264 = vadd.f32 0.0, %v3263
    %3265 = vmatmul.f32.gmra.mxu0 %v3066
    %v3266 = vpop.f32.mrf.mxu0
    %v3267 = vadd.f32 0.0, %v3266
    %3268 = vmatmul.f32.gmra.mxu0 %v3067
    %v3269 = vpop.f32.mrf.mxu0
    %v3270 = vadd.f32 0.0, %v3269
    %3271 = vmatmul.f32.gmra.mxu0 %v3068
    %v3272 = vpop.f32.mrf.mxu0
    %v3273 = vadd.f32 0.0, %v3272
    %3274 = vmatmul.f32.gmra.mxu0 %v3069
    %v3275 = vpop.f32.mrf.mxu0
    %v3276 = vadd.f32 0.0, %v3275
    %3277 = vmatmul.f32.gmra.mxu0 %v3070
    %v3278 = vpop.f32.mrf.mxu0
    %v3279 = vadd.f32 0.0, %v3278
    %3280 = vmatmul.f32.gmra.mxu0 %v3071
    %v3281 = vpop.f32.mrf.mxu0
    %v3282 = vadd.f32 0.0, %v3281
    %3283 = vmatmul.f32.gmra.mxu0 %v3072
    %v3284 = vpop.f32.mrf.mxu0
    %v3285 = vadd.f32 0.0, %v3284
    %3286 = vmatmul.f32.gmra.mxu0 %v3073
    %v3287 = vpop.f32.mrf.mxu0
    %v3288 = vadd.f32 0.0, %v3287
    %3289 = vmatmul.f32.gmra.mxu0 %v3074
    %v3290 = vpop.f32.mrf.mxu0
    %v3291 = vadd.f32 0.0, %v3290
    %3292 = vmatmul.f32.gmra.mxu0 %v3075
    %v3293 = vpop.f32.mrf.mxu0
    %v3294 = vadd.f32 0.0, %v3293
    %3295 = vmatmul.f32.gmra.mxu0 %v3076
    %v3296 = vpop.f32.mrf.mxu0
    %v3297 = vadd.f32 0.0, %v3296
    %3298 = vmatmul.f32.gmra.mxu0 %v3077
    %v3299 = vpop.f32.mrf.mxu0
    %v3300 = vadd.f32 0.0, %v3299
    %3301 = vmatmul.f32.gmra.mxu0 %v3078
    %v3302 = vpop.f32.mrf.mxu0
    %v3303 = vadd.f32 0.0, %v3302
    %3304 = vdwg.mxu0
    %v3305 = vadd.f32 %v2951, %v3114
    %v3306 = vadd.f32 %v2952, %v3117
    %v3307 = vadd.f32 %v2953, %v3120
    %v3308 = vadd.f32 %v2954, %v3123
    %v3309 = vadd.f32 %v2955, %v3126
    %v3310 = vadd.f32 %v2956, %v3129
    %v3311 = vadd.f32 %v2957, %v3132
    %v3312 = vadd.f32 %v2958, %v3135
    %v3313 = vadd.f32 %v2959, %v3138
    %v3314 = vadd.f32 %v2960, %v3141
    %v3315 = vadd.f32 %v2961, %v3144
    %v3316 = vadd.f32 %v2962, %v3147
    %v3317 = vadd.f32 %v2963, %v3150
    %v3318 = vadd.f32 %v2964, %v3153
    %v3319 = vadd.f32 %v2965, %v3156
    %v3320 = vadd.f32 %v2966, %v3159
    %v3321 = vadd.f32 %v2967, %v3162
    %v3322 = vadd.f32 %v2968, %v3165
    %v3323 = vadd.f32 %v2969, %v3168
    %v3324 = vadd.f32 %v2970, %v3171
    %v3325 = vadd.f32 %v2971, %v3174
    %v3326 = vadd.f32 %v2972, %v3177
    %v3327 = vadd.f32 %v2973, %v3180
    %v3328 = vadd.f32 %v2974, %v3183
    %v3329 = vadd.f32 %v2975, %v3186
    %v3330 = vadd.f32 %v2976, %v3189
    %v3331 = vadd.f32 %v2977, %v3192
    %v3332 = vadd.f32 %v2978, %v3195
    %v3333 = vadd.f32 %v2979, %v3198
    %v3334 = vadd.f32 %v2980, %v3201
    %v3335 = vadd.f32 %v2981, %v3204
    %v3336 = vadd.f32 %v2982, %v3207
    %v3337 = vadd.f32 %v2983, %v3210
    %v3338 = vadd.f32 %v2984, %v3213
    %v3339 = vadd.f32 %v2985, %v3216
    %v3340 = vadd.f32 %v2986, %v3219
    %v3341 = vadd.f32 %v2987, %v3222
    %v3342 = vadd.f32 %v2988, %v3225
    %v3343 = vadd.f32 %v2989, %v3228
    %v3344 = vadd.f32 %v2990, %v3231
    %v3345 = vadd.f32 %v2991, %v3234
    %v3346 = vadd.f32 %v2992, %v3237
    %v3347 = vadd.f32 %v2993, %v3240
    %v3348 = vadd.f32 %v2994, %v3243
    %v3349 = vadd.f32 %v2995, %v3246
    %v3350 = vadd.f32 %v2996, %v3249
    %v3351 = vadd.f32 %v2997, %v3252
    %v3352 = vadd.f32 %v2998, %v3255
    %v3353 = vadd.f32 %v2999, %v3258
    %v3354 = vadd.f32 %v3000, %v3261
    %v3355 = vadd.f32 %v3001, %v3264
    %v3356 = vadd.f32 %v3002, %v3267
    %v3357 = vadd.f32 %v3003, %v3270
    %v3358 = vadd.f32 %v3004, %v3273
    %v3359 = vadd.f32 %v3005, %v3276
    %v3360 = vadd.f32 %v3006, %v3279
    %v3361 = vadd.f32 %v3007, %v3282
    %v3362 = vadd.f32 %v3008, %v3285
    %v3363 = vadd.f32 %v3009, %v3288
    %v3364 = vadd.f32 %v3010, %v3291
    %v3365 = vadd.f32 %v3011, %v3294
    %v3366 = vadd.f32 %v3012, %v3297
    %v3367 = vadd.f32 %v3013, %v3300
    %v3368 = vadd.f32 %v3014, %v3303
    %v3369 = vld [vmem:[%s2] sm:$0x1]
    %v3370 = vld [vmem:[%s3] sm:$0x1]
    %v3371 = vadd.f32 %v3305, %v3306
    %v3372 = vadd.f32 %v3371, %v3307
    %v3373 = vadd.f32 %v3372, %v3308
    %v3374 = vadd.f32 %v3373, %v3309
    %v3375 = vadd.f32 %v3374, %v3310
    %v3376 = vadd.f32 %v3375, %v3311
    %v3377 = vadd.f32 %v3376, %v3312
    %v3378 = vadd.f32 %v3377, %v3313
    %v3379 = vadd.f32 %v3378, %v3314
    %v3380 = vadd.f32 %v3379, %v3315
    %v3381 = vadd.f32 %v3380, %v3316
    %v3382 = vadd.f32 %v3381, %v3317
    %v3383 = vadd.f32 %v3382, %v3318
    %v3384 = vadd.f32 %v3383, %v3319
    %v3385 = vadd.f32 %v3384, %v3320
    %v3386 = vadd.f32 %v3385, %v3321
    %v3387 = vadd.f32 %v3386, %v3322
    %v3388 = vadd.f32 %v3387, %v3323
    %v3389 = vadd.f32 %v3388, %v3324
    %v3390 = vadd.f32 %v3389, %v3325
    %v3391 = vadd.f32 %v3390, %v3326
    %v3392 = vadd.f32 %v3391, %v3327
    %v3393 = vadd.f32 %v3392, %v3328
    %v3394 = vadd.f32 %v3393, %v3329
    %v3395 = vadd.f32 %v3394, %v3330
    %v3396 = vadd.f32 %v3395, %v3331
    %v3397 = vadd.f32 %v3396, %v3332
    %v3398 = vadd.f32 %v3397, %v3333
    %v3399 = vadd.f32 %v3398, %v3334
    %v3400 = vadd.f32 %v3399, %v3335
    %v3401 = vadd.f32 %v3400, %v3336
    %v3402 = vadd.f32 %v3401, %v3337
    %v3403 = vadd.f32 %v3402, %v3338
    %v3404 = vadd.f32 %v3403, %v3339
    %v3405 = vadd.f32 %v3404, %v3340
    %v3406 = vadd.f32 %v3405, %v3341
    %v3407 = vadd.f32 %v3406, %v3342
    %v3408 = vadd.f32 %v3407, %v3343
    %v3409 = vadd.f32 %v3408, %v3344
    %v3410 = vadd.f32 %v3409, %v3345
    %v3411 = vadd.f32 %v3410, %v3346
    %v3412 = vadd.f32 %v3411, %v3347
    %v3413 = vadd.f32 %v3412, %v3348
    %v3414 = vadd.f32 %v3413, %v3349
    %v3415 = vadd.f32 %v3414, %v3350
    %v3416 = vadd.f32 %v3415, %v3351
    %v3417 = vadd.f32 %v3416, %v3352
    %v3418 = vadd.f32 %v3417, %v3353
    %v3419 = vadd.f32 %v3418, %v3354
    %v3420 = vadd.f32 %v3419, %v3355
    %v3421 = vadd.f32 %v3420, %v3356
    %v3422 = vadd.f32 %v3421, %v3357
    %v3423 = vadd.f32 %v3422, %v3358
    %v3424 = vadd.f32 %v3423, %v3359
    %v3425 = vadd.f32 %v3424, %v3360
    %v3426 = vadd.f32 %v3425, %v3361
    %v3427 = vadd.f32 %v3426, %v3362
    %v3428 = vadd.f32 %v3427, %v3363
    %v3429 = vadd.f32 %v3428, %v3364
    %v3430 = vadd.f32 %v3429, %v3365
    %v3431 = vadd.f32 %v3430, %v3366
    %v3432 = vadd.f32 %v3431, %v3367
    %v3433 = vadd.f32 %v3432, %v3368
    %v3434 = vrot.slane %v3433, 4
    %v3435 = vadd.f32 %v3433, %v3434
    %v3436 = vrot.slane %v3435, 2
    %v3437 = vadd.f32 %v3435, %v3436
    %v3438 = vrot.slane %v3437, 1
    %v3439 = vadd.f32 %v3437, %v3438
    %v3440 = vmul.f32 %v3439, 0.001953125
    %v3441 = vsub.f32 %v3305, %v3440
    %v3442 = vsub.f32 %v3306, %v3440
    %v3443 = vsub.f32 %v3307, %v3440
    %v3444 = vsub.f32 %v3308, %v3440
    %v3445 = vsub.f32 %v3309, %v3440
    %v3446 = vsub.f32 %v3310, %v3440
    %v3447 = vsub.f32 %v3311, %v3440
    %v3448 = vsub.f32 %v3312, %v3440
    %v3449 = vsub.f32 %v3313, %v3440
    %v3450 = vsub.f32 %v3314, %v3440
    %v3451 = vsub.f32 %v3315, %v3440
    %v3452 = vsub.f32 %v3316, %v3440
    %v3453 = vsub.f32 %v3317, %v3440
    %v3454 = vsub.f32 %v3318, %v3440
    %v3455 = vsub.f32 %v3319, %v3440
    %v3456 = vsub.f32 %v3320, %v3440
    %v3457 = vsub.f32 %v3321, %v3440
    %v3458 = vsub.f32 %v3322, %v3440
    %v3459 = vsub.f32 %v3323, %v3440
    %v3460 = vsub.f32 %v3324, %v3440
    %v3461 = vsub.f32 %v3325, %v3440
    %v3462 = vsub.f32 %v3326, %v3440
    %v3463 = vsub.f32 %v3327, %v3440
    %v3464 = vsub.f32 %v3328, %v3440
    %v3465 = vsub.f32 %v3329, %v3440
    %v3466 = vsub.f32 %v3330, %v3440
    %v3467 = vsub.f32 %v3331, %v3440
    %v3468 = vsub.f32 %v3332, %v3440
    %v3469 = vsub.f32 %v3333, %v3440
    %v3470 = vsub.f32 %v3334, %v3440
    %v3471 = vsub.f32 %v3335, %v3440
    %v3472 = vsub.f32 %v3336, %v3440
    %v3473 = vsub.f32 %v3337, %v3440
    %v3474 = vsub.f32 %v3338, %v3440
    %v3475 = vsub.f32 %v3339, %v3440
    %v3476 = vsub.f32 %v3340, %v3440
    %v3477 = vsub.f32 %v3341, %v3440
    %v3478 = vsub.f32 %v3342, %v3440
    %v3479 = vsub.f32 %v3343, %v3440
    %v3480 = vsub.f32 %v3344, %v3440
    %v3481 = vsub.f32 %v3345, %v3440
    %v3482 = vsub.f32 %v3346, %v3440
    %v3483 = vsub.f32 %v3347, %v3440
    %v3484 = vsub.f32 %v3348, %v3440
    %v3485 = vsub.f32 %v3349, %v3440
    %v3486 = vsub.f32 %v3350, %v3440
    %v3487 = vsub.f32 %v3351, %v3440
    %v3488 = vsub.f32 %v3352, %v3440
    %v3489 = vsub.f32 %v3353, %v3440
    %v3490 = vsub.f32 %v3354, %v3440
    %v3491 = vsub.f32 %v3355, %v3440
    %v3492 = vsub.f32 %v3356, %v3440
    %v3493 = vsub.f32 %v3357, %v3440
    %v3494 = vsub.f32 %v3358, %v3440
    %v3495 = vsub.f32 %v3359, %v3440
    %v3496 = vsub.f32 %v3360, %v3440
    %v3497 = vsub.f32 %v3361, %v3440
    %v3498 = vsub.f32 %v3362, %v3440
    %v3499 = vsub.f32 %v3363, %v3440
    %v3500 = vsub.f32 %v3364, %v3440
    %v3501 = vsub.f32 %v3365, %v3440
    %v3502 = vsub.f32 %v3366, %v3440
    %v3503 = vsub.f32 %v3367, %v3440
    %v3504 = vsub.f32 %v3368, %v3440
    %v3505 = vmul.f32 %v3441, %v3441
    %v3506 = vmul.f32 %v3442, %v3442
    %v3507 = vmul.f32 %v3443, %v3443
    %v3508 = vmul.f32 %v3444, %v3444
    %v3509 = vmul.f32 %v3445, %v3445
    %v3510 = vmul.f32 %v3446, %v3446
    %v3511 = vmul.f32 %v3447, %v3447
    %v3512 = vmul.f32 %v3448, %v3448
    %v3513 = vmul.f32 %v3449, %v3449
    %v3514 = vmul.f32 %v3450, %v3450
    %v3515 = vmul.f32 %v3451, %v3451
    %v3516 = vmul.f32 %v3452, %v3452
    %v3517 = vmul.f32 %v3453, %v3453
    %v3518 = vmul.f32 %v3454, %v3454
    %v3519 = vmul.f32 %v3455, %v3455
    %v3520 = vmul.f32 %v3456, %v3456
    %v3521 = vmul.f32 %v3457, %v3457
    %v3522 = vmul.f32 %v3458, %v3458
    %v3523 = vmul.f32 %v3459, %v3459
    %v3524 = vmul.f32 %v3460, %v3460
    %v3525 = vmul.f32 %v3461, %v3461
    %v3526 = vmul.f32 %v3462, %v3462
    %v3527 = vmul.f32 %v3463, %v3463
    %v3528 = vmul.f32 %v3464, %v3464
    %v3529 = vmul.f32 %v3465, %v3465
    %v3530 = vmul.f32 %v3466, %v3466
    %v3531 = vmul.f32 %v3467, %v3467
    %v3532 = vmul.f32 %v3468, %v3468
    %v3533 = vmul.f32 %v3469, %v3469
    %v3534 = vmul.f32 %v3470, %v3470
    %v3535 = vmul.f32 %v3471, %v3471
    %v3536 = vmul.f32 %v3472, %v3472
    %v3537 = vmul.f32 %v3473, %v3473
    %v3538 = vmul.f32 %v3474, %v3474
    %v3539 = vmul.f32 %v3475, %v3475
    %v3540 = vmul.f32 %v3476, %v3476
    %v3541 = vmul.f32 %v3477, %v3477
    %v3542 = vmul.f32 %v3478, %v3478
    %v3543 = vmul.f32 %v3479, %v3479
    %v3544 = vmul.f32 %v3480, %v3480
    %v3545 = vmul.f32 %v3481, %v3481
    %v3546 = vmul.f32 %v3482, %v3482
    %v3547 = vmul.f32 %v3483, %v3483
    %v3548 = vmul.f32 %v3484, %v3484
    %v3549 = vmul.f32 %v3485, %v3485
    %v3550 = vmul.f32 %v3486, %v3486
    %v3551 = vmul.f32 %v3487, %v3487
    %v3552 = vmul.f32 %v3488, %v3488
    %v3553 = vmul.f32 %v3489, %v3489
    %v3554 = vmul.f32 %v3490, %v3490
    %v3555 = vmul.f32 %v3491, %v3491
    %v3556 = vmul.f32 %v3492, %v3492
    %v3557 = vmul.f32 %v3493, %v3493
    %v3558 = vmul.f32 %v3494, %v3494
    %v3559 = vmul.f32 %v3495, %v3495
    %v3560 = vmul.f32 %v3496, %v3496
    %v3561 = vmul.f32 %v3497, %v3497
    %v3562 = vmul.f32 %v3498, %v3498
    %v3563 = vmul.f32 %v3499, %v3499
    %v3564 = vmul.f32 %v3500, %v3500
    %v3565 = vmul.f32 %v3501, %v3501
    %v3566 = vmul.f32 %v3502, %v3502
    %v3567 = vmul.f32 %v3503, %v3503
    %v3568 = vmul.f32 %v3504, %v3504
    %v3569 = vadd.f32 %v3505, %v3506
    %v3570 = vadd.f32 %v3569, %v3507
    %v3571 = vadd.f32 %v3570, %v3508
    %v3572 = vadd.f32 %v3571, %v3509
    %v3573 = vadd.f32 %v3572, %v3510
    %v3574 = vadd.f32 %v3573, %v3511
    %v3575 = vadd.f32 %v3574, %v3512
    %v3576 = vadd.f32 %v3575, %v3513
    %v3577 = vadd.f32 %v3576, %v3514
    %v3578 = vadd.f32 %v3577, %v3515
    %v3579 = vadd.f32 %v3578, %v3516
    %v3580 = vadd.f32 %v3579, %v3517
    %v3581 = vadd.f32 %v3580, %v3518
    %v3582 = vadd.f32 %v3581, %v3519
    %v3583 = vadd.f32 %v3582, %v3520
    %v3584 = vadd.f32 %v3583, %v3521
    %v3585 = vadd.f32 %v3584, %v3522
    %v3586 = vadd.f32 %v3585, %v3523
    %v3587 = vadd.f32 %v3586, %v3524
    %v3588 = vadd.f32 %v3587, %v3525
    %v3589 = vadd.f32 %v3588, %v3526
    %v3590 = vadd.f32 %v3589, %v3527
    %v3591 = vadd.f32 %v3590, %v3528
    %v3592 = vadd.f32 %v3591, %v3529
    %v3593 = vadd.f32 %v3592, %v3530
    %v3594 = vadd.f32 %v3593, %v3531
    %v3595 = vadd.f32 %v3594, %v3532
    %v3596 = vadd.f32 %v3595, %v3533
    %v3597 = vadd.f32 %v3596, %v3534
    %v3598 = vadd.f32 %v3597, %v3535
    %v3599 = vadd.f32 %v3598, %v3536
    %v3600 = vadd.f32 %v3599, %v3537
    %v3601 = vadd.f32 %v3600, %v3538
    %v3602 = vadd.f32 %v3601, %v3539
    %v3603 = vadd.f32 %v3602, %v3540
    %v3604 = vadd.f32 %v3603, %v3541
    %v3605 = vadd.f32 %v3604, %v3542
    %v3606 = vadd.f32 %v3605, %v3543
    %v3607 = vadd.f32 %v3606, %v3544
    %v3608 = vadd.f32 %v3607, %v3545
    %v3609 = vadd.f32 %v3608, %v3546
    %v3610 = vadd.f32 %v3609, %v3547
    %v3611 = vadd.f32 %v3610, %v3548
    %v3612 = vadd.f32 %v3611, %v3549
    %v3613 = vadd.f32 %v3612, %v3550
    %v3614 = vadd.f32 %v3613, %v3551
    %v3615 = vadd.f32 %v3614, %v3552
    %v3616 = vadd.f32 %v3615, %v3553
    %v3617 = vadd.f32 %v3616, %v3554
    %v3618 = vadd.f32 %v3617, %v3555
    %v3619 = vadd.f32 %v3618, %v3556
    %v3620 = vadd.f32 %v3619, %v3557
    %v3621 = vadd.f32 %v3620, %v3558
    %v3622 = vadd.f32 %v3621, %v3559
    %v3623 = vadd.f32 %v3622, %v3560
    %v3624 = vadd.f32 %v3623, %v3561
    %v3625 = vadd.f32 %v3624, %v3562
    %v3626 = vadd.f32 %v3625, %v3563
    %v3627 = vadd.f32 %v3626, %v3564
    %v3628 = vadd.f32 %v3627, %v3565
    %v3629 = vadd.f32 %v3628, %v3566
    %v3630 = vadd.f32 %v3629, %v3567
    %v3631 = vadd.f32 %v3630, %v3568
    %v3632 = vrot.slane %v3631, 4
    %v3633 = vadd.f32 %v3631, %v3632
    %v3634 = vrot.slane %v3633, 2
    %v3635 = vadd.f32 %v3633, %v3634
    %v3636 = vrot.slane %v3635, 1
    %v3637 = vadd.f32 %v3635, %v3636
    %v3638 = vmul.f32 %v3637, 0.001953125
    %v3639 = vadd.f32 %v3638, 1e-05
    %v3640 = vrsqrt.pop %v3639
    %v3641 = vmul.f32 %v3640, %v3639
    %v3642 = vmul.f32 %v3641, %v3640
    %v3643 = vmul.f32 0.5, %v3642
    %v3644 = vsub.f32 1.5, %v3643
    %v3645 = vmul.f32 %v3640, %v3644
    %vm3646 = vweird.f32 %v3639
    %vm3647 = vweird.f32 %v3640
    %vm3648 = vmor %vm3646, %vm3647
    %v3649 = vsel %vm3648, %v3640, %v3645
    %v3650 = vmul.f32 %v3369, %v3649
    %v3652 = vperm.slane %v3650, 0
    %v3654 = vmul.f32 %v3441, %v3652
    %v3655 = vmul.f32 %v3442, %v3652
    %v3656 = vmul.f32 %v3443, %v3652
    %v3657 = vmul.f32 %v3444, %v3652
    %v3658 = vmul.f32 %v3445, %v3652
    %v3659 = vmul.f32 %v3446, %v3652
    %v3660 = vmul.f32 %v3447, %v3652
    %v3661 = vmul.f32 %v3448, %v3652
    %v3662 = vmul.f32 %v3449, %v3652
    %v3663 = vmul.f32 %v3450, %v3652
    %v3664 = vmul.f32 %v3451, %v3652
    %v3665 = vmul.f32 %v3452, %v3652
    %v3666 = vmul.f32 %v3453, %v3652
    %v3667 = vmul.f32 %v3454, %v3652
    %v3668 = vmul.f32 %v3455, %v3652
    %v3669 = vmul.f32 %v3456, %v3652
    %v3670 = vmul.f32 %v3457, %v3652
    %v3671 = vmul.f32 %v3458, %v3652
    %v3672 = vmul.f32 %v3459, %v3652
    %v3673 = vmul.f32 %v3460, %v3652
    %v3674 = vmul.f32 %v3461, %v3652
    %v3675 = vmul.f32 %v3462, %v3652
    %v3676 = vmul.f32 %v3463, %v3652
    %v3677 = vmul.f32 %v3464, %v3652
    %v3678 = vmul.f32 %v3465, %v3652
    %v3679 = vmul.f32 %v3466, %v3652
    %v3680 = vmul.f32 %v3467, %v3652
    %v3681 = vmul.f32 %v3468, %v3652
    %v3682 = vmul.f32 %v3469, %v3652
    %v3683 = vmul.f32 %v3470, %v3652
    %v3684 = vmul.f32 %v3471, %v3652
    %v3685 = vmul.f32 %v3472, %v3652
    %v3686 = vmul.f32 %v3473, %v3652
    %v3687 = vmul.f32 %v3474, %v3652
    %v3688 = vmul.f32 %v3475, %v3652
    %v3689 = vmul.f32 %v3476, %v3652
    %v3690 = vmul.f32 %v3477, %v3652
    %v3691 = vmul.f32 %v3478, %v3652
    %v3692 = vmul.f32 %v3479, %v3652
    %v3693 = vmul.f32 %v3480, %v3652
    %v3694 = vmul.f32 %v3481, %v3652
    %v3695 = vmul.f32 %v3482, %v3652
    %v3696 = vmul.f32 %v3483, %v3652
    %v3697 = vmul.f32 %v3484, %v3652
    %v3698 = vmul.f32 %v3485, %v3652
    %v3699 = vmul.f32 %v3486, %v3652
    %v3700 = vmul.f32 %v3487, %v3652
    %v3701 = vmul.f32 %v3488, %v3652
    %v3702 = vmul.f32 %v3489, %v3652
    %v3703 = vmul.f32 %v3490, %v3652
    %v3704 = vmul.f32 %v3491, %v3652
    %v3705 = vmul.f32 %v3492, %v3652
    %v3706 = vmul.f32 %v3493, %v3652
    %v3707 = vmul.f32 %v3494, %v3652
    %v3708 = vmul.f32 %v3495, %v3652
    %v3709 = vmul.f32 %v3496, %v3652
    %v3710 = vmul.f32 %v3497, %v3652
    %v3711 = vmul.f32 %v3498, %v3652
    %v3712 = vmul.f32 %v3499, %v3652
    %v3713 = vmul.f32 %v3500, %v3652
    %v3714 = vmul.f32 %v3501, %v3652
    %v3715 = vmul.f32 %v3502, %v3652
    %v3716 = vmul.f32 %v3503, %v3652
    %v3717 = vmul.f32 %v3504, %v3652
    %v3719 = vperm.slane %v3370, 0
    %v3721 = vadd.f32 %v3654, %v3719
    %v3722 = vadd.f32 %v3655, %v3719
    %v3723 = vadd.f32 %v3656, %v3719
    %v3724 = vadd.f32 %v3657, %v3719
    %v3725 = vadd.f32 %v3658, %v3719
    %v3726 = vadd.f32 %v3659, %v3719
    %v3727 = vadd.f32 %v3660, %v3719
    %v3728 = vadd.f32 %v3661, %v3719
    %v3729 = vadd.f32 %v3662, %v3719
    %v3730 = vadd.f32 %v3663, %v3719
    %v3731 = vadd.f32 %v3664, %v3719
    %v3732 = vadd.f32 %v3665, %v3719
    %v3733 = vadd.f32 %v3666, %v3719
    %v3734 = vadd.f32 %v3667, %v3719
    %v3735 = vadd.f32 %v3668, %v3719
    %v3736 = vadd.f32 %v3669, %v3719
    %v3737 = vadd.f32 %v3670, %v3719
    %v3738 = vadd.f32 %v3671, %v3719
    %v3739 = vadd.f32 %v3672, %v3719
    %v3740 = vadd.f32 %v3673, %v3719
    %v3741 = vadd.f32 %v3674, %v3719
    %v3742 = vadd.f32 %v3675, %v3719
    %v3743 = vadd.f32 %v3676, %v3719
    %v3744 = vadd.f32 %v3677, %v3719
    %v3745 = vadd.f32 %v3678, %v3719
    %v3746 = vadd.f32 %v3679, %v3719
    %v3747 = vadd.f32 %v3680, %v3719
    %v3748 = vadd.f32 %v3681, %v3719
    %v3749 = vadd.f32 %v3682, %v3719
    %v3750 = vadd.f32 %v3683, %v3719
    %v3751 = vadd.f32 %v3684, %v3719
    %v3752 = vadd.f32 %v3685, %v3719
    %v3753 = vadd.f32 %v3686, %v3719
    %v3754 = vadd.f32 %v3687, %v3719
    %v3755 = vadd.f32 %v3688, %v3719
    %v3756 = vadd.f32 %v3689, %v3719
    %v3757 = vadd.f32 %v3690, %v3719
    %v3758 = vadd.f32 %v3691, %v3719
    %v3759 = vadd.f32 %v3692, %v3719
    %v3760 = vadd.f32 %v3693, %v3719
    %v3761 = vadd.f32 %v3694, %v3719
    %v3762 = vadd.f32 %v3695, %v3719
    %v3763 = vadd.f32 %v3696, %v3719
    %v3764 = vadd.f32 %v3697, %v3719
    %v3765 = vadd.f32 %v3698, %v3719
    %v3766 = vadd.f32 %v3699, %v3719
    %v3767 = vadd.f32 %v3700, %v3719
    %v3768 = vadd.f32 %v3701, %v3719
    %v3769 = vadd.f32 %v3702, %v3719
    %v3770 = vadd.f32 %v3703, %v3719
    %v3771 = vadd.f32 %v3704, %v3719
    %v3772 = vadd.f32 %v3705, %v3719
    %v3773 = vadd.f32 %v3706, %v3719
    %v3774 = vadd.f32 %v3707, %v3719
    %v3775 = vadd.f32 %v3708, %v3719
    %v3776 = vadd.f32 %v3709, %v3719
    %v3777 = vadd.f32 %v3710, %v3719
    %v3778 = vadd.f32 %v3711, %v3719
    %v3779 = vadd.f32 %v3712, %v3719
    %v3780 = vadd.f32 %v3713, %v3719
    %v3781 = vadd.f32 %v3714, %v3719
    %v3782 = vadd.f32 %v3715, %v3719
    %v3783 = vadd.f32 %v3716, %v3719
    %v3784 = vadd.f32 %v3717, %v3719
    %v3785 = vmax.f32 %v3721, 0.0
    %v3786 = vmax.f32 %v3722, 0.0
    %v3787 = vmax.f32 %v3723, 0.0
    %v3788 = vmax.f32 %v3724, 0.0
    %v3789 = vmax.f32 %v3725, 0.0
    %v3790 = vmax.f32 %v3726, 0.0
    %v3791 = vmax.f32 %v3727, 0.0
    %v3792 = vmax.f32 %v3728, 0.0
    %v3793 = vmax.f32 %v3729, 0.0
    %v3794 = vmax.f32 %v3730, 0.0
    %v3795 = vmax.f32 %v3731, 0.0
    %v3796 = vmax.f32 %v3732, 0.0
    %v3797 = vmax.f32 %v3733, 0.0
    %v3798 = vmax.f32 %v3734, 0.0
    %v3799 = vmax.f32 %v3735, 0.0
    %v3800 = vmax.f32 %v3736, 0.0
    %v3801 = vmax.f32 %v3737, 0.0
    %v3802 = vmax.f32 %v3738, 0.0
    %v3803 = vmax.f32 %v3739, 0.0
    %v3804 = vmax.f32 %v3740, 0.0
    %v3805 = vmax.f32 %v3741, 0.0
    %v3806 = vmax.f32 %v3742, 0.0
    %v3807 = vmax.f32 %v3743, 0.0
    %v3808 = vmax.f32 %v3744, 0.0
    %v3809 = vmax.f32 %v3745, 0.0
    %v3810 = vmax.f32 %v3746, 0.0
    %v3811 = vmax.f32 %v3747, 0.0
    %v3812 = vmax.f32 %v3748, 0.0
    %v3813 = vmax.f32 %v3749, 0.0
    %v3814 = vmax.f32 %v3750, 0.0
    %v3815 = vmax.f32 %v3751, 0.0
    %v3816 = vmax.f32 %v3752, 0.0
    %v3817 = vmax.f32 %v3753, 0.0
    %v3818 = vmax.f32 %v3754, 0.0
    %v3819 = vmax.f32 %v3755, 0.0
    %v3820 = vmax.f32 %v3756, 0.0
    %v3821 = vmax.f32 %v3757, 0.0
    %v3822 = vmax.f32 %v3758, 0.0
    %v3823 = vmax.f32 %v3759, 0.0
    %v3824 = vmax.f32 %v3760, 0.0
    %v3825 = vmax.f32 %v3761, 0.0
    %v3826 = vmax.f32 %v3762, 0.0
    %v3827 = vmax.f32 %v3763, 0.0
    %v3828 = vmax.f32 %v3764, 0.0
    %v3829 = vmax.f32 %v3765, 0.0
    %v3830 = vmax.f32 %v3766, 0.0
    %v3831 = vmax.f32 %v3767, 0.0
    %v3832 = vmax.f32 %v3768, 0.0
    %v3833 = vmax.f32 %v3769, 0.0
    %v3834 = vmax.f32 %v3770, 0.0
    %v3835 = vmax.f32 %v3771, 0.0
    %v3836 = vmax.f32 %v3772, 0.0
    %v3837 = vmax.f32 %v3773, 0.0
    %v3838 = vmax.f32 %v3774, 0.0
    %v3839 = vmax.f32 %v3775, 0.0
    %v3840 = vmax.f32 %v3776, 0.0
    %v3841 = vmax.f32 %v3777, 0.0
    %v3842 = vmax.f32 %v3778, 0.0
    %v3843 = vmax.f32 %v3779, 0.0
    %v3844 = vmax.f32 %v3780, 0.0
    %v3845 = vmax.f32 %v3781, 0.0
    %v3846 = vmax.f32 %v3782, 0.0
    %v3847 = vmax.f32 %v3783, 0.0
    %v3848 = vmax.f32 %v3784, 0.0
    %3849 = vst [vmem:[#allocation3] sm:$0xff] 0.0
    %3850 = vst [vmem:[#allocation3 + $0x8] sm:$0xff] 0.0
    %3851 = vst [vmem:[#allocation3 + $0x10] sm:$0x3] 0.0
    %3852 = vst [vmem:[#allocation3 + $0x18] sm:$0xff] 0.0
    %3853 = vst [vmem:[#allocation3 + $0x20] sm:$0xff] 0.0
    %3854 = vst [vmem:[#allocation3 + $0x28] sm:$0x3] 0.0
    %3855 = vst [vmem:[#allocation3 + $0x30] sm:$0xff] 0.0
    %3856 = vst [vmem:[#allocation3 + $0x38] sm:$0xff] 0.0
    %3857 = vst [vmem:[#allocation3 + $0x40] sm:$0x3] 0.0
    %3858 = vst [vmem:[#allocation3 + $0x48] sm:$0xff] 0.0
    %3859 = vst [vmem:[#allocation3 + $0x50] sm:$0xff] 0.0
    %3860 = vst [vmem:[#allocation3 + $0x58] sm:$0x3] 0.0
    %3861 = vst [vmem:[#allocation3 + $0x60] sm:$0xff] 0.0
    %3862 = vst [vmem:[#allocation3 + $0x68] sm:$0xff] 0.0
    %3863 = vst [vmem:[#allocation3 + $0x70] sm:$0x3] 0.0
    %3864 = vst [vmem:[#allocation3 + $0x78] sm:$0xff] 0.0
    %3865 = vst [vmem:[#allocation3 + $0x80] sm:$0xff] 0.0
    %3866 = vst [vmem:[#allocation3 + $0x88] sm:$0x3] 0.0
    %3867 = vst [vmem:[#allocation3 + $0x90] sm:$0xff] 0.0
    %3868 = vst [vmem:[#allocation3 + $0x98] sm:$0xff] 0.0
    %3869 = vst [vmem:[#allocation3 + $0xa0] sm:$0x3] 0.0
    %3870 = vst [vmem:[#allocation3 + $0xa8] sm:$0xff] 0.0
    %3871 = vst [vmem:[#allocation3 + $0xb0] sm:$0xff] 0.0
    %3872 = vst [vmem:[#allocation3 + $0xb8] sm:$0x3] 0.0
    %3873 = vst [vmem:[#allocation3 + $0xc0] sm:$0xff] 0.0
    %3874 = vst [vmem:[#allocation3 + $0xc8] sm:$0xff] 0.0
    %3875 = vst [vmem:[#allocation3 + $0xd0] sm:$0x3] 0.0
    %3876 = vst [vmem:[#allocation3 + $0xd8] sm:$0xff] 0.0
    %3877 = vst [vmem:[#allocation3 + $0xe0] sm:$0xff] 0.0
    %3878 = vst [vmem:[#allocation3 + $0xe8] sm:$0x3] 0.0
    %3879 = vst [vmem:[#allocation3 + $0xf0] sm:$0xff] 0.0
    %3880 = vst [vmem:[#allocation3 + $0xf8] sm:$0xff] 0.0
    %3881 = vst [vmem:[#allocation3 + $0x100] sm:$0x3] 0.0
    %3882 = vst [vmem:[#allocation3 + $0x108] sm:$0xff] 0.0
    %3883 = vst [vmem:[#allocation3 + $0x110] sm:$0xff] 0.0
    %3884 = vst [vmem:[#allocation3 + $0x118] sm:$0x3] 0.0
    %3885 = vst [vmem:[#allocation3 + $0x120] sm:$0xff] 0.0
    %3886 = vst [vmem:[#allocation3 + $0x128] sm:$0xff] 0.0
    %3887 = vst [vmem:[#allocation3 + $0x130] sm:$0x3] 0.0
    %3888 = vst [vmem:[#allocation3 + $0x138] sm:$0xff] 0.0
    %3889 = vst [vmem:[#allocation3 + $0x140] sm:$0xff] 0.0
    %3890 = vst [vmem:[#allocation3 + $0x148] sm:$0x3] 0.0
    %3891 = vst [vmem:[#allocation3 + $0x150] sm:$0xff] 0.0
    %3892 = vst [vmem:[#allocation3 + $0x158] sm:$0xff] 0.0
    %3893 = vst [vmem:[#allocation3 + $0x160] sm:$0x3] 0.0
    %3894 = vst [vmem:[#allocation3 + $0x168] sm:$0xff] 0.0
    %3895 = vst [vmem:[#allocation3 + $0x170] sm:$0xff] 0.0
    %3896 = vst [vmem:[#allocation3 + $0x178] sm:$0x3] 0.0
    %3897 = vst [vmem:[#allocation3 + $0x180] sm:$0xff] 0.0
    %3898 = vst [vmem:[#allocation3 + $0x188] sm:$0xff] 0.0
    %3899 = vst [vmem:[#allocation3 + $0x190] sm:$0x3] 0.0
    %3900 = vst [vmem:[#allocation3 + $0x198] sm:$0xff] 0.0
    %3901 = vst [vmem:[#allocation3 + $0x1a0] sm:$0xff] 0.0
    %3902 = vst [vmem:[#allocation3 + $0x1a8] sm:$0x3] 0.0
    %3903 = vst [vmem:[#allocation3 + $0x1b0] sm:$0xff] 0.0
    %3904 = vst [vmem:[#allocation3 + $0x1b8] sm:$0xff] 0.0
    %3905 = vst [vmem:[#allocation3 + $0x1c0] sm:$0x3] 0.0
    %3906 = vst [vmem:[#allocation3 + $0x1c8] sm:$0xff] 0.0
    %3907 = vst [vmem:[#allocation3 + $0x1d0] sm:$0xff] 0.0
    %3908 = vst [vmem:[#allocation3 + $0x1d8] sm:$0x3] 0.0
    %3909 = vst [vmem:[#allocation3 + $0x1e0] sm:$0xff] 0.0
    %3910 = vst [vmem:[#allocation3 + $0x1e8] sm:$0xff] 0.0
    %3911 = vst [vmem:[#allocation3 + $0x1f0] sm:$0x3] 0.0
    %3912 = vst [vmem:[#allocation3 + $0x1f8] sm:$0xff] 0.0
    %3913 = vst [vmem:[#allocation3 + $0x200] sm:$0xff] 0.0
    %3914 = vst [vmem:[#allocation3 + $0x208] sm:$0x3] 0.0
    %3915 = vst [vmem:[#allocation3 + $0x210] sm:$0xff] 0.0
    %3916 = vst [vmem:[#allocation3 + $0x218] sm:$0xff] 0.0
    %3917 = vst [vmem:[#allocation3 + $0x220] sm:$0x3] 0.0
    %3918 = vst [vmem:[#allocation3 + $0x228] sm:$0xff] 0.0
    %3919 = vst [vmem:[#allocation3 + $0x230] sm:$0xff] 0.0
    %3920 = vst [vmem:[#allocation3 + $0x238] sm:$0x3] 0.0
    %3921 = vst [vmem:[#allocation3 + $0x240] sm:$0xff] 0.0
    %3922 = vst [vmem:[#allocation3 + $0x248] sm:$0xff] 0.0
    %3923 = vst [vmem:[#allocation3 + $0x250] sm:$0x3] 0.0
    %3924 = vst [vmem:[#allocation3 + $0x258] sm:$0xff] 0.0
    %3925 = vst [vmem:[#allocation3 + $0x260] sm:$0xff] 0.0
    %3926 = vst [vmem:[#allocation3 + $0x268] sm:$0x3] 0.0
    %3927 = vst [vmem:[#allocation3 + $0x270] sm:$0xff] 0.0
    %3928 = vst [vmem:[#allocation3 + $0x278] sm:$0xff] 0.0
    %3929 = vst [vmem:[#allocation3 + $0x280] sm:$0x3] 0.0
    %3930 = vst [vmem:[#allocation3 + $0x288] sm:$0xff] 0.0
    %3931 = vst [vmem:[#allocation3 + $0x290] sm:$0xff] 0.0
    %3932 = vst [vmem:[#allocation3 + $0x298] sm:$0x3] 0.0
    %3933 = vst [vmem:[#allocation3 + $0x2a0] sm:$0xff] 0.0
    %3934 = vst [vmem:[#allocation3 + $0x2a8] sm:$0xff] 0.0
    %3935 = vst [vmem:[#allocation3 + $0x2b0] sm:$0x3] 0.0
    %3936 = vst [vmem:[#allocation3 + $0x2b8] sm:$0xff] 0.0
    %3937 = vst [vmem:[#allocation3 + $0x2c0] sm:$0xff] 0.0
    %3938 = vst [vmem:[#allocation3 + $0x2c8] sm:$0x3] 0.0
    %3939 = vst [vmem:[#allocation3 + $0x2d0] sm:$0xff] 0.0
    %3940 = vst [vmem:[#allocation3 + $0x2d8] sm:$0xff] 0.0
    %3941 = vst [vmem:[#allocation3 + $0x2e0] sm:$0x3] 0.0
    %3942 = vst [vmem:[#allocation3 + $0x2e8] sm:$0xff] 0.0
    %3943 = vst [vmem:[#allocation3 + $0x2f0] sm:$0xff] 0.0
    %3944 = vst [vmem:[#allocation3 + $0x2f8] sm:$0x3] 0.0
    %3945 = vst [vmem:[#allocation3 + $0x300] sm:$0xff] 0.0
    %3946 = vst [vmem:[#allocation3 + $0x308] sm:$0xff] 0.0
    %3947 = vst [vmem:[#allocation3 + $0x310] sm:$0x3] 0.0
    %3948 = vst [vmem:[#allocation3 + $0x318] sm:$0xff] 0.0
    %3949 = vst [vmem:[#allocation3 + $0x320] sm:$0xff] 0.0
    %3950 = vst [vmem:[#allocation3 + $0x328] sm:$0x3] 0.0
    %3951 = vst [vmem:[#allocation3 + $0x330] sm:$0xff] 0.0
    %3952 = vst [vmem:[#allocation3 + $0x338] sm:$0xff] 0.0
    %3953 = vst [vmem:[#allocation3 + $0x340] sm:$0x3] 0.0
    %3954 = vst [vmem:[#allocation3 + $0x348] sm:$0xff] 0.0
    %3955 = vst [vmem:[#allocation3 + $0x350] sm:$0xff] 0.0
    %3956 = vst [vmem:[#allocation3 + $0x358] sm:$0x3] 0.0
    %s3957 = scalar_lea.vmem [#allocation3], 24
    %3958 = vst [vmem:[%s3957 + $0x1] sm:$0xff] %v3785
    %3959 = vst [vmem:[%s3957 + $0x9] sm:$0xff] %v3786
    %3960 = vst [vmem:[%s3957 + $0x19] sm:$0xff] %v3787
    %3961 = vst [vmem:[%s3957 + $0x21] sm:$0xff] %v3788
    %3962 = vst [vmem:[%s3957 + $0x31] sm:$0xff] %v3789
    %3963 = vst [vmem:[%s3957 + $0x39] sm:$0xff] %v3790
    %3964 = vst [vmem:[%s3957 + $0x49] sm:$0xff] %v3791
    %3965 = vst [vmem:[%s3957 + $0x51] sm:$0xff] %v3792
    %3966 = vst [vmem:[%s3957 + $0x61] sm:$0xff] %v3793
    %3967 = vst [vmem:[%s3957 + $0x69] sm:$0xff] %v3794
    %3968 = vst [vmem:[%s3957 + $0x79] sm:$0xff] %v3795
    %3969 = vst [vmem:[%s3957 + $0x81] sm:$0xff] %v3796
    %3970 = vst [vmem:[%s3957 + $0x91] sm:$0xff] %v3797
    %3971 = vst [vmem:[%s3957 + $0x99] sm:$0xff] %v3798
    %3972 = vst [vmem:[%s3957 + $0xa9] sm:$0xff] %v3799
    %3973 = vst [vmem:[%s3957 + $0xb1] sm:$0xff] %v3800
    %3974 = vst [vmem:[%s3957 + $0xc1] sm:$0xff] %v3801
    %3975 = vst [vmem:[%s3957 + $0xc9] sm:$0xff] %v3802
    %3976 = vst [vmem:[%s3957 + $0xd9] sm:$0xff] %v3803
    %3977 = vst [vmem:[%s3957 + $0xe1] sm:$0xff] %v3804
    %3978 = vst [vmem:[%s3957 + $0xf1] sm:$0xff] %v3805
    %3979 = vst [vmem:[%s3957 + $0xf9] sm:$0xff] %v3806
    %3980 = vst [vmem:[%s3957 + $0x109] sm:$0xff] %v3807
    %3981 = vst [vmem:[%s3957 + $0x111] sm:$0xff] %v3808
    %3982 = vst [vmem:[%s3957 + $0x121] sm:$0xff] %v3809
    %3983 = vst [vmem:[%s3957 + $0x129] sm:$0xff] %v3810
    %3984 = vst [vmem:[%s3957 + $0x139] sm:$0xff] %v3811
    %3985 = vst [vmem:[%s3957 + $0x141] sm:$0xff] %v3812
    %3986 = vst [vmem:[%s3957 + $0x151] sm:$0xff] %v3813
    %3987 = vst [vmem:[%s3957 + $0x159] sm:$0xff] %v3814
    %3988 = vst [vmem:[%s3957 + $0x169] sm:$0xff] %v3815
    %3989 = vst [vmem:[%s3957 + $0x171] sm:$0xff] %v3816
    %3990 = vst [vmem:[%s3957 + $0x1b1] sm:$0xff] %v3817
    %3991 = vst [vmem:[%s3957 + $0x1b9] sm:$0xff] %v3818
    %3992 = vst [vmem:[%s3957 + $0x1c9] sm:$0xff] %v3819
    %3993 = vst [vmem:[%s3957 + $0x1d1] sm:$0xff] %v3820
    %3994 = vst [vmem:[%s3957 + $0x1e1] sm:$0xff] %v3821
    %3995 = vst [vmem:[%s3957 + $0x1e9] sm:$0xff] %v3822
    %3996 = vst [vmem:[%s3957 + $0x1f9] sm:$0xff] %v3823
    %3997 = vst [vmem:[%s3957 + $0x201] sm:$0xff] %v3824
    %3998 = vst [vmem:[%s3957 + $0x211] sm:$0xff] %v3825
    %3999 = vst [vmem:[%s3957 + $0x219] sm:$0xff] %v3826
    %4000 = vst [vmem:[%s3957 + $0x229] sm:$0xff] %v3827
    %4001 = vst [vmem:[%s3957 + $0x231] sm:$0xff] %v3828
    %4002 = vst [vmem:[%s3957 + $0x241] sm:$0xff] %v3829
    %4003 = vst [vmem:[%s3957 + $0x249] sm:$0xff] %v3830
    %4004 = vst [vmem:[%s3957 + $0x259] sm:$0xff] %v3831
    %4005 = vst [vmem:[%s3957 + $0x261] sm:$0xff] %v3832
    %4006 = vst [vmem:[%s3957 + $0x271] sm:$0xff] %v3833
    %4007 = vst [vmem:[%s3957 + $0x279] sm:$0xff] %v3834
    %4008 = vst [vmem:[%s3957 + $0x289] sm:$0xff] %v3835
    %4009 = vst [vmem:[%s3957 + $0x291] sm:$0xff] %v3836
    %4010 = vst [vmem:[%s3957 + $0x2a1] sm:$0xff] %v3837
    %4011 = vst [vmem:[%s3957 + $0x2a9] sm:$0xff] %v3838
    %4012 = vst [vmem:[%s3957 + $0x2b9] sm:$0xff] %v3839
    %4013 = vst [vmem:[%s3957 + $0x2c1] sm:$0xff] %v3840
    %4014 = vst [vmem:[%s3957 + $0x2d1] sm:$0xff] %v3841
    %4015 = vst [vmem:[%s3957 + $0x2d9] sm:$0xff] %v3842
    %4016 = vst [vmem:[%s3957 + $0x2e9] sm:$0xff] %v3843
    %4017 = vst [vmem:[%s3957 + $0x2f1] sm:$0xff] %v3844
    %4018 = vst [vmem:[%s3957 + $0x301] sm:$0xff] %v3845
    %4019 = vst [vmem:[%s3957 + $0x309] sm:$0xff] %v3846
    %4020 = vst [vmem:[%s3957 + $0x319] sm:$0xff] %v3847
    %4021 = vst [vmem:[%s3957 + $0x321] sm:$0xff] %v3848
    %v4022 = vld [vmem:[#allocation3] sm:$0xff]
    %v4023 = vld [vmem:[#allocation3 + $0x8] sm:$0xff]
    %v4024 = vld [vmem:[#allocation3 + $0x18] sm:$0xff]
    %v4025 = vld [vmem:[#allocation3 + $0x20] sm:$0xff]
    %v4026 = vld [vmem:[#allocation3 + $0x30] sm:$0xff]
    %v4027 = vld [vmem:[#allocation3 + $0x38] sm:$0xff]
    %v4028 = vld [vmem:[#allocation3 + $0x48] sm:$0xff]
    %v4029 = vld [vmem:[#allocation3 + $0x50] sm:$0xff]
    %v4030 = vld [vmem:[#allocation3 + $0x60] sm:$0xff]
    %v4031 = vld [vmem:[#allocation3 + $0x68] sm:$0xff]
    %v4032 = vld [vmem:[#allocation3 + $0x78] sm:$0xff]
    %v4033 = vld [vmem:[#allocation3 + $0x80] sm:$0xff]
    %v4034 = vld [vmem:[#allocation3 + $0x90] sm:$0xff]
    %v4035 = vld [vmem:[#allocation3 + $0x98] sm:$0xff]
    %v4036 = vld [vmem:[#allocation3 + $0xa8] sm:$0xff]
    %v4037 = vld [vmem:[#allocation3 + $0xb0] sm:$0xff]
    %v4038 = vld [vmem:[#allocation3 + $0xc0] sm:$0xff]
    %v4039 = vld [vmem:[#allocation3 + $0xc8] sm:$0xff]
    %v4040 = vld [vmem:[#allocation3 + $0xd8] sm:$0xff]
    %v4041 = vld [vmem:[#allocation3 + $0xe0] sm:$0xff]
    %v4042 = vld [vmem:[#allocation3 + $0xf0] sm:$0xff]
    %v4043 = vld [vmem:[#allocation3 + $0xf8] sm:$0xff]
    %v4044 = vld [vmem:[#allocation3 + $0x108] sm:$0xff]
    %v4045 = vld [vmem:[#allocation3 + $0x110] sm:$0xff]
    %v4046 = vld [vmem:[#allocation3 + $0x120] sm:$0xff]
    %v4047 = vld [vmem:[#allocation3 + $0x128] sm:$0xff]
    %v4048 = vld [vmem:[#allocation3 + $0x138] sm:$0xff]
    %v4049 = vld [vmem:[#allocation3 + $0x140] sm:$0xff]
    %v4050 = vld [vmem:[#allocation3 + $0x150] sm:$0xff]
    %v4051 = vld [vmem:[#allocation3 + $0x158] sm:$0xff]
    %v4052 = vld [vmem:[#allocation3 + $0x168] sm:$0xff]
    %v4053 = vld [vmem:[#allocation3 + $0x170] sm:$0xff]
    %v4054 = vld [vmem:[#allocation3 + $0x1b0] sm:$0xff]
    %v4055 = vld [vmem:[#allocation3 + $0x1b8] sm:$0xff]
    %v4056 = vld [vmem:[#allocation3 + $0x1c8] sm:$0xff]
    %v4057 = vld [vmem:[#allocation3 + $0x1d0] sm:$0xff]
    %v4058 = vld [vmem:[#allocation3 + $0x1e0] sm:$0xff]
    %v4059 = vld [vmem:[#allocation3 + $0x1e8] sm:$0xff]
    %v4060 = vld [vmem:[#allocation3 + $0x1f8] sm:$0xff]
    %v4061 = vld [vmem:[#allocation3 + $0x200] sm:$0xff]
    %v4062 = vld [vmem:[#allocation3 + $0x210] sm:$0xff]
    %v4063 = vld [vmem:[#allocation3 + $0x218] sm:$0xff]
    %v4064 = vld [vmem:[#allocation3 + $0x228] sm:$0xff]
    %v4065 = vld [vmem:[#allocation3 + $0x230] sm:$0xff]
    %v4066 = vld [vmem:[#allocation3 + $0x240] sm:$0xff]
    %v4067 = vld [vmem:[#allocation3 + $0x248] sm:$0xff]
    %v4068 = vld [vmem:[#allocation3 + $0x258] sm:$0xff]
    %v4069 = vld [vmem:[#allocation3 + $0x260] sm:$0xff]
    %v4070 = vld [vmem:[#allocation3 + $0x270] sm:$0xff]
    %v4071 = vld [vmem:[#allocation3 + $0x278] sm:$0xff]
    %v4072 = vld [vmem:[#allocation3 + $0x288] sm:$0xff]
    %v4073 = vld [vmem:[#allocation3 + $0x290] sm:$0xff]
    %v4074 = vld [vmem:[#allocation3 + $0x2a0] sm:$0xff]
    %v4075 = vld [vmem:[#allocation3 + $0x2a8] sm:$0xff]
    %v4076 = vld [vmem:[#allocation3 + $0x2b8] sm:$0xff]
    %v4077 = vld [vmem:[#allocation3 + $0x2c0] sm:$0xff]
    %v4078 = vld [vmem:[#allocation3 + $0x2d0] sm:$0xff]
    %v4079 = vld [vmem:[#allocation3 + $0x2d8] sm:$0xff]
    %v4080 = vld [vmem:[#allocation3 + $0x2e8] sm:$0xff]
    %v4081 = vld [vmem:[#allocation3 + $0x2f0] sm:$0xff]
    %v4082 = vld [vmem:[#allocation3 + $0x300] sm:$0xff]
    %v4083 = vld [vmem:[#allocation3 + $0x308] sm:$0xff]
    %v4084 = vld [vmem:[#allocation3 + $0x318] sm:$0xff]
    %v4085 = vld [vmem:[#allocation3 + $0x320] sm:$0xff]
    %v4086 = vld [vmem:[#allocation9] sm:$0xff]
    %v4087 = vld [vmem:[#allocation9 + $0x8] sm:$0xff]
    %v4088 = vld [vmem:[#allocation9 + $0x10] sm:$0xff]
    %v4089 = vld [vmem:[#allocation9 + $0x18] sm:$0xff]
    %v4090 = vld [vmem:[#allocation9 + $0x20] sm:$0xff]
    %v4091 = vld [vmem:[#allocation9 + $0x28] sm:$0xff]
    %v4092 = vld [vmem:[#allocation9 + $0x30] sm:$0xff]
    %v4093 = vld [vmem:[#allocation9 + $0x38] sm:$0xff]
    %v4094 = vld [vmem:[#allocation9 + $0x40] sm:$0xff]
    %v4095 = vld [vmem:[#allocation9 + $0x48] sm:$0xff]
    %v4096 = vld [vmem:[#allocation9 + $0x50] sm:$0xff]
    %v4097 = vld [vmem:[#allocation9 + $0x58] sm:$0xff]
    %v4098 = vld [vmem:[#allocation9 + $0x60] sm:$0xff]
    %v4099 = vld [vmem:[#allocation9 + $0x68] sm:$0xff]
    %v4100 = vld [vmem:[#allocation9 + $0x70] sm:$0xff]
    %v4101 = vld [vmem:[#allocation9 + $0x78] sm:$0xff]
    %v4102 = vld [vmem:[#allocation3 + $0x1] sm:$0xff]
    %v4103 = vld [vmem:[#allocation3 + $0x9] sm:$0xff]
    %v4104 = vld [vmem:[#allocation3 + $0x19] sm:$0xff]
    %v4105 = vld [vmem:[#allocation3 + $0x21] sm:$0xff]
    %v4106 = vld [vmem:[#allocation3 + $0x31] sm:$0xff]
    %v4107 = vld [vmem:[#allocation3 + $0x39] sm:$0xff]
    %v4108 = vld [vmem:[#allocation3 + $0x49] sm:$0xff]
    %v4109 = vld [vmem:[#allocation3 + $0x51] sm:$0xff]
    %v4110 = vld [vmem:[#allocation3 + $0x61] sm:$0xff]
    %v4111 = vld [vmem:[#allocation3 + $0x69] sm:$0xff]
    %v4112 = vld [vmem:[#allocation3 + $0x79] sm:$0xff]
    %v4113 = vld [vmem:[#allocation3 + $0x81] sm:$0xff]
    %v4114 = vld [vmem:[#allocation3 + $0x91] sm:$0xff]
    %v4115 = vld [vmem:[#allocation3 + $0x99] sm:$0xff]
    %v4116 = vld [vmem:[#allocation3 + $0xa9] sm:$0xff]
    %v4117 = vld [vmem:[#allocation3 + $0xb1] sm:$0xff]
    %v4118 = vld [vmem:[#allocation3 + $0xc1] sm:$0xff]
    %v4119 = vld [vmem:[#allocation3 + $0xc9] sm:$0xff]
    %v4120 = vld [vmem:[#allocation3 + $0xd9] sm:$0xff]
    %v4121 = vld [vmem:[#allocation3 + $0xe1] sm:$0xff]
    %v4122 = vld [vmem:[#allocation3 + $0xf1] sm:$0xff]
    %v4123 = vld [vmem:[#allocation3 + $0xf9] sm:$0xff]
    %v4124 = vld [vmem:[#allocation3 + $0x109] sm:$0xff]
    %v4125 = vld [vmem:[#allocation3 + $0x111] sm:$0xff]
    %v4126 = vld [vmem:[#allocation3 + $0x121] sm:$0xff]
    %v4127 = vld [vmem:[#allocation3 + $0x129] sm:$0xff]
    %v4128 = vld [vmem:[#allocation3 + $0x139] sm:$0xff]
    %v4129 = vld [vmem:[#allocation3 + $0x141] sm:$0xff]
    %v4130 = vld [vmem:[#allocation3 + $0x151] sm:$0xff]
    %v4131 = vld [vmem:[#allocation3 + $0x159] sm:$0xff]
    %v4132 = vld [vmem:[#allocation3 + $0x169] sm:$0xff]
    %v4133 = vld [vmem:[#allocation3 + $0x171] sm:$0xff]
    %v4134 = vld [vmem:[#allocation3 + $0x1b1] sm:$0xff]
    %v4135 = vld [vmem:[#allocation3 + $0x1b9] sm:$0xff]
    %v4136 = vld [vmem:[#allocation3 + $0x1c9] sm:$0xff]
    %v4137 = vld [vmem:[#allocation3 + $0x1d1] sm:$0xff]
    %v4138 = vld [vmem:[#allocation3 + $0x1e1] sm:$0xff]
    %v4139 = vld [vmem:[#allocation3 + $0x1e9] sm:$0xff]
    %v4140 = vld [vmem:[#allocation3 + $0x1f9] sm:$0xff]
    %v4141 = vld [vmem:[#allocation3 + $0x201] sm:$0xff]
    %v4142 = vld [vmem:[#allocation3 + $0x211] sm:$0xff]
    %v4143 = vld [vmem:[#allocation3 + $0x219] sm:$0xff]
    %v4144 = vld [vmem:[#allocation3 + $0x229] sm:$0xff]
    %v4145 = vld [vmem:[#allocation3 + $0x231] sm:$0xff]
    %v4146 = vld [vmem:[#allocation3 + $0x241] sm:$0xff]
    %v4147 = vld [vmem:[#allocation3 + $0x249] sm:$0xff]
    %v4148 = vld [vmem:[#allocation3 + $0x259] sm:$0xff]
    %v4149 = vld [vmem:[#allocation3 + $0x261] sm:$0xff]
    %v4150 = vld [vmem:[#allocation3 + $0x271] sm:$0xff]
    %v4151 = vld [vmem:[#allocation3 + $0x279] sm:$0xff]
    %v4152 = vld [vmem:[#allocation3 + $0x289] sm:$0xff]
    %v4153 = vld [vmem:[#allocation3 + $0x291] sm:$0xff]
    %v4154 = vld [vmem:[#allocation3 + $0x2a1] sm:$0xff]
    %v4155 = vld [vmem:[#allocation3 + $0x2a9] sm:$0xff]
    %v4156 = vld [vmem:[#allocation3 + $0x2b9] sm:$0xff]
    %v4157 = vld [vmem:[#allocation3 + $0x2c1] sm:$0xff]
    %v4158 = vld [vmem:[#allocation3 + $0x2d1] sm:$0xff]
    %v4159 = vld [vmem:[#allocation3 + $0x2d9] sm:$0xff]
    %v4160 = vld [vmem:[#allocation3 + $0x2e9] sm:$0xff]
    %v4161 = vld [vmem:[#allocation3 + $0x2f1] sm:$0xff]
    %v4162 = vld [vmem:[#allocation3 + $0x301] sm:$0xff]
    %v4163 = vld [vmem:[#allocation3 + $0x309] sm:$0xff]
    %v4164 = vld [vmem:[#allocation3 + $0x319] sm:$0xff]
    %v4165 = vld [vmem:[#allocation3 + $0x321] sm:$0xff]
    %s4166 = scalar_lea.vmem [#allocation9], 128
    %v4167 = vld [vmem:[%s4166] sm:$0xff]
    %v4168 = vld [vmem:[%s4166 + $0x8] sm:$0xff]
    %v4169 = vld [vmem:[%s4166 + $0x10] sm:$0xff]
    %v4170 = vld [vmem:[%s4166 + $0x18] sm:$0xff]
    %v4171 = vld [vmem:[%s4166 + $0x20] sm:$0xff]
    %v4172 = vld [vmem:[%s4166 + $0x28] sm:$0xff]
    %v4173 = vld [vmem:[%s4166 + $0x30] sm:$0xff]
    %v4174 = vld [vmem:[%s4166 + $0x38] sm:$0xff]
    %v4175 = vld [vmem:[%s4166 + $0x40] sm:$0xff]
    %v4176 = vld [vmem:[%s4166 + $0x48] sm:$0xff]
    %v4177 = vld [vmem:[%s4166 + $0x50] sm:$0xff]
    %v4178 = vld [vmem:[%s4166 + $0x58] sm:$0xff]
    %v4179 = vld [vmem:[%s4166 + $0x60] sm:$0xff]
    %v4180 = vld [vmem:[%s4166 + $0x68] sm:$0xff]
    %v4181 = vld [vmem:[%s4166 + $0x70] sm:$0xff]
    %v4182 = vld [vmem:[%s4166 + $0x78] sm:$0xff]
    %4183 = vmatpush.msra.mxu0 %v4182
    %4184 = vmatpush.msra.mxu0 %v4181
    %4185 = vmatpush.msra.mxu0 %v4180
    %4186 = vmatpush.msra.mxu0 %v4179
    %4187 = vmatpush.msra.mxu0 %v4178
    %4188 = vmatpush.msra.mxu0 %v4177
    %4189 = vmatpush.msra.mxu0 %v4176
    %4190 = vmatpush.msra.mxu0 %v4175
    %4191 = vmatpush.msra.mxu0 %v4174
    %4192 = vmatpush.msra.mxu0 %v4173
    %4193 = vmatpush.msra.mxu0 %v4172
    %4194 = vmatpush.msra.mxu0 %v4171
    %4195 = vmatpush.msra.mxu0 %v4170
    %4196 = vmatpush.msra.mxu0 %v4169
    %4197 = vmatpush.msra.mxu0 %v4168
    %4198 = vmatpush.msra.mxu0 %v4167
    %4199 = vmatmul.f32.gmra.mxu0 %v4102
    %v4200 = vpop.f32.mrf.mxu0
    %v4201 = vadd.f32 0.0, %v4200
    %4202 = vmatmul.f32.gmra.mxu0 %v4103
    %v4203 = vpop.f32.mrf.mxu0
    %v4204 = vadd.f32 0.0, %v4203
    %4205 = vmatmul.f32.gmra.mxu0 %v4104
    %v4206 = vpop.f32.mrf.mxu0
    %v4207 = vadd.f32 0.0, %v4206
    %4208 = vmatmul.f32.gmra.mxu0 %v4105
    %v4209 = vpop.f32.mrf.mxu0
    %v4210 = vadd.f32 0.0, %v4209
    %4211 = vmatmul.f32.gmra.mxu0 %v4106
    %v4212 = vpop.f32.mrf.mxu0
    %v4213 = vadd.f32 0.0, %v4212
    %4214 = vmatmul.f32.gmra.mxu0 %v4107
    %v4215 = vpop.f32.mrf.mxu0
    %v4216 = vadd.f32 0.0, %v4215
    %4217 = vmatmul.f32.gmra.mxu0 %v4108
    %v4218 = vpop.f32.mrf.mxu0
    %v4219 = vadd.f32 0.0, %v4218
    %4220 = vmatmul.f32.gmra.mxu0 %v4109
    %v4221 = vpop.f32.mrf.mxu0
    %v4222 = vadd.f32 0.0, %v4221
    %4223 = vmatmul.f32.gmra.mxu0 %v4110
    %v4224 = vpop.f32.mrf.mxu0
    %v4225 = vadd.f32 0.0, %v4224
    %4226 = vmatmul.f32.gmra.mxu0 %v4111
    %v4227 = vpop.f32.mrf.mxu0
    %v4228 = vadd.f32 0.0, %v4227
    %4229 = vmatmul.f32.gmra.mxu0 %v4112
    %v4230 = vpop.f32.mrf.mxu0
    %v4231 = vadd.f32 0.0, %v4230
    %4232 = vmatmul.f32.gmra.mxu0 %v4113
    %v4233 = vpop.f32.mrf.mxu0
    %v4234 = vadd.f32 0.0, %v4233
    %4235 = vmatmul.f32.gmra.mxu0 %v4114
    %v4236 = vpop.f32.mrf.mxu0
    %v4237 = vadd.f32 0.0, %v4236
    %4238 = vmatmul.f32.gmra.mxu0 %v4115
    %v4239 = vpop.f32.mrf.mxu0
    %v4240 = vadd.f32 0.0, %v4239
    %4241 = vmatmul.f32.gmra.mxu0 %v4116
    %v4242 = vpop.f32.mrf.mxu0
    %v4243 = vadd.f32 0.0, %v4242
    %4244 = vmatmul.f32.gmra.mxu0 %v4117
    %v4245 = vpop.f32.mrf.mxu0
    %v4246 = vadd.f32 0.0, %v4245
    %4247 = vmatmul.f32.gmra.mxu0 %v4118
    %v4248 = vpop.f32.mrf.mxu0
    %v4249 = vadd.f32 0.0, %v4248
    %4250 = vmatmul.f32.gmra.mxu0 %v4119
    %v4251 = vpop.f32.mrf.mxu0
    %v4252 = vadd.f32 0.0, %v4251
    %4253 = vmatmul.f32.gmra.mxu0 %v4120
    %v4254 = vpop.f32.mrf.mxu0
    %v4255 = vadd.f32 0.0, %v4254
    %4256 = vmatmul.f32.gmra.mxu0 %v4121
    %v4257 = vpop.f32.mrf.mxu0
    %v4258 = vadd.f32 0.0, %v4257
    %4259 = vmatmul.f32.gmra.mxu0 %v4122
    %v4260 = vpop.f32.mrf.mxu0
    %v4261 = vadd.f32 0.0, %v4260
    %4262 = vmatmul.f32.gmra.mxu0 %v4123
    %v4263 = vpop.f32.mrf.mxu0
    %v4264 = vadd.f32 0.0, %v4263
    %4265 = vmatmul.f32.gmra.mxu0 %v4124
    %v4266 = vpop.f32.mrf.mxu0
    %v4267 = vadd.f32 0.0, %v4266
    %4268 = vmatmul.f32.gmra.mxu0 %v4125
    %v4269 = vpop.f32.mrf.mxu0
    %v4270 = vadd.f32 0.0, %v4269
    %4271 = vmatmul.f32.gmra.mxu0 %v4126
    %v4272 = vpop.f32.mrf.mxu0
    %v4273 = vadd.f32 0.0, %v4272
    %4274 = vmatmul.f32.gmra.mxu0 %v4127
    %v4275 = vpop.f32.mrf.mxu0
    %v4276 = vadd.f32 0.0, %v4275
    %4277 = vmatmul.f32.gmra.mxu0 %v4128
    %v4278 = vpop.f32.mrf.mxu0
    %v4279 = vadd.f32 0.0, %v4278
    %4280 = vmatmul.f32.gmra.mxu0 %v4129
    %v4281 = vpop.f32.mrf.mxu0
    %v4282 = vadd.f32 0.0, %v4281
    %4283 = vmatmul.f32.gmra.mxu0 %v4130
    %v4284 = vpop.f32.mrf.mxu0
    %v4285 = vadd.f32 0.0, %v4284
    %4286 = vmatmul.f32.gmra.mxu0 %v4131
    %v4287 = vpop.f32.mrf.mxu0
    %v4288 = vadd.f32 0.0, %v4287
    %4289 = vmatmul.f32.gmra.mxu0 %v4132
    %v4290 = vpop.f32.mrf.mxu0
    %v4291 = vadd.f32 0.0, %v4290
    %4292 = vmatmul.f32.gmra.mxu0 %v4133
    %v4293 = vpop.f32.mrf.mxu0
    %v4294 = vadd.f32 0.0, %v4293
    %4295 = vmatmul.f32.gmra.mxu0 %v4134
    %v4296 = vpop.f32.mrf.mxu0
    %v4297 = vadd.f32 0.0, %v4296
    %4298 = vmatmul.f32.gmra.mxu0 %v4135
    %v4299 = vpop.f32.mrf.mxu0
    %v4300 = vadd.f32 0.0, %v4299
    %4301 = vmatmul.f32.gmra.mxu0 %v4136
    %v4302 = vpop.f32.mrf.mxu0
    %v4303 = vadd.f32 0.0, %v4302
    %4304 = vmatmul.f32.gmra.mxu0 %v4137
    %v4305 = vpop.f32.mrf.mxu0
    %v4306 = vadd.f32 0.0, %v4305
    %4307 = vmatmul.f32.gmra.mxu0 %v4138
    %v4308 = vpop.f32.mrf.mxu0
    %v4309 = vadd.f32 0.0, %v4308
    %4310 = vmatmul.f32.gmra.mxu0 %v4139
    %v4311 = vpop.f32.mrf.mxu0
    %v4312 = vadd.f32 0.0, %v4311
    %4313 = vmatmul.f32.gmra.mxu0 %v4140
    %v4314 = vpop.f32.mrf.mxu0
    %v4315 = vadd.f32 0.0, %v4314
    %4316 = vmatmul.f32.gmra.mxu0 %v4141
    %v4317 = vpop.f32.mrf.mxu0
    %v4318 = vadd.f32 0.0, %v4317
    %4319 = vmatmul.f32.gmra.mxu0 %v4142
    %v4320 = vpop.f32.mrf.mxu0
    %v4321 = vadd.f32 0.0, %v4320
    %4322 = vmatmul.f32.gmra.mxu0 %v4143
    %v4323 = vpop.f32.mrf.mxu0
    %v4324 = vadd.f32 0.0, %v4323
    %4325 = vmatmul.f32.gmra.mxu0 %v4144
    %v4326 = vpop.f32.mrf.mxu0
    %v4327 = vadd.f32 0.0, %v4326
    %4328 = vmatmul.f32.gmra.mxu0 %v4145
    %v4329 = vpop.f32.mrf.mxu0
    %v4330 = vadd.f32 0.0, %v4329
    %4331 = vmatmul.f32.gmra.mxu0 %v4146
    %v4332 = vpop.f32.mrf.mxu0
    %v4333 = vadd.f32 0.0, %v4332
    %4334 = vmatmul.f32.gmra.mxu0 %v4147
    %v4335 = vpop.f32.mrf.mxu0
    %v4336 = vadd.f32 0.0, %v4335
    %4337 = vmatmul.f32.gmra.mxu0 %v4148
    %v4338 = vpop.f32.mrf.mxu0
    %v4339 = vadd.f32 0.0, %v4338
    %4340 = vmatmul.f32.gmra.mxu0 %v4149
    %v4341 = vpop.f32.mrf.mxu0
    %v4342 = vadd.f32 0.0, %v4341
    %4343 = vmatmul.f32.gmra.mxu0 %v4150
    %v4344 = vpop.f32.mrf.mxu0
    %v4345 = vadd.f32 0.0, %v4344
    %4346 = vmatmul.f32.gmra.mxu0 %v4151
    %v4347 = vpop.f32.mrf.mxu0
    %v4348 = vadd.f32 0.0, %v4347
    %4349 = vmatmul.f32.gmra.mxu0 %v4152
    %v4350 = vpop.f32.mrf.mxu0
    %v4351 = vadd.f32 0.0, %v4350
    %4352 = vmatmul.f32.gmra.mxu0 %v4153
    %v4353 = vpop.f32.mrf.mxu0
    %v4354 = vadd.f32 0.0, %v4353
    %4355 = vmatmul.f32.gmra.mxu0 %v4154
    %v4356 = vpop.f32.mrf.mxu0
    %v4357 = vadd.f32 0.0, %v4356
    %4358 = vmatmul.f32.gmra.mxu0 %v4155
    %v4359 = vpop.f32.mrf.mxu0
    %v4360 = vadd.f32 0.0, %v4359
    %4361 = vmatmul.f32.gmra.mxu0 %v4156
    %v4362 = vpop.f32.mrf.mxu0
    %v4363 = vadd.f32 0.0, %v4362
    %4364 = vmatmul.f32.gmra.mxu0 %v4157
    %v4365 = vpop.f32.mrf.mxu0
    %v4366 = vadd.f32 0.0, %v4365
    %4367 = vmatmul.f32.gmra.mxu0 %v4158
    %v4368 = vpop.f32.mrf.mxu0
    %v4369 = vadd.f32 0.0, %v4368
    %4370 = vmatmul.f32.gmra.mxu0 %v4159
    %v4371 = vpop.f32.mrf.mxu0
    %v4372 = vadd.f32 0.0, %v4371
    %4373 = vmatmul.f32.gmra.mxu0 %v4160
    %v4374 = vpop.f32.mrf.mxu0
    %v4375 = vadd.f32 0.0, %v4374
    %4376 = vmatmul.f32.gmra.mxu0 %v4161
    %v4377 = vpop.f32.mrf.mxu0
    %v4378 = vadd.f32 0.0, %v4377
    %4379 = vmatmul.f32.gmra.mxu0 %v4162
    %v4380 = vpop.f32.mrf.mxu0
    %v4381 = vadd.f32 0.0, %v4380
    %4382 = vmatmul.f32.gmra.mxu0 %v4163
    %v4383 = vpop.f32.mrf.mxu0
    %v4384 = vadd.f32 0.0, %v4383
    %4385 = vmatmul.f32.gmra.mxu0 %v4164
    %v4386 = vpop.f32.mrf.mxu0
    %v4387 = vadd.f32 0.0, %v4386
    %4388 = vmatmul.f32.gmra.mxu0 %v4165
    %v4389 = vpop.f32.mrf.mxu0
    %v4390 = vadd.f32 0.0, %v4389
    %4391 = vdwg.mxu0
    %4392 = vmatpush.msra.mxu0 %v4101
    %4393 = vmatpush.msra.mxu0 %v4100
    %4394 = vmatpush.msra.mxu0 %v4099
    %4395 = vmatpush.msra.mxu0 %v4098
    %4396 = vmatpush.msra.mxu0 %v4097
    %4397 = vmatpush.msra.mxu0 %v4096
    %4398 = vmatpush.msra.mxu0 %v4095
    %4399 = vmatpush.msra.mxu0 %v4094
    %4400 = vmatpush.msra.mxu0 %v4093
    %4401 = vmatpush.msra.mxu0 %v4092
    %4402 = vmatpush.msra.mxu0 %v4091
    %4403 = vmatpush.msra.mxu0 %v4090
    %4404 = vmatpush.msra.mxu0 %v4089
    %4405 = vmatpush.msra.mxu0 %v4088
    %4406 = vmatpush.msra.mxu0 %v4087
    %4407 = vmatpush.msra.mxu0 %v4086
    %4408 = vmatmul.f32.gmra.mxu0 %v4022
    %v4409 = vpop.f32.mrf.mxu0
    %v4410 = vadd.f32 %v4201, %v4409
    %4411 = vmatmul.f32.gmra.mxu0 %v4023
    %v4412 = vpop.f32.mrf.mxu0
    %v4413 = vadd.f32 %v4204, %v4412
    %4414 = vmatmul.f32.gmra.mxu0 %v4024
    %v4415 = vpop.f32.mrf.mxu0
    %v4416 = vadd.f32 %v4207, %v4415
    %4417 = vmatmul.f32.gmra.mxu0 %v4025
    %v4418 = vpop.f32.mrf.mxu0
    %v4419 = vadd.f32 %v4210, %v4418
    %4420 = vmatmul.f32.gmra.mxu0 %v4026
    %v4421 = vpop.f32.mrf.mxu0
    %v4422 = vadd.f32 %v4213, %v4421
    %4423 = vmatmul.f32.gmra.mxu0 %v4027
    %v4424 = vpop.f32.mrf.mxu0
    %v4425 = vadd.f32 %v4216, %v4424
    %4426 = vmatmul.f32.gmra.mxu0 %v4028
    %v4427 = vpop.f32.mrf.mxu0
    %v4428 = vadd.f32 %v4219, %v4427
    %4429 = vmatmul.f32.gmra.mxu0 %v4029
    %v4430 = vpop.f32.mrf.mxu0
    %v4431 = vadd.f32 %v4222, %v4430
    %4432 = vmatmul.f32.gmra.mxu0 %v4030
    %v4433 = vpop.f32.mrf.mxu0
    %v4434 = vadd.f32 %v4225, %v4433
    %4435 = vmatmul.f32.gmra.mxu0 %v4031
    %v4436 = vpop.f32.mrf.mxu0
    %v4437 = vadd.f32 %v4228, %v4436
    %4438 = vmatmul.f32.gmra.mxu0 %v4032
    %v4439 = vpop.f32.mrf.mxu0
    %v4440 = vadd.f32 %v4231, %v4439
    %4441 = vmatmul.f32.gmra.mxu0 %v4033
    %v4442 = vpop.f32.mrf.mxu0
    %v4443 = vadd.f32 %v4234, %v4442
    %4444 = vmatmul.f32.gmra.mxu0 %v4034
    %v4445 = vpop.f32.mrf.mxu0
    %v4446 = vadd.f32 %v4237, %v4445
    %4447 = vmatmul.f32.gmra.mxu0 %v4035
    %v4448 = vpop.f32.mrf.mxu0
    %v4449 = vadd.f32 %v4240, %v4448
    %4450 = vmatmul.f32.gmra.mxu0 %v4036
    %v4451 = vpop.f32.mrf.mxu0
    %v4452 = vadd.f32 %v4243, %v4451
    %4453 = vmatmul.f32.gmra.mxu0 %v4037
    %v4454 = vpop.f32.mrf.mxu0
    %v4455 = vadd.f32 %v4246, %v4454
    %4456 = vmatmul.f32.gmra.mxu0 %v4038
    %v4457 = vpop.f32.mrf.mxu0
    %v4458 = vadd.f32 %v4249, %v4457
    %4459 = vmatmul.f32.gmra.mxu0 %v4039
    %v4460 = vpop.f32.mrf.mxu0
    %v4461 = vadd.f32 %v4252, %v4460
    %4462 = vmatmul.f32.gmra.mxu0 %v4040
    %v4463 = vpop.f32.mrf.mxu0
    %v4464 = vadd.f32 %v4255, %v4463
    %4465 = vmatmul.f32.gmra.mxu0 %v4041
    %v4466 = vpop.f32.mrf.mxu0
    %v4467 = vadd.f32 %v4258, %v4466
    %4468 = vmatmul.f32.gmra.mxu0 %v4042
    %v4469 = vpop.f32.mrf.mxu0
    %v4470 = vadd.f32 %v4261, %v4469
    %4471 = vmatmul.f32.gmra.mxu0 %v4043
    %v4472 = vpop.f32.mrf.mxu0
    %v4473 = vadd.f32 %v4264, %v4472
    %4474 = vmatmul.f32.gmra.mxu0 %v4044
    %v4475 = vpop.f32.mrf.mxu0
    %v4476 = vadd.f32 %v4267, %v4475
    %4477 = vmatmul.f32.gmra.mxu0 %v4045
    %v4478 = vpop.f32.mrf.mxu0
    %v4479 = vadd.f32 %v4270, %v4478
    %4480 = vmatmul.f32.gmra.mxu0 %v4046
    %v4481 = vpop.f32.mrf.mxu0
    %v4482 = vadd.f32 %v4273, %v4481
    %4483 = vmatmul.f32.gmra.mxu0 %v4047
    %v4484 = vpop.f32.mrf.mxu0
    %v4485 = vadd.f32 %v4276, %v4484
    %4486 = vmatmul.f32.gmra.mxu0 %v4048
    %v4487 = vpop.f32.mrf.mxu0
    %v4488 = vadd.f32 %v4279, %v4487
    %4489 = vmatmul.f32.gmra.mxu0 %v4049
    %v4490 = vpop.f32.mrf.mxu0
    %v4491 = vadd.f32 %v4282, %v4490
    %4492 = vmatmul.f32.gmra.mxu0 %v4050
    %v4493 = vpop.f32.mrf.mxu0
    %v4494 = vadd.f32 %v4285, %v4493
    %4495 = vmatmul.f32.gmra.mxu0 %v4051
    %v4496 = vpop.f32.mrf.mxu0
    %v4497 = vadd.f32 %v4288, %v4496
    %4498 = vmatmul.f32.gmra.mxu0 %v4052
    %v4499 = vpop.f32.mrf.mxu0
    %v4500 = vadd.f32 %v4291, %v4499
    %4501 = vmatmul.f32.gmra.mxu0 %v4053
    %v4502 = vpop.f32.mrf.mxu0
    %v4503 = vadd.f32 %v4294, %v4502
    %4504 = vmatmul.f32.gmra.mxu0 %v4054
    %v4505 = vpop.f32.mrf.mxu0
    %v4506 = vadd.f32 %v4297, %v4505
    %4507 = vmatmul.f32.gmra.mxu0 %v4055
    %v4508 = vpop.f32.mrf.mxu0
    %v4509 = vadd.f32 %v4300, %v4508
    %4510 = vmatmul.f32.gmra.mxu0 %v4056
    %v4511 = vpop.f32.mrf.mxu0
    %v4512 = vadd.f32 %v4303, %v4511
    %4513 = vmatmul.f32.gmra.mxu0 %v4057
    %v4514 = vpop.f32.mrf.mxu0
    %v4515 = vadd.f32 %v4306, %v4514
    %4516 = vmatmul.f32.gmra.mxu0 %v4058
    %v4517 = vpop.f32.mrf.mxu0
    %v4518 = vadd.f32 %v4309, %v4517
    %4519 = vmatmul.f32.gmra.mxu0 %v4059
    %v4520 = vpop.f32.mrf.mxu0
    %v4521 = vadd.f32 %v4312, %v4520
    %4522 = vmatmul.f32.gmra.mxu0 %v4060
    %v4523 = vpop.f32.mrf.mxu0
    %v4524 = vadd.f32 %v4315, %v4523
    %4525 = vmatmul.f32.gmra.mxu0 %v4061
    %v4526 = vpop.f32.mrf.mxu0
    %v4527 = vadd.f32 %v4318, %v4526
    %4528 = vmatmul.f32.gmra.mxu0 %v4062
    %v4529 = vpop.f32.mrf.mxu0
    %v4530 = vadd.f32 %v4321, %v4529
    %4531 = vmatmul.f32.gmra.mxu0 %v4063
    %v4532 = vpop.f32.mrf.mxu0
    %v4533 = vadd.f32 %v4324, %v4532
    %4534 = vmatmul.f32.gmra.mxu0 %v4064
    %v4535 = vpop.f32.mrf.mxu0
    %v4536 = vadd.f32 %v4327, %v4535
    %4537 = vmatmul.f32.gmra.mxu0 %v4065
    %v4538 = vpop.f32.mrf.mxu0
    %v4539 = vadd.f32 %v4330, %v4538
    %4540 = vmatmul.f32.gmra.mxu0 %v4066
    %v4541 = vpop.f32.mrf.mxu0
    %v4542 = vadd.f32 %v4333, %v4541
    %4543 = vmatmul.f32.gmra.mxu0 %v4067
    %v4544 = vpop.f32.mrf.mxu0
    %v4545 = vadd.f32 %v4336, %v4544
    %4546 = vmatmul.f32.gmra.mxu0 %v4068
    %v4547 = vpop.f32.mrf.mxu0
    %v4548 = vadd.f32 %v4339, %v4547
    %4549 = vmatmul.f32.gmra.mxu0 %v4069
    %v4550 = vpop.f32.mrf.mxu0
    %v4551 = vadd.f32 %v4342, %v4550
    %4552 = vmatmul.f32.gmra.mxu0 %v4070
    %v4553 = vpop.f32.mrf.mxu0
    %v4554 = vadd.f32 %v4345, %v4553
    %4555 = vmatmul.f32.gmra.mxu0 %v4071
    %v4556 = vpop.f32.mrf.mxu0
    %v4557 = vadd.f32 %v4348, %v4556
    %4558 = vmatmul.f32.gmra.mxu0 %v4072
    %v4559 = vpop.f32.mrf.mxu0
    %v4560 = vadd.f32 %v4351, %v4559
    %4561 = vmatmul.f32.gmra.mxu0 %v4073
    %v4562 = vpop.f32.mrf.mxu0
    %v4563 = vadd.f32 %v4354, %v4562
    %4564 = vmatmul.f32.gmra.mxu0 %v4074
    %v4565 = vpop.f32.mrf.mxu0
    %v4566 = vadd.f32 %v4357, %v4565
    %4567 = vmatmul.f32.gmra.mxu0 %v4075
    %v4568 = vpop.f32.mrf.mxu0
    %v4569 = vadd.f32 %v4360, %v4568
    %4570 = vmatmul.f32.gmra.mxu0 %v4076
    %v4571 = vpop.f32.mrf.mxu0
    %v4572 = vadd.f32 %v4363, %v4571
    %4573 = vmatmul.f32.gmra.mxu0 %v4077
    %v4574 = vpop.f32.mrf.mxu0
    %v4575 = vadd.f32 %v4366, %v4574
    %4576 = vmatmul.f32.gmra.mxu0 %v4078
    %v4577 = vpop.f32.mrf.mxu0
    %v4578 = vadd.f32 %v4369, %v4577
    %4579 = vmatmul.f32.gmra.mxu0 %v4079
    %v4580 = vpop.f32.mrf.mxu0
    %v4581 = vadd.f32 %v4372, %v4580
    %4582 = vmatmul.f32.gmra.mxu0 %v4080
    %v4583 = vpop.f32.mrf.mxu0
    %v4584 = vadd.f32 %v4375, %v4583
    %4585 = vmatmul.f32.gmra.mxu0 %v4081
    %v4586 = vpop.f32.mrf.mxu0
    %v4587 = vadd.f32 %v4378, %v4586
    %4588 = vmatmul.f32.gmra.mxu0 %v4082
    %v4589 = vpop.f32.mrf.mxu0
    %v4590 = vadd.f32 %v4381, %v4589
    %4591 = vmatmul.f32.gmra.mxu0 %v4083
    %v4592 = vpop.f32.mrf.mxu0
    %v4593 = vadd.f32 %v4384, %v4592
    %4594 = vmatmul.f32.gmra.mxu0 %v4084
    %v4595 = vpop.f32.mrf.mxu0
    %v4596 = vadd.f32 %v4387, %v4595
    %4597 = vmatmul.f32.gmra.mxu0 %v4085
    %v4598 = vpop.f32.mrf.mxu0
    %v4599 = vadd.f32 %v4390, %v4598
    %4600 = vdwg.mxu0
    %v4601 = vld [vmem:[#allocation3 + $0x2] sm:$0xff]
    %v4602 = vld [vmem:[#allocation3 + $0xa] sm:$0xff]
    %v4603 = vld [vmem:[#allocation3 + $0x1a] sm:$0xff]
    %v4604 = vld [vmem:[#allocation3 + $0x22] sm:$0xff]
    %v4605 = vld [vmem:[#allocation3 + $0x32] sm:$0xff]
    %v4606 = vld [vmem:[#allocation3 + $0x3a] sm:$0xff]
    %v4607 = vld [vmem:[#allocation3 + $0x4a] sm:$0xff]
    %v4608 = vld [vmem:[#allocation3 + $0x52] sm:$0xff]
    %v4609 = vld [vmem:[#allocation3 + $0x62] sm:$0xff]
    %v4610 = vld [vmem:[#allocation3 + $0x6a] sm:$0xff]
    %v4611 = vld [vmem:[#allocation3 + $0x7a] sm:$0xff]
    %v4612 = vld [vmem:[#allocation3 + $0x82] sm:$0xff]
    %v4613 = vld [vmem:[#allocation3 + $0x92] sm:$0xff]
    %v4614 = vld [vmem:[#allocation3 + $0x9a] sm:$0xff]
    %v4615 = vld [vmem:[#allocation3 + $0xaa] sm:$0xff]
    %v4616 = vld [vmem:[#allocation3 + $0xb2] sm:$0xff]
    %v4617 = vld [vmem:[#allocation3 + $0xc2] sm:$0xff]
    %v4618 = vld [vmem:[#allocation3 + $0xca] sm:$0xff]
    %v4619 = vld [vmem:[#allocation3 + $0xda] sm:$0xff]
    %v4620 = vld [vmem:[#allocation3 + $0xe2] sm:$0xff]
    %v4621 = vld [vmem:[#allocation3 + $0xf2] sm:$0xff]
    %v4622 = vld [vmem:[#allocation3 + $0xfa] sm:$0xff]
    %v4623 = vld [vmem:[#allocation3 + $0x10a] sm:$0xff]
    %v4624 = vld [vmem:[#allocation3 + $0x112] sm:$0xff]
    %v4625 = vld [vmem:[#allocation3 + $0x122] sm:$0xff]
    %v4626 = vld [vmem:[#allocation3 + $0x12a] sm:$0xff]
    %v4627 = vld [vmem:[#allocation3 + $0x13a] sm:$0xff]
    %v4628 = vld [vmem:[#allocation3 + $0x142] sm:$0xff]
    %v4629 = vld [vmem:[#allocation3 + $0x152] sm:$0xff]
    %v4630 = vld [vmem:[#allocation3 + $0x15a] sm:$0xff]
    %v4631 = vld [vmem:[#allocation3 + $0x16a] sm:$0xff]
    %v4632 = vld [vmem:[#allocation3 + $0x172] sm:$0xff]
    %v4633 = vld [vmem:[#allocation3 + $0x1b2] sm:$0xff]
    %v4634 = vld [vmem:[#allocation3 + $0x1ba] sm:$0xff]
    %v4635 = vld [vmem:[#allocation3 + $0x1ca] sm:$0xff]
    %v4636 = vld [vmem:[#allocation3 + $0x1d2] sm:$0xff]
    %v4637 = vld [vmem:[#allocation3 + $0x1e2] sm:$0xff]
    %v4638 = vld [vmem:[#allocation3 + $0x1ea] sm:$0xff]
    %v4639 = vld [vmem:[#allocation3 + $0x1fa] sm:$0xff]
    %v4640 = vld [vmem:[#allocation3 + $0x202] sm:$0xff]
    %v4641 = vld [vmem:[#allocation3 + $0x212] sm:$0xff]
    %v4642 = vld [vmem:[#allocation3 + $0x21a] sm:$0xff]
    %v4643 = vld [vmem:[#allocation3 + $0x22a] sm:$0xff]
    %v4644 = vld [vmem:[#allocation3 + $0x232] sm:$0xff]
    %v4645 = vld [vmem:[#allocation3 + $0x242] sm:$0xff]
    %v4646 = vld [vmem:[#allocation3 + $0x24a] sm:$0xff]
    %v4647 = vld [vmem:[#allocation3 + $0x25a] sm:$0xff]
    %v4648 = vld [vmem:[#allocation3 + $0x262] sm:$0xff]
    %v4649 = vld [vmem:[#allocation3 + $0x272] sm:$0xff]
    %v4650 = vld [vmem:[#allocation3 + $0x27a] sm:$0xff]
    %v4651 = vld [vmem:[#allocation3 + $0x28a] sm:$0xff]
    %v4652 = vld [vmem:[#allocation3 + $0x292] sm:$0xff]
    %v4653 = vld [vmem:[#allocation3 + $0x2a2] sm:$0xff]
    %v4654 = vld [vmem:[#allocation3 + $0x2aa] sm:$0xff]
    %v4655 = vld [vmem:[#allocation3 + $0x2ba] sm:$0xff]
    %v4656 = vld [vmem:[#allocation3 + $0x2c2] sm:$0xff]
    %v4657 = vld [vmem:[#allocation3 + $0x2d2] sm:$0xff]
    %v4658 = vld [vmem:[#allocation3 + $0x2da] sm:$0xff]
    %v4659 = vld [vmem:[#allocation3 + $0x2ea] sm:$0xff]
    %v4660 = vld [vmem:[#allocation3 + $0x2f2] sm:$0xff]
    %v4661 = vld [vmem:[#allocation3 + $0x302] sm:$0xff]
    %v4662 = vld [vmem:[#allocation3 + $0x30a] sm:$0xff]
    %v4663 = vld [vmem:[#allocation3 + $0x31a] sm:$0xff]
    %v4664 = vld [vmem:[#allocation3 + $0x322] sm:$0xff]
    %s4665 = scalar_lea.vmem [#allocation9], 256
    %v4666 = vld [vmem:[%s4665] sm:$0xff]
    %v4667 = vld [vmem:[%s4665 + $0x8] sm:$0xff]
    %v4668 = vld [vmem:[%s4665 + $0x10] sm:$0xff]
    %v4669 = vld [vmem:[%s4665 + $0x18] sm:$0xff]
    %v4670 = vld [vmem:[%s4665 + $0x20] sm:$0xff]
    %v4671 = vld [vmem:[%s4665 + $0x28] sm:$0xff]
    %v4672 = vld [vmem:[%s4665 + $0x30] sm:$0xff]
    %v4673 = vld [vmem:[%s4665 + $0x38] sm:$0xff]
    %v4674 = vld [vmem:[%s4665 + $0x40] sm:$0xff]
    %v4675 = vld [vmem:[%s4665 + $0x48] sm:$0xff]
    %v4676 = vld [vmem:[%s4665 + $0x50] sm:$0xff]
    %v4677 = vld [vmem:[%s4665 + $0x58] sm:$0xff]
    %v4678 = vld [vmem:[%s4665 + $0x60] sm:$0xff]
    %v4679 = vld [vmem:[%s4665 + $0x68] sm:$0xff]
    %v4680 = vld [vmem:[%s4665 + $0x70] sm:$0xff]
    %v4681 = vld [vmem:[%s4665 + $0x78] sm:$0xff]
    %4682 = vmatpush.msra.mxu0 %v4681
    %4683 = vmatpush.msra.mxu0 %v4680
    %4684 = vmatpush.msra.mxu0 %v4679
    %4685 = vmatpush.msra.mxu0 %v4678
    %4686 = vmatpush.msra.mxu0 %v4677
    %4687 = vmatpush.msra.mxu0 %v4676
    %4688 = vmatpush.msra.mxu0 %v4675
    %4689 = vmatpush.msra.mxu0 %v4674
    %4690 = vmatpush.msra.mxu0 %v4673
    %4691 = vmatpush.msra.mxu0 %v4672
    %4692 = vmatpush.msra.mxu0 %v4671
    %4693 = vmatpush.msra.mxu0 %v4670
    %4694 = vmatpush.msra.mxu0 %v4669
    %4695 = vmatpush.msra.mxu0 %v4668
    %4696 = vmatpush.msra.mxu0 %v4667
    %4697 = vmatpush.msra.mxu0 %v4666
    %4698 = vmatmul.f32.gmra.mxu0 %v4601
    %v4699 = vpop.f32.mrf.mxu0
    %v4700 = vadd.f32 0.0, %v4699
    %4701 = vmatmul.f32.gmra.mxu0 %v4602
    %v4702 = vpop.f32.mrf.mxu0
    %v4703 = vadd.f32 0.0, %v4702
    %4704 = vmatmul.f32.gmra.mxu0 %v4603
    %v4705 = vpop.f32.mrf.mxu0
    %v4706 = vadd.f32 0.0, %v4705
    %4707 = vmatmul.f32.gmra.mxu0 %v4604
    %v4708 = vpop.f32.mrf.mxu0
    %v4709 = vadd.f32 0.0, %v4708
    %4710 = vmatmul.f32.gmra.mxu0 %v4605
    %v4711 = vpop.f32.mrf.mxu0
    %v4712 = vadd.f32 0.0, %v4711
    %4713 = vmatmul.f32.gmra.mxu0 %v4606
    %v4714 = vpop.f32.mrf.mxu0
    %v4715 = vadd.f32 0.0, %v4714
    %4716 = vmatmul.f32.gmra.mxu0 %v4607
    %v4717 = vpop.f32.mrf.mxu0
    %v4718 = vadd.f32 0.0, %v4717
    %4719 = vmatmul.f32.gmra.mxu0 %v4608
    %v4720 = vpop.f32.mrf.mxu0
    %v4721 = vadd.f32 0.0, %v4720
    %4722 = vmatmul.f32.gmra.mxu0 %v4609
    %v4723 = vpop.f32.mrf.mxu0
    %v4724 = vadd.f32 0.0, %v4723
    %4725 = vmatmul.f32.gmra.mxu0 %v4610
    %v4726 = vpop.f32.mrf.mxu0
    %v4727 = vadd.f32 0.0, %v4726
    %4728 = vmatmul.f32.gmra.mxu0 %v4611
    %v4729 = vpop.f32.mrf.mxu0
    %v4730 = vadd.f32 0.0, %v4729
    %4731 = vmatmul.f32.gmra.mxu0 %v4612
    %v4732 = vpop.f32.mrf.mxu0
    %v4733 = vadd.f32 0.0, %v4732
    %4734 = vmatmul.f32.gmra.mxu0 %v4613
    %v4735 = vpop.f32.mrf.mxu0
    %v4736 = vadd.f32 0.0, %v4735
    %4737 = vmatmul.f32.gmra.mxu0 %v4614
    %v4738 = vpop.f32.mrf.mxu0
    %v4739 = vadd.f32 0.0, %v4738
    %4740 = vmatmul.f32.gmra.mxu0 %v4615
    %v4741 = vpop.f32.mrf.mxu0
    %v4742 = vadd.f32 0.0, %v4741
    %4743 = vmatmul.f32.gmra.mxu0 %v4616
    %v4744 = vpop.f32.mrf.mxu0
    %v4745 = vadd.f32 0.0, %v4744
    %4746 = vmatmul.f32.gmra.mxu0 %v4617
    %v4747 = vpop.f32.mrf.mxu0
    %v4748 = vadd.f32 0.0, %v4747
    %4749 = vmatmul.f32.gmra.mxu0 %v4618
    %v4750 = vpop.f32.mrf.mxu0
    %v4751 = vadd.f32 0.0, %v4750
    %4752 = vmatmul.f32.gmra.mxu0 %v4619
    %v4753 = vpop.f32.mrf.mxu0
    %v4754 = vadd.f32 0.0, %v4753
    %4755 = vmatmul.f32.gmra.mxu0 %v4620
    %v4756 = vpop.f32.mrf.mxu0
    %v4757 = vadd.f32 0.0, %v4756
    %4758 = vmatmul.f32.gmra.mxu0 %v4621
    %v4759 = vpop.f32.mrf.mxu0
    %v4760 = vadd.f32 0.0, %v4759
    %4761 = vmatmul.f32.gmra.mxu0 %v4622
    %v4762 = vpop.f32.mrf.mxu0
    %v4763 = vadd.f32 0.0, %v4762
    %4764 = vmatmul.f32.gmra.mxu0 %v4623
    %v4765 = vpop.f32.mrf.mxu0
    %v4766 = vadd.f32 0.0, %v4765
    %4767 = vmatmul.f32.gmra.mxu0 %v4624
    %v4768 = vpop.f32.mrf.mxu0
    %v4769 = vadd.f32 0.0, %v4768
    %4770 = vmatmul.f32.gmra.mxu0 %v4625
    %v4771 = vpop.f32.mrf.mxu0
    %v4772 = vadd.f32 0.0, %v4771
    %4773 = vmatmul.f32.gmra.mxu0 %v4626
    %v4774 = vpop.f32.mrf.mxu0
    %v4775 = vadd.f32 0.0, %v4774
    %4776 = vmatmul.f32.gmra.mxu0 %v4627
    %v4777 = vpop.f32.mrf.mxu0
    %v4778 = vadd.f32 0.0, %v4777
    %4779 = vmatmul.f32.gmra.mxu0 %v4628
    %v4780 = vpop.f32.mrf.mxu0
    %v4781 = vadd.f32 0.0, %v4780
    %4782 = vmatmul.f32.gmra.mxu0 %v4629
    %v4783 = vpop.f32.mrf.mxu0
    %v4784 = vadd.f32 0.0, %v4783
    %4785 = vmatmul.f32.gmra.mxu0 %v4630
    %v4786 = vpop.f32.mrf.mxu0
    %v4787 = vadd.f32 0.0, %v4786
    %4788 = vmatmul.f32.gmra.mxu0 %v4631
    %v4789 = vpop.f32.mrf.mxu0
    %v4790 = vadd.f32 0.0, %v4789
    %4791 = vmatmul.f32.gmra.mxu0 %v4632
    %v4792 = vpop.f32.mrf.mxu0
    %v4793 = vadd.f32 0.0, %v4792
    %4794 = vmatmul.f32.gmra.mxu0 %v4633
    %v4795 = vpop.f32.mrf.mxu0
    %v4796 = vadd.f32 0.0, %v4795
    %4797 = vmatmul.f32.gmra.mxu0 %v4634
    %v4798 = vpop.f32.mrf.mxu0
    %v4799 = vadd.f32 0.0, %v4798
    %4800 = vmatmul.f32.gmra.mxu0 %v4635
    %v4801 = vpop.f32.mrf.mxu0
    %v4802 = vadd.f32 0.0, %v4801
    %4803 = vmatmul.f32.gmra.mxu0 %v4636
    %v4804 = vpop.f32.mrf.mxu0
    %v4805 = vadd.f32 0.0, %v4804
    %4806 = vmatmul.f32.gmra.mxu0 %v4637
    %v4807 = vpop.f32.mrf.mxu0
    %v4808 = vadd.f32 0.0, %v4807
    %4809 = vmatmul.f32.gmra.mxu0 %v4638
    %v4810 = vpop.f32.mrf.mxu0
    %v4811 = vadd.f32 0.0, %v4810
    %4812 = vmatmul.f32.gmra.mxu0 %v4639
    %v4813 = vpop.f32.mrf.mxu0
    %v4814 = vadd.f32 0.0, %v4813
    %4815 = vmatmul.f32.gmra.mxu0 %v4640
    %v4816 = vpop.f32.mrf.mxu0
    %v4817 = vadd.f32 0.0, %v4816
    %4818 = vmatmul.f32.gmra.mxu0 %v4641
    %v4819 = vpop.f32.mrf.mxu0
    %v4820 = vadd.f32 0.0, %v4819
    %4821 = vmatmul.f32.gmra.mxu0 %v4642
    %v4822 = vpop.f32.mrf.mxu0
    %v4823 = vadd.f32 0.0, %v4822
    %4824 = vmatmul.f32.gmra.mxu0 %v4643
    %v4825 = vpop.f32.mrf.mxu0
    %v4826 = vadd.f32 0.0, %v4825
    %4827 = vmatmul.f32.gmra.mxu0 %v4644
    %v4828 = vpop.f32.mrf.mxu0
    %v4829 = vadd.f32 0.0, %v4828
    %4830 = vmatmul.f32.gmra.mxu0 %v4645
    %v4831 = vpop.f32.mrf.mxu0
    %v4832 = vadd.f32 0.0, %v4831
    %4833 = vmatmul.f32.gmra.mxu0 %v4646
    %v4834 = vpop.f32.mrf.mxu0
    %v4835 = vadd.f32 0.0, %v4834
    %4836 = vmatmul.f32.gmra.mxu0 %v4647
    %v4837 = vpop.f32.mrf.mxu0
    %v4838 = vadd.f32 0.0, %v4837
    %4839 = vmatmul.f32.gmra.mxu0 %v4648
    %v4840 = vpop.f32.mrf.mxu0
    %v4841 = vadd.f32 0.0, %v4840
    %4842 = vmatmul.f32.gmra.mxu0 %v4649
    %v4843 = vpop.f32.mrf.mxu0
    %v4844 = vadd.f32 0.0, %v4843
    %4845 = vmatmul.f32.gmra.mxu0 %v4650
    %v4846 = vpop.f32.mrf.mxu0
    %v4847 = vadd.f32 0.0, %v4846
    %4848 = vmatmul.f32.gmra.mxu0 %v4651
    %v4849 = vpop.f32.mrf.mxu0
    %v4850 = vadd.f32 0.0, %v4849
    %4851 = vmatmul.f32.gmra.mxu0 %v4652
    %v4852 = vpop.f32.mrf.mxu0
    %v4853 = vadd.f32 0.0, %v4852
    %4854 = vmatmul.f32.gmra.mxu0 %v4653
    %v4855 = vpop.f32.mrf.mxu0
    %v4856 = vadd.f32 0.0, %v4855
    %4857 = vmatmul.f32.gmra.mxu0 %v4654
    %v4858 = vpop.f32.mrf.mxu0
    %v4859 = vadd.f32 0.0, %v4858
    %4860 = vmatmul.f32.gmra.mxu0 %v4655
    %v4861 = vpop.f32.mrf.mxu0
    %v4862 = vadd.f32 0.0, %v4861
    %4863 = vmatmul.f32.gmra.mxu0 %v4656
    %v4864 = vpop.f32.mrf.mxu0
    %v4865 = vadd.f32 0.0, %v4864
    %4866 = vmatmul.f32.gmra.mxu0 %v4657
    %v4867 = vpop.f32.mrf.mxu0
    %v4868 = vadd.f32 0.0, %v4867
    %4869 = vmatmul.f32.gmra.mxu0 %v4658
    %v4870 = vpop.f32.mrf.mxu0
    %v4871 = vadd.f32 0.0, %v4870
    %4872 = vmatmul.f32.gmra.mxu0 %v4659
    %v4873 = vpop.f32.mrf.mxu0
    %v4874 = vadd.f32 0.0, %v4873
    %4875 = vmatmul.f32.gmra.mxu0 %v4660
    %v4876 = vpop.f32.mrf.mxu0
    %v4877 = vadd.f32 0.0, %v4876
    %4878 = vmatmul.f32.gmra.mxu0 %v4661
    %v4879 = vpop.f32.mrf.mxu0
    %v4880 = vadd.f32 0.0, %v4879
    %4881 = vmatmul.f32.gmra.mxu0 %v4662
    %v4882 = vpop.f32.mrf.mxu0
    %v4883 = vadd.f32 0.0, %v4882
    %4884 = vmatmul.f32.gmra.mxu0 %v4663
    %v4885 = vpop.f32.mrf.mxu0
    %v4886 = vadd.f32 0.0, %v4885
    %4887 = vmatmul.f32.gmra.mxu0 %v4664
    %v4888 = vpop.f32.mrf.mxu0
    %v4889 = vadd.f32 0.0, %v4888
    %4890 = vdwg.mxu0
    %v4891 = vadd.f32 %v4410, %v4700
    %v4892 = vadd.f32 %v4413, %v4703
    %v4893 = vadd.f32 %v4416, %v4706
    %v4894 = vadd.f32 %v4419, %v4709
    %v4895 = vadd.f32 %v4422, %v4712
    %v4896 = vadd.f32 %v4425, %v4715
    %v4897 = vadd.f32 %v4428, %v4718
    %v4898 = vadd.f32 %v4431, %v4721
    %v4899 = vadd.f32 %v4434, %v4724
    %v4900 = vadd.f32 %v4437, %v4727
    %v4901 = vadd.f32 %v4440, %v4730
    %v4902 = vadd.f32 %v4443, %v4733
    %v4903 = vadd.f32 %v4446, %v4736
    %v4904 = vadd.f32 %v4449, %v4739
    %v4905 = vadd.f32 %v4452, %v4742
    %v4906 = vadd.f32 %v4455, %v4745
    %v4907 = vadd.f32 %v4458, %v4748
    %v4908 = vadd.f32 %v4461, %v4751
    %v4909 = vadd.f32 %v4464, %v4754
    %v4910 = vadd.f32 %v4467, %v4757
    %v4911 = vadd.f32 %v4470, %v4760
    %v4912 = vadd.f32 %v4473, %v4763
    %v4913 = vadd.f32 %v4476, %v4766
    %v4914 = vadd.f32 %v4479, %v4769
    %v4915 = vadd.f32 %v4482, %v4772
    %v4916 = vadd.f32 %v4485, %v4775
    %v4917 = vadd.f32 %v4488, %v4778
    %v4918 = vadd.f32 %v4491, %v4781
    %v4919 = vadd.f32 %v4494, %v4784
    %v4920 = vadd.f32 %v4497, %v4787
    %v4921 = vadd.f32 %v4500, %v4790
    %v4922 = vadd.f32 %v4503, %v4793
    %v4923 = vadd.f32 %v4506, %v4796
    %v4924 = vadd.f32 %v4509, %v4799
    %v4925 = vadd.f32 %v4512, %v4802
    %v4926 = vadd.f32 %v4515, %v4805
    %v4927 = vadd.f32 %v4518, %v4808
    %v4928 = vadd.f32 %v4521, %v4811
    %v4929 = vadd.f32 %v4524, %v4814
    %v4930 = vadd.f32 %v4527, %v4817
    %v4931 = vadd.f32 %v4530, %v4820
    %v4932 = vadd.f32 %v4533, %v4823
    %v4933 = vadd.f32 %v4536, %v4826
    %v4934 = vadd.f32 %v4539, %v4829
    %v4935 = vadd.f32 %v4542, %v4832
    %v4936 = vadd.f32 %v4545, %v4835
    %v4937 = vadd.f32 %v4548, %v4838
    %v4938 = vadd.f32 %v4551, %v4841
    %v4939 = vadd.f32 %v4554, %v4844
    %v4940 = vadd.f32 %v4557, %v4847
    %v4941 = vadd.f32 %v4560, %v4850
    %v4942 = vadd.f32 %v4563, %v4853
    %v4943 = vadd.f32 %v4566, %v4856
    %v4944 = vadd.f32 %v4569, %v4859
    %v4945 = vadd.f32 %v4572, %v4862
    %v4946 = vadd.f32 %v4575, %v4865
    %v4947 = vadd.f32 %v4578, %v4868
    %v4948 = vadd.f32 %v4581, %v4871
    %v4949 = vadd.f32 %v4584, %v4874
    %v4950 = vadd.f32 %v4587, %v4877
    %v4951 = vadd.f32 %v4590, %v4880
    %v4952 = vadd.f32 %v4593, %v4883
    %v4953 = vadd.f32 %v4596, %v4886
    %v4954 = vadd.f32 %v4599, %v4889
    %v4955 = vld [vmem:[%s3957] sm:$0xff]
    %v4956 = vld [vmem:[%s3957 + $0x8] sm:$0xff]
    %v4957 = vld [vmem:[%s3957 + $0x18] sm:$0xff]
    %v4958 = vld [vmem:[%s3957 + $0x20] sm:$0xff]
    %v4959 = vld [vmem:[%s3957 + $0x30] sm:$0xff]
    %v4960 = vld [vmem:[%s3957 + $0x38] sm:$0xff]
    %v4961 = vld [vmem:[%s3957 + $0x48] sm:$0xff]
    %v4962 = vld [vmem:[%s3957 + $0x50] sm:$0xff]
    %v4963 = vld [vmem:[%s3957 + $0x60] sm:$0xff]
    %v4964 = vld [vmem:[%s3957 + $0x68] sm:$0xff]
    %v4965 = vld [vmem:[%s3957 + $0x78] sm:$0xff]
    %v4966 = vld [vmem:[%s3957 + $0x80] sm:$0xff]
    %v4967 = vld [vmem:[%s3957 + $0x90] sm:$0xff]
    %v4968 = vld [vmem:[%s3957 + $0x98] sm:$0xff]
    %v4969 = vld [vmem:[%s3957 + $0xa8] sm:$0xff]
    %v4970 = vld [vmem:[%s3957 + $0xb0] sm:$0xff]
    %v4971 = vld [vmem:[%s3957 + $0xc0] sm:$0xff]
    %v4972 = vld [vmem:[%s3957 + $0xc8] sm:$0xff]
    %v4973 = vld [vmem:[%s3957 + $0xd8] sm:$0xff]
    %v4974 = vld [vmem:[%s3957 + $0xe0] sm:$0xff]
    %v4975 = vld [vmem:[%s3957 + $0xf0] sm:$0xff]
    %v4976 = vld [vmem:[%s3957 + $0xf8] sm:$0xff]
    %v4977 = vld [vmem:[%s3957 + $0x108] sm:$0xff]
    %v4978 = vld [vmem:[%s3957 + $0x110] sm:$0xff]
    %v4979 = vld [vmem:[%s3957 + $0x120] sm:$0xff]
    %v4980 = vld [vmem:[%s3957 + $0x128] sm:$0xff]
    %v4981 = vld [vmem:[%s3957 + $0x138] sm:$0xff]
    %v4982 = vld [vmem:[%s3957 + $0x140] sm:$0xff]
    %v4983 = vld [vmem:[%s3957 + $0x150] sm:$0xff]
    %v4984 = vld [vmem:[%s3957 + $0x158] sm:$0xff]
    %v4985 = vld [vmem:[%s3957 + $0x168] sm:$0xff]
    %v4986 = vld [vmem:[%s3957 + $0x170] sm:$0xff]
    %v4987 = vld [vmem:[%s3957 + $0x1b0] sm:$0xff]
    %v4988 = vld [vmem:[%s3957 + $0x1b8] sm:$0xff]
    %v4989 = vld [vmem:[%s3957 + $0x1c8] sm:$0xff]
    %v4990 = vld [vmem:[%s3957 + $0x1d0] sm:$0xff]
    %v4991 = vld [vmem:[%s3957 + $0x1e0] sm:$0xff]
    %v4992 = vld [vmem:[%s3957 + $0x1e8] sm:$0xff]
    %v4993 = vld [vmem:[%s3957 + $0x1f8] sm:$0xff]
    %v4994 = vld [vmem:[%s3957 + $0x200] sm:$0xff]
    %v4995 = vld [vmem:[%s3957 + $0x210] sm:$0xff]
    %v4996 = vld [vmem:[%s3957 + $0x218] sm:$0xff]
    %v4997 = vld [vmem:[%s3957 + $0x228] sm:$0xff]
    %v4998 = vld [vmem:[%s3957 + $0x230] sm:$0xff]
    %v4999 = vld [vmem:[%s3957 + $0x240] sm:$0xff]
    %v5000 = vld [vmem:[%s3957 + $0x248] sm:$0xff]
    %v5001 = vld [vmem:[%s3957 + $0x258] sm:$0xff]
    %v5002 = vld [vmem:[%s3957 + $0x260] sm:$0xff]
    %v5003 = vld [vmem:[%s3957 + $0x270] sm:$0xff]
    %v5004 = vld [vmem:[%s3957 + $0x278] sm:$0xff]
    %v5005 = vld [vmem:[%s3957 + $0x288] sm:$0xff]
    %v5006 = vld [vmem:[%s3957 + $0x290] sm:$0xff]
    %v5007 = vld [vmem:[%s3957 + $0x2a0] sm:$0xff]
    %v5008 = vld [vmem:[%s3957 + $0x2a8] sm:$0xff]
    %v5009 = vld [vmem:[%s3957 + $0x2b8] sm:$0xff]
    %v5010 = vld [vmem:[%s3957 + $0x2c0] sm:$0xff]
    %v5011 = vld [vmem:[%s3957 + $0x2d0] sm:$0xff]
    %v5012 = vld [vmem:[%s3957 + $0x2d8] sm:$0xff]
    %v5013 = vld [vmem:[%s3957 + $0x2e8] sm:$0xff]
    %v5014 = vld [vmem:[%s3957 + $0x2f0] sm:$0xff]
    %v5015 = vld [vmem:[%s3957 + $0x300] sm:$0xff]
    %v5016 = vld [vmem:[%s3957 + $0x308] sm:$0xff]
    %v5017 = vld [vmem:[%s3957 + $0x318] sm:$0xff]
    %v5018 = vld [vmem:[%s3957 + $0x320] sm:$0xff]
    %s5019 = scalar_lea.vmem [#allocation9], 384
    %v5020 = vld [vmem:[%s5019] sm:$0xff]
    %v5021 = vld [vmem:[%s5019 + $0x8] sm:$0xff]
    %v5022 = vld [vmem:[%s5019 + $0x10] sm:$0xff]
    %v5023 = vld [vmem:[%s5019 + $0x18] sm:$0xff]
    %v5024 = vld [vmem:[%s5019 + $0x20] sm:$0xff]
    %v5025 = vld [vmem:[%s5019 + $0x28] sm:$0xff]
    %v5026 = vld [vmem:[%s5019 + $0x30] sm:$0xff]
    %v5027 = vld [vmem:[%s5019 + $0x38] sm:$0xff]
    %v5028 = vld [vmem:[%s5019 + $0x40] sm:$0xff]
    %v5029 = vld [vmem:[%s5019 + $0x48] sm:$0xff]
    %v5030 = vld [vmem:[%s5019 + $0x50] sm:$0xff]
    %v5031 = vld [vmem:[%s5019 + $0x58] sm:$0xff]
    %v5032 = vld [vmem:[%s5019 + $0x60] sm:$0xff]
    %v5033 = vld [vmem:[%s5019 + $0x68] sm:$0xff]
    %v5034 = vld [vmem:[%s5019 + $0x70] sm:$0xff]
    %v5035 = vld [vmem:[%s5019 + $0x78] sm:$0xff]
    %5036 = vmatpush.msra.mxu0 %v5035
    %5037 = vmatpush.msra.mxu0 %v5034
    %5038 = vmatpush.msra.mxu0 %v5033
    %5039 = vmatpush.msra.mxu0 %v5032
    %5040 = vmatpush.msra.mxu0 %v5031
    %5041 = vmatpush.msra.mxu0 %v5030
    %5042 = vmatpush.msra.mxu0 %v5029
    %5043 = vmatpush.msra.mxu0 %v5028
    %5044 = vmatpush.msra.mxu0 %v5027
    %5045 = vmatpush.msra.mxu0 %v5026
    %5046 = vmatpush.msra.mxu0 %v5025
    %5047 = vmatpush.msra.mxu0 %v5024
    %5048 = vmatpush.msra.mxu0 %v5023
    %5049 = vmatpush.msra.mxu0 %v5022
    %5050 = vmatpush.msra.mxu0 %v5021
    %5051 = vmatpush.msra.mxu0 %v5020
    %5052 = vmatmul.f32.gmra.mxu0 %v4955
    %v5053 = vpop.f32.mrf.mxu0
    %v5054 = vadd.f32 0.0, %v5053
    %5055 = vmatmul.f32.gmra.mxu0 %v4956
    %v5056 = vpop.f32.mrf.mxu0
    %v5057 = vadd.f32 0.0, %v5056
    %5058 = vmatmul.f32.gmra.mxu0 %v4957
    %v5059 = vpop.f32.mrf.mxu0
    %v5060 = vadd.f32 0.0, %v5059
    %5061 = vmatmul.f32.gmra.mxu0 %v4958
    %v5062 = vpop.f32.mrf.mxu0
    %v5063 = vadd.f32 0.0, %v5062
    %5064 = vmatmul.f32.gmra.mxu0 %v4959
    %v5065 = vpop.f32.mrf.mxu0
    %v5066 = vadd.f32 0.0, %v5065
    %5067 = vmatmul.f32.gmra.mxu0 %v4960
    %v5068 = vpop.f32.mrf.mxu0
    %v5069 = vadd.f32 0.0, %v5068
    %5070 = vmatmul.f32.gmra.mxu0 %v4961
    %v5071 = vpop.f32.mrf.mxu0
    %v5072 = vadd.f32 0.0, %v5071
    %5073 = vmatmul.f32.gmra.mxu0 %v4962
    %v5074 = vpop.f32.mrf.mxu0
    %v5075 = vadd.f32 0.0, %v5074
    %5076 = vmatmul.f32.gmra.mxu0 %v4963
    %v5077 = vpop.f32.mrf.mxu0
    %v5078 = vadd.f32 0.0, %v5077
    %5079 = vmatmul.f32.gmra.mxu0 %v4964
    %v5080 = vpop.f32.mrf.mxu0
    %v5081 = vadd.f32 0.0, %v5080
    %5082 = vmatmul.f32.gmra.mxu0 %v4965
    %v5083 = vpop.f32.mrf.mxu0
    %v5084 = vadd.f32 0.0, %v5083
    %5085 = vmatmul.f32.gmra.mxu0 %v4966
    %v5086 = vpop.f32.mrf.mxu0
    %v5087 = vadd.f32 0.0, %v5086
    %5088 = vmatmul.f32.gmra.mxu0 %v4967
    %v5089 = vpop.f32.mrf.mxu0
    %v5090 = vadd.f32 0.0, %v5089
    %5091 = vmatmul.f32.gmra.mxu0 %v4968
    %v5092 = vpop.f32.mrf.mxu0
    %v5093 = vadd.f32 0.0, %v5092
    %5094 = vmatmul.f32.gmra.mxu0 %v4969
    %v5095 = vpop.f32.mrf.mxu0
    %v5096 = vadd.f32 0.0, %v5095
    %5097 = vmatmul.f32.gmra.mxu0 %v4970
    %v5098 = vpop.f32.mrf.mxu0
    %v5099 = vadd.f32 0.0, %v5098
    %5100 = vmatmul.f32.gmra.mxu0 %v4971
    %v5101 = vpop.f32.mrf.mxu0
    %v5102 = vadd.f32 0.0, %v5101
    %5103 = vmatmul.f32.gmra.mxu0 %v4972
    %v5104 = vpop.f32.mrf.mxu0
    %v5105 = vadd.f32 0.0, %v5104
    %5106 = vmatmul.f32.gmra.mxu0 %v4973
    %v5107 = vpop.f32.mrf.mxu0
    %v5108 = vadd.f32 0.0, %v5107
    %5109 = vmatmul.f32.gmra.mxu0 %v4974
    %v5110 = vpop.f32.mrf.mxu0
    %v5111 = vadd.f32 0.0, %v5110
    %5112 = vmatmul.f32.gmra.mxu0 %v4975
    %v5113 = vpop.f32.mrf.mxu0
    %v5114 = vadd.f32 0.0, %v5113
    %5115 = vmatmul.f32.gmra.mxu0 %v4976
    %v5116 = vpop.f32.mrf.mxu0
    %v5117 = vadd.f32 0.0, %v5116
    %5118 = vmatmul.f32.gmra.mxu0 %v4977
    %v5119 = vpop.f32.mrf.mxu0
    %v5120 = vadd.f32 0.0, %v5119
    %5121 = vmatmul.f32.gmra.mxu0 %v4978
    %v5122 = vpop.f32.mrf.mxu0
    %v5123 = vadd.f32 0.0, %v5122
    %5124 = vmatmul.f32.gmra.mxu0 %v4979
    %v5125 = vpop.f32.mrf.mxu0
    %v5126 = vadd.f32 0.0, %v5125
    %5127 = vmatmul.f32.gmra.mxu0 %v4980
    %v5128 = vpop.f32.mrf.mxu0
    %v5129 = vadd.f32 0.0, %v5128
    %5130 = vmatmul.f32.gmra.mxu0 %v4981
    %v5131 = vpop.f32.mrf.mxu0
    %v5132 = vadd.f32 0.0, %v5131
    %5133 = vmatmul.f32.gmra.mxu0 %v4982
    %v5134 = vpop.f32.mrf.mxu0
    %v5135 = vadd.f32 0.0, %v5134
    %5136 = vmatmul.f32.gmra.mxu0 %v4983
    %v5137 = vpop.f32.mrf.mxu0
    %v5138 = vadd.f32 0.0, %v5137
    %5139 = vmatmul.f32.gmra.mxu0 %v4984
    %v5140 = vpop.f32.mrf.mxu0
    %v5141 = vadd.f32 0.0, %v5140
    %5142 = vmatmul.f32.gmra.mxu0 %v4985
    %v5143 = vpop.f32.mrf.mxu0
    %v5144 = vadd.f32 0.0, %v5143
    %5145 = vmatmul.f32.gmra.mxu0 %v4986
    %v5146 = vpop.f32.mrf.mxu0
    %v5147 = vadd.f32 0.0, %v5146
    %5148 = vmatmul.f32.gmra.mxu0 %v4987
    %v5149 = vpop.f32.mrf.mxu0
    %v5150 = vadd.f32 0.0, %v5149
    %5151 = vmatmul.f32.gmra.mxu0 %v4988
    %v5152 = vpop.f32.mrf.mxu0
    %v5153 = vadd.f32 0.0, %v5152
    %5154 = vmatmul.f32.gmra.mxu0 %v4989
    %v5155 = vpop.f32.mrf.mxu0
    %v5156 = vadd.f32 0.0, %v5155
    %5157 = vmatmul.f32.gmra.mxu0 %v4990
    %v5158 = vpop.f32.mrf.mxu0
    %v5159 = vadd.f32 0.0, %v5158
    %5160 = vmatmul.f32.gmra.mxu0 %v4991
    %v5161 = vpop.f32.mrf.mxu0
    %v5162 = vadd.f32 0.0, %v5161
    %5163 = vmatmul.f32.gmra.mxu0 %v4992
    %v5164 = vpop.f32.mrf.mxu0
    %v5165 = vadd.f32 0.0, %v5164
    %5166 = vmatmul.f32.gmra.mxu0 %v4993
    %v5167 = vpop.f32.mrf.mxu0
    %v5168 = vadd.f32 0.0, %v5167
    %5169 = vmatmul.f32.gmra.mxu0 %v4994
    %v5170 = vpop.f32.mrf.mxu0
    %v5171 = vadd.f32 0.0, %v5170
    %5172 = vmatmul.f32.gmra.mxu0 %v4995
    %v5173 = vpop.f32.mrf.mxu0
    %v5174 = vadd.f32 0.0, %v5173
    %5175 = vmatmul.f32.gmra.mxu0 %v4996
    %v5176 = vpop.f32.mrf.mxu0
    %v5177 = vadd.f32 0.0, %v5176
    %5178 = vmatmul.f32.gmra.mxu0 %v4997
    %v5179 = vpop.f32.mrf.mxu0
    %v5180 = vadd.f32 0.0, %v5179
    %5181 = vmatmul.f32.gmra.mxu0 %v4998
    %v5182 = vpop.f32.mrf.mxu0
    %v5183 = vadd.f32 0.0, %v5182
    %5184 = vmatmul.f32.gmra.mxu0 %v4999
    %v5185 = vpop.f32.mrf.mxu0
    %v5186 = vadd.f32 0.0, %v5185
    %5187 = vmatmul.f32.gmra.mxu0 %v5000
    %v5188 = vpop.f32.mrf.mxu0
    %v5189 = vadd.f32 0.0, %v5188
    %5190 = vmatmul.f32.gmra.mxu0 %v5001
    %v5191 = vpop.f32.mrf.mxu0
    %v5192 = vadd.f32 0.0, %v5191
    %5193 = vmatmul.f32.gmra.mxu0 %v5002
    %v5194 = vpop.f32.mrf.mxu0
    %v5195 = vadd.f32 0.0, %v5194
    %5196 = vmatmul.f32.gmra.mxu0 %v5003
    %v5197 = vpop.f32.mrf.mxu0
    %v5198 = vadd.f32 0.0, %v5197
    %5199 = vmatmul.f32.gmra.mxu0 %v5004
    %v5200 = vpop.f32.mrf.mxu0
    %v5201 = vadd.f32 0.0, %v5200
    %5202 = vmatmul.f32.gmra.mxu0 %v5005
    %v5203 = vpop.f32.mrf.mxu0
    %v5204 = vadd.f32 0.0, %v5203
    %5205 = vmatmul.f32.gmra.mxu0 %v5006
    %v5206 = vpop.f32.mrf.mxu0
    %v5207 = vadd.f32 0.0, %v5206
    %5208 = vmatmul.f32.gmra.mxu0 %v5007
    %v5209 = vpop.f32.mrf.mxu0
    %v5210 = vadd.f32 0.0, %v5209
    %5211 = vmatmul.f32.gmra.mxu0 %v5008
    %v5212 = vpop.f32.mrf.mxu0
    %v5213 = vadd.f32 0.0, %v5212
    %5214 = vmatmul.f32.gmra.mxu0 %v5009
    %v5215 = vpop.f32.mrf.mxu0
    %v5216 = vadd.f32 0.0, %v5215
    %5217 = vmatmul.f32.gmra.mxu0 %v5010
    %v5218 = vpop.f32.mrf.mxu0
    %v5219 = vadd.f32 0.0, %v5218
    %5220 = vmatmul.f32.gmra.mxu0 %v5011
    %v5221 = vpop.f32.mrf.mxu0
    %v5222 = vadd.f32 0.0, %v5221
    %5223 = vmatmul.f32.gmra.mxu0 %v5012
    %v5224 = vpop.f32.mrf.mxu0
    %v5225 = vadd.f32 0.0, %v5224
    %5226 = vmatmul.f32.gmra.mxu0 %v5013
    %v5227 = vpop.f32.mrf.mxu0
    %v5228 = vadd.f32 0.0, %v5227
    %5229 = vmatmul.f32.gmra.mxu0 %v5014
    %v5230 = vpop.f32.mrf.mxu0
    %v5231 = vadd.f32 0.0, %v5230
    %5232 = vmatmul.f32.gmra.mxu0 %v5015
    %v5233 = vpop.f32.mrf.mxu0
    %v5234 = vadd.f32 0.0, %v5233
    %5235 = vmatmul.f32.gmra.mxu0 %v5016
    %v5236 = vpop.f32.mrf.mxu0
    %v5237 = vadd.f32 0.0, %v5236
    %5238 = vmatmul.f32.gmra.mxu0 %v5017
    %v5239 = vpop.f32.mrf.mxu0
    %v5240 = vadd.f32 0.0, %v5239
    %5241 = vmatmul.f32.gmra.mxu0 %v5018
    %v5242 = vpop.f32.mrf.mxu0
    %v5243 = vadd.f32 0.0, %v5242
    %5244 = vdwg.mxu0
    %v5245 = vadd.f32 %v4891, %v5054
    %v5246 = vadd.f32 %v4892, %v5057
    %v5247 = vadd.f32 %v4893, %v5060
    %v5248 = vadd.f32 %v4894, %v5063
    %v5249 = vadd.f32 %v4895, %v5066
    %v5250 = vadd.f32 %v4896, %v5069
    %v5251 = vadd.f32 %v4897, %v5072
    %v5252 = vadd.f32 %v4898, %v5075
    %v5253 = vadd.f32 %v4899, %v5078
    %v5254 = vadd.f32 %v4900, %v5081
    %v5255 = vadd.f32 %v4901, %v5084
    %v5256 = vadd.f32 %v4902, %v5087
    %v5257 = vadd.f32 %v4903, %v5090
    %v5258 = vadd.f32 %v4904, %v5093
    %v5259 = vadd.f32 %v4905, %v5096
    %v5260 = vadd.f32 %v4906, %v5099
    %v5261 = vadd.f32 %v4907, %v5102
    %v5262 = vadd.f32 %v4908, %v5105
    %v5263 = vadd.f32 %v4909, %v5108
    %v5264 = vadd.f32 %v4910, %v5111
    %v5265 = vadd.f32 %v4911, %v5114
    %v5266 = vadd.f32 %v4912, %v5117
    %v5267 = vadd.f32 %v4913, %v5120
    %v5268 = vadd.f32 %v4914, %v5123
    %v5269 = vadd.f32 %v4915, %v5126
    %v5270 = vadd.f32 %v4916, %v5129
    %v5271 = vadd.f32 %v4917, %v5132
    %v5272 = vadd.f32 %v4918, %v5135
    %v5273 = vadd.f32 %v4919, %v5138
    %v5274 = vadd.f32 %v4920, %v5141
    %v5275 = vadd.f32 %v4921, %v5144
    %v5276 = vadd.f32 %v4922, %v5147
    %v5277 = vadd.f32 %v4923, %v5150
    %v5278 = vadd.f32 %v4924, %v5153
    %v5279 = vadd.f32 %v4925, %v5156
    %v5280 = vadd.f32 %v4926, %v5159
    %v5281 = vadd.f32 %v4927, %v5162
    %v5282 = vadd.f32 %v4928, %v5165
    %v5283 = vadd.f32 %v4929, %v5168
    %v5284 = vadd.f32 %v4930, %v5171
    %v5285 = vadd.f32 %v4931, %v5174
    %v5286 = vadd.f32 %v4932, %v5177
    %v5287 = vadd.f32 %v4933, %v5180
    %v5288 = vadd.f32 %v4934, %v5183
    %v5289 = vadd.f32 %v4935, %v5186
    %v5290 = vadd.f32 %v4936, %v5189
    %v5291 = vadd.f32 %v4937, %v5192
    %v5292 = vadd.f32 %v4938, %v5195
    %v5293 = vadd.f32 %v4939, %v5198
    %v5294 = vadd.f32 %v4940, %v5201
    %v5295 = vadd.f32 %v4941, %v5204
    %v5296 = vadd.f32 %v4942, %v5207
    %v5297 = vadd.f32 %v4943, %v5210
    %v5298 = vadd.f32 %v4944, %v5213
    %v5299 = vadd.f32 %v4945, %v5216
    %v5300 = vadd.f32 %v4946, %v5219
    %v5301 = vadd.f32 %v4947, %v5222
    %v5302 = vadd.f32 %v4948, %v5225
    %v5303 = vadd.f32 %v4949, %v5228
    %v5304 = vadd.f32 %v4950, %v5231
    %v5305 = vadd.f32 %v4951, %v5234
    %v5306 = vadd.f32 %v4952, %v5237
    %v5307 = vadd.f32 %v4953, %v5240
    %v5308 = vadd.f32 %v4954, %v5243
    %v5309 = vld [vmem:[%s3957 + $0x1] sm:$0xff]
    %v5310 = vld [vmem:[%s3957 + $0x9] sm:$0xff]
    %v5311 = vld [vmem:[%s3957 + $0x19] sm:$0xff]
    %v5312 = vld [vmem:[%s3957 + $0x21] sm:$0xff]
    %v5313 = vld [vmem:[%s3957 + $0x31] sm:$0xff]
    %v5314 = vld [vmem:[%s3957 + $0x39] sm:$0xff]
    %v5315 = vld [vmem:[%s3957 + $0x49] sm:$0xff]
    %v5316 = vld [vmem:[%s3957 + $0x51] sm:$0xff]
    %v5317 = vld [vmem:[%s3957 + $0x61] sm:$0xff]
    %v5318 = vld [vmem:[%s3957 + $0x69] sm:$0xff]
    %v5319 = vld [vmem:[%s3957 + $0x79] sm:$0xff]
    %v5320 = vld [vmem:[%s3957 + $0x81] sm:$0xff]
    %v5321 = vld [vmem:[%s3957 + $0x91] sm:$0xff]
    %v5322 = vld [vmem:[%s3957 + $0x99] sm:$0xff]
    %v5323 = vld [vmem:[%s3957 + $0xa9] sm:$0xff]
    %v5324 = vld [vmem:[%s3957 + $0xb1] sm:$0xff]
    %v5325 = vld [vmem:[%s3957 + $0xc1] sm:$0xff]
    %v5326 = vld [vmem:[%s3957 + $0xc9] sm:$0xff]
    %v5327 = vld [vmem:[%s3957 + $0xd9] sm:$0xff]
    %v5328 = vld [vmem:[%s3957 + $0xe1] sm:$0xff]
    %v5329 = vld [vmem:[%s3957 + $0xf1] sm:$0xff]
    %v5330 = vld [vmem:[%s3957 + $0xf9] sm:$0xff]
    %v5331 = vld [vmem:[%s3957 + $0x109] sm:$0xff]
    %v5332 = vld [vmem:[%s3957 + $0x111] sm:$0xff]
    %v5333 = vld [vmem:[%s3957 + $0x121] sm:$0xff]
    %v5334 = vld [vmem:[%s3957 + $0x129] sm:$0xff]
    %v5335 = vld [vmem:[%s3957 + $0x139] sm:$0xff]
    %v5336 = vld [vmem:[%s3957 + $0x141] sm:$0xff]
    %v5337 = vld [vmem:[%s3957 + $0x151] sm:$0xff]
    %v5338 = vld [vmem:[%s3957 + $0x159] sm:$0xff]
    %v5339 = vld [vmem:[%s3957 + $0x169] sm:$0xff]
    %v5340 = vld [vmem:[%s3957 + $0x171] sm:$0xff]
    %v5341 = vld [vmem:[%s3957 + $0x1b1] sm:$0xff]
    %v5342 = vld [vmem:[%s3957 + $0x1b9] sm:$0xff]
    %v5343 = vld [vmem:[%s3957 + $0x1c9] sm:$0xff]
    %v5344 = vld [vmem:[%s3957 + $0x1d1] sm:$0xff]
    %v5345 = vld [vmem:[%s3957 + $0x1e1] sm:$0xff]
    %v5346 = vld [vmem:[%s3957 + $0x1e9] sm:$0xff]
    %v5347 = vld [vmem:[%s3957 + $0x1f9] sm:$0xff]
    %v5348 = vld [vmem:[%s3957 + $0x201] sm:$0xff]
    %v5349 = vld [vmem:[%s3957 + $0x211] sm:$0xff]
    %v5350 = vld [vmem:[%s3957 + $0x219] sm:$0xff]
    %v5351 = vld [vmem:[%s3957 + $0x229] sm:$0xff]
    %v5352 = vld [vmem:[%s3957 + $0x231] sm:$0xff]
    %v5353 = vld [vmem:[%s3957 + $0x241] sm:$0xff]
    %v5354 = vld [vmem:[%s3957 + $0x249] sm:$0xff]
    %v5355 = vld [vmem:[%s3957 + $0x259] sm:$0xff]
    %v5356 = vld [vmem:[%s3957 + $0x261] sm:$0xff]
    %v5357 = vld [vmem:[%s3957 + $0x271] sm:$0xff]
    %v5358 = vld [vmem:[%s3957 + $0x279] sm:$0xff]
    %v5359 = vld [vmem:[%s3957 + $0x289] sm:$0xff]
    %v5360 = vld [vmem:[%s3957 + $0x291] sm:$0xff]
    %v5361 = vld [vmem:[%s3957 + $0x2a1] sm:$0xff]
    %v5362 = vld [vmem:[%s3957 + $0x2a9] sm:$0xff]
    %v5363 = vld [vmem:[%s3957 + $0x2b9] sm:$0xff]
    %v5364 = vld [vmem:[%s3957 + $0x2c1] sm:$0xff]
    %v5365 = vld [vmem:[%s3957 + $0x2d1] sm:$0xff]
    %v5366 = vld [vmem:[%s3957 + $0x2d9] sm:$0xff]
    %v5367 = vld [vmem:[%s3957 + $0x2e9] sm:$0xff]
    %v5368 = vld [vmem:[%s3957 + $0x2f1] sm:$0xff]
    %v5369 = vld [vmem:[%s3957 + $0x301] sm:$0xff]
    %v5370 = vld [vmem:[%s3957 + $0x309] sm:$0xff]
    %v5371 = vld [vmem:[%s3957 + $0x319] sm:$0xff]
    %v5372 = vld [vmem:[%s3957 + $0x321] sm:$0xff]
    %s5373 = scalar_lea.vmem [#allocation9], 512
    %v5374 = vld [vmem:[%s5373] sm:$0xff]
    %v5375 = vld [vmem:[%s5373 + $0x8] sm:$0xff]
    %v5376 = vld [vmem:[%s5373 + $0x10] sm:$0xff]
    %v5377 = vld [vmem:[%s5373 + $0x18] sm:$0xff]
    %v5378 = vld [vmem:[%s5373 + $0x20] sm:$0xff]
    %v5379 = vld [vmem:[%s5373 + $0x28] sm:$0xff]
    %v5380 = vld [vmem:[%s5373 + $0x30] sm:$0xff]
    %v5381 = vld [vmem:[%s5373 + $0x38] sm:$0xff]
    %v5382 = vld [vmem:[%s5373 + $0x40] sm:$0xff]
    %v5383 = vld [vmem:[%s5373 + $0x48] sm:$0xff]
    %v5384 = vld [vmem:[%s5373 + $0x50] sm:$0xff]
    %v5385 = vld [vmem:[%s5373 + $0x58] sm:$0xff]
    %v5386 = vld [vmem:[%s5373 + $0x60] sm:$0xff]
    %v5387 = vld [vmem:[%s5373 + $0x68] sm:$0xff]
    %v5388 = vld [vmem:[%s5373 + $0x70] sm:$0xff]
    %v5389 = vld [vmem:[%s5373 + $0x78] sm:$0xff]
    %5390 = vmatpush.msra.mxu0 %v5389
    %5391 = vmatpush.msra.mxu0 %v5388
    %5392 = vmatpush.msra.mxu0 %v5387
    %5393 = vmatpush.msra.mxu0 %v5386
    %5394 = vmatpush.msra.mxu0 %v5385
    %5395 = vmatpush.msra.mxu0 %v5384
    %5396 = vmatpush.msra.mxu0 %v5383
    %5397 = vmatpush.msra.mxu0 %v5382
    %5398 = vmatpush.msra.mxu0 %v5381
    %5399 = vmatpush.msra.mxu0 %v5380
    %5400 = vmatpush.msra.mxu0 %v5379
    %5401 = vmatpush.msra.mxu0 %v5378
    %5402 = vmatpush.msra.mxu0 %v5377
    %5403 = vmatpush.msra.mxu0 %v5376
    %5404 = vmatpush.msra.mxu0 %v5375
    %5405 = vmatpush.msra.mxu0 %v5374
    %5406 = vmatmul.f32.gmra.mxu0 %v5309
    %v5407 = vpop.f32.mrf.mxu0
    %v5408 = vadd.f32 0.0, %v5407
    %5409 = vmatmul.f32.gmra.mxu0 %v5310
    %v5410 = vpop.f32.mrf.mxu0
    %v5411 = vadd.f32 0.0, %v5410
    %5412 = vmatmul.f32.gmra.mxu0 %v5311
    %v5413 = vpop.f32.mrf.mxu0
    %v5414 = vadd.f32 0.0, %v5413
    %5415 = vmatmul.f32.gmra.mxu0 %v5312
    %v5416 = vpop.f32.mrf.mxu0
    %v5417 = vadd.f32 0.0, %v5416
    %5418 = vmatmul.f32.gmra.mxu0 %v5313
    %v5419 = vpop.f32.mrf.mxu0
    %v5420 = vadd.f32 0.0, %v5419
    %5421 = vmatmul.f32.gmra.mxu0 %v5314
    %v5422 = vpop.f32.mrf.mxu0
    %v5423 = vadd.f32 0.0, %v5422
    %5424 = vmatmul.f32.gmra.mxu0 %v5315
    %v5425 = vpop.f32.mrf.mxu0
    %v5426 = vadd.f32 0.0, %v5425
    %5427 = vmatmul.f32.gmra.mxu0 %v5316
    %v5428 = vpop.f32.mrf.mxu0
    %v5429 = vadd.f32 0.0, %v5428
    %5430 = vmatmul.f32.gmra.mxu0 %v5317
    %v5431 = vpop.f32.mrf.mxu0
    %v5432 = vadd.f32 0.0, %v5431
    %5433 = vmatmul.f32.gmra.mxu0 %v5318
    %v5434 = vpop.f32.mrf.mxu0
    %v5435 = vadd.f32 0.0, %v5434
    %5436 = vmatmul.f32.gmra.mxu0 %v5319
    %v5437 = vpop.f32.mrf.mxu0
    %v5438 = vadd.f32 0.0, %v5437
    %5439 = vmatmul.f32.gmra.mxu0 %v5320
    %v5440 = vpop.f32.mrf.mxu0
    %v5441 = vadd.f32 0.0, %v5440
    %5442 = vmatmul.f32.gmra.mxu0 %v5321
    %v5443 = vpop.f32.mrf.mxu0
    %v5444 = vadd.f32 0.0, %v5443
    %5445 = vmatmul.f32.gmra.mxu0 %v5322
    %v5446 = vpop.f32.mrf.mxu0
    %v5447 = vadd.f32 0.0, %v5446
    %5448 = vmatmul.f32.gmra.mxu0 %v5323
    %v5449 = vpop.f32.mrf.mxu0
    %v5450 = vadd.f32 0.0, %v5449
    %5451 = vmatmul.f32.gmra.mxu0 %v5324
    %v5452 = vpop.f32.mrf.mxu0
    %v5453 = vadd.f32 0.0, %v5452
    %5454 = vmatmul.f32.gmra.mxu0 %v5325
    %v5455 = vpop.f32.mrf.mxu0
    %v5456 = vadd.f32 0.0, %v5455
    %5457 = vmatmul.f32.gmra.mxu0 %v5326
    %v5458 = vpop.f32.mrf.mxu0
    %v5459 = vadd.f32 0.0, %v5458
    %5460 = vmatmul.f32.gmra.mxu0 %v5327
    %v5461 = vpop.f32.mrf.mxu0
    %v5462 = vadd.f32 0.0, %v5461
    %5463 = vmatmul.f32.gmra.mxu0 %v5328
    %v5464 = vpop.f32.mrf.mxu0
    %v5465 = vadd.f32 0.0, %v5464
    %5466 = vmatmul.f32.gmra.mxu0 %v5329
    %v5467 = vpop.f32.mrf.mxu0
    %v5468 = vadd.f32 0.0, %v5467
    %5469 = vmatmul.f32.gmra.mxu0 %v5330
    %v5470 = vpop.f32.mrf.mxu0
    %v5471 = vadd.f32 0.0, %v5470
    %5472 = vmatmul.f32.gmra.mxu0 %v5331
    %v5473 = vpop.f32.mrf.mxu0
    %v5474 = vadd.f32 0.0, %v5473
    %5475 = vmatmul.f32.gmra.mxu0 %v5332
    %v5476 = vpop.f32.mrf.mxu0
    %v5477 = vadd.f32 0.0, %v5476
    %5478 = vmatmul.f32.gmra.mxu0 %v5333
    %v5479 = vpop.f32.mrf.mxu0
    %v5480 = vadd.f32 0.0, %v5479
    %5481 = vmatmul.f32.gmra.mxu0 %v5334
    %v5482 = vpop.f32.mrf.mxu0
    %v5483 = vadd.f32 0.0, %v5482
    %5484 = vmatmul.f32.gmra.mxu0 %v5335
    %v5485 = vpop.f32.mrf.mxu0
    %v5486 = vadd.f32 0.0, %v5485
    %5487 = vmatmul.f32.gmra.mxu0 %v5336
    %v5488 = vpop.f32.mrf.mxu0
    %v5489 = vadd.f32 0.0, %v5488
    %5490 = vmatmul.f32.gmra.mxu0 %v5337
    %v5491 = vpop.f32.mrf.mxu0
    %v5492 = vadd.f32 0.0, %v5491
    %5493 = vmatmul.f32.gmra.mxu0 %v5338
    %v5494 = vpop.f32.mrf.mxu0
    %v5495 = vadd.f32 0.0, %v5494
    %5496 = vmatmul.f32.gmra.mxu0 %v5339
    %v5497 = vpop.f32.mrf.mxu0
    %v5498 = vadd.f32 0.0, %v5497
    %5499 = vmatmul.f32.gmra.mxu0 %v5340
    %v5500 = vpop.f32.mrf.mxu0
    %v5501 = vadd.f32 0.0, %v5500
    %5502 = vmatmul.f32.gmra.mxu0 %v5341
    %v5503 = vpop.f32.mrf.mxu0
    %v5504 = vadd.f32 0.0, %v5503
    %5505 = vmatmul.f32.gmra.mxu0 %v5342
    %v5506 = vpop.f32.mrf.mxu0
    %v5507 = vadd.f32 0.0, %v5506
    %5508 = vmatmul.f32.gmra.mxu0 %v5343
    %v5509 = vpop.f32.mrf.mxu0
    %v5510 = vadd.f32 0.0, %v5509
    %5511 = vmatmul.f32.gmra.mxu0 %v5344
    %v5512 = vpop.f32.mrf.mxu0
    %v5513 = vadd.f32 0.0, %v5512
    %5514 = vmatmul.f32.gmra.mxu0 %v5345
    %v5515 = vpop.f32.mrf.mxu0
    %v5516 = vadd.f32 0.0, %v5515
    %5517 = vmatmul.f32.gmra.mxu0 %v5346
    %v5518 = vpop.f32.mrf.mxu0
    %v5519 = vadd.f32 0.0, %v5518
    %5520 = vmatmul.f32.gmra.mxu0 %v5347
    %v5521 = vpop.f32.mrf.mxu0
    %v5522 = vadd.f32 0.0, %v5521
    %5523 = vmatmul.f32.gmra.mxu0 %v5348
    %v5524 = vpop.f32.mrf.mxu0
    %v5525 = vadd.f32 0.0, %v5524
    %5526 = vmatmul.f32.gmra.mxu0 %v5349
    %v5527 = vpop.f32.mrf.mxu0
    %v5528 = vadd.f32 0.0, %v5527
    %5529 = vmatmul.f32.gmra.mxu0 %v5350
    %v5530 = vpop.f32.mrf.mxu0
    %v5531 = vadd.f32 0.0, %v5530
    %5532 = vmatmul.f32.gmra.mxu0 %v5351
    %v5533 = vpop.f32.mrf.mxu0
    %v5534 = vadd.f32 0.0, %v5533
    %5535 = vmatmul.f32.gmra.mxu0 %v5352
    %v5536 = vpop.f32.mrf.mxu0
    %v5537 = vadd.f32 0.0, %v5536
    %5538 = vmatmul.f32.gmra.mxu0 %v5353
    %v5539 = vpop.f32.mrf.mxu0
    %v5540 = vadd.f32 0.0, %v5539
    %5541 = vmatmul.f32.gmra.mxu0 %v5354
    %v5542 = vpop.f32.mrf.mxu0
    %v5543 = vadd.f32 0.0, %v5542
    %5544 = vmatmul.f32.gmra.mxu0 %v5355
    %v5545 = vpop.f32.mrf.mxu0
    %v5546 = vadd.f32 0.0, %v5545
    %5547 = vmatmul.f32.gmra.mxu0 %v5356
    %v5548 = vpop.f32.mrf.mxu0
    %v5549 = vadd.f32 0.0, %v5548
    %5550 = vmatmul.f32.gmra.mxu0 %v5357
    %v5551 = vpop.f32.mrf.mxu0
    %v5552 = vadd.f32 0.0, %v5551
    %5553 = vmatmul.f32.gmra.mxu0 %v5358
    %v5554 = vpop.f32.mrf.mxu0
    %v5555 = vadd.f32 0.0, %v5554
    %5556 = vmatmul.f32.gmra.mxu0 %v5359
    %v5557 = vpop.f32.mrf.mxu0
    %v5558 = vadd.f32 0.0, %v5557
    %5559 = vmatmul.f32.gmra.mxu0 %v5360
    %v5560 = vpop.f32.mrf.mxu0
    %v5561 = vadd.f32 0.0, %v5560
    %5562 = vmatmul.f32.gmra.mxu0 %v5361
    %v5563 = vpop.f32.mrf.mxu0
    %v5564 = vadd.f32 0.0, %v5563
    %5565 = vmatmul.f32.gmra.mxu0 %v5362
    %v5566 = vpop.f32.mrf.mxu0
    %v5567 = vadd.f32 0.0, %v5566
    %5568 = vmatmul.f32.gmra.mxu0 %v5363
    %v5569 = vpop.f32.mrf.mxu0
    %v5570 = vadd.f32 0.0, %v5569
    %5571 = vmatmul.f32.gmra.mxu0 %v5364
    %v5572 = vpop.f32.mrf.mxu0
    %v5573 = vadd.f32 0.0, %v5572
    %5574 = vmatmul.f32.gmra.mxu0 %v5365
    %v5575 = vpop.f32.mrf.mxu0
    %v5576 = vadd.f32 0.0, %v5575
    %5577 = vmatmul.f32.gmra.mxu0 %v5366
    %v5578 = vpop.f32.mrf.mxu0
    %v5579 = vadd.f32 0.0, %v5578
    %5580 = vmatmul.f32.gmra.mxu0 %v5367
    %v5581 = vpop.f32.mrf.mxu0
    %v5582 = vadd.f32 0.0, %v5581
    %5583 = vmatmul.f32.gmra.mxu0 %v5368
    %v5584 = vpop.f32.mrf.mxu0
    %v5585 = vadd.f32 0.0, %v5584
    %5586 = vmatmul.f32.gmra.mxu0 %v5369
    %v5587 = vpop.f32.mrf.mxu0
    %v5588 = vadd.f32 0.0, %v5587
    %5589 = vmatmul.f32.gmra.mxu0 %v5370
    %v5590 = vpop.f32.mrf.mxu0
    %v5591 = vadd.f32 0.0, %v5590
    %5592 = vmatmul.f32.gmra.mxu0 %v5371
    %v5593 = vpop.f32.mrf.mxu0
    %v5594 = vadd.f32 0.0, %v5593
    %5595 = vmatmul.f32.gmra.mxu0 %v5372
    %v5596 = vpop.f32.mrf.mxu0
    %v5597 = vadd.f32 0.0, %v5596
    %5598 = vdwg.mxu0
    %v5599 = vadd.f32 %v5245, %v5408
    %v5600 = vadd.f32 %v5246, %v5411
    %v5601 = vadd.f32 %v5247, %v5414
    %v5602 = vadd.f32 %v5248, %v5417
    %v5603 = vadd.f32 %v5249, %v5420
    %v5604 = vadd.f32 %v5250, %v5423
    %v5605 = vadd.f32 %v5251, %v5426
    %v5606 = vadd.f32 %v5252, %v5429
    %v5607 = vadd.f32 %v5253, %v5432
    %v5608 = vadd.f32 %v5254, %v5435
    %v5609 = vadd.f32 %v5255, %v5438
    %v5610 = vadd.f32 %v5256, %v5441
    %v5611 = vadd.f32 %v5257, %v5444
    %v5612 = vadd.f32 %v5258, %v5447
    %v5613 = vadd.f32 %v5259, %v5450
    %v5614 = vadd.f32 %v5260, %v5453
    %v5615 = vadd.f32 %v5261, %v5456
    %v5616 = vadd.f32 %v5262, %v5459
    %v5617 = vadd.f32 %v5263, %v5462
    %v5618 = vadd.f32 %v5264, %v5465
    %v5619 = vadd.f32 %v5265, %v5468
    %v5620 = vadd.f32 %v5266, %v5471
    %v5621 = vadd.f32 %v5267, %v5474
    %v5622 = vadd.f32 %v5268, %v5477
    %v5623 = vadd.f32 %v5269, %v5480
    %v5624 = vadd.f32 %v5270, %v5483
    %v5625 = vadd.f32 %v5271, %v5486
    %v5626 = vadd.f32 %v5272, %v5489
    %v5627 = vadd.f32 %v5273, %v5492
    %v5628 = vadd.f32 %v5274, %v5495
    %v5629 = vadd.f32 %v5275, %v5498
    %v5630 = vadd.f32 %v5276, %v5501
    %v5631 = vadd.f32 %v5277, %v5504
    %v5632 = vadd.f32 %v5278, %v5507
    %v5633 = vadd.f32 %v5279, %v5510
    %v5634 = vadd.f32 %v5280, %v5513
    %v5635 = vadd.f32 %v5281, %v5516
    %v5636 = vadd.f32 %v5282, %v5519
    %v5637 = vadd.f32 %v5283, %v5522
    %v5638 = vadd.f32 %v5284, %v5525
    %v5639 = vadd.f32 %v5285, %v5528
    %v5640 = vadd.f32 %v5286, %v5531
    %v5641 = vadd.f32 %v5287, %v5534
    %v5642 = vadd.f32 %v5288, %v5537
    %v5643 = vadd.f32 %v5289, %v5540
    %v5644 = vadd.f32 %v5290, %v5543
    %v5645 = vadd.f32 %v5291, %v5546
    %v5646 = vadd.f32 %v5292, %v5549
    %v5647 = vadd.f32 %v5293, %v5552
    %v5648 = vadd.f32 %v5294, %v5555
    %v5649 = vadd.f32 %v5295, %v5558
    %v5650 = vadd.f32 %v5296, %v5561
    %v5651 = vadd.f32 %v5297, %v5564
    %v5652 = vadd.f32 %v5298, %v5567
    %v5653 = vadd.f32 %v5299, %v5570
    %v5654 = vadd.f32 %v5300, %v5573
    %v5655 = vadd.f32 %v5301, %v5576
    %v5656 = vadd.f32 %v5302, %v5579
    %v5657 = vadd.f32 %v5303, %v5582
    %v5658 = vadd.f32 %v5304, %v5585
    %v5659 = vadd.f32 %v5305, %v5588
    %v5660 = vadd.f32 %v5306, %v5591
    %v5661 = vadd.f32 %v5307, %v5594
    %v5662 = vadd.f32 %v5308, %v5597
    %v5663 = vld [vmem:[%s3957 + $0x2] sm:$0xff]
    %v5664 = vld [vmem:[%s3957 + $0xa] sm:$0xff]
    %v5665 = vld [vmem:[%s3957 + $0x1a] sm:$0xff]
    %v5666 = vld [vmem:[%s3957 + $0x22] sm:$0xff]
    %v5667 = vld [vmem:[%s3957 + $0x32] sm:$0xff]
    %v5668 = vld [vmem:[%s3957 + $0x3a] sm:$0xff]
    %v5669 = vld [vmem:[%s3957 + $0x4a] sm:$0xff]
    %v5670 = vld [vmem:[%s3957 + $0x52] sm:$0xff]
    %v5671 = vld [vmem:[%s3957 + $0x62] sm:$0xff]
    %v5672 = vld [vmem:[%s3957 + $0x6a] sm:$0xff]
    %v5673 = vld [vmem:[%s3957 + $0x7a] sm:$0xff]
    %v5674 = vld [vmem:[%s3957 + $0x82] sm:$0xff]
    %v5675 = vld [vmem:[%s3957 + $0x92] sm:$0xff]
    %v5676 = vld [vmem:[%s3957 + $0x9a] sm:$0xff]
    %v5677 = vld [vmem:[%s3957 + $0xaa] sm:$0xff]
    %v5678 = vld [vmem:[%s3957 + $0xb2] sm:$0xff]
    %v5679 = vld [vmem:[%s3957 + $0xc2] sm:$0xff]
    %v5680 = vld [vmem:[%s3957 + $0xca] sm:$0xff]
    %v5681 = vld [vmem:[%s3957 + $0xda] sm:$0xff]
    %v5682 = vld [vmem:[%s3957 + $0xe2] sm:$0xff]
    %v5683 = vld [vmem:[%s3957 + $0xf2] sm:$0xff]
    %v5684 = vld [vmem:[%s3957 + $0xfa] sm:$0xff]
    %v5685 = vld [vmem:[%s3957 + $0x10a] sm:$0xff]
    %v5686 = vld [vmem:[%s3957 + $0x112] sm:$0xff]
    %v5687 = vld [vmem:[%s3957 + $0x122] sm:$0xff]
    %v5688 = vld [vmem:[%s3957 + $0x12a] sm:$0xff]
    %v5689 = vld [vmem:[%s3957 + $0x13a] sm:$0xff]
    %v5690 = vld [vmem:[%s3957 + $0x142] sm:$0xff]
    %v5691 = vld [vmem:[%s3957 + $0x152] sm:$0xff]
    %v5692 = vld [vmem:[%s3957 + $0x15a] sm:$0xff]
    %v5693 = vld [vmem:[%s3957 + $0x16a] sm:$0xff]
    %v5694 = vld [vmem:[%s3957 + $0x172] sm:$0xff]
    %v5695 = vld [vmem:[%s3957 + $0x1b2] sm:$0xff]
    %v5696 = vld [vmem:[%s3957 + $0x1ba] sm:$0xff]
    %v5697 = vld [vmem:[%s3957 + $0x1ca] sm:$0xff]
    %v5698 = vld [vmem:[%s3957 + $0x1d2] sm:$0xff]
    %v5699 = vld [vmem:[%s3957 + $0x1e2] sm:$0xff]
    %v5700 = vld [vmem:[%s3957 + $0x1ea] sm:$0xff]
    %v5701 = vld [vmem:[%s3957 + $0x1fa] sm:$0xff]
    %v5702 = vld [vmem:[%s3957 + $0x202] sm:$0xff]
    %v5703 = vld [vmem:[%s3957 + $0x212] sm:$0xff]
    %v5704 = vld [vmem:[%s3957 + $0x21a] sm:$0xff]
    %v5705 = vld [vmem:[%s3957 + $0x22a] sm:$0xff]
    %v5706 = vld [vmem:[%s3957 + $0x232] sm:$0xff]
    %v5707 = vld [vmem:[%s3957 + $0x242] sm:$0xff]
    %v5708 = vld [vmem:[%s3957 + $0x24a] sm:$0xff]
    %v5709 = vld [vmem:[%s3957 + $0x25a] sm:$0xff]
    %v5710 = vld [vmem:[%s3957 + $0x262] sm:$0xff]
    %v5711 = vld [vmem:[%s3957 + $0x272] sm:$0xff]
    %v5712 = vld [vmem:[%s3957 + $0x27a] sm:$0xff]
    %v5713 = vld [vmem:[%s3957 + $0x28a] sm:$0xff]
    %v5714 = vld [vmem:[%s3957 + $0x292] sm:$0xff]
    %v5715 = vld [vmem:[%s3957 + $0x2a2] sm:$0xff]
    %v5716 = vld [vmem:[%s3957 + $0x2aa] sm:$0xff]
    %v5717 = vld [vmem:[%s3957 + $0x2ba] sm:$0xff]
    %v5718 = vld [vmem:[%s3957 + $0x2c2] sm:$0xff]
    %v5719 = vld [vmem:[%s3957 + $0x2d2] sm:$0xff]
    %v5720 = vld [vmem:[%s3957 + $0x2da] sm:$0xff]
    %v5721 = vld [vmem:[%s3957 + $0x2ea] sm:$0xff]
    %v5722 = vld [vmem:[%s3957 + $0x2f2] sm:$0xff]
    %v5723 = vld [vmem:[%s3957 + $0x302] sm:$0xff]
    %v5724 = vld [vmem:[%s3957 + $0x30a] sm:$0xff]
    %v5725 = vld [vmem:[%s3957 + $0x31a] sm:$0xff]
    %v5726 = vld [vmem:[%s3957 + $0x322] sm:$0xff]
    %s5727 = scalar_lea.vmem [#allocation9], 640
    %v5728 = vld [vmem:[%s5727] sm:$0xff]
    %v5729 = vld [vmem:[%s5727 + $0x8] sm:$0xff]
    %v5730 = vld [vmem:[%s5727 + $0x10] sm:$0xff]
    %v5731 = vld [vmem:[%s5727 + $0x18] sm:$0xff]
    %v5732 = vld [vmem:[%s5727 + $0x20] sm:$0xff]
    %v5733 = vld [vmem:[%s5727 + $0x28] sm:$0xff]
    %v5734 = vld [vmem:[%s5727 + $0x30] sm:$0xff]
    %v5735 = vld [vmem:[%s5727 + $0x38] sm:$0xff]
    %v5736 = vld [vmem:[%s5727 + $0x40] sm:$0xff]
    %v5737 = vld [vmem:[%s5727 + $0x48] sm:$0xff]
    %v5738 = vld [vmem:[%s5727 + $0x50] sm:$0xff]
    %v5739 = vld [vmem:[%s5727 + $0x58] sm:$0xff]
    %v5740 = vld [vmem:[%s5727 + $0x60] sm:$0xff]
    %v5741 = vld [vmem:[%s5727 + $0x68] sm:$0xff]
    %v5742 = vld [vmem:[%s5727 + $0x70] sm:$0xff]
    %v5743 = vld [vmem:[%s5727 + $0x78] sm:$0xff]
    %5744 = vmatpush.msra.mxu0 %v5743
    %5745 = vmatpush.msra.mxu0 %v5742
    %5746 = vmatpush.msra.mxu0 %v5741
    %5747 = vmatpush.msra.mxu0 %v5740
    %5748 = vmatpush.msra.mxu0 %v5739
    %5749 = vmatpush.msra.mxu0 %v5738
    %5750 = vmatpush.msra.mxu0 %v5737
    %5751 = vmatpush.msra.mxu0 %v5736
    %5752 = vmatpush.msra.mxu0 %v5735
    %5753 = vmatpush.msra.mxu0 %v5734
    %5754 = vmatpush.msra.mxu0 %v5733
    %5755 = vmatpush.msra.mxu0 %v5732
    %5756 = vmatpush.msra.mxu0 %v5731
    %5757 = vmatpush.msra.mxu0 %v5730
    %5758 = vmatpush.msra.mxu0 %v5729
    %5759 = vmatpush.msra.mxu0 %v5728
    %5760 = vmatmul.f32.gmra.mxu0 %v5663
    %v5761 = vpop.f32.mrf.mxu0
    %v5762 = vadd.f32 0.0, %v5761
    %5763 = vmatmul.f32.gmra.mxu0 %v5664
    %v5764 = vpop.f32.mrf.mxu0
    %v5765 = vadd.f32 0.0, %v5764
    %5766 = vmatmul.f32.gmra.mxu0 %v5665
    %v5767 = vpop.f32.mrf.mxu0
    %v5768 = vadd.f32 0.0, %v5767
    %5769 = vmatmul.f32.gmra.mxu0 %v5666
    %v5770 = vpop.f32.mrf.mxu0
    %v5771 = vadd.f32 0.0, %v5770
    %5772 = vmatmul.f32.gmra.mxu0 %v5667
    %v5773 = vpop.f32.mrf.mxu0
    %v5774 = vadd.f32 0.0, %v5773
    %5775 = vmatmul.f32.gmra.mxu0 %v5668
    %v5776 = vpop.f32.mrf.mxu0
    %v5777 = vadd.f32 0.0, %v5776
    %5778 = vmatmul.f32.gmra.mxu0 %v5669
    %v5779 = vpop.f32.mrf.mxu0
    %v5780 = vadd.f32 0.0, %v5779
    %5781 = vmatmul.f32.gmra.mxu0 %v5670
    %v5782 = vpop.f32.mrf.mxu0
    %v5783 = vadd.f32 0.0, %v5782
    %5784 = vmatmul.f32.gmra.mxu0 %v5671
    %v5785 = vpop.f32.mrf.mxu0
    %v5786 = vadd.f32 0.0, %v5785
    %5787 = vmatmul.f32.gmra.mxu0 %v5672
    %v5788 = vpop.f32.mrf.mxu0
    %v5789 = vadd.f32 0.0, %v5788
    %5790 = vmatmul.f32.gmra.mxu0 %v5673
    %v5791 = vpop.f32.mrf.mxu0
    %v5792 = vadd.f32 0.0, %v5791
    %5793 = vmatmul.f32.gmra.mxu0 %v5674
    %v5794 = vpop.f32.mrf.mxu0
    %v5795 = vadd.f32 0.0, %v5794
    %5796 = vmatmul.f32.gmra.mxu0 %v5675
    %v5797 = vpop.f32.mrf.mxu0
    %v5798 = vadd.f32 0.0, %v5797
    %5799 = vmatmul.f32.gmra.mxu0 %v5676
    %v5800 = vpop.f32.mrf.mxu0
    %v5801 = vadd.f32 0.0, %v5800
    %5802 = vmatmul.f32.gmra.mxu0 %v5677
    %v5803 = vpop.f32.mrf.mxu0
    %v5804 = vadd.f32 0.0, %v5803
    %5805 = vmatmul.f32.gmra.mxu0 %v5678
    %v5806 = vpop.f32.mrf.mxu0
    %v5807 = vadd.f32 0.0, %v5806
    %5808 = vmatmul.f32.gmra.mxu0 %v5679
    %v5809 = vpop.f32.mrf.mxu0
    %v5810 = vadd.f32 0.0, %v5809
    %5811 = vmatmul.f32.gmra.mxu0 %v5680
    %v5812 = vpop.f32.mrf.mxu0
    %v5813 = vadd.f32 0.0, %v5812
    %5814 = vmatmul.f32.gmra.mxu0 %v5681
    %v5815 = vpop.f32.mrf.mxu0
    %v5816 = vadd.f32 0.0, %v5815
    %5817 = vmatmul.f32.gmra.mxu0 %v5682
    %v5818 = vpop.f32.mrf.mxu0
    %v5819 = vadd.f32 0.0, %v5818
    %5820 = vmatmul.f32.gmra.mxu0 %v5683
    %v5821 = vpop.f32.mrf.mxu0
    %v5822 = vadd.f32 0.0, %v5821
    %5823 = vmatmul.f32.gmra.mxu0 %v5684
    %v5824 = vpop.f32.mrf.mxu0
    %v5825 = vadd.f32 0.0, %v5824
    %5826 = vmatmul.f32.gmra.mxu0 %v5685
    %v5827 = vpop.f32.mrf.mxu0
    %v5828 = vadd.f32 0.0, %v5827
    %5829 = vmatmul.f32.gmra.mxu0 %v5686
    %v5830 = vpop.f32.mrf.mxu0
    %v5831 = vadd.f32 0.0, %v5830
    %5832 = vmatmul.f32.gmra.mxu0 %v5687
    %v5833 = vpop.f32.mrf.mxu0
    %v5834 = vadd.f32 0.0, %v5833
    %5835 = vmatmul.f32.gmra.mxu0 %v5688
    %v5836 = vpop.f32.mrf.mxu0
    %v5837 = vadd.f32 0.0, %v5836
    %5838 = vmatmul.f32.gmra.mxu0 %v5689
    %v5839 = vpop.f32.mrf.mxu0
    %v5840 = vadd.f32 0.0, %v5839
    %5841 = vmatmul.f32.gmra.mxu0 %v5690
    %v5842 = vpop.f32.mrf.mxu0
    %v5843 = vadd.f32 0.0, %v5842
    %5844 = vmatmul.f32.gmra.mxu0 %v5691
    %v5845 = vpop.f32.mrf.mxu0
    %v5846 = vadd.f32 0.0, %v5845
    %5847 = vmatmul.f32.gmra.mxu0 %v5692
    %v5848 = vpop.f32.mrf.mxu0
    %v5849 = vadd.f32 0.0, %v5848
    %5850 = vmatmul.f32.gmra.mxu0 %v5693
    %v5851 = vpop.f32.mrf.mxu0
    %v5852 = vadd.f32 0.0, %v5851
    %5853 = vmatmul.f32.gmra.mxu0 %v5694
    %v5854 = vpop.f32.mrf.mxu0
    %v5855 = vadd.f32 0.0, %v5854
    %5856 = vmatmul.f32.gmra.mxu0 %v5695
    %v5857 = vpop.f32.mrf.mxu0
    %v5858 = vadd.f32 0.0, %v5857
    %5859 = vmatmul.f32.gmra.mxu0 %v5696
    %v5860 = vpop.f32.mrf.mxu0
    %v5861 = vadd.f32 0.0, %v5860
    %5862 = vmatmul.f32.gmra.mxu0 %v5697
    %v5863 = vpop.f32.mrf.mxu0
    %v5864 = vadd.f32 0.0, %v5863
    %5865 = vmatmul.f32.gmra.mxu0 %v5698
    %v5866 = vpop.f32.mrf.mxu0
    %v5867 = vadd.f32 0.0, %v5866
    %5868 = vmatmul.f32.gmra.mxu0 %v5699
    %v5869 = vpop.f32.mrf.mxu0
    %v5870 = vadd.f32 0.0, %v5869
    %5871 = vmatmul.f32.gmra.mxu0 %v5700
    %v5872 = vpop.f32.mrf.mxu0
    %v5873 = vadd.f32 0.0, %v5872
    %5874 = vmatmul.f32.gmra.mxu0 %v5701
    %v5875 = vpop.f32.mrf.mxu0
    %v5876 = vadd.f32 0.0, %v5875
    %5877 = vmatmul.f32.gmra.mxu0 %v5702
    %v5878 = vpop.f32.mrf.mxu0
    %v5879 = vadd.f32 0.0, %v5878
    %5880 = vmatmul.f32.gmra.mxu0 %v5703
    %v5881 = vpop.f32.mrf.mxu0
    %v5882 = vadd.f32 0.0, %v5881
    %5883 = vmatmul.f32.gmra.mxu0 %v5704
    %v5884 = vpop.f32.mrf.mxu0
    %v5885 = vadd.f32 0.0, %v5884
    %5886 = vmatmul.f32.gmra.mxu0 %v5705
    %v5887 = vpop.f32.mrf.mxu0
    %v5888 = vadd.f32 0.0, %v5887
    %5889 = vmatmul.f32.gmra.mxu0 %v5706
    %v5890 = vpop.f32.mrf.mxu0
    %v5891 = vadd.f32 0.0, %v5890
    %5892 = vmatmul.f32.gmra.mxu0 %v5707
    %v5893 = vpop.f32.mrf.mxu0
    %v5894 = vadd.f32 0.0, %v5893
    %5895 = vmatmul.f32.gmra.mxu0 %v5708
    %v5896 = vpop.f32.mrf.mxu0
    %v5897 = vadd.f32 0.0, %v5896
    %5898 = vmatmul.f32.gmra.mxu0 %v5709
    %v5899 = vpop.f32.mrf.mxu0
    %v5900 = vadd.f32 0.0, %v5899
    %5901 = vmatmul.f32.gmra.mxu0 %v5710
    %v5902 = vpop.f32.mrf.mxu0
    %v5903 = vadd.f32 0.0, %v5902
    %5904 = vmatmul.f32.gmra.mxu0 %v5711
    %v5905 = vpop.f32.mrf.mxu0
    %v5906 = vadd.f32 0.0, %v5905
    %5907 = vmatmul.f32.gmra.mxu0 %v5712
    %v5908 = vpop.f32.mrf.mxu0
    %v5909 = vadd.f32 0.0, %v5908
    %5910 = vmatmul.f32.gmra.mxu0 %v5713
    %v5911 = vpop.f32.mrf.mxu0
    %v5912 = vadd.f32 0.0, %v5911
    %5913 = vmatmul.f32.gmra.mxu0 %v5714
    %v5914 = vpop.f32.mrf.mxu0
    %v5915 = vadd.f32 0.0, %v5914
    %5916 = vmatmul.f32.gmra.mxu0 %v5715
    %v5917 = vpop.f32.mrf.mxu0
    %v5918 = vadd.f32 0.0, %v5917
    %5919 = vmatmul.f32.gmra.mxu0 %v5716
    %v5920 = vpop.f32.mrf.mxu0
    %v5921 = vadd.f32 0.0, %v5920
    %5922 = vmatmul.f32.gmra.mxu0 %v5717
    %v5923 = vpop.f32.mrf.mxu0
    %v5924 = vadd.f32 0.0, %v5923
    %5925 = vmatmul.f32.gmra.mxu0 %v5718
    %v5926 = vpop.f32.mrf.mxu0
    %v5927 = vadd.f32 0.0, %v5926
    %5928 = vmatmul.f32.gmra.mxu0 %v5719
    %v5929 = vpop.f32.mrf.mxu0
    %v5930 = vadd.f32 0.0, %v5929
    %5931 = vmatmul.f32.gmra.mxu0 %v5720
    %v5932 = vpop.f32.mrf.mxu0
    %v5933 = vadd.f32 0.0, %v5932
    %5934 = vmatmul.f32.gmra.mxu0 %v5721
    %v5935 = vpop.f32.mrf.mxu0
    %v5936 = vadd.f32 0.0, %v5935
    %5937 = vmatmul.f32.gmra.mxu0 %v5722
    %v5938 = vpop.f32.mrf.mxu0
    %v5939 = vadd.f32 0.0, %v5938
    %5940 = vmatmul.f32.gmra.mxu0 %v5723
    %v5941 = vpop.f32.mrf.mxu0
    %v5942 = vadd.f32 0.0, %v5941
    %5943 = vmatmul.f32.gmra.mxu0 %v5724
    %v5944 = vpop.f32.mrf.mxu0
    %v5945 = vadd.f32 0.0, %v5944
    %5946 = vmatmul.f32.gmra.mxu0 %v5725
    %v5947 = vpop.f32.mrf.mxu0
    %v5948 = vadd.f32 0.0, %v5947
    %5949 = vmatmul.f32.gmra.mxu0 %v5726
    %v5950 = vpop.f32.mrf.mxu0
    %v5951 = vadd.f32 0.0, %v5950
    %5952 = vdwg.mxu0
    %v5953 = vadd.f32 %v5599, %v5762
    %v5954 = vadd.f32 %v5600, %v5765
    %v5955 = vadd.f32 %v5601, %v5768
    %v5956 = vadd.f32 %v5602, %v5771
    %v5957 = vadd.f32 %v5603, %v5774
    %v5958 = vadd.f32 %v5604, %v5777
    %v5959 = vadd.f32 %v5605, %v5780
    %v5960 = vadd.f32 %v5606, %v5783
    %v5961 = vadd.f32 %v5607, %v5786
    %v5962 = vadd.f32 %v5608, %v5789
    %v5963 = vadd.f32 %v5609, %v5792
    %v5964 = vadd.f32 %v5610, %v5795
    %v5965 = vadd.f32 %v5611, %v5798
    %v5966 = vadd.f32 %v5612, %v5801
    %v5967 = vadd.f32 %v5613, %v5804
    %v5968 = vadd.f32 %v5614, %v5807
    %v5969 = vadd.f32 %v5615, %v5810
    %v5970 = vadd.f32 %v5616, %v5813
    %v5971 = vadd.f32 %v5617, %v5816
    %v5972 = vadd.f32 %v5618, %v5819
    %v5973 = vadd.f32 %v5619, %v5822
    %v5974 = vadd.f32 %v5620, %v5825
    %v5975 = vadd.f32 %v5621, %v5828
    %v5976 = vadd.f32 %v5622, %v5831
    %v5977 = vadd.f32 %v5623, %v5834
    %v5978 = vadd.f32 %v5624, %v5837
    %v5979 = vadd.f32 %v5625, %v5840
    %v5980 = vadd.f32 %v5626, %v5843
    %v5981 = vadd.f32 %v5627, %v5846
    %v5982 = vadd.f32 %v5628, %v5849
    %v5983 = vadd.f32 %v5629, %v5852
    %v5984 = vadd.f32 %v5630, %v5855
    %v5985 = vadd.f32 %v5631, %v5858
    %v5986 = vadd.f32 %v5632, %v5861
    %v5987 = vadd.f32 %v5633, %v5864
    %v5988 = vadd.f32 %v5634, %v5867
    %v5989 = vadd.f32 %v5635, %v5870
    %v5990 = vadd.f32 %v5636, %v5873
    %v5991 = vadd.f32 %v5637, %v5876
    %v5992 = vadd.f32 %v5638, %v5879
    %v5993 = vadd.f32 %v5639, %v5882
    %v5994 = vadd.f32 %v5640, %v5885
    %v5995 = vadd.f32 %v5641, %v5888
    %v5996 = vadd.f32 %v5642, %v5891
    %v5997 = vadd.f32 %v5643, %v5894
    %v5998 = vadd.f32 %v5644, %v5897
    %v5999 = vadd.f32 %v5645, %v5900
    %v6000 = vadd.f32 %v5646, %v5903
    %v6001 = vadd.f32 %v5647, %v5906
    %v6002 = vadd.f32 %v5648, %v5909
    %v6003 = vadd.f32 %v5649, %v5912
    %v6004 = vadd.f32 %v5650, %v5915
    %v6005 = vadd.f32 %v5651, %v5918
    %v6006 = vadd.f32 %v5652, %v5921
    %v6007 = vadd.f32 %v5653, %v5924
    %v6008 = vadd.f32 %v5654, %v5927
    %v6009 = vadd.f32 %v5655, %v5930
    %v6010 = vadd.f32 %v5656, %v5933
    %v6011 = vadd.f32 %v5657, %v5936
    %v6012 = vadd.f32 %v5658, %v5939
    %v6013 = vadd.f32 %v5659, %v5942
    %v6014 = vadd.f32 %v5660, %v5945
    %v6015 = vadd.f32 %v5661, %v5948
    %v6016 = vadd.f32 %v5662, %v5951
    %s6017 = scalar_lea.vmem [#allocation3], 48
    %v6018 = vld [vmem:[%s6017] sm:$0xff]
    %v6019 = vld [vmem:[%s6017 + $0x8] sm:$0xff]
    %v6020 = vld [vmem:[%s6017 + $0x18] sm:$0xff]
    %v6021 = vld [vmem:[%s6017 + $0x20] sm:$0xff]
    %v6022 = vld [vmem:[%s6017 + $0x30] sm:$0xff]
    %v6023 = vld [vmem:[%s6017 + $0x38] sm:$0xff]
    %v6024 = vld [vmem:[%s6017 + $0x48] sm:$0xff]
    %v6025 = vld [vmem:[%s6017 + $0x50] sm:$0xff]
    %v6026 = vld [vmem:[%s6017 + $0x60] sm:$0xff]
    %v6027 = vld [vmem:[%s6017 + $0x68] sm:$0xff]
    %v6028 = vld [vmem:[%s6017 + $0x78] sm:$0xff]
    %v6029 = vld [vmem:[%s6017 + $0x80] sm:$0xff]
    %v6030 = vld [vmem:[%s6017 + $0x90] sm:$0xff]
    %v6031 = vld [vmem:[%s6017 + $0x98] sm:$0xff]
    %v6032 = vld [vmem:[%s6017 + $0xa8] sm:$0xff]
    %v6033 = vld [vmem:[%s6017 + $0xb0] sm:$0xff]
    %v6034 = vld [vmem:[%s6017 + $0xc0] sm:$0xff]
    %v6035 = vld [vmem:[%s6017 + $0xc8] sm:$0xff]
    %v6036 = vld [vmem:[%s6017 + $0xd8] sm:$0xff]
    %v6037 = vld [vmem:[%s6017 + $0xe0] sm:$0xff]
    %v6038 = vld [vmem:[%s6017 + $0xf0] sm:$0xff]
    %v6039 = vld [vmem:[%s6017 + $0xf8] sm:$0xff]
    %v6040 = vld [vmem:[%s6017 + $0x108] sm:$0xff]
    %v6041 = vld [vmem:[%s6017 + $0x110] sm:$0xff]
    %v6042 = vld [vmem:[%s6017 + $0x120] sm:$0xff]
    %v6043 = vld [vmem:[%s6017 + $0x128] sm:$0xff]
    %v6044 = vld [vmem:[%s6017 + $0x138] sm:$0xff]
    %v6045 = vld [vmem:[%s6017 + $0x140] sm:$0xff]
    %v6046 = vld [vmem:[%s6017 + $0x150] sm:$0xff]
    %v6047 = vld [vmem:[%s6017 + $0x158] sm:$0xff]
    %v6048 = vld [vmem:[%s6017 + $0x168] sm:$0xff]
    %v6049 = vld [vmem:[%s6017 + $0x170] sm:$0xff]
    %v6050 = vld [vmem:[%s6017 + $0x1b0] sm:$0xff]
    %v6051 = vld [vmem:[%s6017 + $0x1b8] sm:$0xff]
    %v6052 = vld [vmem:[%s6017 + $0x1c8] sm:$0xff]
    %v6053 = vld [vmem:[%s6017 + $0x1d0] sm:$0xff]
    %v6054 = vld [vmem:[%s6017 + $0x1e0] sm:$0xff]
    %v6055 = vld [vmem:[%s6017 + $0x1e8] sm:$0xff]
    %v6056 = vld [vmem:[%s6017 + $0x1f8] sm:$0xff]
    %v6057 = vld [vmem:[%s6017 + $0x200] sm:$0xff]
    %v6058 = vld [vmem:[%s6017 + $0x210] sm:$0xff]
    %v6059 = vld [vmem:[%s6017 + $0x218] sm:$0xff]
    %v6060 = vld [vmem:[%s6017 + $0x228] sm:$0xff]
    %v6061 = vld [vmem:[%s6017 + $0x230] sm:$0xff]
    %v6062 = vld [vmem:[%s6017 + $0x240] sm:$0xff]
    %v6063 = vld [vmem:[%s6017 + $0x248] sm:$0xff]
    %v6064 = vld [vmem:[%s6017 + $0x258] sm:$0xff]
    %v6065 = vld [vmem:[%s6017 + $0x260] sm:$0xff]
    %v6066 = vld [vmem:[%s6017 + $0x270] sm:$0xff]
    %v6067 = vld [vmem:[%s6017 + $0x278] sm:$0xff]
    %v6068 = vld [vmem:[%s6017 + $0x288] sm:$0xff]
    %v6069 = vld [vmem:[%s6017 + $0x290] sm:$0xff]
    %v6070 = vld [vmem:[%s6017 + $0x2a0] sm:$0xff]
    %v6071 = vld [vmem:[%s6017 + $0x2a8] sm:$0xff]
    %v6072 = vld [vmem:[%s6017 + $0x2b8] sm:$0xff]
    %v6073 = vld [vmem:[%s6017 + $0x2c0] sm:$0xff]
    %v6074 = vld [vmem:[%s6017 + $0x2d0] sm:$0xff]
    %v6075 = vld [vmem:[%s6017 + $0x2d8] sm:$0xff]
    %v6076 = vld [vmem:[%s6017 + $0x2e8] sm:$0xff]
    %v6077 = vld [vmem:[%s6017 + $0x2f0] sm:$0xff]
    %v6078 = vld [vmem:[%s6017 + $0x300] sm:$0xff]
    %v6079 = vld [vmem:[%s6017 + $0x308] sm:$0xff]
    %v6080 = vld [vmem:[%s6017 + $0x318] sm:$0xff]
    %v6081 = vld [vmem:[%s6017 + $0x320] sm:$0xff]
    %s6082 = scalar_lea.vmem [#allocation9], 768
    %v6083 = vld [vmem:[%s6082] sm:$0xff]
    %v6084 = vld [vmem:[%s6082 + $0x8] sm:$0xff]
    %v6085 = vld [vmem:[%s6082 + $0x10] sm:$0xff]
    %v6086 = vld [vmem:[%s6082 + $0x18] sm:$0xff]
    %v6087 = vld [vmem:[%s6082 + $0x20] sm:$0xff]
    %v6088 = vld [vmem:[%s6082 + $0x28] sm:$0xff]
    %v6089 = vld [vmem:[%s6082 + $0x30] sm:$0xff]
    %v6090 = vld [vmem:[%s6082 + $0x38] sm:$0xff]
    %v6091 = vld [vmem:[%s6082 + $0x40] sm:$0xff]
    %v6092 = vld [vmem:[%s6082 + $0x48] sm:$0xff]
    %v6093 = vld [vmem:[%s6082 + $0x50] sm:$0xff]
    %v6094 = vld [vmem:[%s6082 + $0x58] sm:$0xff]
    %v6095 = vld [vmem:[%s6082 + $0x60] sm:$0xff]
    %v6096 = vld [vmem:[%s6082 + $0x68] sm:$0xff]
    %v6097 = vld [vmem:[%s6082 + $0x70] sm:$0xff]
    %v6098 = vld [vmem:[%s6082 + $0x78] sm:$0xff]
    %6099 = vmatpush.msra.mxu0 %v6098
    %6100 = vmatpush.msra.mxu0 %v6097
    %6101 = vmatpush.msra.mxu0 %v6096
    %6102 = vmatpush.msra.mxu0 %v6095
    %6103 = vmatpush.msra.mxu0 %v6094
    %6104 = vmatpush.msra.mxu0 %v6093
    %6105 = vmatpush.msra.mxu0 %v6092
    %6106 = vmatpush.msra.mxu0 %v6091
    %6107 = vmatpush.msra.mxu0 %v6090
    %6108 = vmatpush.msra.mxu0 %v6089
    %6109 = vmatpush.msra.mxu0 %v6088
    %6110 = vmatpush.msra.mxu0 %v6087
    %6111 = vmatpush.msra.mxu0 %v6086
    %6112 = vmatpush.msra.mxu0 %v6085
    %6113 = vmatpush.msra.mxu0 %v6084
    %6114 = vmatpush.msra.mxu0 %v6083
    %6115 = vmatmul.f32.gmra.mxu0 %v6018
    %v6116 = vpop.f32.mrf.mxu0
    %v6117 = vadd.f32 0.0, %v6116
    %6118 = vmatmul.f32.gmra.mxu0 %v6019
    %v6119 = vpop.f32.mrf.mxu0
    %v6120 = vadd.f32 0.0, %v6119
    %6121 = vmatmul.f32.gmra.mxu0 %v6020
    %v6122 = vpop.f32.mrf.mxu0
    %v6123 = vadd.f32 0.0, %v6122
    %6124 = vmatmul.f32.gmra.mxu0 %v6021
    %v6125 = vpop.f32.mrf.mxu0
    %v6126 = vadd.f32 0.0, %v6125
    %6127 = vmatmul.f32.gmra.mxu0 %v6022
    %v6128 = vpop.f32.mrf.mxu0
    %v6129 = vadd.f32 0.0, %v6128
    %6130 = vmatmul.f32.gmra.mxu0 %v6023
    %v6131 = vpop.f32.mrf.mxu0
    %v6132 = vadd.f32 0.0, %v6131
    %6133 = vmatmul.f32.gmra.mxu0 %v6024
    %v6134 = vpop.f32.mrf.mxu0
    %v6135 = vadd.f32 0.0, %v6134
    %6136 = vmatmul.f32.gmra.mxu0 %v6025
    %v6137 = vpop.f32.mrf.mxu0
    %v6138 = vadd.f32 0.0, %v6137
    %6139 = vmatmul.f32.gmra.mxu0 %v6026
    %v6140 = vpop.f32.mrf.mxu0
    %v6141 = vadd.f32 0.0, %v6140
    %6142 = vmatmul.f32.gmra.mxu0 %v6027
    %v6143 = vpop.f32.mrf.mxu0
    %v6144 = vadd.f32 0.0, %v6143
    %6145 = vmatmul.f32.gmra.mxu0 %v6028
    %v6146 = vpop.f32.mrf.mxu0
    %v6147 = vadd.f32 0.0, %v6146
    %6148 = vmatmul.f32.gmra.mxu0 %v6029
    %v6149 = vpop.f32.mrf.mxu0
    %v6150 = vadd.f32 0.0, %v6149
    %6151 = vmatmul.f32.gmra.mxu0 %v6030
    %v6152 = vpop.f32.mrf.mxu0
    %v6153 = vadd.f32 0.0, %v6152
    %6154 = vmatmul.f32.gmra.mxu0 %v6031
    %v6155 = vpop.f32.mrf.mxu0
    %v6156 = vadd.f32 0.0, %v6155
    %6157 = vmatmul.f32.gmra.mxu0 %v6032
    %v6158 = vpop.f32.mrf.mxu0
    %v6159 = vadd.f32 0.0, %v6158
    %6160 = vmatmul.f32.gmra.mxu0 %v6033
    %v6161 = vpop.f32.mrf.mxu0
    %v6162 = vadd.f32 0.0, %v6161
    %6163 = vmatmul.f32.gmra.mxu0 %v6034
    %v6164 = vpop.f32.mrf.mxu0
    %v6165 = vadd.f32 0.0, %v6164
    %6166 = vmatmul.f32.gmra.mxu0 %v6035
    %v6167 = vpop.f32.mrf.mxu0
    %v6168 = vadd.f32 0.0, %v6167
    %6169 = vmatmul.f32.gmra.mxu0 %v6036
    %v6170 = vpop.f32.mrf.mxu0
    %v6171 = vadd.f32 0.0, %v6170
    %6172 = vmatmul.f32.gmra.mxu0 %v6037
    %v6173 = vpop.f32.mrf.mxu0
    %v6174 = vadd.f32 0.0, %v6173
    %6175 = vmatmul.f32.gmra.mxu0 %v6038
    %v6176 = vpop.f32.mrf.mxu0
    %v6177 = vadd.f32 0.0, %v6176
    %6178 = vmatmul.f32.gmra.mxu0 %v6039
    %v6179 = vpop.f32.mrf.mxu0
    %v6180 = vadd.f32 0.0, %v6179
    %6181 = vmatmul.f32.gmra.mxu0 %v6040
    %v6182 = vpop.f32.mrf.mxu0
    %v6183 = vadd.f32 0.0, %v6182
    %6184 = vmatmul.f32.gmra.mxu0 %v6041
    %v6185 = vpop.f32.mrf.mxu0
    %v6186 = vadd.f32 0.0, %v6185
    %6187 = vmatmul.f32.gmra.mxu0 %v6042
    %v6188 = vpop.f32.mrf.mxu0
    %v6189 = vadd.f32 0.0, %v6188
    %6190 = vmatmul.f32.gmra.mxu0 %v6043
    %v6191 = vpop.f32.mrf.mxu0
    %v6192 = vadd.f32 0.0, %v6191
    %6193 = vmatmul.f32.gmra.mxu0 %v6044
    %v6194 = vpop.f32.mrf.mxu0
    %v6195 = vadd.f32 0.0, %v6194
    %6196 = vmatmul.f32.gmra.mxu0 %v6045
    %v6197 = vpop.f32.mrf.mxu0
    %v6198 = vadd.f32 0.0, %v6197
    %6199 = vmatmul.f32.gmra.mxu0 %v6046
    %v6200 = vpop.f32.mrf.mxu0
    %v6201 = vadd.f32 0.0, %v6200
    %6202 = vmatmul.f32.gmra.mxu0 %v6047
    %v6203 = vpop.f32.mrf.mxu0
    %v6204 = vadd.f32 0.0, %v6203
    %6205 = vmatmul.f32.gmra.mxu0 %v6048
    %v6206 = vpop.f32.mrf.mxu0
    %v6207 = vadd.f32 0.0, %v6206
    %6208 = vmatmul.f32.gmra.mxu0 %v6049
    %v6209 = vpop.f32.mrf.mxu0
    %v6210 = vadd.f32 0.0, %v6209
    %6211 = vmatmul.f32.gmra.mxu0 %v6050
    %v6212 = vpop.f32.mrf.mxu0
    %v6213 = vadd.f32 0.0, %v6212
    %6214 = vmatmul.f32.gmra.mxu0 %v6051
    %v6215 = vpop.f32.mrf.mxu0
    %v6216 = vadd.f32 0.0, %v6215
    %6217 = vmatmul.f32.gmra.mxu0 %v6052
    %v6218 = vpop.f32.mrf.mxu0
    %v6219 = vadd.f32 0.0, %v6218
    %6220 = vmatmul.f32.gmra.mxu0 %v6053
    %v6221 = vpop.f32.mrf.mxu0
    %v6222 = vadd.f32 0.0, %v6221
    %6223 = vmatmul.f32.gmra.mxu0 %v6054
    %v6224 = vpop.f32.mrf.mxu0
    %v6225 = vadd.f32 0.0, %v6224
    %6226 = vmatmul.f32.gmra.mxu0 %v6055
    %v6227 = vpop.f32.mrf.mxu0
    %v6228 = vadd.f32 0.0, %v6227
    %6229 = vmatmul.f32.gmra.mxu0 %v6056
    %v6230 = vpop.f32.mrf.mxu0
    %v6231 = vadd.f32 0.0, %v6230
    %6232 = vmatmul.f32.gmra.mxu0 %v6057
    %v6233 = vpop.f32.mrf.mxu0
    %v6234 = vadd.f32 0.0, %v6233
    %6235 = vmatmul.f32.gmra.mxu0 %v6058
    %v6236 = vpop.f32.mrf.mxu0
    %v6237 = vadd.f32 0.0, %v6236
    %6238 = vmatmul.f32.gmra.mxu0 %v6059
    %v6239 = vpop.f32.mrf.mxu0
    %v6240 = vadd.f32 0.0, %v6239
    %6241 = vmatmul.f32.gmra.mxu0 %v6060
    %v6242 = vpop.f32.mrf.mxu0
    %v6243 = vadd.f32 0.0, %v6242
    %6244 = vmatmul.f32.gmra.mxu0 %v6061
    %v6245 = vpop.f32.mrf.mxu0
    %v6246 = vadd.f32 0.0, %v6245
    %6247 = vmatmul.f32.gmra.mxu0 %v6062
    %v6248 = vpop.f32.mrf.mxu0
    %v6249 = vadd.f32 0.0, %v6248
    %6250 = vmatmul.f32.gmra.mxu0 %v6063
    %v6251 = vpop.f32.mrf.mxu0
    %v6252 = vadd.f32 0.0, %v6251
    %6253 = vmatmul.f32.gmra.mxu0 %v6064
    %v6254 = vpop.f32.mrf.mxu0
    %v6255 = vadd.f32 0.0, %v6254
    %6256 = vmatmul.f32.gmra.mxu0 %v6065
    %v6257 = vpop.f32.mrf.mxu0
    %v6258 = vadd.f32 0.0, %v6257
    %6259 = vmatmul.f32.gmra.mxu0 %v6066
    %v6260 = vpop.f32.mrf.mxu0
    %v6261 = vadd.f32 0.0, %v6260
    %6262 = vmatmul.f32.gmra.mxu0 %v6067
    %v6263 = vpop.f32.mrf.mxu0
    %v6264 = vadd.f32 0.0, %v6263
    %6265 = vmatmul.f32.gmra.mxu0 %v6068
    %v6266 = vpop.f32.mrf.mxu0
    %v6267 = vadd.f32 0.0, %v6266
    %6268 = vmatmul.f32.gmra.mxu0 %v6069
    %v6269 = vpop.f32.mrf.mxu0
    %v6270 = vadd.f32 0.0, %v6269
    %6271 = vmatmul.f32.gmra.mxu0 %v6070
    %v6272 = vpop.f32.mrf.mxu0
    %v6273 = vadd.f32 0.0, %v6272
    %6274 = vmatmul.f32.gmra.mxu0 %v6071
    %v6275 = vpop.f32.mrf.mxu0
    %v6276 = vadd.f32 0.0, %v6275
    %6277 = vmatmul.f32.gmra.mxu0 %v6072
    %v6278 = vpop.f32.mrf.mxu0
    %v6279 = vadd.f32 0.0, %v6278
    %6280 = vmatmul.f32.gmra.mxu0 %v6073
    %v6281 = vpop.f32.mrf.mxu0
    %v6282 = vadd.f32 0.0, %v6281
    %6283 = vmatmul.f32.gmra.mxu0 %v6074
    %v6284 = vpop.f32.mrf.mxu0
    %v6285 = vadd.f32 0.0, %v6284
    %6286 = vmatmul.f32.gmra.mxu0 %v6075
    %v6287 = vpop.f32.mrf.mxu0
    %v6288 = vadd.f32 0.0, %v6287
    %6289 = vmatmul.f32.gmra.mxu0 %v6076
    %v6290 = vpop.f32.mrf.mxu0
    %v6291 = vadd.f32 0.0, %v6290
    %6292 = vmatmul.f32.gmra.mxu0 %v6077
    %v6293 = vpop.f32.mrf.mxu0
    %v6294 = vadd.f32 0.0, %v6293
    %6295 = vmatmul.f32.gmra.mxu0 %v6078
    %v6296 = vpop.f32.mrf.mxu0
    %v6297 = vadd.f32 0.0, %v6296
    %6298 = vmatmul.f32.gmra.mxu0 %v6079
    %v6299 = vpop.f32.mrf.mxu0
    %v6300 = vadd.f32 0.0, %v6299
    %6301 = vmatmul.f32.gmra.mxu0 %v6080
    %v6302 = vpop.f32.mrf.mxu0
    %v6303 = vadd.f32 0.0, %v6302
    %6304 = vmatmul.f32.gmra.mxu0 %v6081
    %v6305 = vpop.f32.mrf.mxu0
    %v6306 = vadd.f32 0.0, %v6305
    %6307 = vdwg.mxu0
    %v6308 = vadd.f32 %v5953, %v6117
    %v6309 = vadd.f32 %v5954, %v6120
    %v6310 = vadd.f32 %v5955, %v6123
    %v6311 = vadd.f32 %v5956, %v6126
    %v6312 = vadd.f32 %v5957, %v6129
    %v6313 = vadd.f32 %v5958, %v6132
    %v6314 = vadd.f32 %v5959, %v6135
    %v6315 = vadd.f32 %v5960, %v6138
    %v6316 = vadd.f32 %v5961, %v6141
    %v6317 = vadd.f32 %v5962, %v6144
    %v6318 = vadd.f32 %v5963, %v6147
    %v6319 = vadd.f32 %v5964, %v6150
    %v6320 = vadd.f32 %v5965, %v6153
    %v6321 = vadd.f32 %v5966, %v6156
    %v6322 = vadd.f32 %v5967, %v6159
    %v6323 = vadd.f32 %v5968, %v6162
    %v6324 = vadd.f32 %v5969, %v6165
    %v6325 = vadd.f32 %v5970, %v6168
    %v6326 = vadd.f32 %v5971, %v6171
    %v6327 = vadd.f32 %v5972, %v6174
    %v6328 = vadd.f32 %v5973, %v6177
    %v6329 = vadd.f32 %v5974, %v6180
    %v6330 = vadd.f32 %v5975, %v6183
    %v6331 = vadd.f32 %v5976, %v6186
    %v6332 = vadd.f32 %v5977, %v6189
    %v6333 = vadd.f32 %v5978, %v6192
    %v6334 = vadd.f32 %v5979, %v6195
    %v6335 = vadd.f32 %v5980, %v6198
    %v6336 = vadd.f32 %v5981, %v6201
    %v6337 = vadd.f32 %v5982, %v6204
    %v6338 = vadd.f32 %v5983, %v6207
    %v6339 = vadd.f32 %v5984, %v6210
    %v6340 = vadd.f32 %v5985, %v6213
    %v6341 = vadd.f32 %v5986, %v6216
    %v6342 = vadd.f32 %v5987, %v6219
    %v6343 = vadd.f32 %v5988, %v6222
    %v6344 = vadd.f32 %v5989, %v6225
    %v6345 = vadd.f32 %v5990, %v6228
    %v6346 = vadd.f32 %v5991, %v6231
    %v6347 = vadd.f32 %v5992, %v6234
    %v6348 = vadd.f32 %v5993, %v6237
    %v6349 = vadd.f32 %v5994, %v6240
    %v6350 = vadd.f32 %v5995, %v6243
    %v6351 = vadd.f32 %v5996, %v6246
    %v6352 = vadd.f32 %v5997, %v6249
    %v6353 = vadd.f32 %v5998, %v6252
    %v6354 = vadd.f32 %v5999, %v6255
    %v6355 = vadd.f32 %v6000, %v6258
    %v6356 = vadd.f32 %v6001, %v6261
    %v6357 = vadd.f32 %v6002, %v6264
    %v6358 = vadd.f32 %v6003, %v6267
    %v6359 = vadd.f32 %v6004, %v6270
    %v6360 = vadd.f32 %v6005, %v6273
    %v6361 = vadd.f32 %v6006, %v6276
    %v6362 = vadd.f32 %v6007, %v6279
    %v6363 = vadd.f32 %v6008, %v6282
    %v6364 = vadd.f32 %v6009, %v6285
    %v6365 = vadd.f32 %v6010, %v6288
    %v6366 = vadd.f32 %v6011, %v6291
    %v6367 = vadd.f32 %v6012, %v6294
    %v6368 = vadd.f32 %v6013, %v6297
    %v6369 = vadd.f32 %v6014, %v6300
    %v6370 = vadd.f32 %v6015, %v6303
    %v6371 = vadd.f32 %v6016, %v6306
    %v6372 = vld [vmem:[%s6017 + $0x1] sm:$0xff]
    %v6373 = vld [vmem:[%s6017 + $0x9] sm:$0xff]
    %v6374 = vld [vmem:[%s6017 + $0x19] sm:$0xff]
    %v6375 = vld [vmem:[%s6017 + $0x21] sm:$0xff]
    %v6376 = vld [vmem:[%s6017 + $0x31] sm:$0xff]
    %v6377 = vld [vmem:[%s6017 + $0x39] sm:$0xff]
    %v6378 = vld [vmem:[%s6017 + $0x49] sm:$0xff]
    %v6379 = vld [vmem:[%s6017 + $0x51] sm:$0xff]
    %v6380 = vld [vmem:[%s6017 + $0x61] sm:$0xff]
    %v6381 = vld [vmem:[%s6017 + $0x69] sm:$0xff]
    %v6382 = vld [vmem:[%s6017 + $0x79] sm:$0xff]
    %v6383 = vld [vmem:[%s6017 + $0x81] sm:$0xff]
    %v6384 = vld [vmem:[%s6017 + $0x91] sm:$0xff]
    %v6385 = vld [vmem:[%s6017 + $0x99] sm:$0xff]
    %v6386 = vld [vmem:[%s6017 + $0xa9] sm:$0xff]
    %v6387 = vld [vmem:[%s6017 + $0xb1] sm:$0xff]
    %v6388 = vld [vmem:[%s6017 + $0xc1] sm:$0xff]
    %v6389 = vld [vmem:[%s6017 + $0xc9] sm:$0xff]
    %v6390 = vld [vmem:[%s6017 + $0xd9] sm:$0xff]
    %v6391 = vld [vmem:[%s6017 + $0xe1] sm:$0xff]
    %v6392 = vld [vmem:[%s6017 + $0xf1] sm:$0xff]
    %v6393 = vld [vmem:[%s6017 + $0xf9] sm:$0xff]
    %v6394 = vld [vmem:[%s6017 + $0x109] sm:$0xff]
    %v6395 = vld [vmem:[%s6017 + $0x111] sm:$0xff]
    %v6396 = vld [vmem:[%s6017 + $0x121] sm:$0xff]
    %v6397 = vld [vmem:[%s6017 + $0x129] sm:$0xff]
    %v6398 = vld [vmem:[%s6017 + $0x139] sm:$0xff]
    %v6399 = vld [vmem:[%s6017 + $0x141] sm:$0xff]
    %v6400 = vld [vmem:[%s6017 + $0x151] sm:$0xff]
    %v6401 = vld [vmem:[%s6017 + $0x159] sm:$0xff]
    %v6402 = vld [vmem:[%s6017 + $0x169] sm:$0xff]
    %v6403 = vld [vmem:[%s6017 + $0x171] sm:$0xff]
    %v6404 = vld [vmem:[%s6017 + $0x1b1] sm:$0xff]
    %v6405 = vld [vmem:[%s6017 + $0x1b9] sm:$0xff]
    %v6406 = vld [vmem:[%s6017 + $0x1c9] sm:$0xff]
    %v6407 = vld [vmem:[%s6017 + $0x1d1] sm:$0xff]
    %v6408 = vld [vmem:[%s6017 + $0x1e1] sm:$0xff]
    %v6409 = vld [vmem:[%s6017 + $0x1e9] sm:$0xff]
    %v6410 = vld [vmem:[%s6017 + $0x1f9] sm:$0xff]
    %v6411 = vld [vmem:[%s6017 + $0x201] sm:$0xff]
    %v6412 = vld [vmem:[%s6017 + $0x211] sm:$0xff]
    %v6413 = vld [vmem:[%s6017 + $0x219] sm:$0xff]
    %v6414 = vld [vmem:[%s6017 + $0x229] sm:$0xff]
    %v6415 = vld [vmem:[%s6017 + $0x231] sm:$0xff]
    %v6416 = vld [vmem:[%s6017 + $0x241] sm:$0xff]
    %v6417 = vld [vmem:[%s6017 + $0x249] sm:$0xff]
    %v6418 = vld [vmem:[%s6017 + $0x259] sm:$0xff]
    %v6419 = vld [vmem:[%s6017 + $0x261] sm:$0xff]
    %v6420 = vld [vmem:[%s6017 + $0x271] sm:$0xff]
    %v6421 = vld [vmem:[%s6017 + $0x279] sm:$0xff]
    %v6422 = vld [vmem:[%s6017 + $0x289] sm:$0xff]
    %v6423 = vld [vmem:[%s6017 + $0x291] sm:$0xff]
    %v6424 = vld [vmem:[%s6017 + $0x2a1] sm:$0xff]
    %v6425 = vld [vmem:[%s6017 + $0x2a9] sm:$0xff]
    %v6426 = vld [vmem:[%s6017 + $0x2b9] sm:$0xff]
    %v6427 = vld [vmem:[%s6017 + $0x2c1] sm:$0xff]
    %v6428 = vld [vmem:[%s6017 + $0x2d1] sm:$0xff]
    %v6429 = vld [vmem:[%s6017 + $0x2d9] sm:$0xff]
    %v6430 = vld [vmem:[%s6017 + $0x2e9] sm:$0xff]
    %v6431 = vld [vmem:[%s6017 + $0x2f1] sm:$0xff]
    %v6432 = vld [vmem:[%s6017 + $0x301] sm:$0xff]
    %v6433 = vld [vmem:[%s6017 + $0x309] sm:$0xff]
    %v6434 = vld [vmem:[%s6017 + $0x319] sm:$0xff]
    %v6435 = vld [vmem:[%s6017 + $0x321] sm:$0xff]
    %s6436 = scalar_lea.vmem [#allocation9], 896
    %v6437 = vld [vmem:[%s6436] sm:$0xff]
    %v6438 = vld [vmem:[%s6436 + $0x8] sm:$0xff]
    %v6439 = vld [vmem:[%s6436 + $0x10] sm:$0xff]
    %v6440 = vld [vmem:[%s6436 + $0x18] sm:$0xff]
    %v6441 = vld [vmem:[%s6436 + $0x20] sm:$0xff]
    %v6442 = vld [vmem:[%s6436 + $0x28] sm:$0xff]
    %v6443 = vld [vmem:[%s6436 + $0x30] sm:$0xff]
    %v6444 = vld [vmem:[%s6436 + $0x38] sm:$0xff]
    %v6445 = vld [vmem:[%s6436 + $0x40] sm:$0xff]
    %v6446 = vld [vmem:[%s6436 + $0x48] sm:$0xff]
    %v6447 = vld [vmem:[%s6436 + $0x50] sm:$0xff]
    %v6448 = vld [vmem:[%s6436 + $0x58] sm:$0xff]
    %v6449 = vld [vmem:[%s6436 + $0x60] sm:$0xff]
    %v6450 = vld [vmem:[%s6436 + $0x68] sm:$0xff]
    %v6451 = vld [vmem:[%s6436 + $0x70] sm:$0xff]
    %v6452 = vld [vmem:[%s6436 + $0x78] sm:$0xff]
    %6453 = vmatpush.msra.mxu0 %v6452
    %6454 = vmatpush.msra.mxu0 %v6451
    %6455 = vmatpush.msra.mxu0 %v6450
    %6456 = vmatpush.msra.mxu0 %v6449
    %6457 = vmatpush.msra.mxu0 %v6448
    %6458 = vmatpush.msra.mxu0 %v6447
    %6459 = vmatpush.msra.mxu0 %v6446
    %6460 = vmatpush.msra.mxu0 %v6445
    %6461 = vmatpush.msra.mxu0 %v6444
    %6462 = vmatpush.msra.mxu0 %v6443
    %6463 = vmatpush.msra.mxu0 %v6442
    %6464 = vmatpush.msra.mxu0 %v6441
    %6465 = vmatpush.msra.mxu0 %v6440
    %6466 = vmatpush.msra.mxu0 %v6439
    %6467 = vmatpush.msra.mxu0 %v6438
    %6468 = vmatpush.msra.mxu0 %v6437
    %6469 = vmatmul.f32.gmra.mxu0 %v6372
    %v6470 = vpop.f32.mrf.mxu0
    %v6471 = vadd.f32 0.0, %v6470
    %6472 = vmatmul.f32.gmra.mxu0 %v6373
    %v6473 = vpop.f32.mrf.mxu0
    %v6474 = vadd.f32 0.0, %v6473
    %6475 = vmatmul.f32.gmra.mxu0 %v6374
    %v6476 = vpop.f32.mrf.mxu0
    %v6477 = vadd.f32 0.0, %v6476
    %6478 = vmatmul.f32.gmra.mxu0 %v6375
    %v6479 = vpop.f32.mrf.mxu0
    %v6480 = vadd.f32 0.0, %v6479
    %6481 = vmatmul.f32.gmra.mxu0 %v6376
    %v6482 = vpop.f32.mrf.mxu0
    %v6483 = vadd.f32 0.0, %v6482
    %6484 = vmatmul.f32.gmra.mxu0 %v6377
    %v6485 = vpop.f32.mrf.mxu0
    %v6486 = vadd.f32 0.0, %v6485
    %6487 = vmatmul.f32.gmra.mxu0 %v6378
    %v6488 = vpop.f32.mrf.mxu0
    %v6489 = vadd.f32 0.0, %v6488
    %6490 = vmatmul.f32.gmra.mxu0 %v6379
    %v6491 = vpop.f32.mrf.mxu0
    %v6492 = vadd.f32 0.0, %v6491
    %6493 = vmatmul.f32.gmra.mxu0 %v6380
    %v6494 = vpop.f32.mrf.mxu0
    %v6495 = vadd.f32 0.0, %v6494
    %6496 = vmatmul.f32.gmra.mxu0 %v6381
    %v6497 = vpop.f32.mrf.mxu0
    %v6498 = vadd.f32 0.0, %v6497
    %6499 = vmatmul.f32.gmra.mxu0 %v6382
    %v6500 = vpop.f32.mrf.mxu0
    %v6501 = vadd.f32 0.0, %v6500
    %6502 = vmatmul.f32.gmra.mxu0 %v6383
    %v6503 = vpop.f32.mrf.mxu0
    %v6504 = vadd.f32 0.0, %v6503
    %6505 = vmatmul.f32.gmra.mxu0 %v6384
    %v6506 = vpop.f32.mrf.mxu0
    %v6507 = vadd.f32 0.0, %v6506
    %6508 = vmatmul.f32.gmra.mxu0 %v6385
    %v6509 = vpop.f32.mrf.mxu0
    %v6510 = vadd.f32 0.0, %v6509
    %6511 = vmatmul.f32.gmra.mxu0 %v6386
    %v6512 = vpop.f32.mrf.mxu0
    %v6513 = vadd.f32 0.0, %v6512
    %6514 = vmatmul.f32.gmra.mxu0 %v6387
    %v6515 = vpop.f32.mrf.mxu0
    %v6516 = vadd.f32 0.0, %v6515
    %6517 = vmatmul.f32.gmra.mxu0 %v6388
    %v6518 = vpop.f32.mrf.mxu0
    %v6519 = vadd.f32 0.0, %v6518
    %6520 = vmatmul.f32.gmra.mxu0 %v6389
    %v6521 = vpop.f32.mrf.mxu0
    %v6522 = vadd.f32 0.0, %v6521
    %6523 = vmatmul.f32.gmra.mxu0 %v6390
    %v6524 = vpop.f32.mrf.mxu0
    %v6525 = vadd.f32 0.0, %v6524
    %6526 = vmatmul.f32.gmra.mxu0 %v6391
    %v6527 = vpop.f32.mrf.mxu0
    %v6528 = vadd.f32 0.0, %v6527
    %6529 = vmatmul.f32.gmra.mxu0 %v6392
    %v6530 = vpop.f32.mrf.mxu0
    %v6531 = vadd.f32 0.0, %v6530
    %6532 = vmatmul.f32.gmra.mxu0 %v6393
    %v6533 = vpop.f32.mrf.mxu0
    %v6534 = vadd.f32 0.0, %v6533
    %6535 = vmatmul.f32.gmra.mxu0 %v6394
    %v6536 = vpop.f32.mrf.mxu0
    %v6537 = vadd.f32 0.0, %v6536
    %6538 = vmatmul.f32.gmra.mxu0 %v6395
    %v6539 = vpop.f32.mrf.mxu0
    %v6540 = vadd.f32 0.0, %v6539
    %6541 = vmatmul.f32.gmra.mxu0 %v6396
    %v6542 = vpop.f32.mrf.mxu0
    %v6543 = vadd.f32 0.0, %v6542
    %6544 = vmatmul.f32.gmra.mxu0 %v6397
    %v6545 = vpop.f32.mrf.mxu0
    %v6546 = vadd.f32 0.0, %v6545
    %6547 = vmatmul.f32.gmra.mxu0 %v6398
    %v6548 = vpop.f32.mrf.mxu0
    %v6549 = vadd.f32 0.0, %v6548
    %6550 = vmatmul.f32.gmra.mxu0 %v6399
    %v6551 = vpop.f32.mrf.mxu0
    %v6552 = vadd.f32 0.0, %v6551
    %6553 = vmatmul.f32.gmra.mxu0 %v6400
    %v6554 = vpop.f32.mrf.mxu0
    %v6555 = vadd.f32 0.0, %v6554
    %6556 = vmatmul.f32.gmra.mxu0 %v6401
    %v6557 = vpop.f32.mrf.mxu0
    %v6558 = vadd.f32 0.0, %v6557
    %6559 = vmatmul.f32.gmra.mxu0 %v6402
    %v6560 = vpop.f32.mrf.mxu0
    %v6561 = vadd.f32 0.0, %v6560
    %6562 = vmatmul.f32.gmra.mxu0 %v6403
    %v6563 = vpop.f32.mrf.mxu0
    %v6564 = vadd.f32 0.0, %v6563
    %6565 = vmatmul.f32.gmra.mxu0 %v6404
    %v6566 = vpop.f32.mrf.mxu0
    %v6567 = vadd.f32 0.0, %v6566
    %6568 = vmatmul.f32.gmra.mxu0 %v6405
    %v6569 = vpop.f32.mrf.mxu0
    %v6570 = vadd.f32 0.0, %v6569
    %6571 = vmatmul.f32.gmra.mxu0 %v6406
    %v6572 = vpop.f32.mrf.mxu0
    %v6573 = vadd.f32 0.0, %v6572
    %6574 = vmatmul.f32.gmra.mxu0 %v6407
    %v6575 = vpop.f32.mrf.mxu0
    %v6576 = vadd.f32 0.0, %v6575
    %6577 = vmatmul.f32.gmra.mxu0 %v6408
    %v6578 = vpop.f32.mrf.mxu0
    %v6579 = vadd.f32 0.0, %v6578
    %6580 = vmatmul.f32.gmra.mxu0 %v6409
    %v6581 = vpop.f32.mrf.mxu0
    %v6582 = vadd.f32 0.0, %v6581
    %6583 = vmatmul.f32.gmra.mxu0 %v6410
    %v6584 = vpop.f32.mrf.mxu0
    %v6585 = vadd.f32 0.0, %v6584
    %6586 = vmatmul.f32.gmra.mxu0 %v6411
    %v6587 = vpop.f32.mrf.mxu0
    %v6588 = vadd.f32 0.0, %v6587
    %6589 = vmatmul.f32.gmra.mxu0 %v6412
    %v6590 = vpop.f32.mrf.mxu0
    %v6591 = vadd.f32 0.0, %v6590
    %6592 = vmatmul.f32.gmra.mxu0 %v6413
    %v6593 = vpop.f32.mrf.mxu0
    %v6594 = vadd.f32 0.0, %v6593
    %6595 = vmatmul.f32.gmra.mxu0 %v6414
    %v6596 = vpop.f32.mrf.mxu0
    %v6597 = vadd.f32 0.0, %v6596
    %6598 = vmatmul.f32.gmra.mxu0 %v6415
    %v6599 = vpop.f32.mrf.mxu0
    %v6600 = vadd.f32 0.0, %v6599
    %6601 = vmatmul.f32.gmra.mxu0 %v6416
    %v6602 = vpop.f32.mrf.mxu0
    %v6603 = vadd.f32 0.0, %v6602
    %6604 = vmatmul.f32.gmra.mxu0 %v6417
    %v6605 = vpop.f32.mrf.mxu0
    %v6606 = vadd.f32 0.0, %v6605
    %6607 = vmatmul.f32.gmra.mxu0 %v6418
    %v6608 = vpop.f32.mrf.mxu0
    %v6609 = vadd.f32 0.0, %v6608
    %6610 = vmatmul.f32.gmra.mxu0 %v6419
    %v6611 = vpop.f32.mrf.mxu0
    %v6612 = vadd.f32 0.0, %v6611
    %6613 = vmatmul.f32.gmra.mxu0 %v6420
    %v6614 = vpop.f32.mrf.mxu0
    %v6615 = vadd.f32 0.0, %v6614
    %6616 = vmatmul.f32.gmra.mxu0 %v6421
    %v6617 = vpop.f32.mrf.mxu0
    %v6618 = vadd.f32 0.0, %v6617
    %6619 = vmatmul.f32.gmra.mxu0 %v6422
    %v6620 = vpop.f32.mrf.mxu0
    %v6621 = vadd.f32 0.0, %v6620
    %6622 = vmatmul.f32.gmra.mxu0 %v6423
    %v6623 = vpop.f32.mrf.mxu0
    %v6624 = vadd.f32 0.0, %v6623
    %6625 = vmatmul.f32.gmra.mxu0 %v6424
    %v6626 = vpop.f32.mrf.mxu0
    %v6627 = vadd.f32 0.0, %v6626
    %6628 = vmatmul.f32.gmra.mxu0 %v6425
    %v6629 = vpop.f32.mrf.mxu0
    %v6630 = vadd.f32 0.0, %v6629
    %6631 = vmatmul.f32.gmra.mxu0 %v6426
    %v6632 = vpop.f32.mrf.mxu0
    %v6633 = vadd.f32 0.0, %v6632
    %6634 = vmatmul.f32.gmra.mxu0 %v6427
    %v6635 = vpop.f32.mrf.mxu0
    %v6636 = vadd.f32 0.0, %v6635
    %6637 = vmatmul.f32.gmra.mxu0 %v6428
    %v6638 = vpop.f32.mrf.mxu0
    %v6639 = vadd.f32 0.0, %v6638
    %6640 = vmatmul.f32.gmra.mxu0 %v6429
    %v6641 = vpop.f32.mrf.mxu0
    %v6642 = vadd.f32 0.0, %v6641
    %6643 = vmatmul.f32.gmra.mxu0 %v6430
    %v6644 = vpop.f32.mrf.mxu0
    %v6645 = vadd.f32 0.0, %v6644
    %6646 = vmatmul.f32.gmra.mxu0 %v6431
    %v6647 = vpop.f32.mrf.mxu0
    %v6648 = vadd.f32 0.0, %v6647
    %6649 = vmatmul.f32.gmra.mxu0 %v6432
    %v6650 = vpop.f32.mrf.mxu0
    %v6651 = vadd.f32 0.0, %v6650
    %6652 = vmatmul.f32.gmra.mxu0 %v6433
    %v6653 = vpop.f32.mrf.mxu0
    %v6654 = vadd.f32 0.0, %v6653
    %6655 = vmatmul.f32.gmra.mxu0 %v6434
    %v6656 = vpop.f32.mrf.mxu0
    %v6657 = vadd.f32 0.0, %v6656
    %6658 = vmatmul.f32.gmra.mxu0 %v6435
    %v6659 = vpop.f32.mrf.mxu0
    %v6660 = vadd.f32 0.0, %v6659
    %6661 = vdwg.mxu0
    %v6662 = vadd.f32 %v6308, %v6471
    %v6663 = vadd.f32 %v6309, %v6474
    %v6664 = vadd.f32 %v6310, %v6477
    %v6665 = vadd.f32 %v6311, %v6480
    %v6666 = vadd.f32 %v6312, %v6483
    %v6667 = vadd.f32 %v6313, %v6486
    %v6668 = vadd.f32 %v6314, %v6489
    %v6669 = vadd.f32 %v6315, %v6492
    %v6670 = vadd.f32 %v6316, %v6495
    %v6671 = vadd.f32 %v6317, %v6498
    %v6672 = vadd.f32 %v6318, %v6501
    %v6673 = vadd.f32 %v6319, %v6504
    %v6674 = vadd.f32 %v6320, %v6507
    %v6675 = vadd.f32 %v6321, %v6510
    %v6676 = vadd.f32 %v6322, %v6513
    %v6677 = vadd.f32 %v6323, %v6516
    %v6678 = vadd.f32 %v6324, %v6519
    %v6679 = vadd.f32 %v6325, %v6522
    %v6680 = vadd.f32 %v6326, %v6525
    %v6681 = vadd.f32 %v6327, %v6528
    %v6682 = vadd.f32 %v6328, %v6531
    %v6683 = vadd.f32 %v6329, %v6534
    %v6684 = vadd.f32 %v6330, %v6537
    %v6685 = vadd.f32 %v6331, %v6540
    %v6686 = vadd.f32 %v6332, %v6543
    %v6687 = vadd.f32 %v6333, %v6546
    %v6688 = vadd.f32 %v6334, %v6549
    %v6689 = vadd.f32 %v6335, %v6552
    %v6690 = vadd.f32 %v6336, %v6555
    %v6691 = vadd.f32 %v6337, %v6558
    %v6692 = vadd.f32 %v6338, %v6561
    %v6693 = vadd.f32 %v6339, %v6564
    %v6694 = vadd.f32 %v6340, %v6567
    %v6695 = vadd.f32 %v6341, %v6570
    %v6696 = vadd.f32 %v6342, %v6573
    %v6697 = vadd.f32 %v6343, %v6576
    %v6698 = vadd.f32 %v6344, %v6579
    %v6699 = vadd.f32 %v6345, %v6582
    %v6700 = vadd.f32 %v6346, %v6585
    %v6701 = vadd.f32 %v6347, %v6588
    %v6702 = vadd.f32 %v6348, %v6591
    %v6703 = vadd.f32 %v6349, %v6594
    %v6704 = vadd.f32 %v6350, %v6597
    %v6705 = vadd.f32 %v6351, %v6600
    %v6706 = vadd.f32 %v6352, %v6603
    %v6707 = vadd.f32 %v6353, %v6606
    %v6708 = vadd.f32 %v6354, %v6609
    %v6709 = vadd.f32 %v6355, %v6612
    %v6710 = vadd.f32 %v6356, %v6615
    %v6711 = vadd.f32 %v6357, %v6618
    %v6712 = vadd.f32 %v6358, %v6621
    %v6713 = vadd.f32 %v6359, %v6624
    %v6714 = vadd.f32 %v6360, %v6627
    %v6715 = vadd.f32 %v6361, %v6630
    %v6716 = vadd.f32 %v6362, %v6633
    %v6717 = vadd.f32 %v6363, %v6636
    %v6718 = vadd.f32 %v6364, %v6639
    %v6719 = vadd.f32 %v6365, %v6642
    %v6720 = vadd.f32 %v6366, %v6645
    %v6721 = vadd.f32 %v6367, %v6648
    %v6722 = vadd.f32 %v6368, %v6651
    %v6723 = vadd.f32 %v6369, %v6654
    %v6724 = vadd.f32 %v6370, %v6657
    %v6725 = vadd.f32 %v6371, %v6660
    %v6726 = vld [vmem:[%s6017 + $0x2] sm:$0xff]
    %v6727 = vld [vmem:[%s6017 + $0xa] sm:$0xff]
    %v6728 = vld [vmem:[%s6017 + $0x1a] sm:$0xff]
    %v6729 = vld [vmem:[%s6017 + $0x22] sm:$0xff]
    %v6730 = vld [vmem:[%s6017 + $0x32] sm:$0xff]
    %v6731 = vld [vmem:[%s6017 + $0x3a] sm:$0xff]
    %v6732 = vld [vmem:[%s6017 + $0x4a] sm:$0xff]
    %v6733 = vld [vmem:[%s6017 + $0x52] sm:$0xff]
    %v6734 = vld [vmem:[%s6017 + $0x62] sm:$0xff]
    %v6735 = vld [vmem:[%s6017 + $0x6a] sm:$0xff]
    %v6736 = vld [vmem:[%s6017 + $0x7a] sm:$0xff]
    %v6737 = vld [vmem:[%s6017 + $0x82] sm:$0xff]
    %v6738 = vld [vmem:[%s6017 + $0x92] sm:$0xff]
    %v6739 = vld [vmem:[%s6017 + $0x9a] sm:$0xff]
    %v6740 = vld [vmem:[%s6017 + $0xaa] sm:$0xff]
    %v6741 = vld [vmem:[%s6017 + $0xb2] sm:$0xff]
    %v6742 = vld [vmem:[%s6017 + $0xc2] sm:$0xff]
    %v6743 = vld [vmem:[%s6017 + $0xca] sm:$0xff]
    %v6744 = vld [vmem:[%s6017 + $0xda] sm:$0xff]
    %v6745 = vld [vmem:[%s6017 + $0xe2] sm:$0xff]
    %v6746 = vld [vmem:[%s6017 + $0xf2] sm:$0xff]
    %v6747 = vld [vmem:[%s6017 + $0xfa] sm:$0xff]
    %v6748 = vld [vmem:[%s6017 + $0x10a] sm:$0xff]
    %v6749 = vld [vmem:[%s6017 + $0x112] sm:$0xff]
    %v6750 = vld [vmem:[%s6017 + $0x122] sm:$0xff]
    %v6751 = vld [vmem:[%s6017 + $0x12a] sm:$0xff]
    %v6752 = vld [vmem:[%s6017 + $0x13a] sm:$0xff]
    %v6753 = vld [vmem:[%s6017 + $0x142] sm:$0xff]
    %v6754 = vld [vmem:[%s6017 + $0x152] sm:$0xff]
    %v6755 = vld [vmem:[%s6017 + $0x15a] sm:$0xff]
    %v6756 = vld [vmem:[%s6017 + $0x16a] sm:$0xff]
    %v6757 = vld [vmem:[%s6017 + $0x172] sm:$0xff]
    %v6758 = vld [vmem:[%s6017 + $0x1b2] sm:$0xff]
    %v6759 = vld [vmem:[%s6017 + $0x1ba] sm:$0xff]
    %v6760 = vld [vmem:[%s6017 + $0x1ca] sm:$0xff]
    %v6761 = vld [vmem:[%s6017 + $0x1d2] sm:$0xff]
    %v6762 = vld [vmem:[%s6017 + $0x1e2] sm:$0xff]
    %v6763 = vld [vmem:[%s6017 + $0x1ea] sm:$0xff]
    %v6764 = vld [vmem:[%s6017 + $0x1fa] sm:$0xff]
    %v6765 = vld [vmem:[%s6017 + $0x202] sm:$0xff]
    %v6766 = vld [vmem:[%s6017 + $0x212] sm:$0xff]
    %v6767 = vld [vmem:[%s6017 + $0x21a] sm:$0xff]
    %v6768 = vld [vmem:[%s6017 + $0x22a] sm:$0xff]
    %v6769 = vld [vmem:[%s6017 + $0x232] sm:$0xff]
    %v6770 = vld [vmem:[%s6017 + $0x242] sm:$0xff]
    %v6771 = vld [vmem:[%s6017 + $0x24a] sm:$0xff]
    %v6772 = vld [vmem:[%s6017 + $0x25a] sm:$0xff]
    %v6773 = vld [vmem:[%s6017 + $0x262] sm:$0xff]
    %v6774 = vld [vmem:[%s6017 + $0x272] sm:$0xff]
    %v6775 = vld [vmem:[%s6017 + $0x27a] sm:$0xff]
    %v6776 = vld [vmem:[%s6017 + $0x28a] sm:$0xff]
    %v6777 = vld [vmem:[%s6017 + $0x292] sm:$0xff]
    %v6778 = vld [vmem:[%s6017 + $0x2a2] sm:$0xff]
    %v6779 = vld [vmem:[%s6017 + $0x2aa] sm:$0xff]
    %v6780 = vld [vmem:[%s6017 + $0x2ba] sm:$0xff]
    %v6781 = vld [vmem:[%s6017 + $0x2c2] sm:$0xff]
    %v6782 = vld [vmem:[%s6017 + $0x2d2] sm:$0xff]
    %v6783 = vld [vmem:[%s6017 + $0x2da] sm:$0xff]
    %v6784 = vld [vmem:[%s6017 + $0x2ea] sm:$0xff]
    %v6785 = vld [vmem:[%s6017 + $0x2f2] sm:$0xff]
    %v6786 = vld [vmem:[%s6017 + $0x302] sm:$0xff]
    %v6787 = vld [vmem:[%s6017 + $0x30a] sm:$0xff]
    %v6788 = vld [vmem:[%s6017 + $0x31a] sm:$0xff]
    %v6789 = vld [vmem:[%s6017 + $0x322] sm:$0xff]
    %s6790 = scalar_lea.vmem [#allocation9], 1024
    %v6791 = vld [vmem:[%s6790] sm:$0xff]
    %v6792 = vld [vmem:[%s6790 + $0x8] sm:$0xff]
    %v6793 = vld [vmem:[%s6790 + $0x10] sm:$0xff]
    %v6794 = vld [vmem:[%s6790 + $0x18] sm:$0xff]
    %v6795 = vld [vmem:[%s6790 + $0x20] sm:$0xff]
    %v6796 = vld [vmem:[%s6790 + $0x28] sm:$0xff]
    %v6797 = vld [vmem:[%s6790 + $0x30] sm:$0xff]
    %v6798 = vld [vmem:[%s6790 + $0x38] sm:$0xff]
    %v6799 = vld [vmem:[%s6790 + $0x40] sm:$0xff]
    %v6800 = vld [vmem:[%s6790 + $0x48] sm:$0xff]
    %v6801 = vld [vmem:[%s6790 + $0x50] sm:$0xff]
    %v6802 = vld [vmem:[%s6790 + $0x58] sm:$0xff]
    %v6803 = vld [vmem:[%s6790 + $0x60] sm:$0xff]
    %v6804 = vld [vmem:[%s6790 + $0x68] sm:$0xff]
    %v6805 = vld [vmem:[%s6790 + $0x70] sm:$0xff]
    %v6806 = vld [vmem:[%s6790 + $0x78] sm:$0xff]
    %6807 = vmatpush.msra.mxu0 %v6806
    %6808 = vmatpush.msra.mxu0 %v6805
    %6809 = vmatpush.msra.mxu0 %v6804
    %6810 = vmatpush.msra.mxu0 %v6803
    %6811 = vmatpush.msra.mxu0 %v6802
    %6812 = vmatpush.msra.mxu0 %v6801
    %6813 = vmatpush.msra.mxu0 %v6800
    %6814 = vmatpush.msra.mxu0 %v6799
    %6815 = vmatpush.msra.mxu0 %v6798
    %6816 = vmatpush.msra.mxu0 %v6797
    %6817 = vmatpush.msra.mxu0 %v6796
    %6818 = vmatpush.msra.mxu0 %v6795
    %6819 = vmatpush.msra.mxu0 %v6794
    %6820 = vmatpush.msra.mxu0 %v6793
    %6821 = vmatpush.msra.mxu0 %v6792
    %6822 = vmatpush.msra.mxu0 %v6791
    %6823 = vmatmul.f32.gmra.mxu0 %v6726
    %v6824 = vpop.f32.mrf.mxu0
    %v6825 = vadd.f32 0.0, %v6824
    %6826 = vmatmul.f32.gmra.mxu0 %v6727
    %v6827 = vpop.f32.mrf.mxu0
    %v6828 = vadd.f32 0.0, %v6827
    %6829 = vmatmul.f32.gmra.mxu0 %v6728
    %v6830 = vpop.f32.mrf.mxu0
    %v6831 = vadd.f32 0.0, %v6830
    %6832 = vmatmul.f32.gmra.mxu0 %v6729
    %v6833 = vpop.f32.mrf.mxu0
    %v6834 = vadd.f32 0.0, %v6833
    %6835 = vmatmul.f32.gmra.mxu0 %v6730
    %v6836 = vpop.f32.mrf.mxu0
    %v6837 = vadd.f32 0.0, %v6836
    %6838 = vmatmul.f32.gmra.mxu0 %v6731
    %v6839 = vpop.f32.mrf.mxu0
    %v6840 = vadd.f32 0.0, %v6839
    %6841 = vmatmul.f32.gmra.mxu0 %v6732
    %v6842 = vpop.f32.mrf.mxu0
    %v6843 = vadd.f32 0.0, %v6842
    %6844 = vmatmul.f32.gmra.mxu0 %v6733
    %v6845 = vpop.f32.mrf.mxu0
    %v6846 = vadd.f32 0.0, %v6845
    %6847 = vmatmul.f32.gmra.mxu0 %v6734
    %v6848 = vpop.f32.mrf.mxu0
    %v6849 = vadd.f32 0.0, %v6848
    %6850 = vmatmul.f32.gmra.mxu0 %v6735
    %v6851 = vpop.f32.mrf.mxu0
    %v6852 = vadd.f32 0.0, %v6851
    %6853 = vmatmul.f32.gmra.mxu0 %v6736
    %v6854 = vpop.f32.mrf.mxu0
    %v6855 = vadd.f32 0.0, %v6854
    %6856 = vmatmul.f32.gmra.mxu0 %v6737
    %v6857 = vpop.f32.mrf.mxu0
    %v6858 = vadd.f32 0.0, %v6857
    %6859 = vmatmul.f32.gmra.mxu0 %v6738
    %v6860 = vpop.f32.mrf.mxu0
    %v6861 = vadd.f32 0.0, %v6860
    %6862 = vmatmul.f32.gmra.mxu0 %v6739
    %v6863 = vpop.f32.mrf.mxu0
    %v6864 = vadd.f32 0.0, %v6863
    %6865 = vmatmul.f32.gmra.mxu0 %v6740
    %v6866 = vpop.f32.mrf.mxu0
    %v6867 = vadd.f32 0.0, %v6866
    %6868 = vmatmul.f32.gmra.mxu0 %v6741
    %v6869 = vpop.f32.mrf.mxu0
    %v6870 = vadd.f32 0.0, %v6869
    %6871 = vmatmul.f32.gmra.mxu0 %v6742
    %v6872 = vpop.f32.mrf.mxu0
    %v6873 = vadd.f32 0.0, %v6872
    %6874 = vmatmul.f32.gmra.mxu0 %v6743
    %v6875 = vpop.f32.mrf.mxu0
    %v6876 = vadd.f32 0.0, %v6875
    %6877 = vmatmul.f32.gmra.mxu0 %v6744
    %v6878 = vpop.f32.mrf.mxu0
    %v6879 = vadd.f32 0.0, %v6878
    %6880 = vmatmul.f32.gmra.mxu0 %v6745
    %v6881 = vpop.f32.mrf.mxu0
    %v6882 = vadd.f32 0.0, %v6881
    %6883 = vmatmul.f32.gmra.mxu0 %v6746
    %v6884 = vpop.f32.mrf.mxu0
    %v6885 = vadd.f32 0.0, %v6884
    %6886 = vmatmul.f32.gmra.mxu0 %v6747
    %v6887 = vpop.f32.mrf.mxu0
    %v6888 = vadd.f32 0.0, %v6887
    %6889 = vmatmul.f32.gmra.mxu0 %v6748
    %v6890 = vpop.f32.mrf.mxu0
    %v6891 = vadd.f32 0.0, %v6890
    %6892 = vmatmul.f32.gmra.mxu0 %v6749
    %v6893 = vpop.f32.mrf.mxu0
    %v6894 = vadd.f32 0.0, %v6893
    %6895 = vmatmul.f32.gmra.mxu0 %v6750
    %v6896 = vpop.f32.mrf.mxu0
    %v6897 = vadd.f32 0.0, %v6896
    %6898 = vmatmul.f32.gmra.mxu0 %v6751
    %v6899 = vpop.f32.mrf.mxu0
    %v6900 = vadd.f32 0.0, %v6899
    %6901 = vmatmul.f32.gmra.mxu0 %v6752
    %v6902 = vpop.f32.mrf.mxu0
    %v6903 = vadd.f32 0.0, %v6902
    %6904 = vmatmul.f32.gmra.mxu0 %v6753
    %v6905 = vpop.f32.mrf.mxu0
    %v6906 = vadd.f32 0.0, %v6905
    %6907 = vmatmul.f32.gmra.mxu0 %v6754
    %v6908 = vpop.f32.mrf.mxu0
    %v6909 = vadd.f32 0.0, %v6908
    %6910 = vmatmul.f32.gmra.mxu0 %v6755
    %v6911 = vpop.f32.mrf.mxu0
    %v6912 = vadd.f32 0.0, %v6911
    %6913 = vmatmul.f32.gmra.mxu0 %v6756
    %v6914 = vpop.f32.mrf.mxu0
    %v6915 = vadd.f32 0.0, %v6914
    %6916 = vmatmul.f32.gmra.mxu0 %v6757
    %v6917 = vpop.f32.mrf.mxu0
    %v6918 = vadd.f32 0.0, %v6917
    %6919 = vmatmul.f32.gmra.mxu0 %v6758
    %v6920 = vpop.f32.mrf.mxu0
    %v6921 = vadd.f32 0.0, %v6920
    %6922 = vmatmul.f32.gmra.mxu0 %v6759
    %v6923 = vpop.f32.mrf.mxu0
    %v6924 = vadd.f32 0.0, %v6923
    %6925 = vmatmul.f32.gmra.mxu0 %v6760
    %v6926 = vpop.f32.mrf.mxu0
    %v6927 = vadd.f32 0.0, %v6926
    %6928 = vmatmul.f32.gmra.mxu0 %v6761
    %v6929 = vpop.f32.mrf.mxu0
    %v6930 = vadd.f32 0.0, %v6929
    %6931 = vmatmul.f32.gmra.mxu0 %v6762
    %v6932 = vpop.f32.mrf.mxu0
    %v6933 = vadd.f32 0.0, %v6932
    %6934 = vmatmul.f32.gmra.mxu0 %v6763
    %v6935 = vpop.f32.mrf.mxu0
    %v6936 = vadd.f32 0.0, %v6935
    %6937 = vmatmul.f32.gmra.mxu0 %v6764
    %v6938 = vpop.f32.mrf.mxu0
    %v6939 = vadd.f32 0.0, %v6938
    %6940 = vmatmul.f32.gmra.mxu0 %v6765
    %v6941 = vpop.f32.mrf.mxu0
    %v6942 = vadd.f32 0.0, %v6941
    %6943 = vmatmul.f32.gmra.mxu0 %v6766
    %v6944 = vpop.f32.mrf.mxu0
    %v6945 = vadd.f32 0.0, %v6944
    %6946 = vmatmul.f32.gmra.mxu0 %v6767
    %v6947 = vpop.f32.mrf.mxu0
    %v6948 = vadd.f32 0.0, %v6947
    %6949 = vmatmul.f32.gmra.mxu0 %v6768
    %v6950 = vpop.f32.mrf.mxu0
    %v6951 = vadd.f32 0.0, %v6950
    %6952 = vmatmul.f32.gmra.mxu0 %v6769
    %v6953 = vpop.f32.mrf.mxu0
    %v6954 = vadd.f32 0.0, %v6953
    %6955 = vmatmul.f32.gmra.mxu0 %v6770
    %v6956 = vpop.f32.mrf.mxu0
    %v6957 = vadd.f32 0.0, %v6956
    %6958 = vmatmul.f32.gmra.mxu0 %v6771
    %v6959 = vpop.f32.mrf.mxu0
    %v6960 = vadd.f32 0.0, %v6959
    %6961 = vmatmul.f32.gmra.mxu0 %v6772
    %v6962 = vpop.f32.mrf.mxu0
    %v6963 = vadd.f32 0.0, %v6962
    %6964 = vmatmul.f32.gmra.mxu0 %v6773
    %v6965 = vpop.f32.mrf.mxu0
    %v6966 = vadd.f32 0.0, %v6965
    %6967 = vmatmul.f32.gmra.mxu0 %v6774
    %v6968 = vpop.f32.mrf.mxu0
    %v6969 = vadd.f32 0.0, %v6968
    %6970 = vmatmul.f32.gmra.mxu0 %v6775
    %v6971 = vpop.f32.mrf.mxu0
    %v6972 = vadd.f32 0.0, %v6971
    %6973 = vmatmul.f32.gmra.mxu0 %v6776
    %v6974 = vpop.f32.mrf.mxu0
    %v6975 = vadd.f32 0.0, %v6974
    %6976 = vmatmul.f32.gmra.mxu0 %v6777
    %v6977 = vpop.f32.mrf.mxu0
    %v6978 = vadd.f32 0.0, %v6977
    %6979 = vmatmul.f32.gmra.mxu0 %v6778
    %v6980 = vpop.f32.mrf.mxu0
    %v6981 = vadd.f32 0.0, %v6980
    %6982 = vmatmul.f32.gmra.mxu0 %v6779
    %v6983 = vpop.f32.mrf.mxu0
    %v6984 = vadd.f32 0.0, %v6983
    %6985 = vmatmul.f32.gmra.mxu0 %v6780
    %v6986 = vpop.f32.mrf.mxu0
    %v6987 = vadd.f32 0.0, %v6986
    %6988 = vmatmul.f32.gmra.mxu0 %v6781
    %v6989 = vpop.f32.mrf.mxu0
    %v6990 = vadd.f32 0.0, %v6989
    %6991 = vmatmul.f32.gmra.mxu0 %v6782
    %v6992 = vpop.f32.mrf.mxu0
    %v6993 = vadd.f32 0.0, %v6992
    %6994 = vmatmul.f32.gmra.mxu0 %v6783
    %v6995 = vpop.f32.mrf.mxu0
    %v6996 = vadd.f32 0.0, %v6995
    %6997 = vmatmul.f32.gmra.mxu0 %v6784
    %v6998 = vpop.f32.mrf.mxu0
    %v6999 = vadd.f32 0.0, %v6998
    %7000 = vmatmul.f32.gmra.mxu0 %v6785
    %v7001 = vpop.f32.mrf.mxu0
    %v7002 = vadd.f32 0.0, %v7001
    %7003 = vmatmul.f32.gmra.mxu0 %v6786
    %v7004 = vpop.f32.mrf.mxu0
    %v7005 = vadd.f32 0.0, %v7004
    %7006 = vmatmul.f32.gmra.mxu0 %v6787
    %v7007 = vpop.f32.mrf.mxu0
    %v7008 = vadd.f32 0.0, %v7007
    %7009 = vmatmul.f32.gmra.mxu0 %v6788
    %v7010 = vpop.f32.mrf.mxu0
    %v7011 = vadd.f32 0.0, %v7010
    %7012 = vmatmul.f32.gmra.mxu0 %v6789
    %v7013 = vpop.f32.mrf.mxu0
    %v7014 = vadd.f32 0.0, %v7013
    %7015 = vdwg.mxu0
    %v7016 = vadd.f32 %v6662, %v6825
    %v7017 = vadd.f32 %v6663, %v6828
    %v7018 = vadd.f32 %v6664, %v6831
    %v7019 = vadd.f32 %v6665, %v6834
    %v7020 = vadd.f32 %v6666, %v6837
    %v7021 = vadd.f32 %v6667, %v6840
    %v7022 = vadd.f32 %v6668, %v6843
    %v7023 = vadd.f32 %v6669, %v6846
    %v7024 = vadd.f32 %v6670, %v6849
    %v7025 = vadd.f32 %v6671, %v6852
    %v7026 = vadd.f32 %v6672, %v6855
    %v7027 = vadd.f32 %v6673, %v6858
    %v7028 = vadd.f32 %v6674, %v6861
    %v7029 = vadd.f32 %v6675, %v6864
    %v7030 = vadd.f32 %v6676, %v6867
    %v7031 = vadd.f32 %v6677, %v6870
    %v7032 = vadd.f32 %v6678, %v6873
    %v7033 = vadd.f32 %v6679, %v6876
    %v7034 = vadd.f32 %v6680, %v6879
    %v7035 = vadd.f32 %v6681, %v6882
    %v7036 = vadd.f32 %v6682, %v6885
    %v7037 = vadd.f32 %v6683, %v6888
    %v7038 = vadd.f32 %v6684, %v6891
    %v7039 = vadd.f32 %v6685, %v6894
    %v7040 = vadd.f32 %v6686, %v6897
    %v7041 = vadd.f32 %v6687, %v6900
    %v7042 = vadd.f32 %v6688, %v6903
    %v7043 = vadd.f32 %v6689, %v6906
    %v7044 = vadd.f32 %v6690, %v6909
    %v7045 = vadd.f32 %v6691, %v6912
    %v7046 = vadd.f32 %v6692, %v6915
    %v7047 = vadd.f32 %v6693, %v6918
    %v7048 = vadd.f32 %v6694, %v6921
    %v7049 = vadd.f32 %v6695, %v6924
    %v7050 = vadd.f32 %v6696, %v6927
    %v7051 = vadd.f32 %v6697, %v6930
    %v7052 = vadd.f32 %v6698, %v6933
    %v7053 = vadd.f32 %v6699, %v6936
    %v7054 = vadd.f32 %v6700, %v6939
    %v7055 = vadd.f32 %v6701, %v6942
    %v7056 = vadd.f32 %v6702, %v6945
    %v7057 = vadd.f32 %v6703, %v6948
    %v7058 = vadd.f32 %v6704, %v6951
    %v7059 = vadd.f32 %v6705, %v6954
    %v7060 = vadd.f32 %v6706, %v6957
    %v7061 = vadd.f32 %v6707, %v6960
    %v7062 = vadd.f32 %v6708, %v6963
    %v7063 = vadd.f32 %v6709, %v6966
    %v7064 = vadd.f32 %v6710, %v6969
    %v7065 = vadd.f32 %v6711, %v6972
    %v7066 = vadd.f32 %v6712, %v6975
    %v7067 = vadd.f32 %v6713, %v6978
    %v7068 = vadd.f32 %v6714, %v6981
    %v7069 = vadd.f32 %v6715, %v6984
    %v7070 = vadd.f32 %v6716, %v6987
    %v7071 = vadd.f32 %v6717, %v6990
    %v7072 = vadd.f32 %v6718, %v6993
    %v7073 = vadd.f32 %v6719, %v6996
    %v7074 = vadd.f32 %v6720, %v6999
    %v7075 = vadd.f32 %v6721, %v7002
    %v7076 = vadd.f32 %v6722, %v7005
    %v7077 = vadd.f32 %v6723, %v7008
    %v7078 = vadd.f32 %v6724, %v7011
    %v7079 = vadd.f32 %v6725, %v7014
    %v7080 = vld [vmem:[%s5] sm:$0x1]
    %v7081 = vld [vmem:[%s6] sm:$0x1]
    %v7082 = vadd.f32 %v7016, %v7017
    %v7083 = vadd.f32 %v7082, %v7018
    %v7084 = vadd.f32 %v7083, %v7019
    %v7085 = vadd.f32 %v7084, %v7020
    %v7086 = vadd.f32 %v7085, %v7021
    %v7087 = vadd.f32 %v7086, %v7022
    %v7088 = vadd.f32 %v7087, %v7023
    %v7089 = vadd.f32 %v7088, %v7024
    %v7090 = vadd.f32 %v7089, %v7025
    %v7091 = vadd.f32 %v7090, %v7026
    %v7092 = vadd.f32 %v7091, %v7027
    %v7093 = vadd.f32 %v7092, %v7028
    %v7094 = vadd.f32 %v7093, %v7029
    %v7095 = vadd.f32 %v7094, %v7030
    %v7096 = vadd.f32 %v7095, %v7031
    %v7097 = vadd.f32 %v7096, %v7032
    %v7098 = vadd.f32 %v7097, %v7033
    %v7099 = vadd.f32 %v7098, %v7034
    %v7100 = vadd.f32 %v7099, %v7035
    %v7101 = vadd.f32 %v7100, %v7036
    %v7102 = vadd.f32 %v7101, %v7037
    %v7103 = vadd.f32 %v7102, %v7038
    %v7104 = vadd.f32 %v7103, %v7039
    %v7105 = vadd.f32 %v7104, %v7040
    %v7106 = vadd.f32 %v7105, %v7041
    %v7107 = vadd.f32 %v7106, %v7042
    %v7108 = vadd.f32 %v7107, %v7043
    %v7109 = vadd.f32 %v7108, %v7044
    %v7110 = vadd.f32 %v7109, %v7045
    %v7111 = vadd.f32 %v7110, %v7046
    %v7112 = vadd.f32 %v7111, %v7047
    %v7113 = vadd.f32 %v7112, %v7048
    %v7114 = vadd.f32 %v7113, %v7049
    %v7115 = vadd.f32 %v7114, %v7050
    %v7116 = vadd.f32 %v7115, %v7051
    %v7117 = vadd.f32 %v7116, %v7052
    %v7118 = vadd.f32 %v7117, %v7053
    %v7119 = vadd.f32 %v7118, %v7054
    %v7120 = vadd.f32 %v7119, %v7055
    %v7121 = vadd.f32 %v7120, %v7056
    %v7122 = vadd.f32 %v7121, %v7057
    %v7123 = vadd.f32 %v7122, %v7058
    %v7124 = vadd.f32 %v7123, %v7059
    %v7125 = vadd.f32 %v7124, %v7060
    %v7126 = vadd.f32 %v7125, %v7061
    %v7127 = vadd.f32 %v7126, %v7062
    %v7128 = vadd.f32 %v7127, %v7063
    %v7129 = vadd.f32 %v7128, %v7064
    %v7130 = vadd.f32 %v7129, %v7065
    %v7131 = vadd.f32 %v7130, %v7066
    %v7132 = vadd.f32 %v7131, %v7067
    %v7133 = vadd.f32 %v7132, %v7068
    %v7134 = vadd.f32 %v7133, %v7069
    %v7135 = vadd.f32 %v7134, %v7070
    %v7136 = vadd.f32 %v7135, %v7071
    %v7137 = vadd.f32 %v7136, %v7072
    %v7138 = vadd.f32 %v7137, %v7073
    %v7139 = vadd.f32 %v7138, %v7074
    %v7140 = vadd.f32 %v7139, %v7075
    %v7141 = vadd.f32 %v7140, %v7076
    %v7142 = vadd.f32 %v7141, %v7077
    %v7143 = vadd.f32 %v7142, %v7078
    %v7144 = vadd.f32 %v7143, %v7079
    %v7145 = vrot.slane %v7144, 4
    %v7146 = vadd.f32 %v7144, %v7145
    %v7147 = vrot.slane %v7146, 2
    %v7148 = vadd.f32 %v7146, %v7147
    %v7149 = vrot.slane %v7148, 1
    %v7150 = vadd.f32 %v7148, %v7149
    %v7151 = vmul.f32 %v7150, 0.001953125
    %v7152 = vsub.f32 %v7016, %v7151
    %v7153 = vsub.f32 %v7017, %v7151
    %v7154 = vsub.f32 %v7018, %v7151
    %v7155 = vsub.f32 %v7019, %v7151
    %v7156 = vsub.f32 %v7020, %v7151
    %v7157 = vsub.f32 %v7021, %v7151
    %v7158 = vsub.f32 %v7022, %v7151
    %v7159 = vsub.f32 %v7023, %v7151
    %v7160 = vsub.f32 %v7024, %v7151
    %v7161 = vsub.f32 %v7025, %v7151
    %v7162 = vsub.f32 %v7026, %v7151
    %v7163 = vsub.f32 %v7027, %v7151
    %v7164 = vsub.f32 %v7028, %v7151
    %v7165 = vsub.f32 %v7029, %v7151
    %v7166 = vsub.f32 %v7030, %v7151
    %v7167 = vsub.f32 %v7031, %v7151
    %v7168 = vsub.f32 %v7032, %v7151
    %v7169 = vsub.f32 %v7033, %v7151
    %v7170 = vsub.f32 %v7034, %v7151
    %v7171 = vsub.f32 %v7035, %v7151
    %v7172 = vsub.f32 %v7036, %v7151
    %v7173 = vsub.f32 %v7037, %v7151
    %v7174 = vsub.f32 %v7038, %v7151
    %v7175 = vsub.f32 %v7039, %v7151
    %v7176 = vsub.f32 %v7040, %v7151
    %v7177 = vsub.f32 %v7041, %v7151
    %v7178 = vsub.f32 %v7042, %v7151
    %v7179 = vsub.f32 %v7043, %v7151
    %v7180 = vsub.f32 %v7044, %v7151
    %v7181 = vsub.f32 %v7045, %v7151
    %v7182 = vsub.f32 %v7046, %v7151
    %v7183 = vsub.f32 %v7047, %v7151
    %v7184 = vsub.f32 %v7048, %v7151
    %v7185 = vsub.f32 %v7049, %v7151
    %v7186 = vsub.f32 %v7050, %v7151
    %v7187 = vsub.f32 %v7051, %v7151
    %v7188 = vsub.f32 %v7052, %v7151
    %v7189 = vsub.f32 %v7053, %v7151
    %v7190 = vsub.f32 %v7054, %v7151
    %v7191 = vsub.f32 %v7055, %v7151
    %v7192 = vsub.f32 %v7056, %v7151
    %v7193 = vsub.f32 %v7057, %v7151
    %v7194 = vsub.f32 %v7058, %v7151
    %v7195 = vsub.f32 %v7059, %v7151
    %v7196 = vsub.f32 %v7060, %v7151
    %v7197 = vsub.f32 %v7061, %v7151
    %v7198 = vsub.f32 %v7062, %v7151
    %v7199 = vsub.f32 %v7063, %v7151
    %v7200 = vsub.f32 %v7064, %v7151
    %v7201 = vsub.f32 %v7065, %v7151
    %v7202 = vsub.f32 %v7066, %v7151
    %v7203 = vsub.f32 %v7067, %v7151
    %v7204 = vsub.f32 %v7068, %v7151
    %v7205 = vsub.f32 %v7069, %v7151
    %v7206 = vsub.f32 %v7070, %v7151
    %v7207 = vsub.f32 %v7071, %v7151
    %v7208 = vsub.f32 %v7072, %v7151
    %v7209 = vsub.f32 %v7073, %v7151
    %v7210 = vsub.f32 %v7074, %v7151
    %v7211 = vsub.f32 %v7075, %v7151
    %v7212 = vsub.f32 %v7076, %v7151
    %v7213 = vsub.f32 %v7077, %v7151
    %v7214 = vsub.f32 %v7078, %v7151
    %v7215 = vsub.f32 %v7079, %v7151
    %v7216 = vmul.f32 %v7152, %v7152
    %v7217 = vmul.f32 %v7153, %v7153
    %v7218 = vmul.f32 %v7154, %v7154
    %v7219 = vmul.f32 %v7155, %v7155
    %v7220 = vmul.f32 %v7156, %v7156
    %v7221 = vmul.f32 %v7157, %v7157
    %v7222 = vmul.f32 %v7158, %v7158
    %v7223 = vmul.f32 %v7159, %v7159
    %v7224 = vmul.f32 %v7160, %v7160
    %v7225 = vmul.f32 %v7161, %v7161
    %v7226 = vmul.f32 %v7162, %v7162
    %v7227 = vmul.f32 %v7163, %v7163
    %v7228 = vmul.f32 %v7164, %v7164
    %v7229 = vmul.f32 %v7165, %v7165
    %v7230 = vmul.f32 %v7166, %v7166
    %v7231 = vmul.f32 %v7167, %v7167
    %v7232 = vmul.f32 %v7168, %v7168
    %v7233 = vmul.f32 %v7169, %v7169
    %v7234 = vmul.f32 %v7170, %v7170
    %v7235 = vmul.f32 %v7171, %v7171
    %v7236 = vmul.f32 %v7172, %v7172
    %v7237 = vmul.f32 %v7173, %v7173
    %v7238 = vmul.f32 %v7174, %v7174
    %v7239 = vmul.f32 %v7175, %v7175
    %v7240 = vmul.f32 %v7176, %v7176
    %v7241 = vmul.f32 %v7177, %v7177
    %v7242 = vmul.f32 %v7178, %v7178
    %v7243 = vmul.f32 %v7179, %v7179
    %v7244 = vmul.f32 %v7180, %v7180
    %v7245 = vmul.f32 %v7181, %v7181
    %v7246 = vmul.f32 %v7182, %v7182
    %v7247 = vmul.f32 %v7183, %v7183
    %v7248 = vmul.f32 %v7184, %v7184
    %v7249 = vmul.f32 %v7185, %v7185
    %v7250 = vmul.f32 %v7186, %v7186
    %v7251 = vmul.f32 %v7187, %v7187
    %v7252 = vmul.f32 %v7188, %v7188
    %v7253 = vmul.f32 %v7189, %v7189
    %v7254 = vmul.f32 %v7190, %v7190
    %v7255 = vmul.f32 %v7191, %v7191
    %v7256 = vmul.f32 %v7192, %v7192
    %v7257 = vmul.f32 %v7193, %v7193
    %v7258 = vmul.f32 %v7194, %v7194
    %v7259 = vmul.f32 %v7195, %v7195
    %v7260 = vmul.f32 %v7196, %v7196
    %v7261 = vmul.f32 %v7197, %v7197
    %v7262 = vmul.f32 %v7198, %v7198
    %v7263 = vmul.f32 %v7199, %v7199
    %v7264 = vmul.f32 %v7200, %v7200
    %v7265 = vmul.f32 %v7201, %v7201
    %v7266 = vmul.f32 %v7202, %v7202
    %v7267 = vmul.f32 %v7203, %v7203
    %v7268 = vmul.f32 %v7204, %v7204
    %v7269 = vmul.f32 %v7205, %v7205
    %v7270 = vmul.f32 %v7206, %v7206
    %v7271 = vmul.f32 %v7207, %v7207
    %v7272 = vmul.f32 %v7208, %v7208
    %v7273 = vmul.f32 %v7209, %v7209
    %v7274 = vmul.f32 %v7210, %v7210
    %v7275 = vmul.f32 %v7211, %v7211
    %v7276 = vmul.f32 %v7212, %v7212
    %v7277 = vmul.f32 %v7213, %v7213
    %v7278 = vmul.f32 %v7214, %v7214
    %v7279 = vmul.f32 %v7215, %v7215
    %v7280 = vadd.f32 %v7216, %v7217
    %v7281 = vadd.f32 %v7280, %v7218
    %v7282 = vadd.f32 %v7281, %v7219
    %v7283 = vadd.f32 %v7282, %v7220
    %v7284 = vadd.f32 %v7283, %v7221
    %v7285 = vadd.f32 %v7284, %v7222
    %v7286 = vadd.f32 %v7285, %v7223
    %v7287 = vadd.f32 %v7286, %v7224
    %v7288 = vadd.f32 %v7287, %v7225
    %v7289 = vadd.f32 %v7288, %v7226
    %v7290 = vadd.f32 %v7289, %v7227
    %v7291 = vadd.f32 %v7290, %v7228
    %v7292 = vadd.f32 %v7291, %v7229
    %v7293 = vadd.f32 %v7292, %v7230
    %v7294 = vadd.f32 %v7293, %v7231
    %v7295 = vadd.f32 %v7294, %v7232
    %v7296 = vadd.f32 %v7295, %v7233
    %v7297 = vadd.f32 %v7296, %v7234
    %v7298 = vadd.f32 %v7297, %v7235
    %v7299 = vadd.f32 %v7298, %v7236
    %v7300 = vadd.f32 %v7299, %v7237
    %v7301 = vadd.f32 %v7300, %v7238
    %v7302 = vadd.f32 %v7301, %v7239
    %v7303 = vadd.f32 %v7302, %v7240
    %v7304 = vadd.f32 %v7303, %v7241
    %v7305 = vadd.f32 %v7304, %v7242
    %v7306 = vadd.f32 %v7305, %v7243
    %v7307 = vadd.f32 %v7306, %v7244
    %v7308 = vadd.f32 %v7307, %v7245
    %v7309 = vadd.f32 %v7308, %v7246
    %v7310 = vadd.f32 %v7309, %v7247
    %v7311 = vadd.f32 %v7310, %v7248
    %v7312 = vadd.f32 %v7311, %v7249
    %v7313 = vadd.f32 %v7312, %v7250
    %v7314 = vadd.f32 %v7313, %v7251
    %v7315 = vadd.f32 %v7314, %v7252
    %v7316 = vadd.f32 %v7315, %v7253
    %v7317 = vadd.f32 %v7316, %v7254
    %v7318 = vadd.f32 %v7317, %v7255
    %v7319 = vadd.f32 %v7318, %v7256
    %v7320 = vadd.f32 %v7319, %v7257
    %v7321 = vadd.f32 %v7320, %v7258
    %v7322 = vadd.f32 %v7321, %v7259
    %v7323 = vadd.f32 %v7322, %v7260
    %v7324 = vadd.f32 %v7323, %v7261
    %v7325 = vadd.f32 %v7324, %v7262
    %v7326 = vadd.f32 %v7325, %v7263
    %v7327 = vadd.f32 %v7326, %v7264
    %v7328 = vadd.f32 %v7327, %v7265
    %v7329 = vadd.f32 %v7328, %v7266
    %v7330 = vadd.f32 %v7329, %v7267
    %v7331 = vadd.f32 %v7330, %v7268
    %v7332 = vadd.f32 %v7331, %v7269
    %v7333 = vadd.f32 %v7332, %v7270
    %v7334 = vadd.f32 %v7333, %v7271
    %v7335 = vadd.f32 %v7334, %v7272
    %v7336 = vadd.f32 %v7335, %v7273
    %v7337 = vadd.f32 %v7336, %v7274
    %v7338 = vadd.f32 %v7337, %v7275
    %v7339 = vadd.f32 %v7338, %v7276
    %v7340 = vadd.f32 %v7339, %v7277
    %v7341 = vadd.f32 %v7340, %v7278
    %v7342 = vadd.f32 %v7341, %v7279
    %v7343 = vrot.slane %v7342, 4
    %v7344 = vadd.f32 %v7342, %v7343
    %v7345 = vrot.slane %v7344, 2
    %v7346 = vadd.f32 %v7344, %v7345
    %v7347 = vrot.slane %v7346, 1
    %v7348 = vadd.f32 %v7346, %v7347
    %v7349 = vmul.f32 %v7348, 0.001953125
    %v7350 = vadd.f32 %v7349, 1e-05
    %v7351 = vrsqrt.pop %v7350
    %v7352 = vmul.f32 %v7351, %v7350
    %v7353 = vmul.f32 %v7352, %v7351
    %v7354 = vmul.f32 0.5, %v7353
    %v7355 = vsub.f32 1.5, %v7354
    %v7356 = vmul.f32 %v7351, %v7355
    %vm7357 = vweird.f32 %v7350
    %vm7358 = vweird.f32 %v7351
    %vm7359 = vmor %vm7357, %vm7358
    %v7360 = vsel %vm7359, %v7351, %v7356
    %v7361 = vmul.f32 %v7080, %v7360
    %v7363 = vperm.slane %v7361, 0
    %v7365 = vmul.f32 %v7152, %v7363
    %v7366 = vmul.f32 %v7153, %v7363
    %v7367 = vmul.f32 %v7154, %v7363
    %v7368 = vmul.f32 %v7155, %v7363
    %v7369 = vmul.f32 %v7156, %v7363
    %v7370 = vmul.f32 %v7157, %v7363
    %v7371 = vmul.f32 %v7158, %v7363
    %v7372 = vmul.f32 %v7159, %v7363
    %v7373 = vmul.f32 %v7160, %v7363
    %v7374 = vmul.f32 %v7161, %v7363
    %v7375 = vmul.f32 %v7162, %v7363
    %v7376 = vmul.f32 %v7163, %v7363
    %v7377 = vmul.f32 %v7164, %v7363
    %v7378 = vmul.f32 %v7165, %v7363
    %v7379 = vmul.f32 %v7166, %v7363
    %v7380 = vmul.f32 %v7167, %v7363
    %v7381 = vmul.f32 %v7168, %v7363
    %v7382 = vmul.f32 %v7169, %v7363
    %v7383 = vmul.f32 %v7170, %v7363
    %v7384 = vmul.f32 %v7171, %v7363
    %v7385 = vmul.f32 %v7172, %v7363
    %v7386 = vmul.f32 %v7173, %v7363
    %v7387 = vmul.f32 %v7174, %v7363
    %v7388 = vmul.f32 %v7175, %v7363
    %v7389 = vmul.f32 %v7176, %v7363
    %v7390 = vmul.f32 %v7177, %v7363
    %v7391 = vmul.f32 %v7178, %v7363
    %v7392 = vmul.f32 %v7179, %v7363
    %v7393 = vmul.f32 %v7180, %v7363
    %v7394 = vmul.f32 %v7181, %v7363
    %v7395 = vmul.f32 %v7182, %v7363
    %v7396 = vmul.f32 %v7183, %v7363
    %v7397 = vmul.f32 %v7184, %v7363
    %v7398 = vmul.f32 %v7185, %v7363
    %v7399 = vmul.f32 %v7186, %v7363
    %v7400 = vmul.f32 %v7187, %v7363
    %v7401 = vmul.f32 %v7188, %v7363
    %v7402 = vmul.f32 %v7189, %v7363
    %v7403 = vmul.f32 %v7190, %v7363
    %v7404 = vmul.f32 %v7191, %v7363
    %v7405 = vmul.f32 %v7192, %v7363
    %v7406 = vmul.f32 %v7193, %v7363
    %v7407 = vmul.f32 %v7194, %v7363
    %v7408 = vmul.f32 %v7195, %v7363
    %v7409 = vmul.f32 %v7196, %v7363
    %v7410 = vmul.f32 %v7197, %v7363
    %v7411 = vmul.f32 %v7198, %v7363
    %v7412 = vmul.f32 %v7199, %v7363
    %v7413 = vmul.f32 %v7200, %v7363
    %v7414 = vmul.f32 %v7201, %v7363
    %v7415 = vmul.f32 %v7202, %v7363
    %v7416 = vmul.f32 %v7203, %v7363
    %v7417 = vmul.f32 %v7204, %v7363
    %v7418 = vmul.f32 %v7205, %v7363
    %v7419 = vmul.f32 %v7206, %v7363
    %v7420 = vmul.f32 %v7207, %v7363
    %v7421 = vmul.f32 %v7208, %v7363
    %v7422 = vmul.f32 %v7209, %v7363
    %v7423 = vmul.f32 %v7210, %v7363
    %v7424 = vmul.f32 %v7211, %v7363
    %v7425 = vmul.f32 %v7212, %v7363
    %v7426 = vmul.f32 %v7213, %v7363
    %v7427 = vmul.f32 %v7214, %v7363
    %v7428 = vmul.f32 %v7215, %v7363
    %v7430 = vperm.slane %v7081, 0
    %v7432 = vadd.f32 %v7365, %v7430
    %v7433 = vadd.f32 %v7366, %v7430
    %v7434 = vadd.f32 %v7367, %v7430
    %v7435 = vadd.f32 %v7368, %v7430
    %v7436 = vadd.f32 %v7369, %v7430
    %v7437 = vadd.f32 %v7370, %v7430
    %v7438 = vadd.f32 %v7371, %v7430
    %v7439 = vadd.f32 %v7372, %v7430
    %v7440 = vadd.f32 %v7373, %v7430
    %v7441 = vadd.f32 %v7374, %v7430
    %v7442 = vadd.f32 %v7375, %v7430
    %v7443 = vadd.f32 %v7376, %v7430
    %v7444 = vadd.f32 %v7377, %v7430
    %v7445 = vadd.f32 %v7378, %v7430
    %v7446 = vadd.f32 %v7379, %v7430
    %v7447 = vadd.f32 %v7380, %v7430
    %v7448 = vadd.f32 %v7381, %v7430
    %v7449 = vadd.f32 %v7382, %v7430
    %v7450 = vadd.f32 %v7383, %v7430
    %v7451 = vadd.f32 %v7384, %v7430
    %v7452 = vadd.f32 %v7385, %v7430
    %v7453 = vadd.f32 %v7386, %v7430
    %v7454 = vadd.f32 %v7387, %v7430
    %v7455 = vadd.f32 %v7388, %v7430
    %v7456 = vadd.f32 %v7389, %v7430
    %v7457 = vadd.f32 %v7390, %v7430
    %v7458 = vadd.f32 %v7391, %v7430
    %v7459 = vadd.f32 %v7392, %v7430
    %v7460 = vadd.f32 %v7393, %v7430
    %v7461 = vadd.f32 %v7394, %v7430
    %v7462 = vadd.f32 %v7395, %v7430
    %v7463 = vadd.f32 %v7396, %v7430
    %v7464 = vadd.f32 %v7397, %v7430
    %v7465 = vadd.f32 %v7398, %v7430
    %v7466 = vadd.f32 %v7399, %v7430
    %v7467 = vadd.f32 %v7400, %v7430
    %v7468 = vadd.f32 %v7401, %v7430
    %v7469 = vadd.f32 %v7402, %v7430
    %v7470 = vadd.f32 %v7403, %v7430
    %v7471 = vadd.f32 %v7404, %v7430
    %v7472 = vadd.f32 %v7405, %v7430
    %v7473 = vadd.f32 %v7406, %v7430
    %v7474 = vadd.f32 %v7407, %v7430
    %v7475 = vadd.f32 %v7408, %v7430
    %v7476 = vadd.f32 %v7409, %v7430
    %v7477 = vadd.f32 %v7410, %v7430
    %v7478 = vadd.f32 %v7411, %v7430
    %v7479 = vadd.f32 %v7412, %v7430
    %v7480 = vadd.f32 %v7413, %v7430
    %v7481 = vadd.f32 %v7414, %v7430
    %v7482 = vadd.f32 %v7415, %v7430
    %v7483 = vadd.f32 %v7416, %v7430
    %v7484 = vadd.f32 %v7417, %v7430
    %v7485 = vadd.f32 %v7418, %v7430
    %v7486 = vadd.f32 %v7419, %v7430
    %v7487 = vadd.f32 %v7420, %v7430
    %v7488 = vadd.f32 %v7421, %v7430
    %v7489 = vadd.f32 %v7422, %v7430
    %v7490 = vadd.f32 %v7423, %v7430
    %v7491 = vadd.f32 %v7424, %v7430
    %v7492 = vadd.f32 %v7425, %v7430
    %v7493 = vadd.f32 %v7426, %v7430
    %v7494 = vadd.f32 %v7427, %v7430
    %v7495 = vadd.f32 %v7428, %v7430
    %v7496 = vmax.f32 %v7432, 0.0
    %v7497 = vmax.f32 %v7433, 0.0
    %v7498 = vmax.f32 %v7434, 0.0
    %v7499 = vmax.f32 %v7435, 0.0
    %v7500 = vmax.f32 %v7436, 0.0
    %v7501 = vmax.f32 %v7437, 0.0
    %v7502 = vmax.f32 %v7438, 0.0
    %v7503 = vmax.f32 %v7439, 0.0
    %v7504 = vmax.f32 %v7440, 0.0
    %v7505 = vmax.f32 %v7441, 0.0
    %v7506 = vmax.f32 %v7442, 0.0
    %v7507 = vmax.f32 %v7443, 0.0
    %v7508 = vmax.f32 %v7444, 0.0
    %v7509 = vmax.f32 %v7445, 0.0
    %v7510 = vmax.f32 %v7446, 0.0
    %v7511 = vmax.f32 %v7447, 0.0
    %v7512 = vmax.f32 %v7448, 0.0
    %v7513 = vmax.f32 %v7449, 0.0
    %v7514 = vmax.f32 %v7450, 0.0
    %v7515 = vmax.f32 %v7451, 0.0
    %v7516 = vmax.f32 %v7452, 0.0
    %v7517 = vmax.f32 %v7453, 0.0
    %v7518 = vmax.f32 %v7454, 0.0
    %v7519 = vmax.f32 %v7455, 0.0
    %v7520 = vmax.f32 %v7456, 0.0
    %v7521 = vmax.f32 %v7457, 0.0
    %v7522 = vmax.f32 %v7458, 0.0
    %v7523 = vmax.f32 %v7459, 0.0
    %v7524 = vmax.f32 %v7460, 0.0
    %v7525 = vmax.f32 %v7461, 0.0
    %v7526 = vmax.f32 %v7462, 0.0
    %v7527 = vmax.f32 %v7463, 0.0
    %v7528 = vmax.f32 %v7464, 0.0
    %v7529 = vmax.f32 %v7465, 0.0
    %v7530 = vmax.f32 %v7466, 0.0
    %v7531 = vmax.f32 %v7467, 0.0
    %v7532 = vmax.f32 %v7468, 0.0
    %v7533 = vmax.f32 %v7469, 0.0
    %v7534 = vmax.f32 %v7470, 0.0
    %v7535 = vmax.f32 %v7471, 0.0
    %v7536 = vmax.f32 %v7472, 0.0
    %v7537 = vmax.f32 %v7473, 0.0
    %v7538 = vmax.f32 %v7474, 0.0
    %v7539 = vmax.f32 %v7475, 0.0
    %v7540 = vmax.f32 %v7476, 0.0
    %v7541 = vmax.f32 %v7477, 0.0
    %v7542 = vmax.f32 %v7478, 0.0
    %v7543 = vmax.f32 %v7479, 0.0
    %v7544 = vmax.f32 %v7480, 0.0
    %v7545 = vmax.f32 %v7481, 0.0
    %v7546 = vmax.f32 %v7482, 0.0
    %v7547 = vmax.f32 %v7483, 0.0
    %v7548 = vmax.f32 %v7484, 0.0
    %v7549 = vmax.f32 %v7485, 0.0
    %v7550 = vmax.f32 %v7486, 0.0
    %v7551 = vmax.f32 %v7487, 0.0
    %v7552 = vmax.f32 %v7488, 0.0
    %v7553 = vmax.f32 %v7489, 0.0
    %v7554 = vmax.f32 %v7490, 0.0
    %v7555 = vmax.f32 %v7491, 0.0
    %v7556 = vmax.f32 %v7492, 0.0
    %v7557 = vmax.f32 %v7493, 0.0
    %v7558 = vmax.f32 %v7494, 0.0
    %v7559 = vmax.f32 %v7495, 0.0
    %7560 = vst [vmem:[#allocation10] sm:$0xff] %v7496
    %7561 = vst [vmem:[#allocation10 + $0x8] sm:$0xff] %v7497
    %7562 = vst [vmem:[#allocation10 + $0x10] sm:$0xff] %v7498
    %7563 = vst [vmem:[#allocation10 + $0x18] sm:$0xff] %v7499
    %7564 = vst [vmem:[#allocation10 + $0x20] sm:$0xff] %v7500
    %7565 = vst [vmem:[#allocation10 + $0x28] sm:$0xff] %v7501
    %7566 = vst [vmem:[#allocation10 + $0x30] sm:$0xff] %v7502
    %7567 = vst [vmem:[#allocation10 + $0x38] sm:$0xff] %v7503
    %7568 = vst [vmem:[#allocation10 + $0x40] sm:$0xff] %v7504
    %7569 = vst [vmem:[#allocation10 + $0x48] sm:$0xff] %v7505
    %7570 = vst [vmem:[#allocation10 + $0x50] sm:$0xff] %v7506
    %7571 = vst [vmem:[#allocation10 + $0x58] sm:$0xff] %v7507
    %7572 = vst [vmem:[#allocation10 + $0x60] sm:$0xff] %v7508
    %7573 = vst [vmem:[#allocation10 + $0x68] sm:$0xff] %v7509
    %7574 = vst [vmem:[#allocation10 + $0x70] sm:$0xff] %v7510
    %7575 = vst [vmem:[#allocation10 + $0x78] sm:$0xff] %v7511
    %7576 = vst [vmem:[#allocation10 + $0x80] sm:$0xff] %v7512
    %7577 = vst [vmem:[#allocation10 + $0x88] sm:$0xff] %v7513
    %7578 = vst [vmem:[#allocation10 + $0x90] sm:$0xff] %v7514
    %7579 = vst [vmem:[#allocation10 + $0x98] sm:$0xff] %v7515
    %7580 = vst [vmem:[#allocation10 + $0xa0] sm:$0xff] %v7516
    %7581 = vst [vmem:[#allocation10 + $0xa8] sm:$0xff] %v7517
    %7582 = vst [vmem:[#allocation10 + $0xb0] sm:$0xff] %v7518
    %7583 = vst [vmem:[#allocation10 + $0xb8] sm:$0xff] %v7519
    %7584 = vst [vmem:[#allocation10 + $0xc0] sm:$0xff] %v7520
    %7585 = vst [vmem:[#allocation10 + $0xc8] sm:$0xff] %v7521
    %7586 = vst [vmem:[#allocation10 + $0xd0] sm:$0xff] %v7522
    %7587 = vst [vmem:[#allocation10 + $0xd8] sm:$0xff] %v7523
    %7588 = vst [vmem:[#allocation10 + $0xe0] sm:$0xff] %v7524
    %7589 = vst [vmem:[#allocation10 + $0xe8] sm:$0xff] %v7525
    %7590 = vst [vmem:[#allocation10 + $0xf0] sm:$0xff] %v7526
    %7591 = vst [vmem:[#allocation10 + $0xf8] sm:$0xff] %v7527
    %7592 = vst [vmem:[#allocation10 + $0x100] sm:$0xff] %v7528
    %7593 = vst [vmem:[#allocation10 + $0x108] sm:$0xff] %v7529
    %7594 = vst [vmem:[#allocation10 + $0x110] sm:$0xff] %v7530
    %7595 = vst [vmem:[#allocation10 + $0x118] sm:$0xff] %v7531
    %7596 = vst [vmem:[#allocation10 + $0x120] sm:$0xff] %v7532
    %7597 = vst [vmem:[#allocation10 + $0x128] sm:$0xff] %v7533
    %7598 = vst [vmem:[#allocation10 + $0x130] sm:$0xff] %v7534
    %7599 = vst [vmem:[#allocation10 + $0x138] sm:$0xff] %v7535
    %7600 = vst [vmem:[#allocation10 + $0x140] sm:$0xff] %v7536
    %7601 = vst [vmem:[#allocation10 + $0x148] sm:$0xff] %v7537
    %7602 = vst [vmem:[#allocation10 + $0x150] sm:$0xff] %v7538
    %7603 = vst [vmem:[#allocation10 + $0x158] sm:$0xff] %v7539
    %7604 = vst [vmem:[#allocation10 + $0x160] sm:$0xff] %v7540
    %7605 = vst [vmem:[#allocation10 + $0x168] sm:$0xff] %v7541
    %7606 = vst [vmem:[#allocation10 + $0x170] sm:$0xff] %v7542
    %7607 = vst [vmem:[#allocation10 + $0x178] sm:$0xff] %v7543
    %7608 = vst [vmem:[#allocation10 + $0x180] sm:$0xff] %v7544
    %7609 = vst [vmem:[#allocation10 + $0x188] sm:$0xff] %v7545
    %7610 = vst [vmem:[#allocation10 + $0x190] sm:$0xff] %v7546
    %7611 = vst [vmem:[#allocation10 + $0x198] sm:$0xff] %v7547
    %7612 = vst [vmem:[#allocation10 + $0x1a0] sm:$0xff] %v7548
    %7613 = vst [vmem:[#allocation10 + $0x1a8] sm:$0xff] %v7549
    %7614 = vst [vmem:[#allocation10 + $0x1b0] sm:$0xff] %v7550
    %7615 = vst [vmem:[#allocation10 + $0x1b8] sm:$0xff] %v7551
    %7616 = vst [vmem:[#allocation10 + $0x1c0] sm:$0xff] %v7552
    %7617 = vst [vmem:[#allocation10 + $0x1c8] sm:$0xff] %v7553
    %7618 = vst [vmem:[#allocation10 + $0x1d0] sm:$0xff] %v7554
    %7619 = vst [vmem:[#allocation10 + $0x1d8] sm:$0xff] %v7555
    %7620 = vst [vmem:[#allocation10 + $0x1e0] sm:$0xff] %v7556
    %7621 = vst [vmem:[#allocation10 + $0x1e8] sm:$0xff] %v7557
    %7622 = vst [vmem:[#allocation10 + $0x1f0] sm:$0xff] %v7558
    %7623 = vst [vmem:[#allocation10 + $0x1f8] sm:$0xff] %v7559
    // Predicated region
    $region42: #{tpu_custom_call.1} parent=1 // pred_check
      _
    $region43: #{tpu_custom_call.1} parent=1 // pred_check_branch
      %7625 = sbr.rel (0) target = $region45
    $region44: #{tpu_custom_call.1} parent=1 // pred_region
      %7627 = vsyncadd [#allocation6], 0
      %s7628 = sshll.u32 [#allocation10], 4
      %s7629 = int_to_ptr.vmem [resolvable:$true] %s7628
      %s7630 = sshll.u32 %s7, 4
      %s7631 = int_to_ptr.hbm [resolvable:$true] %s7630
      %7636 = dma.vmem_to_hbm [thread:$0]  %s7629, 8192, %s7631, [#allocation6], 128, 128, 8
    $region45: #{tpu_custom_call.1} parent=1 // pred_fallthru
      _
    // Predicated region
    $region46: #{tpu_custom_call.1} parent=1 // pred_check
      _
    $region47: #{tpu_custom_call.1} parent=1 // pred_check_branch
      %7638 = sbr.rel (0) target = $region49
    $region48: #{tpu_custom_call.1} parent=1 // pred_region
      %7640 = dma.done [#allocation6], 8192
    $region49: #{tpu_custom_call.1} parent=1 // pred_fallthru
      _
    %7641 = vsyncpa [#allocation5], 1
    %7642 = vsyncpa [#allocation8], 1
    %7643 = vsyncpa [#allocation6], 1

</llo_original>
